<compile_context>
chip_gen: v5e
topology: v5e:2x2
jax: 0.10.0
libtpu: 0.0.40
codegen_flags: <defaults>
</compile_context>

<pallas_src>
import functools
import math

import jax
import jax.numpy as jnp
from jax.experimental import pallas as pl
from jax.experimental.pallas import tpu as pltpu

_VMEM_LIMIT = 64 * 1024 * 1024


def _pick(dim, target, mult):
    """Largest tile <= target that divides `dim` and is a multiple of `mult`,
    falling back to the full dim (always a legal block size)."""
    t = target
    while t >= mult:
        if dim % t == 0:
            return t
        t //= 2
    return dim


def _gelu_tanh(x):
    c = math.sqrt(2.0 / math.pi)
    return 0.5 * x * (1.0 + jnp.tanh(c * (x + 0.044715 * x * x * x)))


# ----------------------------------------------------------------------------
# Kernel: (optional SiLU on input) K-tiled matmul + bias — used for Modulation(vec)
# ----------------------------------------------------------------------------
def _vec_linear_kernel(x_ref, w_ref, b_ref, o_ref, acc_ref, *, pre_silu):
    kk = pl.program_id(1)

    @pl.when(kk == 0)
    def _():
        acc_ref[...] = jnp.zeros_like(acc_ref)

    x = x_ref[...]
    if pre_silu:
        x = x * jax.nn.sigmoid(x)                       # f32 elementwise
    acc_ref[...] += jnp.dot(x.astype(w_ref.dtype), w_ref[...],
                            preferred_element_type=jnp.float32)

    @pl.when(kk == pl.num_programs(1) - 1)
    def _():
        o_ref[...] = (acc_ref[...] + b_ref[...]).astype(o_ref.dtype)


def vec_linear(x, w, b, *, pre_silu=False, tn_target=512, tk_target=512):
    M, K = x.shape
    N = w.shape[1]
    tn = _pick(N, tn_target, 128)
    tk = _pick(K, tk_target, 128)
    kernel = functools.partial(_vec_linear_kernel, pre_silu=pre_silu)
    return pl.pallas_call(
        kernel,
        out_shape=jax.ShapeDtypeStruct((M, N), jnp.float32),
        grid=(N // tn, K // tk),
        in_specs=[
            pl.BlockSpec((M, tk), lambda n, kk: (0, kk)),
            pl.BlockSpec((tk, tn), lambda n, kk: (kk, n)),
            pl.BlockSpec((1, tn), lambda n, kk: (0, n)),
        ],
        out_specs=pl.BlockSpec((M, tn), lambda n, kk: (0, n)),
        scratch_shapes=[pltpu.VMEM((M, tn), jnp.float32)],
        compiler_params=pltpu.CompilerParams(
            dimension_semantics=("parallel", "arbitrary"),
            vmem_limit_bytes=_VMEM_LIMIT),
    )(x, w.astype(jnp.bfloat16), b.reshape(1, N))


# ----------------------------------------------------------------------------
# Kernel: fused LayerNorm(eps=1e-6, no affine) + (1+scale)*xhat + shift, then
#         matmul + bias (+ optional tanh-GELU).  Used for QKV proj and MLP fc1.
# ----------------------------------------------------------------------------
def _ln_mod_linear_kernel(x_ref, sc_ref, sh_ref, w_ref, b_ref, o_ref, *, activation):
    x = x_ref[0]                                        # (tl, D) f32
    mu = jnp.mean(x, axis=-1, keepdims=True)
    xc = x - mu
    var = jnp.mean(xc * xc, axis=-1, keepdims=True)
    xhat = xc * jax.lax.rsqrt(var + 1e-6)
    xm = (1.0 + sc_ref[0]) * xhat + sh_ref[0]           # (tl, D)
    y = jnp.dot(xm.astype(w_ref.dtype), w_ref[...],
                preferred_element_type=jnp.float32) + b_ref[...]
    if activation == "gelu_tanh":
        y = _gelu_tanh(y)
    o_ref[0] = y.astype(o_ref.dtype)


def ln_mod_linear(x, scale, shift, w, b, *, activation="none",
                  tl_target=256, tn_target=256, out_dtype=jnp.bfloat16):
    B, Lx, D = x.shape
    N = w.shape[1]
    tl = _pick(Lx, tl_target, 8)
    tn = _pick(N, tn_target, 128)
    kernel = functools.partial(_ln_mod_linear_kernel, activation=activation)
    return pl.pallas_call(
        kernel,
        out_shape=jax.ShapeDtypeStruct((B, Lx, N), out_dtype),
        grid=(B, Lx // tl, N // tn),
        in_specs=[
            pl.BlockSpec((1, tl, D), lambda b, l, n: (b, l, 0)),
            pl.BlockSpec((1, 1, D), lambda b, l, n: (b, 0, 0)),
            pl.BlockSpec((1, 1, D), lambda b, l, n: (b, 0, 0)),
            pl.BlockSpec((D, tn), lambda b, l, n: (0, n)),
            pl.BlockSpec((1, tn), lambda b, l, n: (0, n)),
        ],
        out_specs=pl.BlockSpec((1, tl, tn), lambda b, l, n: (b, l, n)),
        compiler_params=pltpu.CompilerParams(
            dimension_semantics=("parallel", "parallel", "parallel"),
            vmem_limit_bytes=_VMEM_LIMIT),
    )(x, scale.reshape(B, 1, D), shift.reshape(B, 1, D),
      w.astype(jnp.bfloat16), b.reshape(1, N))


# ----------------------------------------------------------------------------
# Kernel: K-tiled matmul + bias, then out = residual + gate * (.)  (f32 output)
#         Used for attention-proj and MLP fc2 epilogues.
# ----------------------------------------------------------------------------
def _linear_residual_kernel(x_ref, w_ref, b_ref, g_ref, r_ref, o_ref, acc_ref):
    kk = pl.program_id(3)

    @pl.when(kk == 0)
    def _():
        acc_ref[...] = jnp.zeros_like(acc_ref)

    acc_ref[...] += jnp.dot(x_ref[0], w_ref[...], preferred_element_type=jnp.float32)

    @pl.when(kk == pl.num_programs(3) - 1)
    def _():
        y = acc_ref[...] + b_ref[...]                   # bias on final K step only
        o_ref[0] = r_ref[0] + g_ref[0] * y


def linear_residual(x, w, b, gate, res, *, tl_target=256, tn_target=256, tk_target=512):
    B, Lx, K = x.shape
    N = w.shape[1]
    tl = _pick(Lx, tl_target, 8)
    tn = _pick(N, tn_target, 128)
    tk = _pick(K, tk_target, 128)
    return pl.pallas_call(
        _linear_residual_kernel,
        out_shape=jax.ShapeDtypeStruct((B, Lx, N), jnp.float32),
        grid=(B, Lx // tl, N // tn, K // tk),
        in_specs=[
            pl.BlockSpec((1, tl, tk), lambda b, l, n, kk: (b, l, kk)),
            pl.BlockSpec((tk, tn), lambda b, l, n, kk: (kk, n)),
            pl.BlockSpec((1, tn), lambda b, l, n, kk: (0, n)),
            pl.BlockSpec((1, 1, tn), lambda b, l, n, kk: (b, 0, n)),
            pl.BlockSpec((1, tl, tn), lambda b, l, n, kk: (b, l, n)),
        ],
        out_specs=pl.BlockSpec((1, tl, tn), lambda b, l, n, kk: (b, l, n)),
        scratch_shapes=[pltpu.VMEM((tl, tn), jnp.float32)],
        compiler_params=pltpu.CompilerParams(
            dimension_semantics=("parallel", "parallel", "parallel", "arbitrary"),
            vmem_limit_bytes=_VMEM_LIMIT),
    )(x.astype(jnp.bfloat16), w.astype(jnp.bfloat16), b.reshape(1, N),
      gate.reshape(B, 1, N), res)


# ----------------------------------------------------------------------------
# Kernel: flash attention with fused QK-RMSNorm + RoPE (online softmax)
#   q/k arrive de-interleaved ([even | odd] per head); rot(x) = pa*x + pb*swap(x).
#   q-side scale already contains the learnable RMSNorm scale * 1/sqrt(Dh).
#   The processed q tile is cached in VMEM scratch (computed once per q tile).
# ----------------------------------------------------------------------------
def _flash_attn_kernel(q_ref, k_ref, v_ref, qaux_ref, kaux_ref, o_ref,
                       m_sc, l_sc, acc_sc, q_sc, *, dh2):
    kv = pl.program_id(3)

    @pl.when(kv == 0)
    def _():
        m_sc[...] = jnp.full_like(m_sc, -jnp.inf)
        l_sc[...] = jnp.zeros_like(l_sc)
        acc_sc[...] = jnp.zeros_like(acc_sc)
        # q-side RMSNorm + RoPE, computed once per q tile and cached (bf16).
        q = q_ref[0, 0].astype(jnp.float32)             # (tq, Dh)
        q_scale, q_pa, q_pb = qaux_ref[0], qaux_ref[1], qaux_ref[2]
        q = q * jax.lax.rsqrt(jnp.mean(q * q, axis=-1, keepdims=True) + 1e-6) * q_scale
        q = q_pa * q + q_pb * jnp.concatenate([q[:, dh2:], q[:, :dh2]], axis=-1)
        q_sc[...] = q.astype(q_sc.dtype)

    k = k_ref[0, 0].astype(jnp.float32)                 # (tkv, Dh)
    k_scale, k_pa, k_pb = kaux_ref[0], kaux_ref[1], kaux_ref[2]

    # fused K-RMSNorm (eps=1e-6) + RoPE in de-interleaved layout
    k = k * jax.lax.rsqrt(jnp.mean(k * k, axis=-1, keepdims=True) + 1e-6) * k_scale
    k = k_pa * k + k_pb * jnp.concatenate([k[:, dh2:], k[:, :dh2]], axis=-1)

    # lane-dense score matmul: contract over the full head dim (bf16 MXU, f32 acc)
    s = jax.lax.dot_general(q_sc[...], k.astype(jnp.bfloat16),
                            (((1,), (1,)), ((), ())),
                            preferred_element_type=jnp.float32)   # (tq, tkv)

    m_prev = m_sc[...]
    m_new = jnp.maximum(m_prev, jnp.max(s, axis=-1, keepdims=True))
    alpha = jnp.exp(m_prev - m_new)
    p = jnp.exp(s - m_new)
    l_sc[...] = alpha * l_sc[...] + jnp.sum(p, axis=-1, keepdims=True)
    acc_sc[...] = alpha * acc_sc[...] + jnp.dot(p.astype(v_ref.dtype), v_ref[0, 0],
                                                preferred_element_type=jnp.float32)
    m_sc[...] = m_new

    @pl.when(kv == pl.num_programs(3) - 1)
    def _():
        inv_l = pl.reciprocal(l_sc[...], approx=True)
        o_ref[0, 0] = (acc_sc[...] * inv_l).astype(o_ref.dtype)


def flash_attention(q, k, v, qaux, kaux, *, tq_target=256, tkv_target=512):
    B, H, L, Dh = q.shape
    tq = _pick(L, tq_target, 8)
    tkv = _pick(L, tkv_target, 8)
    kernel = functools.partial(_flash_attn_kernel, dh2=Dh // 2)
    return pl.pallas_call(
        kernel,
        out_shape=jax.ShapeDtypeStruct((B, H, L, Dh), jnp.bfloat16),
        grid=(B, H, L // tq, L // tkv),
        in_specs=[
            pl.BlockSpec((1, 1, tq, Dh), lambda b, h, qi, kv: (b, h, qi, 0)),
            pl.BlockSpec((1, 1, tkv, Dh), lambda b, h, qi, kv: (b, h, kv, 0)),
            pl.BlockSpec((1, 1, tkv, Dh), lambda b, h, qi, kv: (b, h, kv, 0)),
            pl.BlockSpec((3, tq, Dh), lambda b, h, qi, kv: (0, qi, 0)),
            pl.BlockSpec((3, tkv, Dh), lambda b, h, qi, kv: (0, kv, 0)),
        ],
        out_specs=pl.BlockSpec((1, 1, tq, Dh), lambda b, h, qi, kv: (b, h, qi, 0)),
        scratch_shapes=[
            pltpu.VMEM((tq, 1), jnp.float32),
            pltpu.VMEM((tq, 1), jnp.float32),
            pltpu.VMEM((tq, Dh), jnp.float32),
            pltpu.VMEM((tq, Dh), jnp.bfloat16),
        ],
        compiler_params=pltpu.CompilerParams(
            dimension_semantics=("parallel", "parallel", "parallel", "arbitrary"),
            vmem_limit_bytes=_VMEM_LIMIT),
    )(q, k, v, qaux, kaux)


# ----------------------------------------------------------------------------
# DoubleStreamBlock forward (Pallas pipeline)
# ----------------------------------------------------------------------------
@functools.partial(jax.jit, static_argnames=("num_heads",))
def double_stream_block(img, txt, vec, pe, params, num_heads):
    B, L_img, D = img.shape
    L_txt = txt.shape[1]
    L = L_txt + L_img
    Dh = D // num_heads
    Dh2 = Dh // 2

    # ---- Modulation(double=True): Linear(D, 6D) applied to SiLU(vec) ----
    img_mod = vec_linear(vec, params["img_mod_w"], params["img_mod_b"], pre_silu=True)
    txt_mod = vec_linear(vec, params["txt_mod_w"], params["txt_mod_b"], pre_silu=True)
    # chunk order: shift1, scale1, gate1, shift2, scale2, gate2
    i_sh1, i_sc1, i_g1, i_sh2, i_sc2, i_g2 = jnp.split(img_mod, 6, axis=-1)
    t_sh1, t_sc1, t_g1, t_sh2, t_sc2, t_g2 = jnp.split(txt_mod, 6, axis=-1)

    # ---- offline QKV-column permutation: q/k come out de-interleaved per head ----
    head_perm = jnp.concatenate([jnp.arange(0, Dh, 2), jnp.arange(1, Dh, 2)])
    qk_perm = (jnp.arange(num_heads)[:, None] * Dh + head_perm[None, :]).reshape(-1)
    col_perm = jnp.concatenate([qk_perm, D + qk_perm, 2 * D + jnp.arange(D)])
    img_qkv_w = params["img_qkv_w"][:, col_perm]
    img_qkv_b = params["img_qkv_b"][col_perm]
    txt_qkv_w = params["txt_qkv_w"][:, col_perm]
    txt_qkv_b = params["txt_qkv_b"][col_perm]

    # ---- fused pre-attention LayerNorm + modulation + QKV projection (bf16) ----
    img_qkv = ln_mod_linear(img, i_sc1, i_sh1, img_qkv_w, img_qkv_b)
    txt_qkv = ln_mod_linear(txt, t_sc1, t_sh1, txt_qkv_w, txt_qkv_b)

    def split_qkv(qkv_flat, Lx):
        qkv = qkv_flat.reshape(B, Lx, 3, num_heads, Dh).transpose(2, 0, 3, 1, 4)
        return qkv[0], qkv[1], qkv[2]

    iq, ik, iv = split_qkv(img_qkv, L_img)
    tq_, tk_, tv_ = split_qkv(txt_qkv, L_txt)

    # concat along sequence: txt tokens first
    q = jnp.concatenate([tq_, iq], axis=2)              # (B, H, L, Dh)
    k = jnp.concatenate([tk_, ik], axis=2)
    v = jnp.concatenate([tv_, iv], axis=2)

    # ---- per-token QKNorm scales (permuted layout, 1/sqrt(Dh) folded into q side)
    def token_scale(txt_s, img_s):
        ts = txt_s[head_perm]
        ims = img_s[head_perm]
        return jnp.concatenate(
            [jnp.broadcast_to(ts[None, :], (L_txt, Dh)),
             jnp.broadcast_to(ims[None, :], (L_img, Dh))], axis=0)  # (L, Dh)

    q_scale = token_scale(params["txt_q_scale"], params["img_q_scale"]) * (1.0 / math.sqrt(Dh))
    k_scale = token_scale(params["txt_k_scale"], params["img_k_scale"])

    # ---- RoPE coefficients in de-interleaved layout: rot(x) = pe_a*x + pe_b*swap(x)
    p00 = pe[0, 0, :, :, 0, 0]
    p01 = pe[0, 0, :, :, 0, 1]
    p10 = pe[0, 0, :, :, 1, 0]
    p11 = pe[0, 0, :, :, 1, 1]
    pe_a = jnp.concatenate([p00, p11], axis=-1)          # (L, Dh)
    pe_b = jnp.concatenate([p01, p10], axis=-1)
    qaux = jnp.stack([q_scale, pe_a, pe_b], axis=0).astype(jnp.float32)  # (3, L, Dh)
    kaux = jnp.stack([k_scale, pe_a, pe_b], axis=0).astype(jnp.float32)

    attn = flash_attention(q, k, v, qaux, kaux)          # (B, H, L, Dh) bf16
    # TODO(synk): when Dh % 128 == 0, write the attention output lane-dense as
    # (B, L, H*Dh) directly from the kernel instead of this XLA transpose.
    attn = attn.transpose(0, 2, 1, 3).reshape(B, L, D)
    txt_attn, img_attn = attn[:, :L_txt], attn[:, L_txt:]

    # ---- img stream: proj (+gated residual), fused LN+mod+fc1+GELU, fc2 (+gated residual)
    img = linear_residual(img_attn, params["img_proj_w"], params["img_proj_b"], i_g1, img)
    h = ln_mod_linear(img, i_sc2, i_sh2, params["img_mlp_w1"], params["img_mlp_b1"],
                      activation="gelu_tanh")
    img = linear_residual(h, params["img_mlp_w2"], params["img_mlp_b2"], i_g2, img)

    # ---- txt stream ----
    txt = linear_residual(txt_attn, params["txt_proj_w"], params["txt_proj_b"], t_g1, txt)
    h = ln_mod_linear(txt, t_sc2, t_sh2, params["txt_mlp_w1"], params["txt_mlp_b1"],
                      activation="gelu_tanh")
    txt = linear_residual(h, params["txt_mlp_w2"], params["txt_mlp_b2"], t_g2, txt)

    return img, txt


# ----------------------------------------------------------------------------
# Pure-JAX reference (mirrors the PyTorch forward semantics)
# ----------------------------------------------------------------------------
def ref_forward(img, txt, vec, pe, p, num_heads):
    B, L_img, D = img.shape
    L_txt = txt.shape[1]
    Dh = D // num_heads
    hp = jax.lax.Precision.HIGHEST
    silu = lambda x: x * jax.nn.sigmoid(x)
    gelu = lambda x: 0.5 * x * (1.0 + jnp.tanh(math.sqrt(2.0 / math.pi) * (x + 0.044715 * x ** 3)))

    def layer_norm(x, eps=1e-6):
        mu = jnp.mean(x, -1, keepdims=True)
        var = jnp.mean((x - mu) ** 2, -1, keepdims=True)
        return (x - mu) / jnp.sqrt(var + eps)

    def rms_norm(x, scale, eps=1e-6):
        rrms = jax.lax.rsqrt(jnp.mean(x * x, -1, keepdims=True) + eps)
        return x * rrms * scale

    img_mod = jnp.dot(silu(vec), p["img_mod_w"], precision=hp) + p["img_mod_b"]
    txt_mod = jnp.dot(silu(vec), p["txt_mod_w"], precision=hp) + p["txt_mod_b"]
    im = jnp.split(img_mod, 6, -1)   # shift1, scale1, gate1, shift2, scale2, gate2
    tm = jnp.split(txt_mod, 6, -1)

    def mod(x, scale, shift):
        return (1.0 + scale[:, None, :]) * layer_norm(x) + shift[:, None, :]

    def qkv_split(x, w, b, Lx):
        qkv = jnp.dot(x, w, precision=hp) + b
        qkv = qkv.reshape(B, Lx, 3, num_heads, Dh).transpose(2, 0, 3, 1, 4)
        return qkv[0], qkv[1], qkv[2]

    iq, ik, iv = qkv_split(mod(img, im[1], im[0]), p["img_qkv_w"], p["img_qkv_b"], L_img)
    tq, tk, tv = qkv_split(mod(txt, tm[1], tm[0]), p["txt_qkv_w"], p["txt_qkv_b"], L_txt)
    iq, ik = rms_norm(iq, p["img_q_scale"]), rms_norm(ik, p["img_k_scale"])
    tq, tk = rms_norm(tq, p["txt_q_scale"]), rms_norm(tk, p["txt_k_scale"])

    q = jnp.concatenate([tq, iq], axis=2)
    k = jnp.concatenate([tk, ik], axis=2)
    v = jnp.concatenate([tv, iv], axis=2)

    def apply_rope(x):
        xr = x.reshape(*x.shape[:-1], -1, 1, 2)
        out = pe[..., 0] * xr[..., 0] + pe[..., 1] * xr[..., 1]
        return out.reshape(x.shape)

    qr, kr = apply_rope(q), apply_rope(k)
    scores = jnp.einsum("bhqd,bhkd->bhqk", qr, kr, precision=hp) / math.sqrt(Dh)
    attn_w = jax.nn.softmax(scores, axis=-1)
    out = jnp.einsum("bhqk,bhkd->bhqd", attn_w, v, precision=hp)
    out = out.transpose(0, 2, 1, 3).reshape(B, L_txt + L_img, D)
    txt_attn, img_attn = out[:, :L_txt], out[:, L_txt:]

    def mlp(x, w1, b1, w2, b2):
        return jnp.dot(gelu(jnp.dot(x, w1, precision=hp) + b1), w2, precision=hp) + b2

    img_o = img + im[2][:, None] * (jnp.dot(img_attn, p["img_proj_w"], precision=hp) + p["img_proj_b"])
    img_o = img_o + im[5][:, None] * mlp(mod(img_o, im[4], im[3]),
                                         p["img_mlp_w1"], p["img_mlp_b1"],
                                         p["img_mlp_w2"], p["img_mlp_b2"])
    txt_o = txt + tm[2][:, None] * (jnp.dot(txt_attn, p["txt_proj_w"], precision=hp) + p["txt_proj_b"])
    txt_o = txt_o + tm[5][:, None] * mlp(mod(txt_o, tm[4], tm[3]),
                                         p["txt_mlp_w1"], p["txt_mlp_b1"],
                                         p["txt_mlp_w2"], p["txt_mlp_b2"])
    return img_o, txt_o


# ----------------------------------------------------------------------------
if __name__ == "__main__":
    B, L_img, L_txt = 2, 8, 4
    hidden, num_heads, mlp_ratio = 32, 4, 4.0
    Dh = hidden // num_heads
    mlp_hidden = int(hidden * mlp_ratio)
    L = L_txt + L_img

    key = jax.random.PRNGKey(0)
    keys = jax.random.split(key, 32)
    kit = iter(keys)

    def w(shape, scale=0.2):
        return jax.random.normal(next(kit), shape, jnp.float32) * scale

    params = {
        "img_mod_w": w((hidden, 6 * hidden)), "img_mod_b": w((6 * hidden,)),
        "txt_mod_w": w((hidden, 6 * hidden)), "txt_mod_b": w((6 * hidden,)),
        # qkv_bias=False (default) -> zero bias
        "img_qkv_w": w((hidden, 3 * hidden)), "img_qkv_b": jnp.zeros((3 * hidden,), jnp.float32),
        "txt_qkv_w": w((hidden, 3 * hidden)), "txt_qkv_b": jnp.zeros((3 * hidden,), jnp.float32),
        # QKNorm (RMSNorm) learnable scales
        "img_q_scale": 1.0 + w((Dh,), 0.1), "img_k_scale": 1.0 + w((Dh,), 0.1),
        "txt_q_scale": 1.0 + w((Dh,), 0.1), "txt_k_scale": 1.0 + w((Dh,), 0.1),
        "img_proj_w": w((hidden, hidden)), "img_proj_b": w((hidden,)),
        "txt_proj_w": w((hidden, hidden)), "txt_proj_b": w((hidden,)),
        "img_mlp_w1": w((hidden, mlp_hidden)), "img_mlp_b1": w((mlp_hidden,)),
        "img_mlp_w2": w((mlp_hidden, hidden)), "img_mlp_b2": w((hidden,)),
        "txt_mlp_w1": w((hidden, mlp_hidden)), "txt_mlp_b1": w((mlp_hidden,)),
        "txt_mlp_w2": w((mlp_hidden, hidden)), "txt_mlp_b2": w((hidden,)),
    }

    img = jax.random.normal(next(kit), (B, L_img, hidden), jnp.float32)
    txt = jax.random.normal(next(kit), (B, L_txt, hidden), jnp.float32)
    vec = jax.random.normal(next(kit), (B, hidden), jnp.float32)

    # pe: (1, 1, L, Dh/2, 2, 2) rotation matrices [[cos, -sin], [sin, cos]]
    pos = jnp.arange(L, dtype=jnp.float32)[:, None]
    freqs = 1.0 / (10000.0 ** (jnp.arange(Dh // 2, dtype=jnp.float32) * 2.0 / Dh))[None, :]
    ang = pos * freqs
    cos, sin = jnp.cos(ang), jnp.sin(ang)
    pe = jnp.stack([jnp.stack([cos, -sin], -1), jnp.stack([sin, cos], -1)], axis=-2)
    pe = pe[None, None]  # (1, 1, L, Dh/2, 2, 2)

    img_out, txt_out = double_stream_block(img, txt, vec, pe, params, num_heads)
    jax.block_until_ready((img_out, txt_out))

    ref_img, ref_txt = ref_forward(img, txt, vec, pe, params, num_heads)
    assert img_out.shape == (B, L_img, hidden) and txt_out.shape == (B, L_txt, hidden)
    # bf16 MXU operands + bf16 intermediates -> compare against f32 reference at a
    # tolerance consistent with bf16 rounding.
    assert bool(jnp.allclose(img_out, ref_img, atol=5e-2, rtol=5e-2)), "img mismatch"
    assert bool(jnp.allclose(txt_out, ref_txt, atol=5e-2, rtol=5e-2)), "txt mismatch"

    print("KERNEL_OK")
</pallas_src>

<mosaic_0001>
module attributes {stable_mosaic.version = 11 : i64} {
  func.func @_vec_linear_kernel(%arg0: i32, %arg1: i32, %arg2: memref<2x32xf32, #tpu.memory_space<vmem>>, %arg3: memref<32x192xbf16, #tpu.memory_space<vmem>>, %arg4: memref<1x192xf32, #tpu.memory_space<vmem>>, %arg5: memref<2x192xf32, #tpu.memory_space<vmem>>, %arg6: memref<2x192xf32, #tpu.memory_space<vmem>>) attributes {dimension_semantics = [#tpu.dimension_semantics<parallel>, #tpu.dimension_semantics<arbitrary>], iteration_bounds = array<i64: 1, 1>, scalar_prefetch = 0 : i64, scratch_operands = 1 : i64, tpu.core_type = #tpu.core_type<tc>, window_params = [{transform_indices = @transform_0, window_bounds = array<i64: 2, 32>}, {transform_indices = @transform_1, window_bounds = array<i64: 32, 192>}, {transform_indices = @transform_2, window_bounds = array<i64: 1, 192>}, {transform_indices = @transform_3, window_bounds = array<i64: 2, 192>}]} {
    %c0_i32 = arith.constant 0 : i32
    %0 = arith.cmpi eq, %arg1, %c0_i32 : i32
    %1 = arith.extui %0 : i1 to i32
    %c0_i32_0 = arith.constant 0 : i32
    %2 = arith.cmpi ne, %1, %c0_i32_0 : i32
    scf.if %2 {
      %cst_11 = arith.constant 0.000000e+00 : f32
      %19 = vector.broadcast %cst_11 : f32 to vector<2x192xf32>
      %c0_12 = arith.constant 0 : index
      %c0_13 = arith.constant 0 : index
      %20 = vector.load %arg6[%c0_12, %c0_13] : memref<2x192xf32, #tpu.memory_space<vmem>>, vector<2x192xf32>
      tpu.vector_store %arg6[%c0_12, %c0_13], %19 {strides = array<i32>} : memref<2x192xf32, #tpu.memory_space<vmem>>, vector<2x192xf32>,
    } else {
    }
    %c0 = arith.constant 0 : index
    %c0_1 = arith.constant 0 : index
    %3 = vector.load %arg2[%c0, %c0_1] : memref<2x32xf32, #tpu.memory_space<vmem>>, vector<2x32xf32>
    %4 = arith.negf %3 : vector<2x32xf32>
    %5 = math.exp %4 : vector<2x32xf32>
    %cst = arith.constant 1.000000e+00 : f32
    %6 = vector.broadcast %cst : f32 to vector<2x32xf32>
    %7 = arith.addf %6, %5 : vector<2x32xf32>
    %8 = arith.divf %6, %7 : vector<2x32xf32>
    %9 = arith.mulf %3, %8 : vector<2x32xf32>
    %c0_2 = arith.constant 0 : index
    %c0_3 = arith.constant 0 : index
    %10 = vector.load %arg6[%c0_2, %c0_3] : memref<2x192xf32, #tpu.memory_space<vmem>>, vector<2x192xf32>
    %11 = arith.truncf %9 : vector<2x32xf32> to vector<2x32xbf16>
    %c0_4 = arith.constant 0 : index
    %c0_5 = arith.constant 0 : index
    %12 = vector.load %arg3[%c0_4, %c0_5] : memref<32x192xbf16, #tpu.memory_space<vmem>>, vector<32x192xbf16>
    %cst_6 = arith.constant dense<0.000000e+00> : vector<2x192xf32>
    %13 = tpu.matmul %11, %12, %cst_6 {dimension_numbers = #tpu.dot_dimension_numbers<[1], [0], [0], [1], [0, 0, 1, 1], [], []>} : vector<2x32xbf16>, vector<32x192xbf16>, vector<2x192xf32> -> vector<2x192xf32>
    %14 = arith.addf %10, %13 : vector<2x192xf32>
    %c0_7 = arith.constant 0 : index
    %c0_8 = arith.constant 0 : index
    %15 = vector.load %arg6[%c0_7, %c0_8] : memref<2x192xf32, #tpu.memory_space<vmem>>, vector<2x192xf32>
    tpu.vector_store %arg6[%c0_7, %c0_8], %14 {strides = array<i32>} : memref<2x192xf32, #tpu.memory_space<vmem>>, vector<2x192xf32>,
    %c0_i32_9 = arith.constant 0 : i32
    %16 = arith.cmpi eq, %arg1, %c0_i32_9 : i32
    %17 = arith.extui %16 : i1 to i32
    %c0_i32_10 = arith.constant 0 : i32
    %18 = arith.cmpi ne, %17, %c0_i32_10 : i32
    scf.if %18 {
      %c0_11 = arith.constant 0 : index
      %c0_12 = arith.constant 0 : index
      %19 = vector.load %arg6[%c0_11, %c0_12] : memref<2x192xf32, #tpu.memory_space<vmem>>, vector<2x192xf32>
      %c0_13 = arith.constant 0 : index
      %c0_14 = arith.constant 0 : index
      %20 = vector.load %arg4[%c0_13, %c0_14] : memref<1x192xf32, #tpu.memory_space<vmem>>, vector<1x192xf32>
      %21 = vector.broadcast %20 : vector<1x192xf32> to vector<2x192xf32>
      %22 = arith.addf %19, %21 : vector<2x192xf32>
      %c0_15 = arith.constant 0 : index
      %c0_16 = arith.constant 0 : index
      %23 = vector.load %arg5[%c0_15, %c0_16] : memref<2x192xf32, #tpu.memory_space<vmem>>, vector<2x192xf32>
      tpu.vector_store %arg5[%c0_15, %c0_16], %22 {strides = array<i32>} : memref<2x192xf32, #tpu.memory_space<vmem>>, vector<2x192xf32>,
    } else {
    }
    return
  }
  func.func @transform_0(%arg0: i32, %arg1: i32) -> (i32, i32) {
    %c0_i32 = arith.constant 0 : i32
    %c0_i32_0 = arith.constant 0 : i32
    return %c0_i32, %arg1 : i32, i32
  }
  func.func @transform_1(%arg0: i32, %arg1: i32) -> (i32, i32) {
    %c0_i32 = arith.constant 0 : i32
    return %arg1, %arg0 : i32, i32
  }
  func.func @transform_2(%arg0: i32, %arg1: i32) -> (i32, i32) {
    %c0_i32 = arith.constant 0 : i32
    %c0_i32_0 = arith.constant 0 : i32
    return %c0_i32, %arg0 : i32, i32
  }
  func.func @transform_3(%arg0: i32, %arg1: i32) -> (i32, i32) {
    %c0_i32 = arith.constant 0 : i32
    %c0_i32_0 = arith.constant 0 : i32
    return %c0_i32, %arg0 : i32, i32
  }
}

module attributes {stable_mosaic.version = 11 : i64} {
  func.func @_ln_mod_linear_kernel(%arg0: i32, %arg1: i32, %arg2: i32, %arg3: memref<1x8x32xf32, #tpu.memory_space<vmem>>, %arg4: memref<1x1x32xf32, #tpu.memory_space<vmem>>, %arg5: memref<1x1x32xf32, #tpu.memory_space<vmem>>, %arg6: memref<32x96xbf16, #tpu.memory_space<vmem>>, %arg7: memref<1x96xf32, #tpu.memory_space<vmem>>, %arg8: memref<1x8x96xbf16, #tpu.memory_space<vmem>>) attributes {dimension_semantics = [#tpu.dimension_semantics<parallel>, #tpu.dimension_semantics<parallel>, #tpu.dimension_semantics<parallel>], iteration_bounds = array<i64: 2, 1, 1>, scalar_prefetch = 0 : i64, scratch_operands = 0 : i64, tpu.core_type = #tpu.core_type<tc>, window_params = [{transform_indices = @transform_0, window_bounds = array<i64: 1, 8, 32>}, {transform_indices = @transform_1, window_bounds = array<i64: 1, 1, 32>}, {transform_indices = @transform_2, window_bounds = array<i64: 1, 1, 32>}, {transform_indices = @transform_3, window_bounds = array<i64: 32, 96>}, {transform_indices = @transform_4, window_bounds = array<i64: 1, 96>}, {transform_indices = @transform_5, window_bounds = array<i64: 1, 8, 96>}]} {
    %c0 = arith.constant 0 : index
    %c0_0 = arith.constant 0 : index
    %c0_1 = arith.constant 0 : index
    %0 = vector.load %arg3[%c0, %c0_0, %c0_1] : memref<1x8x32xf32, #tpu.memory_space<vmem>>, vector<1x8x32xf32>
    %1 = vector.shape_cast %0 : vector<1x8x32xf32> to vector<8x32xf32>
    %cst = arith.constant dense<0.000000e+00> : vector<8xf32>
    %2 = vector.multi_reduction <add>, %1, %cst [1] : vector<8x32xf32> to vector<8xf32>
    %3 = vector.shape_cast %2 : vector<8xf32> to vector<8x1xf32>
    %cst_2 = arith.constant 3.200000e+01 : f32
    %4 = vector.broadcast %cst_2 : f32 to vector<8x1xf32>
    %5 = arith.divf %3, %4 : vector<8x1xf32>
    %6 = vector.broadcast %5 : vector<8x1xf32> to vector<8x32xf32>
    %7 = arith.subf %1, %6 : vector<8x32xf32>
    %8 = arith.mulf %7, %7 : vector<8x32xf32>
    %cst_3 = arith.constant dense<0.000000e+00> : vector<8xf32>
    %9 = vector.multi_reduction <add>, %8, %cst_3 [1] : vector<8x32xf32> to vector<8xf32>
    %10 = vector.shape_cast %9 : vector<8xf32> to vector<8x1xf32>
    %cst_4 = arith.constant 3.200000e+01 : f32
    %11 = vector.broadcast %cst_4 : f32 to vector<8x1xf32>
    %12 = arith.divf %10, %11 : vector<8x1xf32>
    %cst_5 = arith.constant 9.99999997E-7 : f32
    %13 = vector.broadcast %cst_5 : f32 to vector<8x1xf32>
    %14 = arith.addf %12, %13 : vector<8x1xf32>
    %15 = math.rsqrt %14 : vector<8x1xf32>
    %16 = vector.broadcast %15 : vector<8x1xf32> to vector<8x32xf32>
    %17 = arith.mulf %7, %16 : vector<8x32xf32>
    %c0_6 = arith.constant 0 : index
    %c0_7 = arith.constant 0 : index
    %c0_8 = arith.constant 0 : index
    %18 = vector.load %arg4[%c0_6, %c0_7, %c0_8] : memref<1x1x32xf32, #tpu.memory_space<vmem>>, vector<1x1x32xf32>
    %19 = vector.shape_cast %18 : vector<1x1x32xf32> to vector<1x32xf32>
    %cst_9 = arith.constant 1.000000e+00 : f32
    %20 = vector.broadcast %cst_9 : f32 to vector<1x32xf32>
    %21 = arith.addf %20, %19 : vector<1x32xf32>
    %22 = vector.broadcast %21 : vector<1x32xf32> to vector<8x32xf32>
    %23 = arith.mulf %22, %17 : vector<8x32xf32>
    %c0_10 = arith.constant 0 : index
    %c0_11 = arith.constant 0 : index
    %c0_12 = arith.constant 0 : index
    %24 = vector.load %arg5[%c0_10, %c0_11, %c0_12] : memref<1x1x32xf32, #tpu.memory_space<vmem>>, vector<1x1x32xf32>
    %25 = vector.shape_cast %24 : vector<1x1x32xf32> to vector<1x32xf32>
    %26 = vector.broadcast %25 : vector<1x32xf32> to vector<8x32xf32>
    %27 = arith.addf %23, %26 : vector<8x32xf32>
    %28 = arith.truncf %27 : vector<8x32xf32> to vector<8x32xbf16>
    %c0_13 = arith.constant 0 : index
    %c0_14 = arith.constant 0 : index
    %29 = vector.load %arg6[%c0_13, %c0_14] : memref<32x96xbf16, #tpu.memory_space<vmem>>, vector<32x96xbf16>
    %cst_15 = arith.constant dense<0.000000e+00> : vector<8x96xf32>
    %30 = tpu.matmul %28, %29, %cst_15 {dimension_numbers = #tpu.dot_dimension_numbers<[1], [0], [0], [1], [0, 0, 1, 1], [], []>} : vector<8x32xbf16>, vector<32x96xbf16>, vector<8x96xf32> -> vector<8x96xf32>
    %c0_16 = arith.constant 0 : index
    %c0_17 = arith.constant 0 : index
    %31 = vector.load %arg7[%c0_16, %c0_17] : memref<1x96xf32, #tpu.memory_space<vmem>>, vector<1x96xf32>
    %32 = vector.broadcast %31 : vector<1x96xf32> to vector<8x96xf32>
    %33 = arith.addf %30, %32 : vector<8x96xf32>
    %34 = arith.truncf %33 : vector<8x96xf32> to vector<8x96xbf16>
    %c0_18 = arith.constant 0 : index
    %c0_19 = arith.constant 0 : index
    %c0_20 = arith.constant 0 : index
    %35 = vector.load %arg8[%c0_18, %c0_19, %c0_20] : memref<1x8x96xbf16, #tpu.memory_space<vmem>>, vector<1x8x96xbf16>
    %36 = vector.shape_cast %35 : vector<1x8x96xbf16> to vector<8x96xbf16>
    %37 = vector.shape_cast %34 : vector<8x96xbf16> to vector<1x8x96xbf16>
    tpu.vector_store %arg8[%c0_18, %c0_19, %c0_20], %37 {strides = array<i32>} : memref<1x8x96xbf16, #tpu.memory_space<vmem>>, vector<1x8x96xbf16>,
    return
  }
  func.func @transform_0(%arg0: i32, %arg1: i32, %arg2: i32) -> (i32, i32, i32) {
    %c0_i32 = arith.constant 0 : i32
    %c0_i32_0 = arith.constant 0 : i32
    return %arg0, %arg1, %c0_i32 : i32, i32, i32
  }
  func.func @transform_1(%arg0: i32, %arg1: i32, %arg2: i32) -> (i32, i32, i32) {
    %c0_i32 = arith.constant 0 : i32
    %c0_i32_0 = arith.constant 0 : i32
    %c0_i32_1 = arith.constant 0 : i32
    return %arg0, %c0_i32, %c0_i32_0 : i32, i32, i32
  }
  func.func @transform_2(%arg0: i32, %arg1: i32, %arg2: i32) -> (i32, i32, i32) {
    %c0_i32 = arith.constant 0 : i32
    %c0_i32_0 = arith.constant 0 : i32
    %c0_i32_1 = arith.constant 0 : i32
    return %arg0, %c0_i32, %c0_i32_0 : i32, i32, i32
  }
  func.func @transform_3(%arg0: i32, %arg1: i32, %arg2: i32) -> (i32, i32) {
    %c0_i32 = arith.constant 0 : i32
    %c0_i32_0 = arith.constant 0 : i32
    return %c0_i32, %arg2 : i32, i32
  }
  func.func @transform_4(%arg0: i32, %arg1: i32, %arg2: i32) -> (i32, i32) {
    %c0_i32 = arith.constant 0 : i32
    %c0_i32_0 = arith.constant 0 : i32
    return %c0_i32, %arg2 : i32, i32
  }
  func.func @transform_5(%arg0: i32, %arg1: i32, %arg2: i32) -> (i32, i32, i32) {
    %c0_i32 = arith.constant 0 : i32
    return %arg0, %arg1, %arg2 : i32, i32, i32
  }
}

module attributes {stable_mosaic.version = 11 : i64} {
  func.func @_ln_mod_linear_kernel(%arg0: i32, %arg1: i32, %arg2: i32, %arg3: memref<1x4x32xf32, #tpu.memory_space<vmem>>, %arg4: memref<1x1x32xf32, #tpu.memory_space<vmem>>, %arg5: memref<1x1x32xf32, #tpu.memory_space<vmem>>, %arg6: memref<32x96xbf16, #tpu.memory_space<vmem>>, %arg7: memref<1x96xf32, #tpu.memory_space<vmem>>, %arg8: memref<1x4x96xbf16, #tpu.memory_space<vmem>>) attributes {dimension_semantics = [#tpu.dimension_semantics<parallel>, #tpu.dimension_semantics<parallel>, #tpu.dimension_semantics<parallel>], iteration_bounds = array<i64: 2, 1, 1>, scalar_prefetch = 0 : i64, scratch_operands = 0 : i64, tpu.core_type = #tpu.core_type<tc>, window_params = [{transform_indices = @transform_0, window_bounds = array<i64: 1, 4, 32>}, {transform_indices = @transform_1, window_bounds = array<i64: 1, 1, 32>}, {transform_indices = @transform_2, window_bounds = array<i64: 1, 1, 32>}, {transform_indices = @transform_3, window_bounds = array<i64: 32, 96>}, {transform_indices = @transform_4, window_bounds = array<i64: 1, 96>}, {transform_indices = @transform_5, window_bounds = array<i64: 1, 4, 96>}]} {
    %c0 = arith.constant 0 : index
    %c0_0 = arith.constant 0 : index
    %c0_1 = arith.constant 0 : index
    %0 = vector.load %arg3[%c0, %c0_0, %c0_1] : memref<1x4x32xf32, #tpu.memory_space<vmem>>, vector<1x4x32xf32>
    %1 = vector.shape_cast %0 : vector<1x4x32xf32> to vector<4x32xf32>
    %cst = arith.constant dense<0.000000e+00> : vector<4xf32>
    %2 = vector.multi_reduction <add>, %1, %cst [1] : vector<4x32xf32> to vector<4xf32>
    %3 = vector.shape_cast %2 : vector<4xf32> to vector<4x1xf32>
    %cst_2 = arith.constant 3.200000e+01 : f32
    %4 = vector.broadcast %cst_2 : f32 to vector<4x1xf32>
    %5 = arith.divf %3, %4 : vector<4x1xf32>
    %6 = vector.broadcast %5 : vector<4x1xf32> to vector<4x32xf32>
    %7 = arith.subf %1, %6 : vector<4x32xf32>
    %8 = arith.mulf %7, %7 : vector<4x32xf32>
    %cst_3 = arith.constant dense<0.000000e+00> : vector<4xf32>
    %9 = vector.multi_reduction <add>, %8, %cst_3 [1] : vector<4x32xf32> to vector<4xf32>
    %10 = vector.shape_cast %9 : vector<4xf32> to vector<4x1xf32>
    %cst_4 = arith.constant 3.200000e+01 : f32
    %11 = vector.broadcast %cst_4 : f32 to vector<4x1xf32>
    %12 = arith.divf %10, %11 : vector<4x1xf32>
    %cst_5 = arith.constant 9.99999997E-7 : f32
    %13 = vector.broadcast %cst_5 : f32 to vector<4x1xf32>
    %14 = arith.addf %12, %13 : vector<4x1xf32>
    %15 = math.rsqrt %14 : vector<4x1xf32>
    %16 = vector.broadcast %15 : vector<4x1xf32> to vector<4x32xf32>
    %17 = arith.mulf %7, %16 : vector<4x32xf32>
    %c0_6 = arith.constant 0 : index
    %c0_7 = arith.constant 0 : index
    %c0_8 = arith.constant 0 : index
    %18 = vector.load %arg4[%c0_6, %c0_7, %c0_8] : memref<1x1x32xf32, #tpu.memory_space<vmem>>, vector<1x1x32xf32>
    %19 = vector.shape_cast %18 : vector<1x1x32xf32> to vector<1x32xf32>
    %cst_9 = arith.constant 1.000000e+00 : f32
    %20 = vector.broadcast %cst_9 : f32 to vector<1x32xf32>
    %21 = arith.addf %20, %19 : vector<1x32xf32>
    %22 = vector.broadcast %21 : vector<1x32xf32> to vector<4x32xf32>
    %23 = arith.mulf %22, %17 : vector<4x32xf32>
    %c0_10 = arith.constant 0 : index
    %c0_11 = arith.constant 0 : index
    %c0_12 = arith.constant 0 : index
    %24 = vector.load %arg5[%c0_10, %c0_11, %c0_12] : memref<1x1x32xf32, #tpu.memory_space<vmem>>, vector<1x1x32xf32>
    %25 = vector.shape_cast %24 : vector<1x1x32xf32> to vector<1x32xf32>
    %26 = vector.broadcast %25 : vector<1x32xf32> to vector<4x32xf32>
    %27 = arith.addf %23, %26 : vector<4x32xf32>
    %28 = arith.truncf %27 : vector<4x32xf32> to vector<4x32xbf16>
    %c0_13 = arith.constant 0 : index
    %c0_14 = arith.constant 0 : index
    %29 = vector.load %arg6[%c0_13, %c0_14] : memref<32x96xbf16, #tpu.memory_space<vmem>>, vector<32x96xbf16>
    %cst_15 = arith.constant dense<0.000000e+00> : vector<4x96xf32>
    %30 = tpu.matmul %28, %29, %cst_15 {dimension_numbers = #tpu.dot_dimension_numbers<[1], [0], [0], [1], [0, 0, 1, 1], [], []>} : vector<4x32xbf16>, vector<32x96xbf16>, vector<4x96xf32> -> vector<4x96xf32>
    %c0_16 = arith.constant 0 : index
    %c0_17 = arith.constant 0 : index
    %31 = vector.load %arg7[%c0_16, %c0_17] : memref<1x96xf32, #tpu.memory_space<vmem>>, vector<1x96xf32>
    %32 = vector.broadcast %31 : vector<1x96xf32> to vector<4x96xf32>
    %33 = arith.addf %30, %32 : vector<4x96xf32>
    %34 = arith.truncf %33 : vector<4x96xf32> to vector<4x96xbf16>
    %c0_18 = arith.constant 0 : index
    %c0_19 = arith.constant 0 : index
    %c0_20 = arith.constant 0 : index
    %35 = vector.load %arg8[%c0_18, %c0_19, %c0_20] : memref<1x4x96xbf16, #tpu.memory_space<vmem>>, vector<1x4x96xbf16>
    %36 = vector.shape_cast %35 : vector<1x4x96xbf16> to vector<4x96xbf16>
    %37 = vector.shape_cast %34 : vector<4x96xbf16> to vector<1x4x96xbf16>
    tpu.vector_store %arg8[%c0_18, %c0_19, %c0_20], %37 {strides = array<i32>} : memref<1x4x96xbf16, #tpu.memory_space<vmem>>, vector<1x4x96xbf16>,
    return
  }
  func.func @transform_0(%arg0: i32, %arg1: i32, %arg2: i32) -> (i32, i32, i32) {
    %c0_i32 = arith.constant 0 : i32
    %c0_i32_0 = arith.constant 0 : i32
    return %arg0, %arg1, %c0_i32 : i32, i32, i32
  }
  func.func @transform_1(%arg0: i32, %arg1: i32, %arg2: i32) -> (i32, i32, i32) {
    %c0_i32 = arith.constant 0 : i32
    %c0_i32_0 = arith.constant 0 : i32
    %c0_i32_1 = arith.constant 0 : i32
    return %arg0, %c0_i32, %c0_i32_0 : i32, i32, i32
  }
  func.func @transform_2(%arg0: i32, %arg1: i32, %arg2: i32) -> (i32, i32, i32) {
    %c0_i32 = arith.constant 0 : i32
    %c0_i32_0 = arith.constant 0 : i32
    %c0_i32_1 = arith.constant 0 : i32
    return %arg0, %c0_i32, %c0_i32_0 : i32, i32, i32
  }
  func.func @transform_3(%arg0: i32, %arg1: i32, %arg2: i32) -> (i32, i32) {
    %c0_i32 = arith.constant 0 : i32
    %c0_i32_0 = arith.constant 0 : i32
    return %c0_i32, %arg2 : i32, i32
  }
  func.func @transform_4(%arg0: i32, %arg1: i32, %arg2: i32) -> (i32, i32) {
    %c0_i32 = arith.constant 0 : i32
    %c0_i32_0 = arith.constant 0 : i32
    return %c0_i32, %arg2 : i32, i32
  }
  func.func @transform_5(%arg0: i32, %arg1: i32, %arg2: i32) -> (i32, i32, i32) {
    %c0_i32 = arith.constant 0 : i32
    return %arg0, %arg1, %arg2 : i32, i32, i32
  }
}

module attributes {stable_mosaic.version = 11 : i64} {
  func.func @_flash_attn_kernel(%arg0: i32, %arg1: i32, %arg2: i32, %arg3: i32, %arg4: memref<1x1x12x8xbf16, #tpu.memory_space<vmem>>, %arg5: memref<1x1x12x8xbf16, #tpu.memory_space<vmem>>, %arg6: memref<1x1x12x8xbf16, #tpu.memory_space<vmem>>, %arg7: memref<3x12x8xf32, #tpu.memory_space<vmem>>, %arg8: memref<3x12x8xf32, #tpu.memory_space<vmem>>, %arg9: memref<1x1x12x8xbf16, #tpu.memory_space<vmem>>, %arg10: memref<12x1xf32, #tpu.memory_space<vmem>>, %arg11: memref<12x1xf32, #tpu.memory_space<vmem>>, %arg12: memref<12x8xf32, #tpu.memory_space<vmem>>, %arg13: memref<12x8xbf16, #tpu.memory_space<vmem>>) attributes {dimension_semantics = [#tpu.dimension_semantics<parallel>, #tpu.dimension_semantics<parallel>, #tpu.dimension_semantics<parallel>, #tpu.dimension_semantics<arbitrary>], iteration_bounds = array<i64: 2, 4, 1, 1>, scalar_prefetch = 0 : i64, scratch_operands = 4 : i64, tpu.core_type = #tpu.core_type<tc>, window_params = [{transform_indices = @transform_0, window_bounds = array<i64: 1, 1, 12, 8>}, {transform_indices = @transform_1, window_bounds = array<i64: 1, 1, 12, 8>}, {transform_indices = @transform_2, window_bounds = array<i64: 1, 1, 12, 8>}, {transform_indices = @transform_3, window_bounds = array<i64: 3, 12, 8>}, {transform_indices = @transform_4, window_bounds = array<i64: 3, 12, 8>}, {transform_indices = @transform_5, window_bounds = array<i64: 1, 1, 12, 8>}]} {
    %c0_i32 = arith.constant 0 : i32
    %0 = arith.cmpi eq, %arg3, %c0_i32 : i32
    %1 = arith.extui %0 : i1 to i32
    %c0_i32_0 = arith.constant 0 : i32
    %2 = arith.cmpi ne, %1, %c0_i32_0 : i32
    scf.if %2 {
      %cst_37 = arith.constant 0xFF800000 : f32
      %60 = vector.broadcast %cst_37 : f32 to vector<12x1xf32>
      %c0_38 = arith.constant 0 : index
      %c0_39 = arith.constant 0 : index
      %61 = vector.load %arg10[%c0_38, %c0_39] : memref<12x1xf32, #tpu.memory_space<vmem>>, vector<12x1xf32>
      tpu.vector_store %arg10[%c0_38, %c0_39], %60 {strides = array<i32>} : memref<12x1xf32, #tpu.memory_space<vmem>>, vector<12x1xf32>,
      %cst_40 = arith.constant 0.000000e+00 : f32
      %62 = vector.broadcast %cst_40 : f32 to vector<12x1xf32>
      %c0_41 = arith.constant 0 : index
      %c0_42 = arith.constant 0 : index
      %63 = vector.load %arg11[%c0_41, %c0_42] : memref<12x1xf32, #tpu.memory_space<vmem>>, vector<12x1xf32>
      tpu.vector_store %arg11[%c0_41, %c0_42], %62 {strides = array<i32>} : memref<12x1xf32, #tpu.memory_space<vmem>>, vector<12x1xf32>,
      %cst_43 = arith.constant 0.000000e+00 : f32
      %64 = vector.broadcast %cst_43 : f32 to vector<12x8xf32>
      %c0_44 = arith.constant 0 : index
      %c0_45 = arith.constant 0 : index
      %65 = vector.load %arg12[%c0_44, %c0_45] : memref<12x8xf32, #tpu.memory_space<vmem>>, vector<12x8xf32>
      tpu.vector_store %arg12[%c0_44, %c0_45], %64 {strides = array<i32>} : memref<12x8xf32, #tpu.memory_space<vmem>>, vector<12x8xf32>,
      %c0_46 = arith.constant 0 : index
      %c0_47 = arith.constant 0 : index
      %c0_48 = arith.constant 0 : index
      %c0_49 = arith.constant 0 : index
      %66 = vector.load %arg4[%c0_46, %c0_47, %c0_48, %c0_49] : memref<1x1x12x8xbf16, #tpu.memory_space<vmem>>, vector<1x1x12x8xbf16>
      %67 = vector.shape_cast %66 : vector<1x1x12x8xbf16> to vector<12x8xbf16>
      %68 = arith.extf %67 : vector<12x8xbf16> to vector<12x8xf32>
      %c0_50 = arith.constant 0 : index
      %c0_51 = arith.constant 0 : index
      %c0_52 = arith.constant 0 : index
      %69 = vector.load %arg7[%c0_50, %c0_51, %c0_52] : memref<3x12x8xf32, #tpu.memory_space<vmem>>, vector<1x12x8xf32>
      %70 = vector.shape_cast %69 : vector<1x12x8xf32> to vector<12x8xf32>
      %c1_53 = arith.constant 1 : index
      %c0_54 = arith.constant 0 : index
      %c0_55 = arith.constant 0 : index
      %71 = vector.load %arg7[%c1_53, %c0_54, %c0_55] : memref<3x12x8xf32, #tpu.memory_space<vmem>>, vector<1x12x8xf32>
      %72 = vector.shape_cast %71 : vector<1x12x8xf32> to vector<12x8xf32>
      %c2_56 = arith.constant 2 : index
      %c0_57 = arith.constant 0 : index
      %c0_58 = arith.constant 0 : index
      %73 = vector.load %arg7[%c2_56, %c0_57, %c0_58] : memref<3x12x8xf32, #tpu.memory_space<vmem>>, vector<1x12x8xf32>
      %74 = vector.shape_cast %73 : vector<1x12x8xf32> to vector<12x8xf32>
      %75 = arith.mulf %68, %68 : vector<12x8xf32>
      %cst_59 = arith.constant dense<0.000000e+00> : vector<12xf32>
      %76 = vector.multi_reduction <add>, %75, %cst_59 [1] : vector<12x8xf32> to vector<12xf32>
      %77 = vector.shape_cast %76 : vector<12xf32> to vector<12x1xf32>
      %cst_60 = arith.constant 8.000000e+00 : f32
      %78 = vector.broadcast %cst_60 : f32 to vector<12x1xf32>
      %79 = arith.divf %77, %78 : vector<12x1xf32>
      %cst_61 = arith.constant 9.99999997E-7 : f32
      %80 = vector.broadcast %cst_61 : f32 to vector<12x1xf32>
      %81 = arith.addf %79, %80 : vector<12x1xf32>
      %82 = math.rsqrt %81 : vector<12x1xf32>
      %83 = vector.broadcast %82 : vector<12x1xf32> to vector<12x8xf32>
      %84 = arith.mulf %68, %83 : vector<12x8xf32>
      %85 = arith.mulf %84, %70 : vector<12x8xf32>
      %86 = arith.mulf %72, %85 : vector<12x8xf32>
      %87 = vector.extract_strided_slice %85 {offsets = [0, 4], sizes = [12, 4], strides = [1, 1]} : vector<12x8xf32> to vector<12x4xf32>
      %88 = vector.extract_strided_slice %85 {offsets = [0, 0], sizes = [12, 4], strides = [1, 1]} : vector<12x8xf32> to vector<12x4xf32>
      %89 = tpu.concatenate %87, %88 in 1 : vector<12x4xf32>, vector<12x4xf32> -> vector<12x8xf32>
      %90 = arith.mulf %74, %89 : vector<12x8xf32>
      %91 = arith.addf %86, %90 : vector<12x8xf32>
      %92 = arith.truncf %91 : vector<12x8xf32> to vector<12x8xbf16>
      %c0_62 = arith.constant 0 : index
      %c0_63 = arith.constant 0 : index
      %93 = vector.load %arg13[%c0_62, %c0_63] : memref<12x8xbf16, #tpu.memory_space<vmem>>, vector<12x8xbf16>
      tpu.vector_store %arg13[%c0_62, %c0_63], %92 {strides = array<i32>} : memref<12x8xbf16, #tpu.memory_space<vmem>>, vector<12x8xbf16>,
    } else {
    }
    %c0 = arith.constant 0 : index
    %c0_1 = arith.constant 0 : index
    %c0_2 = arith.constant 0 : index
    %c0_3 = arith.constant 0 : index
    %3 = vector.load %arg5[%c0, %c0_1, %c0_2, %c0_3] : memref<1x1x12x8xbf16, #tpu.memory_space<vmem>>, vector<1x1x12x8xbf16>
    %4 = vector.shape_cast %3 : vector<1x1x12x8xbf16> to vector<12x8xbf16>
    %5 = arith.extf %4 : vector<12x8xbf16> to vector<12x8xf32>
    %c0_4 = arith.constant 0 : index
    %c0_5 = arith.constant 0 : index
    %c0_6 = arith.constant 0 : index
    %6 = vector.load %arg8[%c0_4, %c0_5, %c0_6] : memref<3x12x8xf32, #tpu.memory_space<vmem>>, vector<1x12x8xf32>
    %7 = vector.shape_cast %6 : vector<1x12x8xf32> to vector<12x8xf32>
    %c1 = arith.constant 1 : index
    %c0_7 = arith.constant 0 : index
    %c0_8 = arith.constant 0 : index
    %8 = vector.load %arg8[%c1, %c0_7, %c0_8] : memref<3x12x8xf32, #tpu.memory_space<vmem>>, vector<1x12x8xf32>
    %9 = vector.shape_cast %8 : vector<1x12x8xf32> to vector<12x8xf32>
    %c2 = arith.constant 2 : index
    %c0_9 = arith.constant 0 : index
    %c0_10 = arith.constant 0 : index
    %10 = vector.load %arg8[%c2, %c0_9, %c0_10] : memref<3x12x8xf32, #tpu.memory_space<vmem>>, vector<1x12x8xf32>
    %11 = vector.shape_cast %10 : vector<1x12x8xf32> to vector<12x8xf32>
    %12 = arith.mulf %5, %5 : vector<12x8xf32>
    %cst = arith.constant dense<0.000000e+00> : vector<12xf32>
    %13 = vector.multi_reduction <add>, %12, %cst [1] : vector<12x8xf32> to vector<12xf32>
    %14 = vector.shape_cast %13 : vector<12xf32> to vector<12x1xf32>
    %cst_11 = arith.constant 8.000000e+00 : f32
    %15 = vector.broadcast %cst_11 : f32 to vector<12x1xf32>
    %16 = arith.divf %14, %15 : vector<12x1xf32>
    %cst_12 = arith.constant 9.99999997E-7 : f32
    %17 = vector.broadcast %cst_12 : f32 to vector<12x1xf32>
    %18 = arith.addf %16, %17 : vector<12x1xf32>
    %19 = math.rsqrt %18 : vector<12x1xf32>
    %20 = vector.broadcast %19 : vector<12x1xf32> to vector<12x8xf32>
    %21 = arith.mulf %5, %20 : vector<12x8xf32>
    %22 = arith.mulf %21, %7 : vector<12x8xf32>
    %23 = arith.mulf %9, %22 : vector<12x8xf32>
    %24 = vector.extract_strided_slice %22 {offsets = [0, 4], sizes = [12, 4], strides = [1, 1]} : vector<12x8xf32> to vector<12x4xf32>
    %25 = vector.extract_strided_slice %22 {offsets = [0, 0], sizes = [12, 4], strides = [1, 1]} : vector<12x8xf32> to vector<12x4xf32>
    %26 = tpu.concatenate %24, %25 in 1 : vector<12x4xf32>, vector<12x4xf32> -> vector<12x8xf32>
    %27 = arith.mulf %11, %26 : vector<12x8xf32>
    %28 = arith.addf %23, %27 : vector<12x8xf32>
    %c0_13 = arith.constant 0 : index
    %c0_14 = arith.constant 0 : index
    %29 = vector.load %arg13[%c0_13, %c0_14] : memref<12x8xbf16, #tpu.memory_space<vmem>>, vector<12x8xbf16>
    %30 = arith.truncf %28 : vector<12x8xf32> to vector<12x8xbf16>
    %cst_15 = arith.constant dense<0.000000e+00> : vector<12x12xf32>
    %31 = tpu.matmul %29, %30, %cst_15 {dimension_numbers = #tpu.dot_dimension_numbers<[1], [1], [0], [0], [0, 0, 1, 0], [], []>} : vector<12x8xbf16>, vector<12x8xbf16>, vector<12x12xf32> -> vector<12x12xf32>
    %c0_16 = arith.constant 0 : index
    %c0_17 = arith.constant 0 : index
    %32 = vector.load %arg10[%c0_16, %c0_17] : memref<12x1xf32, #tpu.memory_space<vmem>>, vector<12x1xf32>
    %cst_18 = arith.constant dense<0xFF800000> : vector<12xf32>
    %33 = vector.multi_reduction <maximumf>, %31, %cst_18 [1] : vector<12x12xf32> to vector<12xf32>
    %34 = vector.shape_cast %33 : vector<12xf32> to vector<12x1xf32>
    %35 = arith.maximumf %32, %34 : vector<12x1xf32>
    %36 = arith.subf %32, %35 : vector<12x1xf32>
    %37 = math.exp %36 : vector<12x1xf32>
    %38 = vector.broadcast %35 : vector<12x1xf32> to vector<12x12xf32>
    %39 = arith.subf %31, %38 : vector<12x12xf32>
    %40 = math.exp %39 : vector<12x12xf32>
    %c0_19 = arith.constant 0 : index
    %c0_20 = arith.constant 0 : index
    %41 = vector.load %arg11[%c0_19, %c0_20] : memref<12x1xf32, #tpu.memory_space<vmem>>, vector<12x1xf32>
    %42 = arith.mulf %37, %41 : vector<12x1xf32>
    %cst_21 = arith.constant dense<0.000000e+00> : vector<12xf32>
    %43 = vector.multi_reduction <add>, %40, %cst_21 [1] : vector<12x12xf32> to vector<12xf32>
    %44 = vector.shape_cast %43 : vector<12xf32> to vector<12x1xf32>
    %45 = arith.addf %42, %44 : vector<12x1xf32>
    %c0_22 = arith.constant 0 : index
    %c0_23 = arith.constant 0 : index
    %46 = vector.load %arg11[%c0_22, %c0_23] : memref<12x1xf32, #tpu.memory_space<vmem>>, vector<12x1xf32>
    tpu.vector_store %arg11[%c0_22, %c0_23], %45 {strides = array<i32>} : memref<12x1xf32, #tpu.memory_space<vmem>>, vector<12x1xf32>,
    %c0_24 = arith.constant 0 : index
    %c0_25 = arith.constant 0 : index
    %47 = vector.load %arg12[%c0_24, %c0_25] : memref<12x8xf32, #tpu.memory_space<vmem>>, vector<12x8xf32>
    %48 = vector.broadcast %37 : vector<12x1xf32> to vector<12x8xf32>
    %49 = arith.mulf %48, %47 : vector<12x8xf32>
    %50 = arith.truncf %40 : vector<12x12xf32> to vector<12x12xbf16>
    %c0_26 = arith.constant 0 : index
    %c0_27 = arith.constant 0 : index
    %c0_28 = arith.constant 0 : index
    %c0_29 = arith.constant 0 : index
    %51 = vector.load %arg6[%c0_26, %c0_27, %c0_28, %c0_29] : memref<1x1x12x8xbf16, #tpu.memory_space<vmem>>, vector<1x1x12x8xbf16>
    %52 = vector.shape_cast %51 : vector<1x1x12x8xbf16> to vector<12x8xbf16>
    %cst_30 = arith.constant dense<0.000000e+00> : vector<12x8xf32>
    %53 = tpu.matmul %50, %52, %cst_30 {dimension_numbers = #tpu.dot_dimension_numbers<[1], [0], [0], [1], [0, 0, 1, 1], [], []>} : vector<12x12xbf16>, vector<12x8xbf16>, vector<12x8xf32> -> vector<12x8xf32>
    %54 = arith.addf %49, %53 : vector<12x8xf32>
    %c0_31 = arith.constant 0 : index
    %c0_32 = arith.constant 0 : index
    %55 = vector.load %arg12[%c0_31, %c0_32] : memref<12x8xf32, #tpu.memory_space<vmem>>, vector<12x8xf32>
    tpu.vector_store %arg12[%c0_31, %c0_32], %54 {strides = array<i32>} : memref<12x8xf32, #tpu.memory_space<vmem>>, vector<12x8xf32>,
    %c0_33 = arith.constant 0 : index
    %c0_34 = arith.constant 0 : index
    %56 = vector.load %arg10[%c0_33, %c0_34] : memref<12x1xf32, #tpu.memory_space<vmem>>, vector<12x1xf32>
    tpu.vector_store %arg10[%c0_33, %c0_34], %35 {strides = array<i32>} : memref<12x1xf32, #tpu.memory_space<vmem>>, vector<12x1xf32>,
    %c0_i32_35 = arith.constant 0 : i32
    %57 = arith.cmpi eq, %arg3, %c0_i32_35 : i32
    %58 = arith.extui %57 : i1 to i32
    %c0_i32_36 = arith.constant 0 : i32
    %59 = arith.cmpi ne, %58, %c0_i32_36 : i32
    scf.if %59 {
      %c0_37 = arith.constant 0 : index
      %c0_38 = arith.constant 0 : index
      %60 = vector.load %arg11[%c0_37, %c0_38] : memref<12x1xf32, #tpu.memory_space<vmem>>, vector<12x1xf32>
      %61 = tpu.reciprocal %60 {approx = true} : vector<12x1xf32> -> vector<12x1xf32>
      %c0_39 = arith.constant 0 : index
      %c0_40 = arith.constant 0 : index
      %62 = vector.load %arg12[%c0_39, %c0_40] : memref<12x8xf32, #tpu.memory_space<vmem>>, vector<12x8xf32>
      %63 = vector.broadcast %61 : vector<12x1xf32> to vector<12x8xf32>
      %64 = arith.mulf %62, %63 : vector<12x8xf32>
      %65 = arith.truncf %64 : vector<12x8xf32> to vector<12x8xbf16>
      %c0_41 = arith.constant 0 : index
      %c0_42 = arith.constant 0 : index
      %c0_43 = arith.constant 0 : index
      %c0_44 = arith.constant 0 : index
      %66 = vector.load %arg9[%c0_41, %c0_42, %c0_43, %c0_44] : memref<1x1x12x8xbf16, #tpu.memory_space<vmem>>, vector<1x1x12x8xbf16>
      %67 = vector.shape_cast %66 : vector<1x1x12x8xbf16> to vector<12x8xbf16>
      %68 = vector.shape_cast %65 : vector<12x8xbf16> to vector<1x1x12x8xbf16>
      tpu.vector_store %arg9[%c0_41, %c0_42, %c0_43, %c0_44], %68 {strides = array<i32>} : memref<1x1x12x8xbf16, #tpu.memory_space<vmem>>, vector<1x1x12x8xbf16>,
    } else {
    }
    return
  }
  func.func @transform_0(%arg0: i32, %arg1: i32, %arg2: i32, %arg3: i32) -> (i32, i32, i32, i32) {
    %c0_i32 = arith.constant 0 : i32
    %c0_i32_0 = arith.constant 0 : i32
    return %arg0, %arg1, %arg2, %c0_i32 : i32, i32, i32, i32
  }
  func.func @transform_1(%arg0: i32, %arg1: i32, %arg2: i32, %arg3: i32) -> (i32, i32, i32, i32) {
    %c0_i32 = arith.constant 0 : i32
    %c0_i32_0 = arith.constant 0 : i32
    return %arg0, %arg1, %arg3, %c0_i32 : i32, i32, i32, i32
  }
  func.func @transform_2(%arg0: i32, %arg1: i32, %arg2: i32, %arg3: i32) -> (i32, i32, i32, i32) {
    %c0_i32 = arith.constant 0 : i32
    %c0_i32_0 = arith.constant 0 : i32
    return %arg0, %arg1, %arg3, %c0_i32 : i32, i32, i32, i32
  }
  func.func @transform_3(%arg0: i32, %arg1: i32, %arg2: i32, %arg3: i32) -> (i32, i32, i32) {
    %c0_i32 = arith.constant 0 : i32
    %c0_i32_0 = arith.constant 0 : i32
    %c0_i32_1 = arith.constant 0 : i32
    return %c0_i32, %arg2, %c0_i32_0 : i32, i32, i32
  }
  func.func @transform_4(%arg0: i32, %arg1: i32, %arg2: i32, %arg3: i32) -> (i32, i32, i32) {
    %c0_i32 = arith.constant 0 : i32
    %c0_i32_0 = arith.constant 0 : i32
    %c0_i32_1 = arith.constant 0 : i32
    return %c0_i32, %arg3, %c0_i32_0 : i32, i32, i32
  }
  func.func @transform_5(%arg0: i32, %arg1: i32, %arg2: i32, %arg3: i32) -> (i32, i32, i32, i32) {
    %c0_i32 = arith.constant 0 : i32
    %c0_i32_0 = arith.constant 0 : i32
    return %arg0, %arg1, %arg2, %c0_i32 : i32, i32, i32, i32
  }
}

module attributes {stable_mosaic.version = 11 : i64} {
  func.func @_linear_residual_kernel(%arg0: i32, %arg1: i32, %arg2: i32, %arg3: i32, %arg4: memref<1x4x32xbf16, #tpu.memory_space<vmem>>, %arg5: memref<32x32xbf16, #tpu.memory_space<vmem>>, %arg6: memref<1x32xf32, #tpu.memory_space<vmem>>, %arg7: memref<1x1x32xf32, #tpu.memory_space<vmem>>, %arg8: memref<1x4x32xf32, #tpu.memory_space<vmem>>, %arg9: memref<1x4x32xf32, #tpu.memory_space<vmem>>, %arg10: memref<4x32xf32, #tpu.memory_space<vmem>>) attributes {dimension_semantics = [#tpu.dimension_semantics<parallel>, #tpu.dimension_semantics<parallel>, #tpu.dimension_semantics<parallel>, #tpu.dimension_semantics<arbitrary>], iteration_bounds = array<i64: 2, 1, 1, 1>, scalar_prefetch = 0 : i64, scratch_operands = 1 : i64, tpu.core_type = #tpu.core_type<tc>, window_params = [{transform_indices = @transform_0, window_bounds = array<i64: 1, 4, 32>}, {transform_indices = @transform_1, window_bounds = array<i64: 32, 32>}, {transform_indices = @transform_2, window_bounds = array<i64: 1, 32>}, {transform_indices = @transform_3, window_bounds = array<i64: 1, 1, 32>}, {transform_indices = @transform_4, window_bounds = array<i64: 1, 4, 32>}, {transform_indices = @transform_5, window_bounds = array<i64: 1, 4, 32>}]} {
    %c0_i32 = arith.constant 0 : i32
    %0 = arith.cmpi eq, %arg3, %c0_i32 : i32
    %1 = arith.extui %0 : i1 to i32
    %c0_i32_0 = arith.constant 0 : i32
    %2 = arith.cmpi ne, %1, %c0_i32_0 : i32
    scf.if %2 {
      %cst_11 = arith.constant 0.000000e+00 : f32
      %13 = vector.broadcast %cst_11 : f32 to vector<4x32xf32>
      %c0_12 = arith.constant 0 : index
      %c0_13 = arith.constant 0 : index
      %14 = vector.load %arg10[%c0_12, %c0_13] : memref<4x32xf32, #tpu.memory_space<vmem>>, vector<4x32xf32>
      tpu.vector_store %arg10[%c0_12, %c0_13], %13 {strides = array<i32>} : memref<4x32xf32, #tpu.memory_space<vmem>>, vector<4x32xf32>,
    } else {
    }
    %c0 = arith.constant 0 : index
    %c0_1 = arith.constant 0 : index
    %3 = vector.load %arg10[%c0, %c0_1] : memref<4x32xf32, #tpu.memory_space<vmem>>, vector<4x32xf32>
    %c0_2 = arith.constant 0 : index
    %c0_3 = arith.constant 0 : index
    %c0_4 = arith.constant 0 : index
    %4 = vector.load %arg4[%c0_2, %c0_3, %c0_4] : memref<1x4x32xbf16, #tpu.memory_space<vmem>>, vector<1x4x32xbf16>
    %5 = vector.shape_cast %4 : vector<1x4x32xbf16> to vector<4x32xbf16>
    %c0_5 = arith.constant 0 : index
    %c0_6 = arith.constant 0 : index
    %6 = vector.load %arg5[%c0_5, %c0_6] : memref<32x32xbf16, #tpu.memory_space<vmem>>, vector<32x32xbf16>
    %cst = arith.constant dense<0.000000e+00> : vector<4x32xf32>
    %7 = tpu.matmul %5, %6, %cst {dimension_numbers = #tpu.dot_dimension_numbers<[1], [0], [0], [1], [0, 0, 1, 1], [], []>} : vector<4x32xbf16>, vector<32x32xbf16>, vector<4x32xf32> -> vector<4x32xf32>
    %8 = arith.addf %3, %7 : vector<4x32xf32>
    %c0_7 = arith.constant 0 : index
    %c0_8 = arith.constant 0 : index
    %9 = vector.load %arg10[%c0_7, %c0_8] : memref<4x32xf32, #tpu.memory_space<vmem>>, vector<4x32xf32>
    tpu.vector_store %arg10[%c0_7, %c0_8], %8 {strides = array<i32>} : memref<4x32xf32, #tpu.memory_space<vmem>>, vector<4x32xf32>,
    %c0_i32_9 = arith.constant 0 : i32
    %10 = arith.cmpi eq, %arg3, %c0_i32_9 : i32
    %11 = arith.extui %10 : i1 to i32
    %c0_i32_10 = arith.constant 0 : i32
    %12 = arith.cmpi ne, %11, %c0_i32_10 : i32
    scf.if %12 {
      %c0_11 = arith.constant 0 : index
      %c0_12 = arith.constant 0 : index
      %13 = vector.load %arg10[%c0_11, %c0_12] : memref<4x32xf32, #tpu.memory_space<vmem>>, vector<4x32xf32>
      %c0_13 = arith.constant 0 : index
      %c0_14 = arith.constant 0 : index
      %14 = vector.load %arg6[%c0_13, %c0_14] : memref<1x32xf32, #tpu.memory_space<vmem>>, vector<1x32xf32>
      %15 = vector.broadcast %14 : vector<1x32xf32> to vector<4x32xf32>
      %16 = arith.addf %13, %15 : vector<4x32xf32>
      %c0_15 = arith.constant 0 : index
      %c0_16 = arith.constant 0 : index
      %c0_17 = arith.constant 0 : index
      %17 = vector.load %arg8[%c0_15, %c0_16, %c0_17] : memref<1x4x32xf32, #tpu.memory_space<vmem>>, vector<1x4x32xf32>
      %18 = vector.shape_cast %17 : vector<1x4x32xf32> to vector<4x32xf32>
      %c0_18 = arith.constant 0 : index
      %c0_19 = arith.constant 0 : index
      %c0_20 = arith.constant 0 : index
      %19 = vector.load %arg7[%c0_18, %c0_19, %c0_20] : memref<1x1x32xf32, #tpu.memory_space<vmem>>, vector<1x1x32xf32>
      %20 = vector.shape_cast %19 : vector<1x1x32xf32> to vector<1x32xf32>
      %21 = vector.broadcast %20 : vector<1x32xf32> to vector<4x32xf32>
      %22 = arith.mulf %21, %16 : vector<4x32xf32>
      %23 = arith.addf %18, %22 : vector<4x32xf32>
      %c0_21 = arith.constant 0 : index
      %c0_22 = arith.constant 0 : index
      %c0_23 = arith.constant 0 : index
      %24 = vector.load %arg9[%c0_21, %c0_22, %c0_23] : memref<1x4x32xf32, #tpu.memory_space<vmem>>, vector<1x4x32xf32>
      %25 = vector.shape_cast %24 : vector<1x4x32xf32> to vector<4x32xf32>
      %26 = vector.shape_cast %23 : vector<4x32xf32> to vector<1x4x32xf32>
      tpu.vector_store %arg9[%c0_21, %c0_22, %c0_23], %26 {strides = array<i32>} : memref<1x4x32xf32, #tpu.memory_space<vmem>>, vector<1x4x32xf32>,
    } else {
    }
    return
  }
  func.func @transform_0(%arg0: i32, %arg1: i32, %arg2: i32, %arg3: i32) -> (i32, i32, i32) {
    %c0_i32 = arith.constant 0 : i32
    return %arg0, %arg1, %arg3 : i32, i32, i32
  }
  func.func @transform_1(%arg0: i32, %arg1: i32, %arg2: i32, %arg3: i32) -> (i32, i32) {
    %c0_i32 = arith.constant 0 : i32
    return %arg3, %arg2 : i32, i32
  }
  func.func @transform_2(%arg0: i32, %arg1: i32, %arg2: i32, %arg3: i32) -> (i32, i32) {
    %c0_i32 = arith.constant 0 : i32
    %c0_i32_0 = arith.constant 0 : i32
    return %c0_i32, %arg2 : i32, i32
  }
  func.func @transform_3(%arg0: i32, %arg1: i32, %arg2: i32, %arg3: i32) -> (i32, i32, i32) {
    %c0_i32 = arith.constant 0 : i32
    %c0_i32_0 = arith.constant 0 : i32
    return %arg0, %c0_i32, %arg2 : i32, i32, i32
  }
  func.func @transform_4(%arg0: i32, %arg1: i32, %arg2: i32, %arg3: i32) -> (i32, i32, i32) {
    %c0_i32 = arith.constant 0 : i32
    return %arg0, %arg1, %arg2 : i32, i32, i32
  }
  func.func @transform_5(%arg0: i32, %arg1: i32, %arg2: i32, %arg3: i32) -> (i32, i32, i32) {
    %c0_i32 = arith.constant 0 : i32
    return %arg0, %arg1, %arg2 : i32, i32, i32
  }
}

module attributes {stable_mosaic.version = 11 : i64} {
  func.func @_ln_mod_linear_kernel(%arg0: i32, %arg1: i32, %arg2: i32, %arg3: memref<1x4x32xf32, #tpu.memory_space<vmem>>, %arg4: memref<1x1x32xf32, #tpu.memory_space<vmem>>, %arg5: memref<1x1x32xf32, #tpu.memory_space<vmem>>, %arg6: memref<32x128xbf16, #tpu.memory_space<vmem>>, %arg7: memref<1x128xf32, #tpu.memory_space<vmem>>, %arg8: memref<1x4x128xbf16, #tpu.memory_space<vmem>>) attributes {dimension_semantics = [#tpu.dimension_semantics<parallel>, #tpu.dimension_semantics<parallel>, #tpu.dimension_semantics<parallel>], iteration_bounds = array<i64: 2, 1, 1>, scalar_prefetch = 0 : i64, scratch_operands = 0 : i64, tpu.core_type = #tpu.core_type<tc>, window_params = [{transform_indices = @transform_0, window_bounds = array<i64: 1, 4, 32>}, {transform_indices = @transform_1, window_bounds = array<i64: 1, 1, 32>}, {transform_indices = @transform_2, window_bounds = array<i64: 1, 1, 32>}, {transform_indices = @transform_3, window_bounds = array<i64: 32, 128>}, {transform_indices = @transform_4, window_bounds = array<i64: 1, 128>}, {transform_indices = @transform_5, window_bounds = array<i64: 1, 4, 128>}]} {
    %c0 = arith.constant 0 : index
    %c0_0 = arith.constant 0 : index
    %c0_1 = arith.constant 0 : index
    %0 = vector.load %arg3[%c0, %c0_0, %c0_1] : memref<1x4x32xf32, #tpu.memory_space<vmem>>, vector<1x4x32xf32>
    %1 = vector.shape_cast %0 : vector<1x4x32xf32> to vector<4x32xf32>
    %cst = arith.constant dense<0.000000e+00> : vector<4xf32>
    %2 = vector.multi_reduction <add>, %1, %cst [1] : vector<4x32xf32> to vector<4xf32>
    %3 = vector.shape_cast %2 : vector<4xf32> to vector<4x1xf32>
    %cst_2 = arith.constant 3.200000e+01 : f32
    %4 = vector.broadcast %cst_2 : f32 to vector<4x1xf32>
    %5 = arith.divf %3, %4 : vector<4x1xf32>
    %6 = vector.broadcast %5 : vector<4x1xf32> to vector<4x32xf32>
    %7 = arith.subf %1, %6 : vector<4x32xf32>
    %8 = arith.mulf %7, %7 : vector<4x32xf32>
    %cst_3 = arith.constant dense<0.000000e+00> : vector<4xf32>
    %9 = vector.multi_reduction <add>, %8, %cst_3 [1] : vector<4x32xf32> to vector<4xf32>
    %10 = vector.shape_cast %9 : vector<4xf32> to vector<4x1xf32>
    %cst_4 = arith.constant 3.200000e+01 : f32
    %11 = vector.broadcast %cst_4 : f32 to vector<4x1xf32>
    %12 = arith.divf %10, %11 : vector<4x1xf32>
    %cst_5 = arith.constant 9.99999997E-7 : f32
    %13 = vector.broadcast %cst_5 : f32 to vector<4x1xf32>
    %14 = arith.addf %12, %13 : vector<4x1xf32>
    %15 = math.rsqrt %14 : vector<4x1xf32>
    %16 = vector.broadcast %15 : vector<4x1xf32> to vector<4x32xf32>
    %17 = arith.mulf %7, %16 : vector<4x32xf32>
    %c0_6 = arith.constant 0 : index
    %c0_7 = arith.constant 0 : index
    %c0_8 = arith.constant 0 : index
    %18 = vector.load %arg4[%c0_6, %c0_7, %c0_8] : memref<1x1x32xf32, #tpu.memory_space<vmem>>, vector<1x1x32xf32>
    %19 = vector.shape_cast %18 : vector<1x1x32xf32> to vector<1x32xf32>
    %cst_9 = arith.constant 1.000000e+00 : f32
    %20 = vector.broadcast %cst_9 : f32 to vector<1x32xf32>
    %21 = arith.addf %20, %19 : vector<1x32xf32>
    %22 = vector.broadcast %21 : vector<1x32xf32> to vector<4x32xf32>
    %23 = arith.mulf %22, %17 : vector<4x32xf32>
    %c0_10 = arith.constant 0 : index
    %c0_11 = arith.constant 0 : index
    %c0_12 = arith.constant 0 : index
    %24 = vector.load %arg5[%c0_10, %c0_11, %c0_12] : memref<1x1x32xf32, #tpu.memory_space<vmem>>, vector<1x1x32xf32>
    %25 = vector.shape_cast %24 : vector<1x1x32xf32> to vector<1x32xf32>
    %26 = vector.broadcast %25 : vector<1x32xf32> to vector<4x32xf32>
    %27 = arith.addf %23, %26 : vector<4x32xf32>
    %28 = arith.truncf %27 : vector<4x32xf32> to vector<4x32xbf16>
    %c0_13 = arith.constant 0 : index
    %c0_14 = arith.constant 0 : index
    %29 = vector.load %arg6[%c0_13, %c0_14] : memref<32x128xbf16, #tpu.memory_space<vmem>>, vector<32x128xbf16>
    %cst_15 = arith.constant dense<0.000000e+00> : vector<4x128xf32>
    %30 = tpu.matmul %28, %29, %cst_15 {dimension_numbers = #tpu.dot_dimension_numbers<[1], [0], [0], [1], [0, 0, 1, 1], [], []>} : vector<4x32xbf16>, vector<32x128xbf16>, vector<4x128xf32> -> vector<4x128xf32>
    %c0_16 = arith.constant 0 : index
    %c0_17 = arith.constant 0 : index
    %31 = vector.load %arg7[%c0_16, %c0_17] : memref<1x128xf32, #tpu.memory_space<vmem>>, vector<1x128xf32>
    %32 = vector.broadcast %31 : vector<1x128xf32> to vector<4x128xf32>
    %33 = arith.addf %30, %32 : vector<4x128xf32>
    %cst_18 = arith.constant 5.000000e-01 : f32
    %34 = vector.broadcast %cst_18 : f32 to vector<4x128xf32>
    %35 = arith.mulf %34, %33 : vector<4x128xf32>
    %cst_19 = arith.constant 4.471500e-02 : f32
    %36 = vector.broadcast %cst_19 : f32 to vector<4x128xf32>
    %37 = arith.mulf %36, %33 : vector<4x128xf32>
    %38 = arith.mulf %37, %33 : vector<4x128xf32>
    %39 = arith.mulf %38, %33 : vector<4x128xf32>
    %40 = arith.addf %33, %39 : vector<4x128xf32>
    %cst_20 = arith.constant 0.797884583 : f32
    %41 = vector.broadcast %cst_20 : f32 to vector<4x128xf32>
    %42 = arith.mulf %41, %40 : vector<4x128xf32>
    %43 = math.tanh %42 : vector<4x128xf32>
    %cst_21 = arith.constant 1.000000e+00 : f32
    %44 = vector.broadcast %cst_21 : f32 to vector<4x128xf32>
    %45 = arith.addf %44, %43 : vector<4x128xf32>
    %46 = arith.mulf %35, %45 : vector<4x128xf32>
    %47 = arith.truncf %46 : vector<4x128xf32> to vector<4x128xbf16>
    %c0_22 = arith.constant 0 : index
    %c0_23 = arith.constant 0 : index
    %c0_24 = arith.constant 0 : index
    %48 = vector.load %arg8[%c0_22, %c0_23, %c0_24] : memref<1x4x128xbf16, #tpu.memory_space<vmem>>, vector<1x4x128xbf16>
    %49 = vector.shape_cast %48 : vector<1x4x128xbf16> to vector<4x128xbf16>
    %50 = vector.shape_cast %47 : vector<4x128xbf16> to vector<1x4x128xbf16>
    tpu.vector_store %arg8[%c0_22, %c0_23, %c0_24], %50 {strides = array<i32>} : memref<1x4x128xbf16, #tpu.memory_space<vmem>>, vector<1x4x128xbf16>,
    return
  }
  func.func @transform_0(%arg0: i32, %arg1: i32, %arg2: i32) -> (i32, i32, i32) {
    %c0_i32 = arith.constant 0 : i32
    %c0_i32_0 = arith.constant 0 : i32
    return %arg0, %arg1, %c0_i32 : i32, i32, i32
  }
  func.func @transform_1(%arg0: i32, %arg1: i32, %arg2: i32) -> (i32, i32, i32) {
    %c0_i32 = arith.constant 0 : i32
    %c0_i32_0 = arith.constant 0 : i32
    %c0_i32_1 = arith.constant 0 : i32
    return %arg0, %c0_i32, %c0_i32_0 : i32, i32, i32
  }
  func.func @transform_2(%arg0: i32, %arg1: i32, %arg2: i32) -> (i32, i32, i32) {
    %c0_i32 = arith.constant 0 : i32
    %c0_i32_0 = arith.constant 0 : i32
    %c0_i32_1 = arith.constant 0 : i32
    return %arg0, %c0_i32, %c0_i32_0 : i32, i32, i32
  }
  func.func @transform_3(%arg0: i32, %arg1: i32, %arg2: i32) -> (i32, i32) {
    %c0_i32 = arith.constant 0 : i32
    %c0_i32_0 = arith.constant 0 : i32
    return %c0_i32, %arg2 : i32, i32
  }
  func.func @transform_4(%arg0: i32, %arg1: i32, %arg2: i32) -> (i32, i32) {
    %c0_i32 = arith.constant 0 : i32
    %c0_i32_0 = arith.constant 0 : i32
    return %c0_i32, %arg2 : i32, i32
  }
  func.func @transform_5(%arg0: i32, %arg1: i32, %arg2: i32) -> (i32, i32, i32) {
    %c0_i32 = arith.constant 0 : i32
    return %arg0, %arg1, %arg2 : i32, i32, i32
  }
}

module attributes {stable_mosaic.version = 11 : i64} {
  func.func @_linear_residual_kernel(%arg0: i32, %arg1: i32, %arg2: i32, %arg3: i32, %arg4: memref<1x4x128xbf16, #tpu.memory_space<vmem>>, %arg5: memref<128x32xbf16, #tpu.memory_space<vmem>>, %arg6: memref<1x32xf32, #tpu.memory_space<vmem>>, %arg7: memref<1x1x32xf32, #tpu.memory_space<vmem>>, %arg8: memref<1x4x32xf32, #tpu.memory_space<vmem>>, %arg9: memref<1x4x32xf32, #tpu.memory_space<vmem>>, %arg10: memref<4x32xf32, #tpu.memory_space<vmem>>) attributes {dimension_semantics = [#tpu.dimension_semantics<parallel>, #tpu.dimension_semantics<parallel>, #tpu.dimension_semantics<parallel>, #tpu.dimension_semantics<arbitrary>], iteration_bounds = array<i64: 2, 1, 1, 1>, scalar_prefetch = 0 : i64, scratch_operands = 1 : i64, tpu.core_type = #tpu.core_type<tc>, window_params = [{transform_indices = @transform_0, window_bounds = array<i64: 1, 4, 128>}, {transform_indices = @transform_1, window_bounds = array<i64: 128, 32>}, {transform_indices = @transform_2, window_bounds = array<i64: 1, 32>}, {transform_indices = @transform_3, window_bounds = array<i64: 1, 1, 32>}, {transform_indices = @transform_4, window_bounds = array<i64: 1, 4, 32>}, {transform_indices = @transform_5, window_bounds = array<i64: 1, 4, 32>}]} {
    %c0_i32 = arith.constant 0 : i32
    %0 = arith.cmpi eq, %arg3, %c0_i32 : i32
    %1 = arith.extui %0 : i1 to i32
    %c0_i32_0 = arith.constant 0 : i32
    %2 = arith.cmpi ne, %1, %c0_i32_0 : i32
    scf.if %2 {
      %cst_11 = arith.constant 0.000000e+00 : f32
      %13 = vector.broadcast %cst_11 : f32 to vector<4x32xf32>
      %c0_12 = arith.constant 0 : index
      %c0_13 = arith.constant 0 : index
      %14 = vector.load %arg10[%c0_12, %c0_13] : memref<4x32xf32, #tpu.memory_space<vmem>>, vector<4x32xf32>
      tpu.vector_store %arg10[%c0_12, %c0_13], %13 {strides = array<i32>} : memref<4x32xf32, #tpu.memory_space<vmem>>, vector<4x32xf32>,
    } else {
    }
    %c0 = arith.constant 0 : index
    %c0_1 = arith.constant 0 : index
    %3 = vector.load %arg10[%c0, %c0_1] : memref<4x32xf32, #tpu.memory_space<vmem>>, vector<4x32xf32>
    %c0_2 = arith.constant 0 : index
    %c0_3 = arith.constant 0 : index
    %c0_4 = arith.constant 0 : index
    %4 = vector.load %arg4[%c0_2, %c0_3, %c0_4] : memref<1x4x128xbf16, #tpu.memory_space<vmem>>, vector<1x4x128xbf16>
    %5 = vector.shape_cast %4 : vector<1x4x128xbf16> to vector<4x128xbf16>
    %c0_5 = arith.constant 0 : index
    %c0_6 = arith.constant 0 : index
    %6 = vector.load %arg5[%c0_5, %c0_6] : memref<128x32xbf16, #tpu.memory_space<vmem>>, vector<128x32xbf16>
    %cst = arith.constant dense<0.000000e+00> : vector<4x32xf32>
    %7 = tpu.matmul %5, %6, %cst {dimension_numbers = #tpu.dot_dimension_numbers<[1], [0], [0], [1], [0, 0, 1, 1], [], []>} : vector<4x128xbf16>, vector<128x32xbf16>, vector<4x32xf32> -> vector<4x32xf32>
    %8 = arith.addf %3, %7 : vector<4x32xf32>
    %c0_7 = arith.constant 0 : index
    %c0_8 = arith.constant 0 : index
    %9 = vector.load %arg10[%c0_7, %c0_8] : memref<4x32xf32, #tpu.memory_space<vmem>>, vector<4x32xf32>
    tpu.vector_store %arg10[%c0_7, %c0_8], %8 {strides = array<i32>} : memref<4x32xf32, #tpu.memory_space<vmem>>, vector<4x32xf32>,
    %c0_i32_9 = arith.constant 0 : i32
    %10 = arith.cmpi eq, %arg3, %c0_i32_9 : i32
    %11 = arith.extui %10 : i1 to i32
    %c0_i32_10 = arith.constant 0 : i32
    %12 = arith.cmpi ne, %11, %c0_i32_10 : i32
    scf.if %12 {
      %c0_11 = arith.constant 0 : index
      %c0_12 = arith.constant 0 : index
      %13 = vector.load %arg10[%c0_11, %c0_12] : memref<4x32xf32, #tpu.memory_space<vmem>>, vector<4x32xf32>
      %c0_13 = arith.constant 0 : index
      %c0_14 = arith.constant 0 : index
      %14 = vector.load %arg6[%c0_13, %c0_14] : memref<1x32xf32, #tpu.memory_space<vmem>>, vector<1x32xf32>
      %15 = vector.broadcast %14 : vector<1x32xf32> to vector<4x32xf32>
      %16 = arith.addf %13, %15 : vector<4x32xf32>
      %c0_15 = arith.constant 0 : index
      %c0_16 = arith.constant 0 : index
      %c0_17 = arith.constant 0 : index
      %17 = vector.load %arg8[%c0_15, %c0_16, %c0_17] : memref<1x4x32xf32, #tpu.memory_space<vmem>>, vector<1x4x32xf32>
      %18 = vector.shape_cast %17 : vector<1x4x32xf32> to vector<4x32xf32>
      %c0_18 = arith.constant 0 : index
      %c0_19 = arith.constant 0 : index
      %c0_20 = arith.constant 0 : index
      %19 = vector.load %arg7[%c0_18, %c0_19, %c0_20] : memref<1x1x32xf32, #tpu.memory_space<vmem>>, vector<1x1x32xf32>
      %20 = vector.shape_cast %19 : vector<1x1x32xf32> to vector<1x32xf32>
      %21 = vector.broadcast %20 : vector<1x32xf32> to vector<4x32xf32>
      %22 = arith.mulf %21, %16 : vector<4x32xf32>
      %23 = arith.addf %18, %22 : vector<4x32xf32>
      %c0_21 = arith.constant 0 : index
      %c0_22 = arith.constant 0 : index
      %c0_23 = arith.constant 0 : index
      %24 = vector.load %arg9[%c0_21, %c0_22, %c0_23] : memref<1x4x32xf32, #tpu.memory_space<vmem>>, vector<1x4x32xf32>
      %25 = vector.shape_cast %24 : vector<1x4x32xf32> to vector<4x32xf32>
      %26 = vector.shape_cast %23 : vector<4x32xf32> to vector<1x4x32xf32>
      tpu.vector_store %arg9[%c0_21, %c0_22, %c0_23], %26 {strides = array<i32>} : memref<1x4x32xf32, #tpu.memory_space<vmem>>, vector<1x4x32xf32>,
    } else {
    }
    return
  }
  func.func @transform_0(%arg0: i32, %arg1: i32, %arg2: i32, %arg3: i32) -> (i32, i32, i32) {
    %c0_i32 = arith.constant 0 : i32
    return %arg0, %arg1, %arg3 : i32, i32, i32
  }
  func.func @transform_1(%arg0: i32, %arg1: i32, %arg2: i32, %arg3: i32) -> (i32, i32) {
    %c0_i32 = arith.constant 0 : i32
    return %arg3, %arg2 : i32, i32
  }
  func.func @transform_2(%arg0: i32, %arg1: i32, %arg2: i32, %arg3: i32) -> (i32, i32) {
    %c0_i32 = arith.constant 0 : i32
    %c0_i32_0 = arith.constant 0 : i32
    return %c0_i32, %arg2 : i32, i32
  }
  func.func @transform_3(%arg0: i32, %arg1: i32, %arg2: i32, %arg3: i32) -> (i32, i32, i32) {
    %c0_i32 = arith.constant 0 : i32
    %c0_i32_0 = arith.constant 0 : i32
    return %arg0, %c0_i32, %arg2 : i32, i32, i32
  }
  func.func @transform_4(%arg0: i32, %arg1: i32, %arg2: i32, %arg3: i32) -> (i32, i32, i32) {
    %c0_i32 = arith.constant 0 : i32
    return %arg0, %arg1, %arg2 : i32, i32, i32
  }
  func.func @transform_5(%arg0: i32, %arg1: i32, %arg2: i32, %arg3: i32) -> (i32, i32, i32) {
    %c0_i32 = arith.constant 0 : i32
    return %arg0, %arg1, %arg2 : i32, i32, i32
  }
}

module attributes {stable_mosaic.version = 11 : i64} {
  func.func @_linear_residual_kernel(%arg0: i32, %arg1: i32, %arg2: i32, %arg3: i32, %arg4: memref<1x8x32xbf16, #tpu.memory_space<vmem>>, %arg5: memref<32x32xbf16, #tpu.memory_space<vmem>>, %arg6: memref<1x32xf32, #tpu.memory_space<vmem>>, %arg7: memref<1x1x32xf32, #tpu.memory_space<vmem>>, %arg8: memref<1x8x32xf32, #tpu.memory_space<vmem>>, %arg9: memref<1x8x32xf32, #tpu.memory_space<vmem>>, %arg10: memref<8x32xf32, #tpu.memory_space<vmem>>) attributes {dimension_semantics = [#tpu.dimension_semantics<parallel>, #tpu.dimension_semantics<parallel>, #tpu.dimension_semantics<parallel>, #tpu.dimension_semantics<arbitrary>], iteration_bounds = array<i64: 2, 1, 1, 1>, scalar_prefetch = 0 : i64, scratch_operands = 1 : i64, tpu.core_type = #tpu.core_type<tc>, window_params = [{transform_indices = @transform_0, window_bounds = array<i64: 1, 8, 32>}, {transform_indices = @transform_1, window_bounds = array<i64: 32, 32>}, {transform_indices = @transform_2, window_bounds = array<i64: 1, 32>}, {transform_indices = @transform_3, window_bounds = array<i64: 1, 1, 32>}, {transform_indices = @transform_4, window_bounds = array<i64: 1, 8, 32>}, {transform_indices = @transform_5, window_bounds = array<i64: 1, 8, 32>}]} {
    %c0_i32 = arith.constant 0 : i32
    %0 = arith.cmpi eq, %arg3, %c0_i32 : i32
    %1 = arith.extui %0 : i1 to i32
    %c0_i32_0 = arith.constant 0 : i32
    %2 = arith.cmpi ne, %1, %c0_i32_0 : i32
    scf.if %2 {
      %cst_11 = arith.constant 0.000000e+00 : f32
      %13 = vector.broadcast %cst_11 : f32 to vector<8x32xf32>
      %c0_12 = arith.constant 0 : index
      %c0_13 = arith.constant 0 : index
      %14 = vector.load %arg10[%c0_12, %c0_13] : memref<8x32xf32, #tpu.memory_space<vmem>>, vector<8x32xf32>
      tpu.vector_store %arg10[%c0_12, %c0_13], %13 {strides = array<i32>} : memref<8x32xf32, #tpu.memory_space<vmem>>, vector<8x32xf32>,
    } else {
    }
    %c0 = arith.constant 0 : index
    %c0_1 = arith.constant 0 : index
    %3 = vector.load %arg10[%c0, %c0_1] : memref<8x32xf32, #tpu.memory_space<vmem>>, vector<8x32xf32>
    %c0_2 = arith.constant 0 : index
    %c0_3 = arith.constant 0 : index
    %c0_4 = arith.constant 0 : index
    %4 = vector.load %arg4[%c0_2, %c0_3, %c0_4] : memref<1x8x32xbf16, #tpu.memory_space<vmem>>, vector<1x8x32xbf16>
    %5 = vector.shape_cast %4 : vector<1x8x32xbf16> to vector<8x32xbf16>
    %c0_5 = arith.constant 0 : index
    %c0_6 = arith.constant 0 : index
    %6 = vector.load %arg5[%c0_5, %c0_6] : memref<32x32xbf16, #tpu.memory_space<vmem>>, vector<32x32xbf16>
    %cst = arith.constant dense<0.000000e+00> : vector<8x32xf32>
    %7 = tpu.matmul %5, %6, %cst {dimension_numbers = #tpu.dot_dimension_numbers<[1], [0], [0], [1], [0, 0, 1, 1], [], []>} : vector<8x32xbf16>, vector<32x32xbf16>, vector<8x32xf32> -> vector<8x32xf32>
    %8 = arith.addf %3, %7 : vector<8x32xf32>
    %c0_7 = arith.constant 0 : index
    %c0_8 = arith.constant 0 : index
    %9 = vector.load %arg10[%c0_7, %c0_8] : memref<8x32xf32, #tpu.memory_space<vmem>>, vector<8x32xf32>
    tpu.vector_store %arg10[%c0_7, %c0_8], %8 {strides = array<i32>} : memref<8x32xf32, #tpu.memory_space<vmem>>, vector<8x32xf32>,
    %c0_i32_9 = arith.constant 0 : i32
    %10 = arith.cmpi eq, %arg3, %c0_i32_9 : i32
    %11 = arith.extui %10 : i1 to i32
    %c0_i32_10 = arith.constant 0 : i32
    %12 = arith.cmpi ne, %11, %c0_i32_10 : i32
    scf.if %12 {
      %c0_11 = arith.constant 0 : index
      %c0_12 = arith.constant 0 : index
      %13 = vector.load %arg10[%c0_11, %c0_12] : memref<8x32xf32, #tpu.memory_space<vmem>>, vector<8x32xf32>
      %c0_13 = arith.constant 0 : index
      %c0_14 = arith.constant 0 : index
      %14 = vector.load %arg6[%c0_13, %c0_14] : memref<1x32xf32, #tpu.memory_space<vmem>>, vector<1x32xf32>
      %15 = vector.broadcast %14 : vector<1x32xf32> to vector<8x32xf32>
      %16 = arith.addf %13, %15 : vector<8x32xf32>
      %c0_15 = arith.constant 0 : index
      %c0_16 = arith.constant 0 : index
      %c0_17 = arith.constant 0 : index
      %17 = vector.load %arg8[%c0_15, %c0_16, %c0_17] : memref<1x8x32xf32, #tpu.memory_space<vmem>>, vector<1x8x32xf32>
      %18 = vector.shape_cast %17 : vector<1x8x32xf32> to vector<8x32xf32>
      %c0_18 = arith.constant 0 : index
      %c0_19 = arith.constant 0 : index
      %c0_20 = arith.constant 0 : index
      %19 = vector.load %arg7[%c0_18, %c0_19, %c0_20] : memref<1x1x32xf32, #tpu.memory_space<vmem>>, vector<1x1x32xf32>
      %20 = vector.shape_cast %19 : vector<1x1x32xf32> to vector<1x32xf32>
      %21 = vector.broadcast %20 : vector<1x32xf32> to vector<8x32xf32>
      %22 = arith.mulf %21, %16 : vector<8x32xf32>
      %23 = arith.addf %18, %22 : vector<8x32xf32>
      %c0_21 = arith.constant 0 : index
      %c0_22 = arith.constant 0 : index
      %c0_23 = arith.constant 0 : index
      %24 = vector.load %arg9[%c0_21, %c0_22, %c0_23] : memref<1x8x32xf32, #tpu.memory_space<vmem>>, vector<1x8x32xf32>
      %25 = vector.shape_cast %24 : vector<1x8x32xf32> to vector<8x32xf32>
      %26 = vector.shape_cast %23 : vector<8x32xf32> to vector<1x8x32xf32>
      tpu.vector_store %arg9[%c0_21, %c0_22, %c0_23], %26 {strides = array<i32>} : memref<1x8x32xf32, #tpu.memory_space<vmem>>, vector<1x8x32xf32>,
    } else {
    }
    return
  }
  func.func @transform_0(%arg0: i32, %arg1: i32, %arg2: i32, %arg3: i32) -> (i32, i32, i32) {
    %c0_i32 = arith.constant 0 : i32
    return %arg0, %arg1, %arg3 : i32, i32, i32
  }
  func.func @transform_1(%arg0: i32, %arg1: i32, %arg2: i32, %arg3: i32) -> (i32, i32) {
    %c0_i32 = arith.constant 0 : i32
    return %arg3, %arg2 : i32, i32
  }
  func.func @transform_2(%arg0: i32, %arg1: i32, %arg2: i32, %arg3: i32) -> (i32, i32) {
    %c0_i32 = arith.constant 0 : i32
    %c0_i32_0 = arith.constant 0 : i32
    return %c0_i32, %arg2 : i32, i32
  }
  func.func @transform_3(%arg0: i32, %arg1: i32, %arg2: i32, %arg3: i32) -> (i32, i32, i32) {
    %c0_i32 = arith.constant 0 : i32
    %c0_i32_0 = arith.constant 0 : i32
    return %arg0, %c0_i32, %arg2 : i32, i32, i32
  }
  func.func @transform_4(%arg0: i32, %arg1: i32, %arg2: i32, %arg3: i32) -> (i32, i32, i32) {
    %c0_i32 = arith.constant 0 : i32
    return %arg0, %arg1, %arg2 : i32, i32, i32
  }
  func.func @transform_5(%arg0: i32, %arg1: i32, %arg2: i32, %arg3: i32) -> (i32, i32, i32) {
    %c0_i32 = arith.constant 0 : i32
    return %arg0, %arg1, %arg2 : i32, i32, i32
  }
}

module attributes {stable_mosaic.version = 11 : i64} {
  func.func @_ln_mod_linear_kernel(%arg0: i32, %arg1: i32, %arg2: i32, %arg3: memref<1x8x32xf32, #tpu.memory_space<vmem>>, %arg4: memref<1x1x32xf32, #tpu.memory_space<vmem>>, %arg5: memref<1x1x32xf32, #tpu.memory_space<vmem>>, %arg6: memref<32x128xbf16, #tpu.memory_space<vmem>>, %arg7: memref<1x128xf32, #tpu.memory_space<vmem>>, %arg8: memref<1x8x128xbf16, #tpu.memory_space<vmem>>) attributes {dimension_semantics = [#tpu.dimension_semantics<parallel>, #tpu.dimension_semantics<parallel>, #tpu.dimension_semantics<parallel>], iteration_bounds = array<i64: 2, 1, 1>, scalar_prefetch = 0 : i64, scratch_operands = 0 : i64, tpu.core_type = #tpu.core_type<tc>, window_params = [{transform_indices = @transform_0, window_bounds = array<i64: 1, 8, 32>}, {transform_indices = @transform_1, window_bounds = array<i64: 1, 1, 32>}, {transform_indices = @transform_2, window_bounds = array<i64: 1, 1, 32>}, {transform_indices = @transform_3, window_bounds = array<i64: 32, 128>}, {transform_indices = @transform_4, window_bounds = array<i64: 1, 128>}, {transform_indices = @transform_5, window_bounds = array<i64: 1, 8, 128>}]} {
    %c0 = arith.constant 0 : index
    %c0_0 = arith.constant 0 : index
    %c0_1 = arith.constant 0 : index
    %0 = vector.load %arg3[%c0, %c0_0, %c0_1] : memref<1x8x32xf32, #tpu.memory_space<vmem>>, vector<1x8x32xf32>
    %1 = vector.shape_cast %0 : vector<1x8x32xf32> to vector<8x32xf32>
    %cst = arith.constant dense<0.000000e+00> : vector<8xf32>
    %2 = vector.multi_reduction <add>, %1, %cst [1] : vector<8x32xf32> to vector<8xf32>
    %3 = vector.shape_cast %2 : vector<8xf32> to vector<8x1xf32>
    %cst_2 = arith.constant 3.200000e+01 : f32
    %4 = vector.broadcast %cst_2 : f32 to vector<8x1xf32>
    %5 = arith.divf %3, %4 : vector<8x1xf32>
    %6 = vector.broadcast %5 : vector<8x1xf32> to vector<8x32xf32>
    %7 = arith.subf %1, %6 : vector<8x32xf32>
    %8 = arith.mulf %7, %7 : vector<8x32xf32>
    %cst_3 = arith.constant dense<0.000000e+00> : vector<8xf32>
    %9 = vector.multi_reduction <add>, %8, %cst_3 [1] : vector<8x32xf32> to vector<8xf32>
    %10 = vector.shape_cast %9 : vector<8xf32> to vector<8x1xf32>
    %cst_4 = arith.constant 3.200000e+01 : f32
    %11 = vector.broadcast %cst_4 : f32 to vector<8x1xf32>
    %12 = arith.divf %10, %11 : vector<8x1xf32>
    %cst_5 = arith.constant 9.99999997E-7 : f32
    %13 = vector.broadcast %cst_5 : f32 to vector<8x1xf32>
    %14 = arith.addf %12, %13 : vector<8x1xf32>
    %15 = math.rsqrt %14 : vector<8x1xf32>
    %16 = vector.broadcast %15 : vector<8x1xf32> to vector<8x32xf32>
    %17 = arith.mulf %7, %16 : vector<8x32xf32>
    %c0_6 = arith.constant 0 : index
    %c0_7 = arith.constant 0 : index
    %c0_8 = arith.constant 0 : index
    %18 = vector.load %arg4[%c0_6, %c0_7, %c0_8] : memref<1x1x32xf32, #tpu.memory_space<vmem>>, vector<1x1x32xf32>
    %19 = vector.shape_cast %18 : vector<1x1x32xf32> to vector<1x32xf32>
    %cst_9 = arith.constant 1.000000e+00 : f32
    %20 = vector.broadcast %cst_9 : f32 to vector<1x32xf32>
    %21 = arith.addf %20, %19 : vector<1x32xf32>
    %22 = vector.broadcast %21 : vector<1x32xf32> to vector<8x32xf32>
    %23 = arith.mulf %22, %17 : vector<8x32xf32>
    %c0_10 = arith.constant 0 : index
    %c0_11 = arith.constant 0 : index
    %c0_12 = arith.constant 0 : index
    %24 = vector.load %arg5[%c0_10, %c0_11, %c0_12] : memref<1x1x32xf32, #tpu.memory_space<vmem>>, vector<1x1x32xf32>
    %25 = vector.shape_cast %24 : vector<1x1x32xf32> to vector<1x32xf32>
    %26 = vector.broadcast %25 : vector<1x32xf32> to vector<8x32xf32>
    %27 = arith.addf %23, %26 : vector<8x32xf32>
    %28 = arith.truncf %27 : vector<8x32xf32> to vector<8x32xbf16>
    %c0_13 = arith.constant 0 : index
    %c0_14 = arith.constant 0 : index
    %29 = vector.load %arg6[%c0_13, %c0_14] : memref<32x128xbf16, #tpu.memory_space<vmem>>, vector<32x128xbf16>
    %cst_15 = arith.constant dense<0.000000e+00> : vector<8x128xf32>
    %30 = tpu.matmul %28, %29, %cst_15 {dimension_numbers = #tpu.dot_dimension_numbers<[1], [0], [0], [1], [0, 0, 1, 1], [], []>} : vector<8x32xbf16>, vector<32x128xbf16>, vector<8x128xf32> -> vector<8x128xf32>
    %c0_16 = arith.constant 0 : index
    %c0_17 = arith.constant 0 : index
    %31 = vector.load %arg7[%c0_16, %c0_17] : memref<1x128xf32, #tpu.memory_space<vmem>>, vector<1x128xf32>
    %32 = vector.broadcast %31 : vector<1x128xf32> to vector<8x128xf32>
    %33 = arith.addf %30, %32 : vector<8x128xf32>
    %cst_18 = arith.constant 5.000000e-01 : f32
    %34 = vector.broadcast %cst_18 : f32 to vector<8x128xf32>
    %35 = arith.mulf %34, %33 : vector<8x128xf32>
    %cst_19 = arith.constant 4.471500e-02 : f32
    %36 = vector.broadcast %cst_19 : f32 to vector<8x128xf32>
    %37 = arith.mulf %36, %33 : vector<8x128xf32>
    %38 = arith.mulf %37, %33 : vector<8x128xf32>
    %39 = arith.mulf %38, %33 : vector<8x128xf32>
    %40 = arith.addf %33, %39 : vector<8x128xf32>
    %cst_20 = arith.constant 0.797884583 : f32
    %41 = vector.broadcast %cst_20 : f32 to vector<8x128xf32>
    %42 = arith.mulf %41, %40 : vector<8x128xf32>
    %43 = math.tanh %42 : vector<8x128xf32>
    %cst_21 = arith.constant 1.000000e+00 : f32
    %44 = vector.broadcast %cst_21 : f32 to vector<8x128xf32>
    %45 = arith.addf %44, %43 : vector<8x128xf32>
    %46 = arith.mulf %35, %45 : vector<8x128xf32>
    %47 = arith.truncf %46 : vector<8x128xf32> to vector<8x128xbf16>
    %c0_22 = arith.constant 0 : index
    %c0_23 = arith.constant 0 : index
    %c0_24 = arith.constant 0 : index
    %48 = vector.load %arg8[%c0_22, %c0_23, %c0_24] : memref<1x8x128xbf16, #tpu.memory_space<vmem>>, vector<1x8x128xbf16>
    %49 = vector.shape_cast %48 : vector<1x8x128xbf16> to vector<8x128xbf16>
    %50 = vector.shape_cast %47 : vector<8x128xbf16> to vector<1x8x128xbf16>
    tpu.vector_store %arg8[%c0_22, %c0_23, %c0_24], %50 {strides = array<i32>} : memref<1x8x128xbf16, #tpu.memory_space<vmem>>, vector<1x8x128xbf16>,
    return
  }
  func.func @transform_0(%arg0: i32, %arg1: i32, %arg2: i32) -> (i32, i32, i32) {
    %c0_i32 = arith.constant 0 : i32
    %c0_i32_0 = arith.constant 0 : i32
    return %arg0, %arg1, %c0_i32 : i32, i32, i32
  }
  func.func @transform_1(%arg0: i32, %arg1: i32, %arg2: i32) -> (i32, i32, i32) {
    %c0_i32 = arith.constant 0 : i32
    %c0_i32_0 = arith.constant 0 : i32
    %c0_i32_1 = arith.constant 0 : i32
    return %arg0, %c0_i32, %c0_i32_0 : i32, i32, i32
  }
  func.func @transform_2(%arg0: i32, %arg1: i32, %arg2: i32) -> (i32, i32, i32) {
    %c0_i32 = arith.constant 0 : i32
    %c0_i32_0 = arith.constant 0 : i32
    %c0_i32_1 = arith.constant 0 : i32
    return %arg0, %c0_i32, %c0_i32_0 : i32, i32, i32
  }
  func.func @transform_3(%arg0: i32, %arg1: i32, %arg2: i32) -> (i32, i32) {
    %c0_i32 = arith.constant 0 : i32
    %c0_i32_0 = arith.constant 0 : i32
    return %c0_i32, %arg2 : i32, i32
  }
  func.func @transform_4(%arg0: i32, %arg1: i32, %arg2: i32) -> (i32, i32) {
    %c0_i32 = arith.constant 0 : i32
    %c0_i32_0 = arith.constant 0 : i32
    return %c0_i32, %arg2 : i32, i32
  }
  func.func @transform_5(%arg0: i32, %arg1: i32, %arg2: i32) -> (i32, i32, i32) {
    %c0_i32 = arith.constant 0 : i32
    return %arg0, %arg1, %arg2 : i32, i32, i32
  }
}

module attributes {stable_mosaic.version = 11 : i64} {
  func.func @_linear_residual_kernel(%arg0: i32, %arg1: i32, %arg2: i32, %arg3: i32, %arg4: memref<1x8x128xbf16, #tpu.memory_space<vmem>>, %arg5: memref<128x32xbf16, #tpu.memory_space<vmem>>, %arg6: memref<1x32xf32, #tpu.memory_space<vmem>>, %arg7: memref<1x1x32xf32, #tpu.memory_space<vmem>>, %arg8: memref<1x8x32xf32, #tpu.memory_space<vmem>>, %arg9: memref<1x8x32xf32, #tpu.memory_space<vmem>>, %arg10: memref<8x32xf32, #tpu.memory_space<vmem>>) attributes {dimension_semantics = [#tpu.dimension_semantics<parallel>, #tpu.dimension_semantics<parallel>, #tpu.dimension_semantics<parallel>, #tpu.dimension_semantics<arbitrary>], iteration_bounds = array<i64: 2, 1, 1, 1>, scalar_prefetch = 0 : i64, scratch_operands = 1 : i64, tpu.core_type = #tpu.core_type<tc>, window_params = [{transform_indices = @transform_0, window_bounds = array<i64: 1, 8, 128>}, {transform_indices = @transform_1, window_bounds = array<i64: 128, 32>}, {transform_indices = @transform_2, window_bounds = array<i64: 1, 32>}, {transform_indices = @transform_3, window_bounds = array<i64: 1, 1, 32>}, {transform_indices = @transform_4, window_bounds = array<i64: 1, 8, 32>}, {transform_indices = @transform_5, window_bounds = array<i64: 1, 8, 32>}]} {
    %c0_i32 = arith.constant 0 : i32
    %0 = arith.cmpi eq, %arg3, %c0_i32 : i32
    %1 = arith.extui %0 : i1 to i32
    %c0_i32_0 = arith.constant 0 : i32
    %2 = arith.cmpi ne, %1, %c0_i32_0 : i32
    scf.if %2 {
      %cst_11 = arith.constant 0.000000e+00 : f32
      %13 = vector.broadcast %cst_11 : f32 to vector<8x32xf32>
      %c0_12 = arith.constant 0 : index
      %c0_13 = arith.constant 0 : index
      %14 = vector.load %arg10[%c0_12, %c0_13] : memref<8x32xf32, #tpu.memory_space<vmem>>, vector<8x32xf32>
      tpu.vector_store %arg10[%c0_12, %c0_13], %13 {strides = array<i32>} : memref<8x32xf32, #tpu.memory_space<vmem>>, vector<8x32xf32>,
    } else {
    }
    %c0 = arith.constant 0 : index
    %c0_1 = arith.constant 0 : index
    %3 = vector.load %arg10[%c0, %c0_1] : memref<8x32xf32, #tpu.memory_space<vmem>>, vector<8x32xf32>
    %c0_2 = arith.constant 0 : index
    %c0_3 = arith.constant 0 : index
    %c0_4 = arith.constant 0 : index
    %4 = vector.load %arg4[%c0_2, %c0_3, %c0_4] : memref<1x8x128xbf16, #tpu.memory_space<vmem>>, vector<1x8x128xbf16>
    %5 = vector.shape_cast %4 : vector<1x8x128xbf16> to vector<8x128xbf16>
    %c0_5 = arith.constant 0 : index
    %c0_6 = arith.constant 0 : index
    %6 = vector.load %arg5[%c0_5, %c0_6] : memref<128x32xbf16, #tpu.memory_space<vmem>>, vector<128x32xbf16>
    %cst = arith.constant dense<0.000000e+00> : vector<8x32xf32>
    %7 = tpu.matmul %5, %6, %cst {dimension_numbers = #tpu.dot_dimension_numbers<[1], [0], [0], [1], [0, 0, 1, 1], [], []>} : vector<8x128xbf16>, vector<128x32xbf16>, vector<8x32xf32> -> vector<8x32xf32>
    %8 = arith.addf %3, %7 : vector<8x32xf32>
    %c0_7 = arith.constant 0 : index
    %c0_8 = arith.constant 0 : index
    %9 = vector.load %arg10[%c0_7, %c0_8] : memref<8x32xf32, #tpu.memory_space<vmem>>, vector<8x32xf32>
    tpu.vector_store %arg10[%c0_7, %c0_8], %8 {strides = array<i32>} : memref<8x32xf32, #tpu.memory_space<vmem>>, vector<8x32xf32>,
    %c0_i32_9 = arith.constant 0 : i32
    %10 = arith.cmpi eq, %arg3, %c0_i32_9 : i32
    %11 = arith.extui %10 : i1 to i32
    %c0_i32_10 = arith.constant 0 : i32
    %12 = arith.cmpi ne, %11, %c0_i32_10 : i32
    scf.if %12 {
      %c0_11 = arith.constant 0 : index
      %c0_12 = arith.constant 0 : index
      %13 = vector.load %arg10[%c0_11, %c0_12] : memref<8x32xf32, #tpu.memory_space<vmem>>, vector<8x32xf32>
      %c0_13 = arith.constant 0 : index
      %c0_14 = arith.constant 0 : index
      %14 = vector.load %arg6[%c0_13, %c0_14] : memref<1x32xf32, #tpu.memory_space<vmem>>, vector<1x32xf32>
      %15 = vector.broadcast %14 : vector<1x32xf32> to vector<8x32xf32>
      %16 = arith.addf %13, %15 : vector<8x32xf32>
      %c0_15 = arith.constant 0 : index
      %c0_16 = arith.constant 0 : index
      %c0_17 = arith.constant 0 : index
      %17 = vector.load %arg8[%c0_15, %c0_16, %c0_17] : memref<1x8x32xf32, #tpu.memory_space<vmem>>, vector<1x8x32xf32>
      %18 = vector.shape_cast %17 : vector<1x8x32xf32> to vector<8x32xf32>
      %c0_18 = arith.constant 0 : index
      %c0_19 = arith.constant 0 : index
      %c0_20 = arith.constant 0 : index
      %19 = vector.load %arg7[%c0_18, %c0_19, %c0_20] : memref<1x1x32xf32, #tpu.memory_space<vmem>>, vector<1x1x32xf32>
      %20 = vector.shape_cast %19 : vector<1x1x32xf32> to vector<1x32xf32>
      %21 = vector.broadcast %20 : vector<1x32xf32> to vector<8x32xf32>
      %22 = arith.mulf %21, %16 : vector<8x32xf32>
      %23 = arith.addf %18, %22 : vector<8x32xf32>
      %c0_21 = arith.constant 0 : index
      %c0_22 = arith.constant 0 : index
      %c0_23 = arith.constant 0 : index
      %24 = vector.load %arg9[%c0_21, %c0_22, %c0_23] : memref<1x8x32xf32, #tpu.memory_space<vmem>>, vector<1x8x32xf32>
      %25 = vector.shape_cast %24 : vector<1x8x32xf32> to vector<8x32xf32>
      %26 = vector.shape_cast %23 : vector<8x32xf32> to vector<1x8x32xf32>
      tpu.vector_store %arg9[%c0_21, %c0_22, %c0_23], %26 {strides = array<i32>} : memref<1x8x32xf32, #tpu.memory_space<vmem>>, vector<1x8x32xf32>,
    } else {
    }
    return
  }
  func.func @transform_0(%arg0: i32, %arg1: i32, %arg2: i32, %arg3: i32) -> (i32, i32, i32) {
    %c0_i32 = arith.constant 0 : i32
    return %arg0, %arg1, %arg3 : i32, i32, i32
  }
  func.func @transform_1(%arg0: i32, %arg1: i32, %arg2: i32, %arg3: i32) -> (i32, i32) {
    %c0_i32 = arith.constant 0 : i32
    return %arg3, %arg2 : i32, i32
  }
  func.func @transform_2(%arg0: i32, %arg1: i32, %arg2: i32, %arg3: i32) -> (i32, i32) {
    %c0_i32 = arith.constant 0 : i32
    %c0_i32_0 = arith.constant 0 : i32
    return %c0_i32, %arg2 : i32, i32
  }
  func.func @transform_3(%arg0: i32, %arg1: i32, %arg2: i32, %arg3: i32) -> (i32, i32, i32) {
    %c0_i32 = arith.constant 0 : i32
    %c0_i32_0 = arith.constant 0 : i32
    return %arg0, %c0_i32, %arg2 : i32, i32, i32
  }
  func.func @transform_4(%arg0: i32, %arg1: i32, %arg2: i32, %arg3: i32) -> (i32, i32, i32) {
    %c0_i32 = arith.constant 0 : i32
    return %arg0, %arg1, %arg2 : i32, i32, i32
  }
  func.func @transform_5(%arg0: i32, %arg1: i32, %arg2: i32, %arg3: i32) -> (i32, i32, i32) {
    %c0_i32 = arith.constant 0 : i32
    return %arg0, %arg1, %arg2 : i32, i32, i32
  }
}

</mosaic_0001>

<llo_original>
// kernel: double_stream_block.11
$region0: #{double_stream_block.11}
  #allocation0 [shape = 'u32[]', space=smem, size = 0x4, offset = 0x4, fixed_abs, tag = 'smem constant byte address 0x4 - core index']
  #allocation1 [shape = 'u32[72,128]{1,0:T(1,128)}', space=vmem, size = 0x9000, scoped, tag = 'internal scratch']
  #allocation2 [shape = 'f32[2,192]{1,0:T(2,128)}', space=vmem, size = 0x800, scoped, tag = 'scratch operand']
  %s0 = inlined_call_operand.vmem [shape: f32[2,32], index: 0, kind: input, shape index: {}]
  %s1 = inlined_call_operand.vmem [shape: bf16[32,192], index: 1, kind: input, shape index: {}]
  %s2 = inlined_call_operand.vmem [shape: f32[1,192], index: 2, kind: input, shape index: {}]
  %s3 = inlined_call_operand.vmem [shape: f32[2,192], index: 3, kind: output, shape index: {}]
  %s4 = sld [smem:[#allocation0]]
  $region30: #{double_stream_block.11} parent=0
    _
  %s6 = ssub.s32 1, %s4
  %s7 = scalar_select 0, %s6, %s4
  // Predicated region
  $region2: #{double_stream_block.11} parent=0 // pred_check
    _
  $region3: #{double_stream_block.11} parent=0 // pred_check_branch
    %9 = sbr.rel (0) target = $region5
  $region4: #{double_stream_block.11} parent=0 // pred_region
    _
  $region5: #{double_stream_block.11} parent=0 // pred_fallthru
    _
  // Predicated region
  $region6: #{double_stream_block.11} parent=0 // pred_check
    _
  $region7: #{double_stream_block.11} parent=0 // pred_check_branch
    %11 = sbr.rel (0) target = $region9
  $region8: #{double_stream_block.11} parent=0 // pred_region
    _
  $region9: #{double_stream_block.11} parent=0 // pred_fallthru
    _
  // Predicated region
  $region10: #{double_stream_block.11} parent=0 // pred_check
    _
  $region11: #{double_stream_block.11} parent=0 // pred_check_branch
    %13 = sbr.rel (0) target = $region13
  $region12: #{double_stream_block.11} parent=0 // pred_region
    _
  $region13: #{double_stream_block.11} parent=0 // pred_fallthru
    _
  %p15 = scmp.eq.s32.totalorder 0, 0
  // Predicated region
  $region14: #{double_stream_block.11} parent=0 // pred_check
    %p16 = pneg %p15
  $region15: #{double_stream_block.11} parent=0 // pred_check_branch
    %18 = sbr.rel (%p16) target = $region17
  $region16: #{double_stream_block.11} parent=0 // pred_region
    %vm19 = vcmask 1041408
    %vm20 = vcmask 519170
    %vm21 = vmor %vm20, %vm19
    %22 = vst.msk [vmem:[#allocation2] sm:$0xf] %vm21, 0.0
  $region17: #{double_stream_block.11} parent=0 // pred_fallthru
    _
  %v23 = vld [vmem:[%s0] sm:$0x3]
  %v24 = vxor.u32 %v23, 2147483648
  %v25 = vmul.f32 %v24, 1.442695
  %v26 = vpow.pop %v25
  %v27 = vadd.f32 %v26, 1.0
  %v28 = vrcp.pop %v27
  %v29 = vmul.f32 %v27, %v28
  %v30 = vsub.f32 1.0, %v29
  %v31 = vmul.f32 %v28, %v30
  %v32 = vadd.f32 %v28, %v31
  %vm33 = vweird.f32 %v27
  %vm34 = vweird.f32 %v28
  %vm35 = vmor %vm33, %vm34
  %v36 = vsel %vm35, %v28, %v32
  %v37 = vand.u32 2147483647, %v27
  %vm38 = vcmp.eq.f32.partialorder %v37, 8.507059e+37
  %v39 = vand.u32 %v27, 2147483648
  %v40 = vor.u32 1.1754944e-38, %v39
  %v41 = vsel %vm38, %v40, %v36
  %v42 = vmul.f32 1.0, %v41
  %v43 = vmul.f32 %v23, %v42
  %v44 = vld [vmem:[#allocation2] sm:$0xf]
  %v45 = vpack.c.bf16 %v43, %v43
  %v46 = vld [vmem:[%s1] sm:$0xff]
  %v47 = vld [vmem:[%s1 + $0x8] sm:$0xff]
  %v48 = vld [vmem:[%s1 + $0x10] sm:$0xff]
  %v49 = vld [vmem:[%s1 + $0x18] sm:$0xff]
  %v54 = vunpack.c.l.b16 %v46
  %v55 = vunpack.c.h.b16 %v46
  %v56 = vunpack.c.l.b16 %v47
  %v57 = vunpack.c.h.b16 %v47
  %v58 = vunpack.c.l.b16 %v48
  %v59 = vunpack.c.h.b16 %v48
  %v60 = vunpack.c.l.b16 %v49
  %v61 = vunpack.c.h.b16 %v49
  %v62 = vpack.c.b16 %v56, %v54
  %v63 = vpack.c.b16 %v57, %v55
  %v64 = vpack.c.b16 %v60, %v58
  %v65 = vpack.c.b16 %v61, %v59
  %vm70 = vcmask 261120
  %v72 = vsel %vm70, %v45, 0
  %74 = vmatpush.bf16.msra.mxu0 0
  %75 = vmatpush.bf16.msra.mxu0 0
  %76 = vmatpush.bf16.msra.mxu0 0
  %77 = vmatpush.bf16.msra.mxu0 0
  %78 = vmatpush.bf16.msra.mxu0 0
  %79 = vmatpush.bf16.msra.mxu0 0
  %80 = vmatpush.bf16.msra.mxu0 %v64
  %81 = vmatpush.bf16.msra.mxu0 %v62
  %82 = vmatmul.bf16.gmra.mxu0 %v72
  %v83 = vpop.f32.mrf.mxu0
  %v84 = vadd.f32 0.0, %v83
  %v85 = vpop.f32.mrf.mxu0
  %86 = vdwg.mxu0
  %87 = vmatpush.bf16.msra.mxu0 0
  %88 = vmatpush.bf16.msra.mxu0 0
  %89 = vmatpush.bf16.msra.mxu0 0
  %90 = vmatpush.bf16.msra.mxu0 0
  %91 = vmatpush.bf16.msra.mxu0 0
  %92 = vmatpush.bf16.msra.mxu0 0
  %93 = vmatpush.bf16.msra.mxu0 %v65
  %94 = vmatpush.bf16.msra.mxu0 %v63
  %95 = vmatmul.bf16.gmra.mxu0 %v72
  %v96 = vpop.f32.mrf.mxu0
  %v97 = vadd.f32 0.0, %v96
  %v98 = vpop.f32.mrf.mxu0
  %99 = vdwg.mxu0
  %v102 = vrot.slane %v97, 6
  %vm103 = vcmask 1041408
  %v104 = vsel %vm103, %v84, %v102
  %v106 = vadd.f32 %v44, %v104
  %vm107 = vcmask 519170
  %vm108 = vmor %vm107, %vm103
  %109 = vst.msk [vmem:[#allocation2] sm:$0xf] %vm108, %v106
  // Predicated region
  $region18: #{double_stream_block.11} parent=0 // pred_check
    %p110 = pneg %p15
  $region19: #{double_stream_block.11} parent=0 // pred_check_branch
    %112 = sbr.rel (%p110) target = $region21
  $region20: #{double_stream_block.11} parent=0 // pred_region
    %v113 = vld [vmem:[#allocation2] sm:$0xf]
    %v114 = vld [vmem:[%s2] sm:$0x3]
    %v116 = vperm.slane %v114, 0
    %v117 = vperm.slane %v114, 1
    %v118 = vrot.slane %v117, 6
    %v119 = vsel %vm103, %v116, %v118
    %v121 = vadd.f32 %v113, %v119
    %122 = vst.msk [vmem:[%s3] sm:$0xf] %vm108, %v121
  $region21: #{double_stream_block.11} parent=0 // pred_fallthru
    _
  // Predicated region
  $region22: #{double_stream_block.11} parent=0 // pred_check
    _
  $region23: #{double_stream_block.11} parent=0 // pred_check_branch
    %124 = sbr.rel (0) target = $region25
  $region24: #{double_stream_block.11} parent=0 // pred_region
    _
  $region25: #{double_stream_block.11} parent=0 // pred_fallthru
    _
  // Predicated region
  $region26: #{double_stream_block.11} parent=0 // pred_check
    _
  $region27: #{double_stream_block.11} parent=0 // pred_check_branch
    %126 = sbr.rel (0) target = $region29
  $region28: #{double_stream_block.11} parent=0 // pred_region
    _
  $region29: #{double_stream_block.11} parent=0 // pred_fallthru
    _

// kernel: double_stream_block.13
$region0: #{double_stream_block.13}
  #allocation0 [shape = 'u32[]', space=smem, size = 0x4, offset = 0x4, fixed_abs, tag = 'smem constant byte address 0x4 - core index']
  #allocation1 [shape = 'u32[72,128]{1,0:T(1,128)}', space=vmem, size = 0x9000, scoped, tag = 'internal scratch']
  %s0 = inlined_call_operand.vmem [shape: f32[2,8,32], index: 0, kind: input, shape index: {}]
  %s1 = inlined_call_operand.vmem [shape: f32[2,1,32], index: 1, kind: input, shape index: {}]
  %s2 = inlined_call_operand.vmem [shape: f32[2,1,32], index: 2, kind: input, shape index: {}]
  %s3 = inlined_call_operand.vmem [shape: bf16[32,96], index: 3, kind: input, shape index: {}]
  %s4 = inlined_call_operand.vmem [shape: f32[1,96], index: 4, kind: input, shape index: {}]
  %s5 = inlined_call_operand.vmem [shape: bf16[2,8,96], index: 5, kind: output, shape index: {}]
  %s6 = sld [smem:[#allocation0]]
  $region53: #{double_stream_block.13} parent=0
    _
  %s8 = ssub.s32 1, %s6
  %s9 = scalar_select 0, %s8, %s6
  loop: start=0, step=1, limit=4
  $region2: #{double_stream_block.13} parent=0 // loop_pre_header
    _
  $region3: #{double_stream_block.13} parent=0 // loop_header
    %s11 = sphi 0, %s15
    %p12 = scmp.ge.s32.totalorder %s11, 4
    %s18 = sphi 0, %s37
    %s19 = sphi 0, %s33
    %s20 = sphi 0, %s29
    %s21 = sphi 0, %s18
    %s22 = sphi 0, %s19
    %s23 = sphi 0, %s20
    %s24 = sphi 0, %s21
    %s25 = sphi 0, %s22
    %s26 = sphi 0, %s23
    %s42 = sphi 0, %s44
    %s45 = sphi 0, %s42
    %s46 = sphi 0, %s45
    %s62 = sphi 0, %s46
    %s68 = sphi 0, %s70
    %s71 = sphi 0, %s68
    %s72 = sphi 0, %s71
    %s88 = sphi 0, %s72
    %s94 = sphi 0, %s96
    %s97 = sphi 0, %s94
    %s98 = sphi 0, %s97
    %s114 = sphi 0, %s98
    %s120 = sphi 0, %s122
    %s123 = sphi 0, %s120
    %s124 = sphi 0, %s123
    %s140 = sphi 0, %s124
    %s146 = sphi 0, %s148
    %s149 = sphi 0, %s146
    %s150 = sphi 0, %s149
    %s166 = sphi 0, %s150
    %s176 = sphi 0, %s178
    %s179 = sphi 0, %s176
    %s180 = sphi 0, %s179
    %s196 = sphi 0, %s180
  $region4: #{double_stream_block.13} parent=0 // loop_header_branch
    %14 = sbr.rel (%p12) target = $region8
  $region5: #{double_stream_block.13} parent=0 // loop_body
    %s16 = ssub.s32 %s11, 1
    %s17 = ssub.s32 %s11, 2
    %s27 = sadd.s32 1, %s20
    %p28 = scmp.ge.s32.totalorder %s27, 1
    %s29 = scalar_select %p28, 0, %s27
    %s30 = sadd.s32 1, %s19
    %s31 = scalar_select %p28, %s30, %s19
    %p32 = scmp.ge.s32.totalorder %s31, 1
    %s33 = scalar_select %p32, 0, %s31
    %s34 = sadd.s32 1, %s18
    %s35 = scalar_select %p32, %s34, %s18
    %p36 = scmp.ge.s32.totalorder %s35, 2
    %s37 = scalar_select %p36, 0, %s35
    %s38 = ssub.s32 %s18, %s37
    %s39 = ssub.s32 %s19, %s33
    %s40 = sor.u32 %s38, %s39
    %p41 = scmp.eq.s32.totalorder %s40, 0
    %s43 = sadd.s32 %s42, 1
    %s44 = scalar_select %p41, %s42, %s43
    %p47 = pneg %p41
    %p48 = scmp.eq.s32.totalorder %s11, 1
    %p49 = por %p47, %p48
    %p50 = scmp.ne.s32.totalorder %s42, %s45
    %p51 = scmp.eq.s32.totalorder %s11, 0
    %p52 = por %p50, %p51
    %p53 = scmp.ne.s32.totalorder %s42, %s45
    %p54 = scmp.eq.s32.totalorder %s16, 1
    %p55 = por %p53, %p54
    %p56 = scmp.ne.s32.totalorder %s45, %s46
    %p57 = scmp.eq.s32.totalorder %s16, 0
    %p58 = por %p56, %p57
    %p59 = scmp.ne.s32.totalorder %s45, %s46
    %p60 = scmp.eq.s32.totalorder %s17, 1
    %p61 = por %p59, %p60
    %p63 = scmp.ne.s32.totalorder %s46, %s62
    %p64 = scmp.eq.s32.totalorder %s17, 0
    %p65 = por %p63, %p64
    %s66 = ssub.s32 %s18, %s37
    %p67 = scmp.eq.s32.totalorder %s66, 0
    %s69 = sadd.s32 %s68, 1
    %s70 = scalar_select %p67, %s68, %s69
    %p73 = pneg %p67
    %p74 = scmp.eq.s32.totalorder %s11, 1
    %p75 = por %p73, %p74
    %p76 = scmp.ne.s32.totalorder %s68, %s71
    %p77 = scmp.eq.s32.totalorder %s11, 0
    %p78 = por %p76, %p77
    %p79 = scmp.ne.s32.totalorder %s68, %s71
    %p80 = scmp.eq.s32.totalorder %s16, 1
    %p81 = por %p79, %p80
    %p82 = scmp.ne.s32.totalorder %s71, %s72
    %p83 = scmp.eq.s32.totalorder %s16, 0
    %p84 = por %p82, %p83
    %p85 = scmp.ne.s32.totalorder %s71, %s72
    %p86 = scmp.eq.s32.totalorder %s17, 1
    %p87 = por %p85, %p86
    %p89 = scmp.ne.s32.totalorder %s72, %s88
    %p90 = scmp.eq.s32.totalorder %s17, 0
    %p91 = por %p89, %p90
    %s92 = ssub.s32 %s18, %s37
    %p93 = scmp.eq.s32.totalorder %s92, 0
    %s95 = sadd.s32 %s94, 1
    %s96 = scalar_select %p93, %s94, %s95
    %p99 = pneg %p93
    %p100 = scmp.eq.s32.totalorder %s11, 1
    %p101 = por %p99, %p100
    %p102 = scmp.ne.s32.totalorder %s94, %s97
    %p103 = scmp.eq.s32.totalorder %s11, 0
    %p104 = por %p102, %p103
    %p105 = scmp.ne.s32.totalorder %s94, %s97
    %p106 = scmp.eq.s32.totalorder %s16, 1
    %p107 = por %p105, %p106
    %p108 = scmp.ne.s32.totalorder %s97, %s98
    %p109 = scmp.eq.s32.totalorder %s16, 0
    %p110 = por %p108, %p109
    %p111 = scmp.ne.s32.totalorder %s97, %s98
    %p112 = scmp.eq.s32.totalorder %s17, 1
    %p113 = por %p111, %p112
    %p115 = scmp.ne.s32.totalorder %s98, %s114
    %p116 = scmp.eq.s32.totalorder %s17, 0
    %p117 = por %p115, %p116
    %s118 = ssub.s32 %s20, %s29
    %p119 = scmp.eq.s32.totalorder %s118, 0
    %s121 = sadd.s32 %s120, 1
    %s122 = scalar_select %p119, %s120, %s121
    %p125 = pneg %p119
    %p126 = scmp.eq.s32.totalorder %s11, 1
    %p127 = por %p125, %p126
    %p128 = scmp.ne.s32.totalorder %s120, %s123
    %p129 = scmp.eq.s32.totalorder %s11, 0
    %p130 = por %p128, %p129
    %p131 = scmp.ne.s32.totalorder %s120, %s123
    %p132 = scmp.eq.s32.totalorder %s16, 1
    %p133 = por %p131, %p132
    %p134 = scmp.ne.s32.totalorder %s123, %s124
    %p135 = scmp.eq.s32.totalorder %s16, 0
    %p136 = por %p134, %p135
    %p137 = scmp.ne.s32.totalorder %s123, %s124
    %p138 = scmp.eq.s32.totalorder %s17, 1
    %p139 = por %p137, %p138
    %p141 = scmp.ne.s32.totalorder %s124, %s140
    %p142 = scmp.eq.s32.totalorder %s17, 0
    %p143 = por %p141, %p142
    %s144 = ssub.s32 %s20, %s29
    %p145 = scmp.eq.s32.totalorder %s144, 0
    %s147 = sadd.s32 %s146, 1
    %s148 = scalar_select %p145, %s146, %s147
    %p151 = pneg %p145
    %p152 = scmp.eq.s32.totalorder %s11, 1
    %p153 = por %p151, %p152
    %p154 = scmp.ne.s32.totalorder %s146, %s149
    %p155 = scmp.eq.s32.totalorder %s11, 0
    %p156 = por %p154, %p155
    %p157 = scmp.ne.s32.totalorder %s146, %s149
    %p158 = scmp.eq.s32.totalorder %s16, 1
    %p159 = por %p157, %p158
    %p160 = scmp.ne.s32.totalorder %s149, %s150
    %p161 = scmp.eq.s32.totalorder %s16, 0
    %p162 = por %p160, %p161
    %p163 = scmp.ne.s32.totalorder %s149, %s150
    %p164 = scmp.eq.s32.totalorder %s17, 1
    %p165 = por %p163, %p164
    %p167 = scmp.ne.s32.totalorder %s150, %s166
    %p168 = scmp.eq.s32.totalorder %s17, 0
    %p169 = por %p167, %p168
    %s170 = ssub.s32 %s18, %s37
    %s171 = ssub.s32 %s19, %s33
    %s172 = sor.u32 %s170, %s171
    %s173 = ssub.s32 %s20, %s29
    %s174 = sor.u32 %s172, %s173
    %p175 = scmp.eq.s32.totalorder %s174, 0
    %s177 = sadd.s32 %s176, 1
    %s178 = scalar_select %p175, %s176, %s177
    %p181 = pneg %p175
    %p182 = scmp.eq.s32.totalorder %s11, 1
    %p183 = por %p181, %p182
    %p184 = scmp.ne.s32.totalorder %s176, %s179
    %p185 = scmp.eq.s32.totalorder %s11, 0
    %p186 = por %p184, %p185
    %p187 = scmp.ne.s32.totalorder %s176, %s179
    %p188 = scmp.eq.s32.totalorder %s16, 1
    %p189 = por %p187, %p188
    %p190 = scmp.ne.s32.totalorder %s179, %s180
    %p191 = scmp.eq.s32.totalorder %s16, 0
    %p192 = por %p190, %p191
    %p193 = scmp.ne.s32.totalorder %s179, %s180
    %p194 = scmp.eq.s32.totalorder %s17, 1
    %p195 = por %p193, %p194
    %p197 = scmp.ne.s32.totalorder %s180, %s196
    %p198 = scmp.eq.s32.totalorder %s17, 0
    %p199 = por %p197, %p198
    %p200 = scmp.le.s32.totalorder 1, %s11
    %p201 = scmp.lt.s32.totalorder %s11, 3
    %p202 = pnand %p200, %p201
    %p203 = pneg %p202
    // Predicated region
    $region9: #{double_stream_block.13} parent=5 // pred_check
      _
    $region10: #{double_stream_block.13} parent=5 // pred_check_branch
      %205 = sbr.rel (%p202) target = $region12
    $region11: #{double_stream_block.13} parent=5 // pred_region
      %s206 = ssub.s32 %s11, 1
      // Predicated region
      $region13: #{double_stream_block.13} parent=11 // pred_check
        %p207 = pneg %p136
      $region14: #{double_stream_block.13} parent=11 // pred_check_branch
        %209 = sbr.rel (%p207) target = $region16
      $region15: #{double_stream_block.13} parent=11 // pred_region
        %p210 = scmp.lt.s32.totalorder %s23, 0
        %s211 = scalar_select %p210, %s23, 0
        %s212 = smul.addr %s211, 4
        %s213 = scalar_lea.vmem %s3, %s212
      $region16: #{double_stream_block.13} parent=11 // pred_fallthru
        _
      // Predicated region
      $region17: #{double_stream_block.13} parent=11 // pred_check
        %p214 = pneg %p162
      $region18: #{double_stream_block.13} parent=11 // pred_check_branch
        %216 = sbr.rel (%p214) target = $region20
      $region19: #{double_stream_block.13} parent=11 // pred_region
        %p217 = scmp.lt.s32.totalorder %s23, 0
        %s218 = scalar_select %p217, %s23, 0
        %s219 = scalar_lea.vmem %s4, %s218
      $region20: #{double_stream_block.13} parent=11 // pred_fallthru
        _
    $region12: #{double_stream_block.13} parent=5 // pred_fallthru
      _
    %p220 = scmp.lt.s32.totalorder %s11, 2
    // Predicated region
    $region21: #{double_stream_block.13} parent=5 // pred_check
      %p221 = pneg %p220
    $region22: #{double_stream_block.13} parent=5 // pred_check_branch
      %223 = sbr.rel (%p221) target = $region24
    $region23: #{double_stream_block.13} parent=5 // pred_region
      // Predicated region
      $region25: #{double_stream_block.13} parent=23 // pred_check
        %p224 = pneg %p52
      $region26: #{double_stream_block.13} parent=23 // pred_check_branch
        %226 = sbr.rel (%p224) target = $region28
      $region27: #{double_stream_block.13} parent=23 // pred_region
        %p227 = scmp.lt.s32.totalorder %s18, 1
        %s228 = scalar_select %p227, %s18, 1
        %p229 = scmp.lt.s32.totalorder %s19, 0
        %s230 = scalar_select %p229, %s19, 0
        %s231 = sadd.s32 %s230, %s228
        %s232 = smul.addr %s231, 8
        %s233 = scalar_lea.vmem %s0, %s232
      $region28: #{double_stream_block.13} parent=23 // pred_fallthru
        _
      // Predicated region
      $region29: #{double_stream_block.13} parent=23 // pred_check
        %p234 = pneg %p78
      $region30: #{double_stream_block.13} parent=23 // pred_check_branch
        %236 = sbr.rel (%p234) target = $region32
      $region31: #{double_stream_block.13} parent=23 // pred_region
        %p237 = scmp.lt.s32.totalorder %s18, 1
        %s238 = scalar_select %p237, %s18, 1
        %s239 = scalar_lea.vmem %s1, %s238
      $region32: #{double_stream_block.13} parent=23 // pred_fallthru
        _
      // Predicated region
      $region33: #{double_stream_block.13} parent=23 // pred_check
        %p240 = pneg %p104
      $region34: #{double_stream_block.13} parent=23 // pred_check_branch
        %242 = sbr.rel (%p240) target = $region36
      $region35: #{double_stream_block.13} parent=23 // pred_region
        %p243 = scmp.lt.s32.totalorder %s18, 1
        %s244 = scalar_select %p243, %s18, 1
        %s245 = scalar_lea.vmem %s2, %s244
      $region36: #{double_stream_block.13} parent=23 // pred_fallthru
        _
    $region24: #{double_stream_block.13} parent=5 // pred_fallthru
      _
    %p246 = scmp.le.s32.totalorder 1, %s11
    %p247 = scmp.lt.s32.totalorder %s11, 3
    %p248 = pnand %p246, %p247
    %p249 = pneg %p248
    // Predicated region
    $region37: #{double_stream_block.13} parent=5 // pred_check
      _
    $region38: #{double_stream_block.13} parent=5 // pred_check_branch
      %251 = sbr.rel (%p248) target = $region40
    $region39: #{double_stream_block.13} parent=5 // pred_region
      %s252 = ssub.s32 %s11, 1
      %p253 = scmp.lt.s32.totalorder %s21, 1
      %s254 = scalar_select %p253, %s21, 1
      %p255 = scmp.lt.s32.totalorder %s22, 0
      %s256 = scalar_select %p255, %s22, 0
      %s257 = sadd.s32 %s256, %s254
      %s258 = smul.addr %s257, 8
      %s259 = scalar_lea.vmem %s0, %s258
      %p260 = pneg %p58
      %p261 = pneg %p55
      %p262 = scmp.lt.s32.totalorder %s21, 1
      %s263 = scalar_select %p262, %s21, 1
      %s264 = scalar_lea.vmem %s1, %s263
      %p265 = pneg %p84
      %p266 = pneg %p81
      %p267 = scmp.lt.s32.totalorder %s21, 1
      %s268 = scalar_select %p267, %s21, 1
      %s269 = scalar_lea.vmem %s2, %s268
      %p270 = pneg %p110
      %p271 = pneg %p107
      %p272 = scmp.lt.s32.totalorder %s23, 0
      %s273 = scalar_select %p272, %s23, 0
      %s274 = smul.addr %s273, 4
      %s275 = scalar_lea.vmem %s3, %s274
      %p276 = pneg %p136
      %p277 = pneg %p133
      %p278 = scmp.lt.s32.totalorder %s23, 0
      %s279 = scalar_select %p278, %s23, 0
      %s280 = scalar_lea.vmem %s4, %s279
      %p281 = pneg %p162
      %p282 = pneg %p159
      %p283 = pneg %p192
      %p284 = pneg %p189
      %p285 = scmp.lt.s32.totalorder %s21, 1
      %s286 = scalar_select %p285, %s21, 1
      %p287 = scmp.lt.s32.totalorder %s22, 0
      %s288 = scalar_select %p287, %s22, 0
      %p289 = scmp.lt.s32.totalorder %s23, 0
      %s290 = scalar_select %p289, %s23, 0
      %s291 = sadd.s32 %s290, %s288
      %s292 = sadd.s32 %s291, %s286
      %s293 = smul.addr %s292, 4
      %s294 = scalar_lea.vmem %s5, %s293
      %p295 = scmp.lt.s32.totalorder %s21, 1
      %s296 = scalar_select %p295, %s21, 1
      %p297 = scmp.lt.s32.totalorder %s22, 0
      %s298 = scalar_select %p297, %s22, 0
      %s299 = sadd.s32 %s298, %s296
      %s300 = smul.addr %s299, 8
      %s301 = scalar_lea.vmem %s0, %s300
      %p302 = scmp.lt.s32.totalorder %s21, 1
      %s303 = scalar_select %p302, %s21, 1
      %s304 = scalar_lea.vmem %s1, %s303
      %p305 = scmp.lt.s32.totalorder %s21, 1
      %s306 = scalar_select %p305, %s21, 1
      %s307 = scalar_lea.vmem %s2, %s306
      %p308 = scmp.lt.s32.totalorder %s23, 0
      %s309 = scalar_select %p308, %s23, 0
      %s310 = smul.addr %s309, 4
      %s311 = scalar_lea.vmem %s3, %s310
      %p312 = scmp.lt.s32.totalorder %s23, 0
      %s313 = scalar_select %p312, %s23, 0
      %s314 = scalar_lea.vmem %s4, %s313
      %p315 = scmp.lt.s32.totalorder %s21, 1
      %s316 = scalar_select %p315, %s21, 1
      %p317 = scmp.lt.s32.totalorder %s22, 0
      %s318 = scalar_select %p317, %s22, 0
      %p319 = scmp.lt.s32.totalorder %s23, 0
      %s320 = scalar_select %p319, %s23, 0
      %s321 = sadd.s32 %s320, %s318
      %s322 = sadd.s32 %s321, %s316
      %s323 = smul.addr %s322, 4
      %s324 = scalar_lea.vmem %s5, %s323
      %v326 = vld [vmem:[%s301] sm:$0xff]
      %vm327 = vcmask 261120
      %v328 = vsel %vm327, %v326, 0.0
      %329 = vadd.xlane.f32.xlu0 %v328
      %v330 = vpop.xlane.xlu0 %329
      %v331 = vrcp.pop 32.0
      %v332 = vmul.f32 32.0, %v331
      %v333 = vsub.f32 1.0, %v332
      %v334 = vmul.f32 %v331, %v333
      %v335 = vadd.f32 %v331, %v334
      %vm336 = vweird.f32 %v331
      %v337 = vsel %vm336, %v331, %v335
      %v338 = vmul.f32 %v330, %v337
      %v339 = vsub.f32 %v326, %v338
      %v340 = vmul.f32 %v339, %v339
      %v341 = vsel %vm327, %v340, 0.0
      %342 = vadd.xlane.f32.xlu0 %v341
      %v343 = vpop.xlane.xlu0 %342
      %v344 = vmul.f32 %v343, %v337
      %v345 = vadd.f32 %v344, 1e-06
      %v346 = vrsqrt.pop %v345
      %v347 = vmul.f32 %v346, %v345
      %v348 = vmul.f32 %v347, %v346
      %v349 = vmul.f32 0.5, %v348
      %v350 = vsub.f32 1.5, %v349
      %v351 = vmul.f32 %v346, %v350
      %vm352 = vweird.f32 %v345
      %vm353 = vweird.f32 %v346
      %vm354 = vmor %vm352, %vm353
      %v355 = vsel %vm354, %v346, %v351
      %v356 = vmul.f32 %v339, %v355
      %v357 = vld [vmem:[%s304] sm:$0x1]
      %v358 = vadd.f32 %v357, 1.0
      %v360 = vperm.slane %v358, 0
      %v362 = vmul.f32 %v360, %v356
      %v363 = vld [vmem:[%s307] sm:$0x1]
      %v365 = vperm.slane %v363, 0
      %v367 = vadd.f32 %v362, %v365
      %v368 = vpack.c.bf16 %v367, %v367
      %v369 = vld [vmem:[%s311] sm:$0xf]
      %v370 = vld [vmem:[%s311 + $0x4] sm:$0xf]
      %v371 = vld [vmem:[%s311 + $0x8] sm:$0xf]
      %v372 = vld [vmem:[%s311 + $0xc] sm:$0xf]
      %v373 = vld [vmem:[%s314] sm:$0x1]
      %v375 = vperm.slane %v373, 0
      %v381 = vunpack.c.l.b16 %v369
      %v382 = vunpack.c.l.b16 %v370
      %v383 = vunpack.c.l.b16 %v371
      %v384 = vunpack.c.l.b16 %v372
      %v385 = vpack.c.b16 %v382, %v381
      %v386 = vpack.c.b16 %v384, %v383
      %v390 = vsel %vm327, %v368, 0
      %392 = vmatpush.bf16.msra.mxu0 0
      %393 = vmatpush.bf16.msra.mxu0 0
      %394 = vmatpush.bf16.msra.mxu0 0
      %395 = vmatpush.bf16.msra.mxu0 0
      %396 = vmatpush.bf16.msra.mxu0 0
      %397 = vmatpush.bf16.msra.mxu0 0
      %398 = vmatpush.bf16.msra.mxu0 %v386
      %399 = vmatpush.bf16.msra.mxu0 %v385
      %400 = vmatmul.bf16.gmra.mxu0 %v390
      %v401 = vpop.f32.mrf.mxu0
      %v402 = vadd.f32 %v375, %v401
      %v403 = vpop.f32.mrf.mxu0
      %404 = vdwg.mxu0
      %v405 = vpack.c.bf16 %v402, %v402
      %vm406 = vcmask 781312
      %407 = vst.msk [vmem:[%s324] sm:$0xf] %vm406, %v405
      %p408 = scmp.lt.s32.totalorder %s21, 1
      %s409 = scalar_select %p408, %s21, 1
      %p410 = scmp.lt.s32.totalorder %s22, 0
      %s411 = scalar_select %p410, %s22, 0
      %p412 = scmp.lt.s32.totalorder %s23, 0
      %s413 = scalar_select %p412, %s23, 0
      %s414 = sadd.s32 %s413, %s411
      %s415 = sadd.s32 %s414, %s409
      %s416 = smul.addr %s415, 4
      %s417 = scalar_lea.vmem %s5, %s416
      // Predicated region
      $region41: #{double_stream_block.13} parent=39 // pred_check
        %p418 = pneg %p189
      $region42: #{double_stream_block.13} parent=39 // pred_check_branch
        %420 = sbr.rel (%p418) target = $region44
      $region43: #{double_stream_block.13} parent=39 // pred_region
        _
      $region44: #{double_stream_block.13} parent=39 // pred_fallthru
        _
    $region40: #{double_stream_block.13} parent=5 // pred_fallthru
      _
    %p421 = scmp.le.s32.totalorder 2, %s11
    // Predicated region
    $region45: #{double_stream_block.13} parent=5 // pred_check
      %p422 = pneg %p421
    $region46: #{double_stream_block.13} parent=5 // pred_check_branch
      %424 = sbr.rel (%p422) target = $region48
    $region47: #{double_stream_block.13} parent=5 // pred_region
      %s425 = ssub.s32 %s11, 2
      // Predicated region
      $region49: #{double_stream_block.13} parent=47 // pred_check
        %p426 = pneg %p195
      $region50: #{double_stream_block.13} parent=47 // pred_check_branch
        %428 = sbr.rel (%p426) target = $region52
      $region51: #{double_stream_block.13} parent=47 // pred_region
        %p429 = scmp.lt.s32.totalorder %s24, 1
        %s430 = scalar_select %p429, %s24, 1
        %p431 = scmp.lt.s32.totalorder %s25, 0
        %s432 = scalar_select %p431, %s25, 0
        %p433 = scmp.lt.s32.totalorder %s26, 0
        %s434 = scalar_select %p433, %s26, 0
        %s435 = sadd.s32 %s434, %s432
        %s436 = sadd.s32 %s435, %s430
        %s437 = smul.addr %s436, 4
        %s438 = scalar_lea.vmem %s5, %s437
      $region52: #{double_stream_block.13} parent=47 // pred_fallthru
        _
    $region48: #{double_stream_block.13} parent=5 // pred_fallthru
      _
  $region6: #{double_stream_block.13} parent=0 // loop_footer
    %s15 = sadd.s32 1, %s11
  $region7: #{double_stream_block.13} parent=0 // loop_footer_branch
    %10 = sbr.rel target = $region3
  $region8: #{double_stream_block.13} parent=0 // loop_exit
    _

// kernel: double_stream_block.14
$region0: #{double_stream_block.14}
  #allocation0 [shape = 'u32[]', space=smem, size = 0x4, offset = 0x4, fixed_abs, tag = 'smem constant byte address 0x4 - core index']
  #allocation1 [shape = 'u32[72,128]{1,0:T(1,128)}', space=vmem, size = 0x9000, scoped, tag = 'internal scratch']
  %s0 = inlined_call_operand.vmem [shape: f32[2,4,32], index: 0, kind: input, shape index: {}]
  %s1 = inlined_call_operand.vmem [shape: f32[2,1,32], index: 1, kind: input, shape index: {}]
  %s2 = inlined_call_operand.vmem [shape: f32[2,1,32], index: 2, kind: input, shape index: {}]
  %s3 = inlined_call_operand.vmem [shape: bf16[32,96], index: 3, kind: input, shape index: {}]
  %s4 = inlined_call_operand.vmem [shape: f32[1,96], index: 4, kind: input, shape index: {}]
  %s5 = inlined_call_operand.vmem [shape: bf16[2,4,96], index: 5, kind: output, shape index: {}]
  %s6 = sld [smem:[#allocation0]]
  $region53: #{double_stream_block.14} parent=0
    _
  %s8 = ssub.s32 1, %s6
  %s9 = scalar_select 0, %s8, %s6
  loop: start=0, step=1, limit=4
  $region2: #{double_stream_block.14} parent=0 // loop_pre_header
    _
  $region3: #{double_stream_block.14} parent=0 // loop_header
    %s11 = sphi 0, %s15
    %p12 = scmp.ge.s32.totalorder %s11, 4
    %s18 = sphi 0, %s37
    %s19 = sphi 0, %s33
    %s20 = sphi 0, %s29
    %s21 = sphi 0, %s18
    %s22 = sphi 0, %s19
    %s23 = sphi 0, %s20
    %s24 = sphi 0, %s21
    %s25 = sphi 0, %s22
    %s26 = sphi 0, %s23
    %s42 = sphi 0, %s44
    %s45 = sphi 0, %s42
    %s46 = sphi 0, %s45
    %s62 = sphi 0, %s46
    %s68 = sphi 0, %s70
    %s71 = sphi 0, %s68
    %s72 = sphi 0, %s71
    %s88 = sphi 0, %s72
    %s94 = sphi 0, %s96
    %s97 = sphi 0, %s94
    %s98 = sphi 0, %s97
    %s114 = sphi 0, %s98
    %s120 = sphi 0, %s122
    %s123 = sphi 0, %s120
    %s124 = sphi 0, %s123
    %s140 = sphi 0, %s124
    %s146 = sphi 0, %s148
    %s149 = sphi 0, %s146
    %s150 = sphi 0, %s149
    %s166 = sphi 0, %s150
    %s176 = sphi 0, %s178
    %s179 = sphi 0, %s176
    %s180 = sphi 0, %s179
    %s196 = sphi 0, %s180
  $region4: #{double_stream_block.14} parent=0 // loop_header_branch
    %14 = sbr.rel (%p12) target = $region8
  $region5: #{double_stream_block.14} parent=0 // loop_body
    %s16 = ssub.s32 %s11, 1
    %s17 = ssub.s32 %s11, 2
    %s27 = sadd.s32 1, %s20
    %p28 = scmp.ge.s32.totalorder %s27, 1
    %s29 = scalar_select %p28, 0, %s27
    %s30 = sadd.s32 1, %s19
    %s31 = scalar_select %p28, %s30, %s19
    %p32 = scmp.ge.s32.totalorder %s31, 1
    %s33 = scalar_select %p32, 0, %s31
    %s34 = sadd.s32 1, %s18
    %s35 = scalar_select %p32, %s34, %s18
    %p36 = scmp.ge.s32.totalorder %s35, 2
    %s37 = scalar_select %p36, 0, %s35
    %s38 = ssub.s32 %s18, %s37
    %s39 = ssub.s32 %s19, %s33
    %s40 = sor.u32 %s38, %s39
    %p41 = scmp.eq.s32.totalorder %s40, 0
    %s43 = sadd.s32 %s42, 1
    %s44 = scalar_select %p41, %s42, %s43
    %p47 = pneg %p41
    %p48 = scmp.eq.s32.totalorder %s11, 1
    %p49 = por %p47, %p48
    %p50 = scmp.ne.s32.totalorder %s42, %s45
    %p51 = scmp.eq.s32.totalorder %s11, 0
    %p52 = por %p50, %p51
    %p53 = scmp.ne.s32.totalorder %s42, %s45
    %p54 = scmp.eq.s32.totalorder %s16, 1
    %p55 = por %p53, %p54
    %p56 = scmp.ne.s32.totalorder %s45, %s46
    %p57 = scmp.eq.s32.totalorder %s16, 0
    %p58 = por %p56, %p57
    %p59 = scmp.ne.s32.totalorder %s45, %s46
    %p60 = scmp.eq.s32.totalorder %s17, 1
    %p61 = por %p59, %p60
    %p63 = scmp.ne.s32.totalorder %s46, %s62
    %p64 = scmp.eq.s32.totalorder %s17, 0
    %p65 = por %p63, %p64
    %s66 = ssub.s32 %s18, %s37
    %p67 = scmp.eq.s32.totalorder %s66, 0
    %s69 = sadd.s32 %s68, 1
    %s70 = scalar_select %p67, %s68, %s69
    %p73 = pneg %p67
    %p74 = scmp.eq.s32.totalorder %s11, 1
    %p75 = por %p73, %p74
    %p76 = scmp.ne.s32.totalorder %s68, %s71
    %p77 = scmp.eq.s32.totalorder %s11, 0
    %p78 = por %p76, %p77
    %p79 = scmp.ne.s32.totalorder %s68, %s71
    %p80 = scmp.eq.s32.totalorder %s16, 1
    %p81 = por %p79, %p80
    %p82 = scmp.ne.s32.totalorder %s71, %s72
    %p83 = scmp.eq.s32.totalorder %s16, 0
    %p84 = por %p82, %p83
    %p85 = scmp.ne.s32.totalorder %s71, %s72
    %p86 = scmp.eq.s32.totalorder %s17, 1
    %p87 = por %p85, %p86
    %p89 = scmp.ne.s32.totalorder %s72, %s88
    %p90 = scmp.eq.s32.totalorder %s17, 0
    %p91 = por %p89, %p90
    %s92 = ssub.s32 %s18, %s37
    %p93 = scmp.eq.s32.totalorder %s92, 0
    %s95 = sadd.s32 %s94, 1
    %s96 = scalar_select %p93, %s94, %s95
    %p99 = pneg %p93
    %p100 = scmp.eq.s32.totalorder %s11, 1
    %p101 = por %p99, %p100
    %p102 = scmp.ne.s32.totalorder %s94, %s97
    %p103 = scmp.eq.s32.totalorder %s11, 0
    %p104 = por %p102, %p103
    %p105 = scmp.ne.s32.totalorder %s94, %s97
    %p106 = scmp.eq.s32.totalorder %s16, 1
    %p107 = por %p105, %p106
    %p108 = scmp.ne.s32.totalorder %s97, %s98
    %p109 = scmp.eq.s32.totalorder %s16, 0
    %p110 = por %p108, %p109
    %p111 = scmp.ne.s32.totalorder %s97, %s98
    %p112 = scmp.eq.s32.totalorder %s17, 1
    %p113 = por %p111, %p112
    %p115 = scmp.ne.s32.totalorder %s98, %s114
    %p116 = scmp.eq.s32.totalorder %s17, 0
    %p117 = por %p115, %p116
    %s118 = ssub.s32 %s20, %s29
    %p119 = scmp.eq.s32.totalorder %s118, 0
    %s121 = sadd.s32 %s120, 1
    %s122 = scalar_select %p119, %s120, %s121
    %p125 = pneg %p119
    %p126 = scmp.eq.s32.totalorder %s11, 1
    %p127 = por %p125, %p126
    %p128 = scmp.ne.s32.totalorder %s120, %s123
    %p129 = scmp.eq.s32.totalorder %s11, 0
    %p130 = por %p128, %p129
    %p131 = scmp.ne.s32.totalorder %s120, %s123
    %p132 = scmp.eq.s32.totalorder %s16, 1
    %p133 = por %p131, %p132
    %p134 = scmp.ne.s32.totalorder %s123, %s124
    %p135 = scmp.eq.s32.totalorder %s16, 0
    %p136 = por %p134, %p135
    %p137 = scmp.ne.s32.totalorder %s123, %s124
    %p138 = scmp.eq.s32.totalorder %s17, 1
    %p139 = por %p137, %p138
    %p141 = scmp.ne.s32.totalorder %s124, %s140
    %p142 = scmp.eq.s32.totalorder %s17, 0
    %p143 = por %p141, %p142
    %s144 = ssub.s32 %s20, %s29
    %p145 = scmp.eq.s32.totalorder %s144, 0
    %s147 = sadd.s32 %s146, 1
    %s148 = scalar_select %p145, %s146, %s147
    %p151 = pneg %p145
    %p152 = scmp.eq.s32.totalorder %s11, 1
    %p153 = por %p151, %p152
    %p154 = scmp.ne.s32.totalorder %s146, %s149
    %p155 = scmp.eq.s32.totalorder %s11, 0
    %p156 = por %p154, %p155
    %p157 = scmp.ne.s32.totalorder %s146, %s149
    %p158 = scmp.eq.s32.totalorder %s16, 1
    %p159 = por %p157, %p158
    %p160 = scmp.ne.s32.totalorder %s149, %s150
    %p161 = scmp.eq.s32.totalorder %s16, 0
    %p162 = por %p160, %p161
    %p163 = scmp.ne.s32.totalorder %s149, %s150
    %p164 = scmp.eq.s32.totalorder %s17, 1
    %p165 = por %p163, %p164
    %p167 = scmp.ne.s32.totalorder %s150, %s166
    %p168 = scmp.eq.s32.totalorder %s17, 0
    %p169 = por %p167, %p168
    %s170 = ssub.s32 %s18, %s37
    %s171 = ssub.s32 %s19, %s33
    %s172 = sor.u32 %s170, %s171
    %s173 = ssub.s32 %s20, %s29
    %s174 = sor.u32 %s172, %s173
    %p175 = scmp.eq.s32.totalorder %s174, 0
    %s177 = sadd.s32 %s176, 1
    %s178 = scalar_select %p175, %s176, %s177
    %p181 = pneg %p175
    %p182 = scmp.eq.s32.totalorder %s11, 1
    %p183 = por %p181, %p182
    %p184 = scmp.ne.s32.totalorder %s176, %s179
    %p185 = scmp.eq.s32.totalorder %s11, 0
    %p186 = por %p184, %p185
    %p187 = scmp.ne.s32.totalorder %s176, %s179
    %p188 = scmp.eq.s32.totalorder %s16, 1
    %p189 = por %p187, %p188
    %p190 = scmp.ne.s32.totalorder %s179, %s180
    %p191 = scmp.eq.s32.totalorder %s16, 0
    %p192 = por %p190, %p191
    %p193 = scmp.ne.s32.totalorder %s179, %s180
    %p194 = scmp.eq.s32.totalorder %s17, 1
    %p195 = por %p193, %p194
    %p197 = scmp.ne.s32.totalorder %s180, %s196
    %p198 = scmp.eq.s32.totalorder %s17, 0
    %p199 = por %p197, %p198
    %p200 = scmp.le.s32.totalorder 1, %s11
    %p201 = scmp.lt.s32.totalorder %s11, 3
    %p202 = pnand %p200, %p201
    %p203 = pneg %p202
    // Predicated region
    $region9: #{double_stream_block.14} parent=5 // pred_check
      _
    $region10: #{double_stream_block.14} parent=5 // pred_check_branch
      %205 = sbr.rel (%p202) target = $region12
    $region11: #{double_stream_block.14} parent=5 // pred_region
      %s206 = ssub.s32 %s11, 1
      // Predicated region
      $region13: #{double_stream_block.14} parent=11 // pred_check
        %p207 = pneg %p136
      $region14: #{double_stream_block.14} parent=11 // pred_check_branch
        %209 = sbr.rel (%p207) target = $region16
      $region15: #{double_stream_block.14} parent=11 // pred_region
        %p210 = scmp.lt.s32.totalorder %s23, 0
        %s211 = scalar_select %p210, %s23, 0
        %s212 = smul.addr %s211, 4
        %s213 = scalar_lea.vmem %s3, %s212
      $region16: #{double_stream_block.14} parent=11 // pred_fallthru
        _
      // Predicated region
      $region17: #{double_stream_block.14} parent=11 // pred_check
        %p214 = pneg %p162
      $region18: #{double_stream_block.14} parent=11 // pred_check_branch
        %216 = sbr.rel (%p214) target = $region20
      $region19: #{double_stream_block.14} parent=11 // pred_region
        %p217 = scmp.lt.s32.totalorder %s23, 0
        %s218 = scalar_select %p217, %s23, 0
        %s219 = scalar_lea.vmem %s4, %s218
      $region20: #{double_stream_block.14} parent=11 // pred_fallthru
        _
    $region12: #{double_stream_block.14} parent=5 // pred_fallthru
      _
    %p220 = scmp.lt.s32.totalorder %s11, 2
    // Predicated region
    $region21: #{double_stream_block.14} parent=5 // pred_check
      %p221 = pneg %p220
    $region22: #{double_stream_block.14} parent=5 // pred_check_branch
      %223 = sbr.rel (%p221) target = $region24
    $region23: #{double_stream_block.14} parent=5 // pred_region
      // Predicated region
      $region25: #{double_stream_block.14} parent=23 // pred_check
        %p224 = pneg %p52
      $region26: #{double_stream_block.14} parent=23 // pred_check_branch
        %226 = sbr.rel (%p224) target = $region28
      $region27: #{double_stream_block.14} parent=23 // pred_region
        %p227 = scmp.lt.s32.totalorder %s18, 1
        %s228 = scalar_select %p227, %s18, 1
        %p229 = scmp.lt.s32.totalorder %s19, 0
        %s230 = scalar_select %p229, %s19, 0
        %s231 = sadd.s32 %s230, %s228
        %s232 = smul.addr %s231, 4
        %s233 = scalar_lea.vmem %s0, %s232
      $region28: #{double_stream_block.14} parent=23 // pred_fallthru
        _
      // Predicated region
      $region29: #{double_stream_block.14} parent=23 // pred_check
        %p234 = pneg %p78
      $region30: #{double_stream_block.14} parent=23 // pred_check_branch
        %236 = sbr.rel (%p234) target = $region32
      $region31: #{double_stream_block.14} parent=23 // pred_region
        %p237 = scmp.lt.s32.totalorder %s18, 1
        %s238 = scalar_select %p237, %s18, 1
        %s239 = scalar_lea.vmem %s1, %s238
      $region32: #{double_stream_block.14} parent=23 // pred_fallthru
        _
      // Predicated region
      $region33: #{double_stream_block.14} parent=23 // pred_check
        %p240 = pneg %p104
      $region34: #{double_stream_block.14} parent=23 // pred_check_branch
        %242 = sbr.rel (%p240) target = $region36
      $region35: #{double_stream_block.14} parent=23 // pred_region
        %p243 = scmp.lt.s32.totalorder %s18, 1
        %s244 = scalar_select %p243, %s18, 1
        %s245 = scalar_lea.vmem %s2, %s244
      $region36: #{double_stream_block.14} parent=23 // pred_fallthru
        _
    $region24: #{double_stream_block.14} parent=5 // pred_fallthru
      _
    %p246 = scmp.le.s32.totalorder 1, %s11
    %p247 = scmp.lt.s32.totalorder %s11, 3
    %p248 = pnand %p246, %p247
    %p249 = pneg %p248
    // Predicated region
    $region37: #{double_stream_block.14} parent=5 // pred_check
      _
    $region38: #{double_stream_block.14} parent=5 // pred_check_branch
      %251 = sbr.rel (%p248) target = $region40
    $region39: #{double_stream_block.14} parent=5 // pred_region
      %s252 = ssub.s32 %s11, 1
      %p253 = scmp.lt.s32.totalorder %s21, 1
      %s254 = scalar_select %p253, %s21, 1
      %p255 = scmp.lt.s32.totalorder %s22, 0
      %s256 = scalar_select %p255, %s22, 0
      %s257 = sadd.s32 %s256, %s254
      %s258 = smul.addr %s257, 4
      %s259 = scalar_lea.vmem %s0, %s258
      %p260 = pneg %p58
      %p261 = pneg %p55
      %p262 = scmp.lt.s32.totalorder %s21, 1
      %s263 = scalar_select %p262, %s21, 1
      %s264 = scalar_lea.vmem %s1, %s263
      %p265 = pneg %p84
      %p266 = pneg %p81
      %p267 = scmp.lt.s32.totalorder %s21, 1
      %s268 = scalar_select %p267, %s21, 1
      %s269 = scalar_lea.vmem %s2, %s268
      %p270 = pneg %p110
      %p271 = pneg %p107
      %p272 = scmp.lt.s32.totalorder %s23, 0
      %s273 = scalar_select %p272, %s23, 0
      %s274 = smul.addr %s273, 4
      %s275 = scalar_lea.vmem %s3, %s274
      %p276 = pneg %p136
      %p277 = pneg %p133
      %p278 = scmp.lt.s32.totalorder %s23, 0
      %s279 = scalar_select %p278, %s23, 0
      %s280 = scalar_lea.vmem %s4, %s279
      %p281 = pneg %p162
      %p282 = pneg %p159
      %p283 = pneg %p192
      %p284 = pneg %p189
      %p285 = scmp.lt.s32.totalorder %s21, 1
      %s286 = scalar_select %p285, %s21, 1
      %p287 = scmp.lt.s32.totalorder %s22, 0
      %s288 = scalar_select %p287, %s22, 0
      %p289 = scmp.lt.s32.totalorder %s23, 0
      %s290 = scalar_select %p289, %s23, 0
      %s291 = sadd.s32 %s290, %s288
      %s292 = sadd.s32 %s291, %s286
      %s293 = smul.addr %s292, 2
      %s294 = scalar_lea.vmem %s5, %s293
      %p295 = scmp.lt.s32.totalorder %s21, 1
      %s296 = scalar_select %p295, %s21, 1
      %p297 = scmp.lt.s32.totalorder %s22, 0
      %s298 = scalar_select %p297, %s22, 0
      %s299 = sadd.s32 %s298, %s296
      %s300 = smul.addr %s299, 4
      %s301 = scalar_lea.vmem %s0, %s300
      %p302 = scmp.lt.s32.totalorder %s21, 1
      %s303 = scalar_select %p302, %s21, 1
      %s304 = scalar_lea.vmem %s1, %s303
      %p305 = scmp.lt.s32.totalorder %s21, 1
      %s306 = scalar_select %p305, %s21, 1
      %s307 = scalar_lea.vmem %s2, %s306
      %p308 = scmp.lt.s32.totalorder %s23, 0
      %s309 = scalar_select %p308, %s23, 0
      %s310 = smul.addr %s309, 4
      %s311 = scalar_lea.vmem %s3, %s310
      %p312 = scmp.lt.s32.totalorder %s23, 0
      %s313 = scalar_select %p312, %s23, 0
      %s314 = scalar_lea.vmem %s4, %s313
      %p315 = scmp.lt.s32.totalorder %s21, 1
      %s316 = scalar_select %p315, %s21, 1
      %p317 = scmp.lt.s32.totalorder %s22, 0
      %s318 = scalar_select %p317, %s22, 0
      %p319 = scmp.lt.s32.totalorder %s23, 0
      %s320 = scalar_select %p319, %s23, 0
      %s321 = sadd.s32 %s320, %s318
      %s322 = sadd.s32 %s321, %s316
      %s323 = smul.addr %s322, 2
      %s324 = scalar_lea.vmem %s5, %s323
      %v326 = vld [vmem:[%s301] sm:$0xf]
      %vm327 = vcmask 257024
      %v328 = vsel %vm327, %v326, 0.0
      %329 = vadd.xlane.f32.xlu0 %v328
      %v330 = vpop.xlane.xlu0 %329
      %v331 = vrcp.pop 32.0
      %v332 = vmul.f32 32.0, %v331
      %v333 = vsub.f32 1.0, %v332
      %v334 = vmul.f32 %v331, %v333
      %v335 = vadd.f32 %v331, %v334
      %vm336 = vweird.f32 %v331
      %v337 = vsel %vm336, %v331, %v335
      %v338 = vmul.f32 %v330, %v337
      %v339 = vsub.f32 %v326, %v338
      %v340 = vmul.f32 %v339, %v339
      %v341 = vsel %vm327, %v340, 0.0
      %342 = vadd.xlane.f32.xlu0 %v341
      %v343 = vpop.xlane.xlu0 %342
      %v344 = vmul.f32 %v343, %v337
      %v345 = vadd.f32 %v344, 1e-06
      %v346 = vrsqrt.pop %v345
      %v347 = vmul.f32 %v346, %v345
      %v348 = vmul.f32 %v347, %v346
      %v349 = vmul.f32 0.5, %v348
      %v350 = vsub.f32 1.5, %v349
      %v351 = vmul.f32 %v346, %v350
      %vm352 = vweird.f32 %v345
      %vm353 = vweird.f32 %v346
      %vm354 = vmor %vm352, %vm353
      %v355 = vsel %vm354, %v346, %v351
      %v356 = vmul.f32 %v339, %v355
      %v357 = vld [vmem:[%s304] sm:$0x1]
      %v358 = vadd.f32 %v357, 1.0
      %v360 = vperm.slane %v358, 0
      %v362 = vmul.f32 %v360, %v356
      %v363 = vld [vmem:[%s307] sm:$0x1]
      %v365 = vperm.slane %v363, 0
      %v367 = vadd.f32 %v362, %v365
      %v368 = vpack.c.bf16 %v367, %v367
      %v369 = vld [vmem:[%s311] sm:$0xf]
      %v370 = vld [vmem:[%s311 + $0x4] sm:$0xf]
      %v371 = vld [vmem:[%s311 + $0x8] sm:$0xf]
      %v372 = vld [vmem:[%s311 + $0xc] sm:$0xf]
      %v373 = vld [vmem:[%s314] sm:$0x1]
      %v375 = vperm.slane %v373, 0
      %v381 = vunpack.c.l.b16 %v369
      %v382 = vunpack.c.l.b16 %v370
      %v383 = vunpack.c.l.b16 %v371
      %v384 = vunpack.c.l.b16 %v372
      %v385 = vpack.c.b16 %v382, %v381
      %v386 = vpack.c.b16 %v384, %v383
      %vm389 = vcmask 261120
      %v391 = vsel %vm389, %v368, 0
      %393 = vmatpush.bf16.msra.mxu0 0
      %394 = vmatpush.bf16.msra.mxu0 0
      %395 = vmatpush.bf16.msra.mxu0 0
      %396 = vmatpush.bf16.msra.mxu0 0
      %397 = vmatpush.bf16.msra.mxu0 0
      %398 = vmatpush.bf16.msra.mxu0 0
      %399 = vmatpush.bf16.msra.mxu0 %v386
      %400 = vmatpush.bf16.msra.mxu0 %v385
      %401 = vmatmul.bf16.gmra.mxu0 %v391
      %v402 = vpop.f32.mrf.mxu0
      %v403 = vadd.f32 %v375, %v402
      %v404 = vpop.f32.mrf.mxu0
      %405 = vdwg.mxu0
      %v406 = vpack.c.bf16 %v403, %v403
      %vm407 = vcmask 779264
      %408 = vst.msk [vmem:[%s324] sm:$0x3] %vm407, %v406
      %p409 = scmp.lt.s32.totalorder %s21, 1
      %s410 = scalar_select %p409, %s21, 1
      %p411 = scmp.lt.s32.totalorder %s22, 0
      %s412 = scalar_select %p411, %s22, 0
      %p413 = scmp.lt.s32.totalorder %s23, 0
      %s414 = scalar_select %p413, %s23, 0
      %s415 = sadd.s32 %s414, %s412
      %s416 = sadd.s32 %s415, %s410
      %s417 = smul.addr %s416, 2
      %s418 = scalar_lea.vmem %s5, %s417
      // Predicated region
      $region41: #{double_stream_block.14} parent=39 // pred_check
        %p419 = pneg %p189
      $region42: #{double_stream_block.14} parent=39 // pred_check_branch
        %421 = sbr.rel (%p419) target = $region44
      $region43: #{double_stream_block.14} parent=39 // pred_region
        _
      $region44: #{double_stream_block.14} parent=39 // pred_fallthru
        _
    $region40: #{double_stream_block.14} parent=5 // pred_fallthru
      _
    %p422 = scmp.le.s32.totalorder 2, %s11
    // Predicated region
    $region45: #{double_stream_block.14} parent=5 // pred_check
      %p423 = pneg %p422
    $region46: #{double_stream_block.14} parent=5 // pred_check_branch
      %425 = sbr.rel (%p423) target = $region48
    $region47: #{double_stream_block.14} parent=5 // pred_region
      %s426 = ssub.s32 %s11, 2
      // Predicated region
      $region49: #{double_stream_block.14} parent=47 // pred_check
        %p427 = pneg %p195
      $region50: #{double_stream_block.14} parent=47 // pred_check_branch
        %429 = sbr.rel (%p427) target = $region52
      $region51: #{double_stream_block.14} parent=47 // pred_region
        %p430 = scmp.lt.s32.totalorder %s24, 1
        %s431 = scalar_select %p430, %s24, 1
        %p432 = scmp.lt.s32.totalorder %s25, 0
        %s433 = scalar_select %p432, %s25, 0
        %p434 = scmp.lt.s32.totalorder %s26, 0
        %s435 = scalar_select %p434, %s26, 0
        %s436 = sadd.s32 %s435, %s433
        %s437 = sadd.s32 %s436, %s431
        %s438 = smul.addr %s437, 2
        %s439 = scalar_lea.vmem %s5, %s438
      $region52: #{double_stream_block.14} parent=47 // pred_fallthru
        _
    $region48: #{double_stream_block.14} parent=5 // pred_fallthru
      _
  $region6: #{double_stream_block.14} parent=0 // loop_footer
    %s15 = sadd.s32 1, %s11
  $region7: #{double_stream_block.14} parent=0 // loop_footer_branch
    %10 = sbr.rel target = $region3
  $region8: #{double_stream_block.14} parent=0 // loop_exit
    _

// kernel: double_stream_block.19
$region0: #{double_stream_block.19}
  #allocation0 [shape = 'u32[]', space=smem, size = 0x4, offset = 0x4, fixed_abs, tag = 'smem constant byte address 0x4 - core index']
  #allocation1 [shape = 'u32[72,128]{1,0:T(1,128)}', space=vmem, size = 0x9000, scoped, tag = 'internal scratch']
  #allocation2 [shape = 'f32[4,32]{1,0:T(4,128)}', space=vmem, size = 0x800, scoped, tag = 'scratch operand']
  %s0 = inlined_call_operand.vmem [shape: bf16[2,4,32], index: 0, kind: input, shape index: {}]
  %s1 = inlined_call_operand.vmem [shape: bf16[32,32], index: 1, kind: input, shape index: {}]
  %s2 = inlined_call_operand.vmem [shape: f32[1,32], index: 2, kind: input, shape index: {}]
  %s3 = inlined_call_operand.vmem [shape: f32[2,1,32], index: 3, kind: input, shape index: {}]
  %s4 = inlined_call_operand.vmem [shape: f32[2,4,32], index: 4, kind: input, shape index: {}]
  %s5 = inlined_call_operand.vmem [shape: f32[2,4,32], index: 5, kind: output, shape index: {}]
  %s6 = sld [smem:[#allocation0]]
  $region61: #{double_stream_block.19} parent=0
    _
  %s8 = ssub.s32 1, %s6
  %s9 = scalar_select 0, %s8, %s6
  loop: start=0, step=1, limit=4
  $region2: #{double_stream_block.19} parent=0 // loop_pre_header
    _
  $region3: #{double_stream_block.19} parent=0 // loop_header
    %s11 = sphi 0, %s15
    %p12 = scmp.ge.s32.totalorder %s11, 4
    %s18 = sphi 0, %s44
    %s19 = sphi 0, %s40
    %s20 = sphi 0, %s36
    %s21 = sphi 0, %s32
    %s22 = sphi 0, %s18
    %s23 = sphi 0, %s19
    %s24 = sphi 0, %s20
    %s25 = sphi 0, %s21
    %s26 = sphi 0, %s22
    %s27 = sphi 0, %s23
    %s28 = sphi 0, %s24
    %s29 = sphi 0, %s25
    %s51 = sphi 0, %s53
    %s54 = sphi 0, %s51
    %s55 = sphi 0, %s54
    %s71 = sphi 0, %s55
    %s79 = sphi 0, %s81
    %s82 = sphi 0, %s79
    %s83 = sphi 0, %s82
    %s99 = sphi 0, %s83
    %s105 = sphi 0, %s107
    %s108 = sphi 0, %s105
    %s109 = sphi 0, %s108
    %s125 = sphi 0, %s109
    %s133 = sphi 0, %s135
    %s136 = sphi 0, %s133
    %s137 = sphi 0, %s136
    %s153 = sphi 0, %s137
    %s163 = sphi 0, %s165
    %s166 = sphi 0, %s163
    %s167 = sphi 0, %s166
    %s183 = sphi 0, %s167
    %s193 = sphi 0, %s195
    %s196 = sphi 0, %s193
    %s197 = sphi 0, %s196
    %s213 = sphi 0, %s197
  $region4: #{double_stream_block.19} parent=0 // loop_header_branch
    %14 = sbr.rel (%p12) target = $region8
  $region5: #{double_stream_block.19} parent=0 // loop_body
    %s16 = ssub.s32 %s11, 1
    %s17 = ssub.s32 %s11, 2
    %s30 = sadd.s32 1, %s21
    %p31 = scmp.ge.s32.totalorder %s30, 1
    %s32 = scalar_select %p31, 0, %s30
    %s33 = sadd.s32 1, %s20
    %s34 = scalar_select %p31, %s33, %s20
    %p35 = scmp.ge.s32.totalorder %s34, 1
    %s36 = scalar_select %p35, 0, %s34
    %s37 = sadd.s32 1, %s19
    %s38 = scalar_select %p35, %s37, %s19
    %p39 = scmp.ge.s32.totalorder %s38, 1
    %s40 = scalar_select %p39, 0, %s38
    %s41 = sadd.s32 1, %s18
    %s42 = scalar_select %p39, %s41, %s18
    %p43 = scmp.ge.s32.totalorder %s42, 2
    %s44 = scalar_select %p43, 0, %s42
    %s45 = ssub.s32 %s18, %s44
    %s46 = ssub.s32 %s19, %s40
    %s47 = sor.u32 %s45, %s46
    %s48 = ssub.s32 %s21, %s32
    %s49 = sor.u32 %s47, %s48
    %p50 = scmp.eq.s32.totalorder %s49, 0
    %s52 = sadd.s32 %s51, 1
    %s53 = scalar_select %p50, %s51, %s52
    %p56 = pneg %p50
    %p57 = scmp.eq.s32.totalorder %s11, 1
    %p58 = por %p56, %p57
    %p59 = scmp.ne.s32.totalorder %s51, %s54
    %p60 = scmp.eq.s32.totalorder %s11, 0
    %p61 = por %p59, %p60
    %p62 = scmp.ne.s32.totalorder %s51, %s54
    %p63 = scmp.eq.s32.totalorder %s16, 1
    %p64 = por %p62, %p63
    %p65 = scmp.ne.s32.totalorder %s54, %s55
    %p66 = scmp.eq.s32.totalorder %s16, 0
    %p67 = por %p65, %p66
    %p68 = scmp.ne.s32.totalorder %s54, %s55
    %p69 = scmp.eq.s32.totalorder %s17, 1
    %p70 = por %p68, %p69
    %p72 = scmp.ne.s32.totalorder %s55, %s71
    %p73 = scmp.eq.s32.totalorder %s17, 0
    %p74 = por %p72, %p73
    %s75 = ssub.s32 %s21, %s32
    %s76 = ssub.s32 %s20, %s36
    %s77 = sor.u32 %s75, %s76
    %p78 = scmp.eq.s32.totalorder %s77, 0
    %s80 = sadd.s32 %s79, 1
    %s81 = scalar_select %p78, %s79, %s80
    %p84 = pneg %p78
    %p85 = scmp.eq.s32.totalorder %s11, 1
    %p86 = por %p84, %p85
    %p87 = scmp.ne.s32.totalorder %s79, %s82
    %p88 = scmp.eq.s32.totalorder %s11, 0
    %p89 = por %p87, %p88
    %p90 = scmp.ne.s32.totalorder %s79, %s82
    %p91 = scmp.eq.s32.totalorder %s16, 1
    %p92 = por %p90, %p91
    %p93 = scmp.ne.s32.totalorder %s82, %s83
    %p94 = scmp.eq.s32.totalorder %s16, 0
    %p95 = por %p93, %p94
    %p96 = scmp.ne.s32.totalorder %s82, %s83
    %p97 = scmp.eq.s32.totalorder %s17, 1
    %p98 = por %p96, %p97
    %p100 = scmp.ne.s32.totalorder %s83, %s99
    %p101 = scmp.eq.s32.totalorder %s17, 0
    %p102 = por %p100, %p101
    %s103 = ssub.s32 %s20, %s36
    %p104 = scmp.eq.s32.totalorder %s103, 0
    %s106 = sadd.s32 %s105, 1
    %s107 = scalar_select %p104, %s105, %s106
    %p110 = pneg %p104
    %p111 = scmp.eq.s32.totalorder %s11, 1
    %p112 = por %p110, %p111
    %p113 = scmp.ne.s32.totalorder %s105, %s108
    %p114 = scmp.eq.s32.totalorder %s11, 0
    %p115 = por %p113, %p114
    %p116 = scmp.ne.s32.totalorder %s105, %s108
    %p117 = scmp.eq.s32.totalorder %s16, 1
    %p118 = por %p116, %p117
    %p119 = scmp.ne.s32.totalorder %s108, %s109
    %p120 = scmp.eq.s32.totalorder %s16, 0
    %p121 = por %p119, %p120
    %p122 = scmp.ne.s32.totalorder %s108, %s109
    %p123 = scmp.eq.s32.totalorder %s17, 1
    %p124 = por %p122, %p123
    %p126 = scmp.ne.s32.totalorder %s109, %s125
    %p127 = scmp.eq.s32.totalorder %s17, 0
    %p128 = por %p126, %p127
    %s129 = ssub.s32 %s18, %s44
    %s130 = ssub.s32 %s20, %s36
    %s131 = sor.u32 %s129, %s130
    %p132 = scmp.eq.s32.totalorder %s131, 0
    %s134 = sadd.s32 %s133, 1
    %s135 = scalar_select %p132, %s133, %s134
    %p138 = pneg %p132
    %p139 = scmp.eq.s32.totalorder %s11, 1
    %p140 = por %p138, %p139
    %p141 = scmp.ne.s32.totalorder %s133, %s136
    %p142 = scmp.eq.s32.totalorder %s11, 0
    %p143 = por %p141, %p142
    %p144 = scmp.ne.s32.totalorder %s133, %s136
    %p145 = scmp.eq.s32.totalorder %s16, 1
    %p146 = por %p144, %p145
    %p147 = scmp.ne.s32.totalorder %s136, %s137
    %p148 = scmp.eq.s32.totalorder %s16, 0
    %p149 = por %p147, %p148
    %p150 = scmp.ne.s32.totalorder %s136, %s137
    %p151 = scmp.eq.s32.totalorder %s17, 1
    %p152 = por %p150, %p151
    %p154 = scmp.ne.s32.totalorder %s137, %s153
    %p155 = scmp.eq.s32.totalorder %s17, 0
    %p156 = por %p154, %p155
    %s157 = ssub.s32 %s18, %s44
    %s158 = ssub.s32 %s19, %s40
    %s159 = sor.u32 %s157, %s158
    %s160 = ssub.s32 %s20, %s36
    %s161 = sor.u32 %s159, %s160
    %p162 = scmp.eq.s32.totalorder %s161, 0
    %s164 = sadd.s32 %s163, 1
    %s165 = scalar_select %p162, %s163, %s164
    %p168 = pneg %p162
    %p169 = scmp.eq.s32.totalorder %s11, 1
    %p170 = por %p168, %p169
    %p171 = scmp.ne.s32.totalorder %s163, %s166
    %p172 = scmp.eq.s32.totalorder %s11, 0
    %p173 = por %p171, %p172
    %p174 = scmp.ne.s32.totalorder %s163, %s166
    %p175 = scmp.eq.s32.totalorder %s16, 1
    %p176 = por %p174, %p175
    %p177 = scmp.ne.s32.totalorder %s166, %s167
    %p178 = scmp.eq.s32.totalorder %s16, 0
    %p179 = por %p177, %p178
    %p180 = scmp.ne.s32.totalorder %s166, %s167
    %p181 = scmp.eq.s32.totalorder %s17, 1
    %p182 = por %p180, %p181
    %p184 = scmp.ne.s32.totalorder %s167, %s183
    %p185 = scmp.eq.s32.totalorder %s17, 0
    %p186 = por %p184, %p185
    %s187 = ssub.s32 %s18, %s44
    %s188 = ssub.s32 %s19, %s40
    %s189 = sor.u32 %s187, %s188
    %s190 = ssub.s32 %s20, %s36
    %s191 = sor.u32 %s189, %s190
    %p192 = scmp.eq.s32.totalorder %s191, 0
    %s194 = sadd.s32 %s193, 1
    %s195 = scalar_select %p192, %s193, %s194
    %p198 = pneg %p192
    %p199 = scmp.eq.s32.totalorder %s11, 1
    %p200 = por %p198, %p199
    %p201 = scmp.ne.s32.totalorder %s193, %s196
    %p202 = scmp.eq.s32.totalorder %s11, 0
    %p203 = por %p201, %p202
    %p204 = scmp.ne.s32.totalorder %s193, %s196
    %p205 = scmp.eq.s32.totalorder %s16, 1
    %p206 = por %p204, %p205
    %p207 = scmp.ne.s32.totalorder %s196, %s197
    %p208 = scmp.eq.s32.totalorder %s16, 0
    %p209 = por %p207, %p208
    %p210 = scmp.ne.s32.totalorder %s196, %s197
    %p211 = scmp.eq.s32.totalorder %s17, 1
    %p212 = por %p210, %p211
    %p214 = scmp.ne.s32.totalorder %s197, %s213
    %p215 = scmp.eq.s32.totalorder %s17, 0
    %p216 = por %p214, %p215
    %p217 = scmp.le.s32.totalorder 1, %s11
    %p218 = scmp.lt.s32.totalorder %s11, 3
    %p219 = pnand %p217, %p218
    %p220 = pneg %p219
    // Predicated region
    $region9: #{double_stream_block.19} parent=5 // pred_check
      _
    $region10: #{double_stream_block.19} parent=5 // pred_check_branch
      %222 = sbr.rel (%p219) target = $region12
    $region11: #{double_stream_block.19} parent=5 // pred_region
      %s223 = ssub.s32 %s11, 1
      // Predicated region
      $region13: #{double_stream_block.19} parent=11 // pred_check
        %p224 = pneg %p95
      $region14: #{double_stream_block.19} parent=11 // pred_check_branch
        %226 = sbr.rel (%p224) target = $region16
      $region15: #{double_stream_block.19} parent=11 // pred_region
        %s227 = smul.u32 4, %s25
        %p228 = scmp.lt.s32.totalorder %s227, 3
        %s229 = scalar_select %p228, %s227, 3
        %p230 = scmp.lt.s32.totalorder %s24, 0
        %s231 = scalar_select %p230, %s24, 0
        %s232 = sadd.s32 %s231, %s229
        %s233 = smul.addr %s232, 4
        %s234 = scalar_lea.vmem %s1, %s233
        %s235 = smul.u32 4, %s25
      $region16: #{double_stream_block.19} parent=11 // pred_fallthru
        _
      // Predicated region
      $region17: #{double_stream_block.19} parent=11 // pred_check
        %p236 = pneg %p121
      $region18: #{double_stream_block.19} parent=11 // pred_check_branch
        %238 = sbr.rel (%p236) target = $region20
      $region19: #{double_stream_block.19} parent=11 // pred_region
        %p239 = scmp.lt.s32.totalorder %s24, 0
        %s240 = scalar_select %p239, %s24, 0
        %s241 = scalar_lea.vmem %s2, %s240
      $region20: #{double_stream_block.19} parent=11 // pred_fallthru
        _
    $region12: #{double_stream_block.19} parent=5 // pred_fallthru
      _
    %p242 = scmp.lt.s32.totalorder %s11, 2
    // Predicated region
    $region21: #{double_stream_block.19} parent=5 // pred_check
      %p243 = pneg %p242
    $region22: #{double_stream_block.19} parent=5 // pred_check_branch
      %245 = sbr.rel (%p243) target = $region24
    $region23: #{double_stream_block.19} parent=5 // pred_region
      // Predicated region
      $region25: #{double_stream_block.19} parent=23 // pred_check
        %p246 = pneg %p61
      $region26: #{double_stream_block.19} parent=23 // pred_check_branch
        %248 = sbr.rel (%p246) target = $region28
      $region27: #{double_stream_block.19} parent=23 // pred_region
        %p249 = scmp.lt.s32.totalorder %s18, 1
        %s250 = scalar_select %p249, %s18, 1
        %p251 = scmp.lt.s32.totalorder %s19, 0
        %s252 = scalar_select %p251, %s19, 0
        %p253 = scmp.lt.s32.totalorder %s21, 0
        %s254 = scalar_select %p253, %s21, 0
        %s255 = sadd.s32 %s254, %s252
        %s256 = sadd.s32 %s255, %s250
        %s257 = smul.addr %s256, 2
        %s258 = scalar_lea.vmem %s0, %s257
      $region28: #{double_stream_block.19} parent=23 // pred_fallthru
        _
      // Predicated region
      $region29: #{double_stream_block.19} parent=23 // pred_check
        %p259 = pneg %p143
      $region30: #{double_stream_block.19} parent=23 // pred_check_branch
        %261 = sbr.rel (%p259) target = $region32
      $region31: #{double_stream_block.19} parent=23 // pred_region
        %p262 = scmp.lt.s32.totalorder %s18, 1
        %s263 = scalar_select %p262, %s18, 1
        %p264 = scmp.lt.s32.totalorder %s20, 0
        %s265 = scalar_select %p264, %s20, 0
        %s266 = sadd.s32 %s265, %s263
        %s267 = scalar_lea.vmem %s3, %s266
      $region32: #{double_stream_block.19} parent=23 // pred_fallthru
        _
      // Predicated region
      $region33: #{double_stream_block.19} parent=23 // pred_check
        %p268 = pneg %p173
      $region34: #{double_stream_block.19} parent=23 // pred_check_branch
        %270 = sbr.rel (%p268) target = $region36
      $region35: #{double_stream_block.19} parent=23 // pred_region
        %p271 = scmp.lt.s32.totalorder %s18, 1
        %s272 = scalar_select %p271, %s18, 1
        %p273 = scmp.lt.s32.totalorder %s19, 0
        %s274 = scalar_select %p273, %s19, 0
        %p275 = scmp.lt.s32.totalorder %s20, 0
        %s276 = scalar_select %p275, %s20, 0
        %s277 = sadd.s32 %s276, %s274
        %s278 = sadd.s32 %s277, %s272
        %s279 = smul.addr %s278, 4
        %s280 = scalar_lea.vmem %s4, %s279
      $region36: #{double_stream_block.19} parent=23 // pred_fallthru
        _
    $region24: #{double_stream_block.19} parent=5 // pred_fallthru
      _
    %p281 = scmp.le.s32.totalorder 1, %s11
    %p282 = scmp.lt.s32.totalorder %s11, 3
    %p283 = pnand %p281, %p282
    %p284 = pneg %p283
    // Predicated region
    $region37: #{double_stream_block.19} parent=5 // pred_check
      _
    $region38: #{double_stream_block.19} parent=5 // pred_check_branch
      %286 = sbr.rel (%p283) target = $region40
    $region39: #{double_stream_block.19} parent=5 // pred_region
      %s287 = ssub.s32 %s11, 1
      %p288 = scmp.lt.s32.totalorder %s22, 1
      %s289 = scalar_select %p288, %s22, 1
      %p290 = scmp.lt.s32.totalorder %s23, 0
      %s291 = scalar_select %p290, %s23, 0
      %p292 = scmp.lt.s32.totalorder %s25, 0
      %s293 = scalar_select %p292, %s25, 0
      %s294 = sadd.s32 %s293, %s291
      %s295 = sadd.s32 %s294, %s289
      %s296 = smul.addr %s295, 2
      %s297 = scalar_lea.vmem %s0, %s296
      %p298 = pneg %p67
      %p299 = pneg %p64
      %s300 = smul.u32 4, %s25
      %p301 = scmp.lt.s32.totalorder %s300, 3
      %s302 = scalar_select %p301, %s300, 3
      %p303 = scmp.lt.s32.totalorder %s24, 0
      %s304 = scalar_select %p303, %s24, 0
      %s305 = sadd.s32 %s304, %s302
      %s306 = smul.addr %s305, 4
      %s307 = scalar_lea.vmem %s1, %s306
      %p308 = pneg %p95
      %p309 = pneg %p92
      %p310 = scmp.lt.s32.totalorder %s24, 0
      %s311 = scalar_select %p310, %s24, 0
      %s312 = scalar_lea.vmem %s2, %s311
      %p313 = pneg %p121
      %p314 = pneg %p118
      %p315 = scmp.lt.s32.totalorder %s22, 1
      %s316 = scalar_select %p315, %s22, 1
      %p317 = scmp.lt.s32.totalorder %s24, 0
      %s318 = scalar_select %p317, %s24, 0
      %s319 = sadd.s32 %s318, %s316
      %s320 = scalar_lea.vmem %s3, %s319
      %p321 = pneg %p149
      %p322 = pneg %p146
      %p323 = scmp.lt.s32.totalorder %s22, 1
      %s324 = scalar_select %p323, %s22, 1
      %p325 = scmp.lt.s32.totalorder %s23, 0
      %s326 = scalar_select %p325, %s23, 0
      %p327 = scmp.lt.s32.totalorder %s24, 0
      %s328 = scalar_select %p327, %s24, 0
      %s329 = sadd.s32 %s328, %s326
      %s330 = sadd.s32 %s329, %s324
      %s331 = smul.addr %s330, 4
      %s332 = scalar_lea.vmem %s4, %s331
      %p333 = pneg %p179
      %p334 = pneg %p176
      %p335 = pneg %p209
      %p336 = pneg %p206
      %p337 = scmp.lt.s32.totalorder %s22, 1
      %s338 = scalar_select %p337, %s22, 1
      %p339 = scmp.lt.s32.totalorder %s23, 0
      %s340 = scalar_select %p339, %s23, 0
      %p341 = scmp.lt.s32.totalorder %s24, 0
      %s342 = scalar_select %p341, %s24, 0
      %s343 = sadd.s32 %s342, %s340
      %s344 = sadd.s32 %s343, %s338
      %s345 = smul.addr %s344, 4
      %s346 = scalar_lea.vmem %s5, %s345
      %p347 = scmp.lt.s32.totalorder %s22, 1
      %s348 = scalar_select %p347, %s22, 1
      %p349 = scmp.lt.s32.totalorder %s23, 0
      %s350 = scalar_select %p349, %s23, 0
      %p351 = scmp.lt.s32.totalorder %s25, 0
      %s352 = scalar_select %p351, %s25, 0
      %s353 = sadd.s32 %s352, %s350
      %s354 = sadd.s32 %s353, %s348
      %s355 = smul.addr %s354, 2
      %s356 = scalar_lea.vmem %s0, %s355
      %s357 = smul.u32 4, %s25
      %p358 = scmp.lt.s32.totalorder %s357, 3
      %s359 = scalar_select %p358, %s357, 3
      %p360 = scmp.lt.s32.totalorder %s24, 0
      %s361 = scalar_select %p360, %s24, 0
      %s362 = sadd.s32 %s361, %s359
      %s363 = smul.addr %s362, 4
      %s364 = scalar_lea.vmem %s1, %s363
      %s365 = smul.u32 4, %s25
      %p366 = scmp.lt.s32.totalorder %s24, 0
      %s367 = scalar_select %p366, %s24, 0
      %s368 = scalar_lea.vmem %s2, %s367
      %p369 = scmp.lt.s32.totalorder %s22, 1
      %s370 = scalar_select %p369, %s22, 1
      %p371 = scmp.lt.s32.totalorder %s24, 0
      %s372 = scalar_select %p371, %s24, 0
      %s373 = sadd.s32 %s372, %s370
      %s374 = scalar_lea.vmem %s3, %s373
      %p375 = scmp.lt.s32.totalorder %s22, 1
      %s376 = scalar_select %p375, %s22, 1
      %p377 = scmp.lt.s32.totalorder %s23, 0
      %s378 = scalar_select %p377, %s23, 0
      %p379 = scmp.lt.s32.totalorder %s24, 0
      %s380 = scalar_select %p379, %s24, 0
      %s381 = sadd.s32 %s380, %s378
      %s382 = sadd.s32 %s381, %s376
      %s383 = smul.addr %s382, 4
      %s384 = scalar_lea.vmem %s4, %s383
      %p385 = scmp.lt.s32.totalorder %s22, 1
      %s386 = scalar_select %p385, %s22, 1
      %p387 = scmp.lt.s32.totalorder %s23, 0
      %s388 = scalar_select %p387, %s23, 0
      %p389 = scmp.lt.s32.totalorder %s24, 0
      %s390 = scalar_select %p389, %s24, 0
      %s391 = sadd.s32 %s390, %s388
      %s392 = sadd.s32 %s391, %s386
      %s393 = smul.addr %s392, 4
      %s394 = scalar_lea.vmem %s5, %s393
      %p396 = scmp.eq.s32.totalorder %s25, 0
      // Predicated region
      $region41: #{double_stream_block.19} parent=39 // pred_check
        %p397 = pneg %p396
      $region42: #{double_stream_block.19} parent=39 // pred_check_branch
        %399 = sbr.rel (%p397) target = $region44
      $region43: #{double_stream_block.19} parent=39 // pred_region
        %vm400 = vcmask 257024
        %401 = vst.msk [vmem:[#allocation2] sm:$0xf] %vm400, 0.0
      $region44: #{double_stream_block.19} parent=39 // pred_fallthru
        _
      %v402 = vld [vmem:[#allocation2] sm:$0xf]
      %v403 = vld [vmem:[%s356] sm:$0x3]
      %v404 = vld [vmem:[%s364] sm:$0xf]
      %v405 = vld [vmem:[%s364 + $0x4] sm:$0xf]
      %v406 = vld [vmem:[%s364 + $0x8] sm:$0xf]
      %v407 = vld [vmem:[%s364 + $0xc] sm:$0xf]
      %v412 = vunpack.c.l.b16 %v404
      %v413 = vunpack.c.l.b16 %v405
      %v414 = vunpack.c.l.b16 %v406
      %v415 = vunpack.c.l.b16 %v407
      %v416 = vpack.c.b16 %v413, %v412
      %v417 = vpack.c.b16 %v415, %v414
      %vm420 = vcmask 261120
      %v422 = vsel %vm420, %v403, 0
      %424 = vmatpush.bf16.msra.mxu0 0
      %425 = vmatpush.bf16.msra.mxu0 0
      %426 = vmatpush.bf16.msra.mxu0 0
      %427 = vmatpush.bf16.msra.mxu0 0
      %428 = vmatpush.bf16.msra.mxu0 0
      %429 = vmatpush.bf16.msra.mxu0 0
      %430 = vmatpush.bf16.msra.mxu0 %v417
      %431 = vmatpush.bf16.msra.mxu0 %v416
      %432 = vmatmul.bf16.gmra.mxu0 %v422
      %v433 = vpop.f32.mrf.mxu0
      %v434 = vadd.f32 0.0, %v433
      %v435 = vpop.f32.mrf.mxu0
      %436 = vdwg.mxu0
      %v437 = vadd.f32 %v402, %v434
      %vm438 = vcmask 257024
      %439 = vst.msk [vmem:[#allocation2] sm:$0xf] %vm438, %v437
      // Predicated region
      $region45: #{double_stream_block.19} parent=39 // pred_check
        %p440 = pneg %p396
      $region46: #{double_stream_block.19} parent=39 // pred_check_branch
        %442 = sbr.rel (%p440) target = $region48
      $region47: #{double_stream_block.19} parent=39 // pred_region
        %v443 = vld [vmem:[#allocation2] sm:$0xf]
        %v444 = vld [vmem:[%s368] sm:$0x1]
        %v446 = vperm.slane %v444, 0
        %v448 = vadd.f32 %v443, %v446
        %v449 = vld [vmem:[%s384] sm:$0xf]
        %v450 = vld [vmem:[%s374] sm:$0x1]
        %v452 = vperm.slane %v450, 0
        %v454 = vmul.f32 %v452, %v448
        %v455 = vadd.f32 %v449, %v454
        %456 = vst.msk [vmem:[%s394] sm:$0xf] %vm438, %v455
      $region48: #{double_stream_block.19} parent=39 // pred_fallthru
        _
      %p457 = scmp.lt.s32.totalorder %s22, 1
      %s458 = scalar_select %p457, %s22, 1
      %p459 = scmp.lt.s32.totalorder %s23, 0
      %s460 = scalar_select %p459, %s23, 0
      %p461 = scmp.lt.s32.totalorder %s24, 0
      %s462 = scalar_select %p461, %s24, 0
      %s463 = sadd.s32 %s462, %s460
      %s464 = sadd.s32 %s463, %s458
      %s465 = smul.addr %s464, 4
      %s466 = scalar_lea.vmem %s5, %s465
      // Predicated region
      $region49: #{double_stream_block.19} parent=39 // pred_check
        %p467 = pneg %p206
      $region50: #{double_stream_block.19} parent=39 // pred_check_branch
        %469 = sbr.rel (%p467) target = $region52
      $region51: #{double_stream_block.19} parent=39 // pred_region
        _
      $region52: #{double_stream_block.19} parent=39 // pred_fallthru
        _
    $region40: #{double_stream_block.19} parent=5 // pred_fallthru
      _
    %p470 = scmp.le.s32.totalorder 2, %s11
    // Predicated region
    $region53: #{double_stream_block.19} parent=5 // pred_check
      %p471 = pneg %p470
    $region54: #{double_stream_block.19} parent=5 // pred_check_branch
      %473 = sbr.rel (%p471) target = $region56
    $region55: #{double_stream_block.19} parent=5 // pred_region
      %s474 = ssub.s32 %s11, 2
      // Predicated region
      $region57: #{double_stream_block.19} parent=55 // pred_check
        %p475 = pneg %p212
      $region58: #{double_stream_block.19} parent=55 // pred_check_branch
        %477 = sbr.rel (%p475) target = $region60
      $region59: #{double_stream_block.19} parent=55 // pred_region
        %p478 = scmp.lt.s32.totalorder %s26, 1
        %s479 = scalar_select %p478, %s26, 1
        %p480 = scmp.lt.s32.totalorder %s27, 0
        %s481 = scalar_select %p480, %s27, 0
        %p482 = scmp.lt.s32.totalorder %s28, 0
        %s483 = scalar_select %p482, %s28, 0
        %s484 = sadd.s32 %s483, %s481
        %s485 = sadd.s32 %s484, %s479
        %s486 = smul.addr %s485, 4
        %s487 = scalar_lea.vmem %s5, %s486
      $region60: #{double_stream_block.19} parent=55 // pred_fallthru
        _
    $region56: #{double_stream_block.19} parent=5 // pred_fallthru
      _
  $region6: #{double_stream_block.19} parent=0 // loop_footer
    %s15 = sadd.s32 1, %s11
  $region7: #{double_stream_block.19} parent=0 // loop_footer_branch
    %10 = sbr.rel target = $region3
  $region8: #{double_stream_block.19} parent=0 // loop_exit
    _

// kernel: double_stream_block.15
$region0: #{double_stream_block.15}
  #allocation0 [shape = 'u32[]', space=smem, size = 0x4, offset = 0x4, fixed_abs, tag = 'smem constant byte address 0x4 - core index']
  #allocation1 [shape = 'u32[72,128]{1,0:T(1,128)}', space=vmem, size = 0x9000, scoped, tag = 'internal scratch']
  #allocation2 [shape = 'f32[12,1]{1,0:T(8,128)}', space=vmem, size = 0x2000, scoped, tag = 'scratch operand']
  #allocation3 [shape = 'f32[12,1]{1,0:T(8,128)}', space=vmem, size = 0x2000, scoped, tag = 'scratch operand']
  #allocation4 [shape = 'f32[12,8]{1,0:T(8,128)}', space=vmem, size = 0x2000, scoped, tag = 'scratch operand']
  #allocation5 [shape = 'bf16[12,8]{1,0:T(8,128)(2,1)}', space=vmem, size = 0x1000, scoped, tag = 'scratch operand']
  %s0 = inlined_call_operand.vmem [shape: bf16[2,4,12,8], index: 0, kind: input, shape index: {}]
  %s1 = inlined_call_operand.vmem [shape: bf16[2,4,12,8], index: 1, kind: input, shape index: {}]
  %s2 = inlined_call_operand.vmem [shape: bf16[2,4,12,8], index: 2, kind: input, shape index: {}]
  %s3 = inlined_call_operand.vmem [shape: f32[3,12,8], index: 3, kind: input, shape index: {}]
  %s4 = inlined_call_operand.vmem [shape: f32[3,12,8], index: 4, kind: input, shape index: {}]
  %s5 = inlined_call_operand.vmem [shape: bf16[2,4,12,8], index: 5, kind: output, shape index: {}]
  %s6 = sld [smem:[#allocation0]]
  $region61: #{double_stream_block.15} parent=0
    _
  %s8 = ssub.s32 1, %s6
  %s9 = scalar_select 0, %s8, %s6
  loop: start=0, step=1, limit=10
  $region2: #{double_stream_block.15} parent=0 // loop_pre_header
    _
  $region3: #{double_stream_block.15} parent=0 // loop_header
    %s11 = sphi 0, %s15
    %p12 = scmp.ge.s32.totalorder %s11, 10
    %s18 = sphi 0, %s44
    %s19 = sphi 0, %s40
    %s20 = sphi 0, %s36
    %s21 = sphi 0, %s32
    %s22 = sphi 0, %s18
    %s23 = sphi 0, %s19
    %s24 = sphi 0, %s20
    %s25 = sphi 0, %s21
    %s26 = sphi 0, %s22
    %s27 = sphi 0, %s23
    %s28 = sphi 0, %s24
    %s29 = sphi 0, %s25
    %s51 = sphi 0, %s53
    %s54 = sphi 0, %s51
    %s55 = sphi 0, %s54
    %s71 = sphi 0, %s55
    %s81 = sphi 0, %s83
    %s84 = sphi 0, %s81
    %s85 = sphi 0, %s84
    %s101 = sphi 0, %s85
    %s111 = sphi 0, %s113
    %s114 = sphi 0, %s111
    %s115 = sphi 0, %s114
    %s131 = sphi 0, %s115
    %s137 = sphi 0, %s139
    %s140 = sphi 0, %s137
    %s141 = sphi 0, %s140
    %s157 = sphi 0, %s141
    %s163 = sphi 0, %s165
    %s166 = sphi 0, %s163
    %s167 = sphi 0, %s166
    %s183 = sphi 0, %s167
    %s193 = sphi 0, %s195
    %s196 = sphi 0, %s193
    %s197 = sphi 0, %s196
    %s213 = sphi 0, %s197
  $region4: #{double_stream_block.15} parent=0 // loop_header_branch
    %14 = sbr.rel (%p12) target = $region8
  $region5: #{double_stream_block.15} parent=0 // loop_body
    %s16 = ssub.s32 %s11, 1
    %s17 = ssub.s32 %s11, 2
    %s30 = sadd.s32 1, %s21
    %p31 = scmp.ge.s32.totalorder %s30, 1
    %s32 = scalar_select %p31, 0, %s30
    %s33 = sadd.s32 1, %s20
    %s34 = scalar_select %p31, %s33, %s20
    %p35 = scmp.ge.s32.totalorder %s34, 1
    %s36 = scalar_select %p35, 0, %s34
    %s37 = sadd.s32 1, %s19
    %s38 = scalar_select %p35, %s37, %s19
    %p39 = scmp.ge.s32.totalorder %s38, 4
    %s40 = scalar_select %p39, 0, %s38
    %s41 = sadd.s32 1, %s18
    %s42 = scalar_select %p39, %s41, %s18
    %p43 = scmp.ge.s32.totalorder %s42, 2
    %s44 = scalar_select %p43, 0, %s42
    %s45 = ssub.s32 %s18, %s44
    %s46 = ssub.s32 %s19, %s40
    %s47 = sor.u32 %s45, %s46
    %s48 = ssub.s32 %s20, %s36
    %s49 = sor.u32 %s47, %s48
    %p50 = scmp.eq.s32.totalorder %s49, 0
    %s52 = sadd.s32 %s51, 1
    %s53 = scalar_select %p50, %s51, %s52
    %p56 = pneg %p50
    %p57 = scmp.eq.s32.totalorder %s11, 7
    %p58 = por %p56, %p57
    %p59 = scmp.ne.s32.totalorder %s51, %s54
    %p60 = scmp.eq.s32.totalorder %s11, 0
    %p61 = por %p59, %p60
    %p62 = scmp.ne.s32.totalorder %s51, %s54
    %p63 = scmp.eq.s32.totalorder %s16, 7
    %p64 = por %p62, %p63
    %p65 = scmp.ne.s32.totalorder %s54, %s55
    %p66 = scmp.eq.s32.totalorder %s16, 0
    %p67 = por %p65, %p66
    %p68 = scmp.ne.s32.totalorder %s54, %s55
    %p69 = scmp.eq.s32.totalorder %s17, 7
    %p70 = por %p68, %p69
    %p72 = scmp.ne.s32.totalorder %s55, %s71
    %p73 = scmp.eq.s32.totalorder %s17, 0
    %p74 = por %p72, %p73
    %s75 = ssub.s32 %s18, %s44
    %s76 = ssub.s32 %s19, %s40
    %s77 = sor.u32 %s75, %s76
    %s78 = ssub.s32 %s21, %s32
    %s79 = sor.u32 %s77, %s78
    %p80 = scmp.eq.s32.totalorder %s79, 0
    %s82 = sadd.s32 %s81, 1
    %s83 = scalar_select %p80, %s81, %s82
    %p86 = pneg %p80
    %p87 = scmp.eq.s32.totalorder %s11, 7
    %p88 = por %p86, %p87
    %p89 = scmp.ne.s32.totalorder %s81, %s84
    %p90 = scmp.eq.s32.totalorder %s11, 0
    %p91 = por %p89, %p90
    %p92 = scmp.ne.s32.totalorder %s81, %s84
    %p93 = scmp.eq.s32.totalorder %s16, 7
    %p94 = por %p92, %p93
    %p95 = scmp.ne.s32.totalorder %s84, %s85
    %p96 = scmp.eq.s32.totalorder %s16, 0
    %p97 = por %p95, %p96
    %p98 = scmp.ne.s32.totalorder %s84, %s85
    %p99 = scmp.eq.s32.totalorder %s17, 7
    %p100 = por %p98, %p99
    %p102 = scmp.ne.s32.totalorder %s85, %s101
    %p103 = scmp.eq.s32.totalorder %s17, 0
    %p104 = por %p102, %p103
    %s105 = ssub.s32 %s18, %s44
    %s106 = ssub.s32 %s19, %s40
    %s107 = sor.u32 %s105, %s106
    %s108 = ssub.s32 %s21, %s32
    %s109 = sor.u32 %s107, %s108
    %p110 = scmp.eq.s32.totalorder %s109, 0
    %s112 = sadd.s32 %s111, 1
    %s113 = scalar_select %p110, %s111, %s112
    %p116 = pneg %p110
    %p117 = scmp.eq.s32.totalorder %s11, 7
    %p118 = por %p116, %p117
    %p119 = scmp.ne.s32.totalorder %s111, %s114
    %p120 = scmp.eq.s32.totalorder %s11, 0
    %p121 = por %p119, %p120
    %p122 = scmp.ne.s32.totalorder %s111, %s114
    %p123 = scmp.eq.s32.totalorder %s16, 7
    %p124 = por %p122, %p123
    %p125 = scmp.ne.s32.totalorder %s114, %s115
    %p126 = scmp.eq.s32.totalorder %s16, 0
    %p127 = por %p125, %p126
    %p128 = scmp.ne.s32.totalorder %s114, %s115
    %p129 = scmp.eq.s32.totalorder %s17, 7
    %p130 = por %p128, %p129
    %p132 = scmp.ne.s32.totalorder %s115, %s131
    %p133 = scmp.eq.s32.totalorder %s17, 0
    %p134 = por %p132, %p133
    %s135 = ssub.s32 %s20, %s36
    %p136 = scmp.eq.s32.totalorder %s135, 0
    %s138 = sadd.s32 %s137, 1
    %s139 = scalar_select %p136, %s137, %s138
    %p142 = pneg %p136
    %p143 = scmp.eq.s32.totalorder %s11, 7
    %p144 = por %p142, %p143
    %p145 = scmp.ne.s32.totalorder %s137, %s140
    %p146 = scmp.eq.s32.totalorder %s11, 0
    %p147 = por %p145, %p146
    %p148 = scmp.ne.s32.totalorder %s137, %s140
    %p149 = scmp.eq.s32.totalorder %s16, 7
    %p150 = por %p148, %p149
    %p151 = scmp.ne.s32.totalorder %s140, %s141
    %p152 = scmp.eq.s32.totalorder %s16, 0
    %p153 = por %p151, %p152
    %p154 = scmp.ne.s32.totalorder %s140, %s141
    %p155 = scmp.eq.s32.totalorder %s17, 7
    %p156 = por %p154, %p155
    %p158 = scmp.ne.s32.totalorder %s141, %s157
    %p159 = scmp.eq.s32.totalorder %s17, 0
    %p160 = por %p158, %p159
    %s161 = ssub.s32 %s21, %s32
    %p162 = scmp.eq.s32.totalorder %s161, 0
    %s164 = sadd.s32 %s163, 1
    %s165 = scalar_select %p162, %s163, %s164
    %p168 = pneg %p162
    %p169 = scmp.eq.s32.totalorder %s11, 7
    %p170 = por %p168, %p169
    %p171 = scmp.ne.s32.totalorder %s163, %s166
    %p172 = scmp.eq.s32.totalorder %s11, 0
    %p173 = por %p171, %p172
    %p174 = scmp.ne.s32.totalorder %s163, %s166
    %p175 = scmp.eq.s32.totalorder %s16, 7
    %p176 = por %p174, %p175
    %p177 = scmp.ne.s32.totalorder %s166, %s167
    %p178 = scmp.eq.s32.totalorder %s16, 0
    %p179 = por %p177, %p178
    %p180 = scmp.ne.s32.totalorder %s166, %s167
    %p181 = scmp.eq.s32.totalorder %s17, 7
    %p182 = por %p180, %p181
    %p184 = scmp.ne.s32.totalorder %s167, %s183
    %p185 = scmp.eq.s32.totalorder %s17, 0
    %p186 = por %p184, %p185
    %s187 = ssub.s32 %s18, %s44
    %s188 = ssub.s32 %s19, %s40
    %s189 = sor.u32 %s187, %s188
    %s190 = ssub.s32 %s20, %s36
    %s191 = sor.u32 %s189, %s190
    %p192 = scmp.eq.s32.totalorder %s191, 0
    %s194 = sadd.s32 %s193, 1
    %s195 = scalar_select %p192, %s193, %s194
    %p198 = pneg %p192
    %p199 = scmp.eq.s32.totalorder %s11, 7
    %p200 = por %p198, %p199
    %p201 = scmp.ne.s32.totalorder %s193, %s196
    %p202 = scmp.eq.s32.totalorder %s11, 0
    %p203 = por %p201, %p202
    %p204 = scmp.ne.s32.totalorder %s193, %s196
    %p205 = scmp.eq.s32.totalorder %s16, 7
    %p206 = por %p204, %p205
    %p207 = scmp.ne.s32.totalorder %s196, %s197
    %p208 = scmp.eq.s32.totalorder %s16, 0
    %p209 = por %p207, %p208
    %p210 = scmp.ne.s32.totalorder %s196, %s197
    %p211 = scmp.eq.s32.totalorder %s17, 7
    %p212 = por %p210, %p211
    %p214 = scmp.ne.s32.totalorder %s197, %s213
    %p215 = scmp.eq.s32.totalorder %s17, 0
    %p216 = por %p214, %p215
    %p217 = scmp.le.s32.totalorder 1, %s11
    %p218 = scmp.lt.s32.totalorder %s11, 9
    %p219 = pnand %p217, %p218
    %p220 = pneg %p219
    // Predicated region
    $region9: #{double_stream_block.15} parent=5 // pred_check
      _
    $region10: #{double_stream_block.15} parent=5 // pred_check_branch
      %222 = sbr.rel (%p219) target = $region12
    $region11: #{double_stream_block.15} parent=5 // pred_region
      %s223 = ssub.s32 %s11, 1
      // Predicated region
      $region13: #{double_stream_block.15} parent=11 // pred_check
        %p224 = pneg %p153
      $region14: #{double_stream_block.15} parent=11 // pred_check_branch
        %226 = sbr.rel (%p224) target = $region16
      $region15: #{double_stream_block.15} parent=11 // pred_region
        %s227 = smul.u32 2, %s24
        %p228 = scmp.lt.s32.totalorder %s227, 1
        %s229 = scalar_select %p228, %s227, 1
        %s230 = smul.addr %s229, 8
        %s231 = scalar_lea.vmem %s3, %s230
        %s232 = smul.u32 2, %s24
      $region16: #{double_stream_block.15} parent=11 // pred_fallthru
        _
      // Predicated region
      $region17: #{double_stream_block.15} parent=11 // pred_check
        %p233 = pneg %p179
      $region18: #{double_stream_block.15} parent=11 // pred_check_branch
        %235 = sbr.rel (%p233) target = $region20
      $region19: #{double_stream_block.15} parent=11 // pred_region
        %s236 = smul.u32 2, %s25
        %p237 = scmp.lt.s32.totalorder %s236, 1
        %s238 = scalar_select %p237, %s236, 1
        %s239 = smul.addr %s238, 8
        %s240 = scalar_lea.vmem %s4, %s239
        %s241 = smul.u32 2, %s25
      $region20: #{double_stream_block.15} parent=11 // pred_fallthru
        _
    $region12: #{double_stream_block.15} parent=5 // pred_fallthru
      _
    %p242 = scmp.lt.s32.totalorder %s11, 8
    // Predicated region
    $region21: #{double_stream_block.15} parent=5 // pred_check
      %p243 = pneg %p242
    $region22: #{double_stream_block.15} parent=5 // pred_check_branch
      %245 = sbr.rel (%p243) target = $region24
    $region23: #{double_stream_block.15} parent=5 // pred_region
      // Predicated region
      $region25: #{double_stream_block.15} parent=23 // pred_check
        %p246 = pneg %p61
      $region26: #{double_stream_block.15} parent=23 // pred_check_branch
        %248 = sbr.rel (%p246) target = $region28
      $region27: #{double_stream_block.15} parent=23 // pred_region
        %s249 = smul.u32 2, %s20
        %p250 = scmp.lt.s32.totalorder %s18, 1
        %s251 = scalar_select %p250, %s18, 1
        %p252 = scmp.lt.s32.totalorder %s19, 3
        %s253 = scalar_select %p252, %s19, 3
        %p254 = scmp.lt.s32.totalorder %s249, 1
        %s255 = scalar_select %p254, %s249, 1
        %s256 = smul.addr %s253, 2
        %s257 = sadd.s32 %s255, %s256
        %s258 = smul.addr %s251, 8
        %s259 = sadd.s32 %s257, %s258
        %s260 = smul.addr %s259, 4
        %s261 = scalar_lea.vmem %s0, %s260
        %s262 = smul.u32 2, %s20
      $region28: #{double_stream_block.15} parent=23 // pred_fallthru
        _
      // Predicated region
      $region29: #{double_stream_block.15} parent=23 // pred_check
        %p263 = pneg %p91
      $region30: #{double_stream_block.15} parent=23 // pred_check_branch
        %265 = sbr.rel (%p263) target = $region32
      $region31: #{double_stream_block.15} parent=23 // pred_region
        %s266 = smul.u32 2, %s21
        %p267 = scmp.lt.s32.totalorder %s18, 1
        %s268 = scalar_select %p267, %s18, 1
        %p269 = scmp.lt.s32.totalorder %s19, 3
        %s270 = scalar_select %p269, %s19, 3
        %p271 = scmp.lt.s32.totalorder %s266, 1
        %s272 = scalar_select %p271, %s266, 1
        %s273 = smul.addr %s270, 2
        %s274 = sadd.s32 %s272, %s273
        %s275 = smul.addr %s268, 8
        %s276 = sadd.s32 %s274, %s275
        %s277 = smul.addr %s276, 4
        %s278 = scalar_lea.vmem %s1, %s277
        %s279 = smul.u32 2, %s21
      $region32: #{double_stream_block.15} parent=23 // pred_fallthru
        _
      // Predicated region
      $region33: #{double_stream_block.15} parent=23 // pred_check
        %p280 = pneg %p121
      $region34: #{double_stream_block.15} parent=23 // pred_check_branch
        %282 = sbr.rel (%p280) target = $region36
      $region35: #{double_stream_block.15} parent=23 // pred_region
        %s283 = smul.u32 2, %s21
        %p284 = scmp.lt.s32.totalorder %s18, 1
        %s285 = scalar_select %p284, %s18, 1
        %p286 = scmp.lt.s32.totalorder %s19, 3
        %s287 = scalar_select %p286, %s19, 3
        %p288 = scmp.lt.s32.totalorder %s283, 1
        %s289 = scalar_select %p288, %s283, 1
        %s290 = smul.addr %s287, 2
        %s291 = sadd.s32 %s289, %s290
        %s292 = smul.addr %s285, 8
        %s293 = sadd.s32 %s291, %s292
        %s294 = smul.addr %s293, 4
        %s295 = scalar_lea.vmem %s2, %s294
        %s296 = smul.u32 2, %s21
      $region36: #{double_stream_block.15} parent=23 // pred_fallthru
        _
    $region24: #{double_stream_block.15} parent=5 // pred_fallthru
      _
    %p297 = scmp.le.s32.totalorder 1, %s11
    %p298 = scmp.lt.s32.totalorder %s11, 9
    %p299 = pnand %p297, %p298
    %p300 = pneg %p299
    // Predicated region
    $region37: #{double_stream_block.15} parent=5 // pred_check
      _
    $region38: #{double_stream_block.15} parent=5 // pred_check_branch
      %302 = sbr.rel (%p299) target = $region40
    $region39: #{double_stream_block.15} parent=5 // pred_region
      %s303 = ssub.s32 %s11, 1
      %s304 = smul.u32 2, %s24
      %p305 = scmp.lt.s32.totalorder %s22, 1
      %s306 = scalar_select %p305, %s22, 1
      %p307 = scmp.lt.s32.totalorder %s23, 3
      %s308 = scalar_select %p307, %s23, 3
      %p309 = scmp.lt.s32.totalorder %s304, 1
      %s310 = scalar_select %p309, %s304, 1
      %s311 = smul.addr %s308, 2
      %s312 = sadd.s32 %s310, %s311
      %s313 = smul.addr %s306, 8
      %s314 = sadd.s32 %s312, %s313
      %s315 = smul.addr %s314, 4
      %s316 = scalar_lea.vmem %s0, %s315
      %p317 = pneg %p67
      %p318 = pneg %p64
      %s319 = smul.u32 2, %s25
      %p320 = scmp.lt.s32.totalorder %s22, 1
      %s321 = scalar_select %p320, %s22, 1
      %p322 = scmp.lt.s32.totalorder %s23, 3
      %s323 = scalar_select %p322, %s23, 3
      %p324 = scmp.lt.s32.totalorder %s319, 1
      %s325 = scalar_select %p324, %s319, 1
      %s326 = smul.addr %s323, 2
      %s327 = sadd.s32 %s325, %s326
      %s328 = smul.addr %s321, 8
      %s329 = sadd.s32 %s327, %s328
      %s330 = smul.addr %s329, 4
      %s331 = scalar_lea.vmem %s1, %s330
      %p332 = pneg %p97
      %p333 = pneg %p94
      %s334 = smul.u32 2, %s25
      %p335 = scmp.lt.s32.totalorder %s22, 1
      %s336 = scalar_select %p335, %s22, 1
      %p337 = scmp.lt.s32.totalorder %s23, 3
      %s338 = scalar_select %p337, %s23, 3
      %p339 = scmp.lt.s32.totalorder %s334, 1
      %s340 = scalar_select %p339, %s334, 1
      %s341 = smul.addr %s338, 2
      %s342 = sadd.s32 %s340, %s341
      %s343 = smul.addr %s336, 8
      %s344 = sadd.s32 %s342, %s343
      %s345 = smul.addr %s344, 4
      %s346 = scalar_lea.vmem %s2, %s345
      %p347 = pneg %p127
      %p348 = pneg %p124
      %s349 = smul.u32 2, %s24
      %p350 = scmp.lt.s32.totalorder %s349, 1
      %s351 = scalar_select %p350, %s349, 1
      %s352 = smul.addr %s351, 8
      %s353 = scalar_lea.vmem %s3, %s352
      %p354 = pneg %p153
      %p355 = pneg %p150
      %s356 = smul.u32 2, %s25
      %p357 = scmp.lt.s32.totalorder %s356, 1
      %s358 = scalar_select %p357, %s356, 1
      %s359 = smul.addr %s358, 8
      %s360 = scalar_lea.vmem %s4, %s359
      %p361 = pneg %p179
      %p362 = pneg %p176
      %p363 = pneg %p209
      %p364 = pneg %p206
      %s365 = smul.u32 2, %s24
      %p366 = scmp.lt.s32.totalorder %s22, 1
      %s367 = scalar_select %p366, %s22, 1
      %p368 = scmp.lt.s32.totalorder %s23, 3
      %s369 = scalar_select %p368, %s23, 3
      %p370 = scmp.lt.s32.totalorder %s365, 1
      %s371 = scalar_select %p370, %s365, 1
      %s372 = smul.addr %s369, 2
      %s373 = sadd.s32 %s371, %s372
      %s374 = smul.addr %s367, 8
      %s375 = sadd.s32 %s373, %s374
      %s376 = smul.addr %s375, 4
      %s377 = scalar_lea.vmem %s5, %s376
      %s378 = smul.u32 2, %s24
      %p379 = scmp.lt.s32.totalorder %s22, 1
      %s380 = scalar_select %p379, %s22, 1
      %p381 = scmp.lt.s32.totalorder %s23, 3
      %s382 = scalar_select %p381, %s23, 3
      %p383 = scmp.lt.s32.totalorder %s378, 1
      %s384 = scalar_select %p383, %s378, 1
      %s385 = smul.addr %s382, 2
      %s386 = sadd.s32 %s384, %s385
      %s387 = smul.addr %s380, 8
      %s388 = sadd.s32 %s386, %s387
      %s389 = smul.addr %s388, 4
      %s390 = scalar_lea.vmem %s0, %s389
      %s391 = smul.u32 2, %s24
      %s392 = smul.u32 2, %s25
      %p393 = scmp.lt.s32.totalorder %s22, 1
      %s394 = scalar_select %p393, %s22, 1
      %p395 = scmp.lt.s32.totalorder %s23, 3
      %s396 = scalar_select %p395, %s23, 3
      %p397 = scmp.lt.s32.totalorder %s392, 1
      %s398 = scalar_select %p397, %s392, 1
      %s399 = smul.addr %s396, 2
      %s400 = sadd.s32 %s398, %s399
      %s401 = smul.addr %s394, 8
      %s402 = sadd.s32 %s400, %s401
      %s403 = smul.addr %s402, 4
      %s404 = scalar_lea.vmem %s1, %s403
      %s405 = smul.u32 2, %s25
      %s406 = smul.u32 2, %s25
      %p407 = scmp.lt.s32.totalorder %s22, 1
      %s408 = scalar_select %p407, %s22, 1
      %p409 = scmp.lt.s32.totalorder %s23, 3
      %s410 = scalar_select %p409, %s23, 3
      %p411 = scmp.lt.s32.totalorder %s406, 1
      %s412 = scalar_select %p411, %s406, 1
      %s413 = smul.addr %s410, 2
      %s414 = sadd.s32 %s412, %s413
      %s415 = smul.addr %s408, 8
      %s416 = sadd.s32 %s414, %s415
      %s417 = smul.addr %s416, 4
      %s418 = scalar_lea.vmem %s2, %s417
      %s419 = smul.u32 2, %s25
      %s420 = smul.u32 2, %s24
      %p421 = scmp.lt.s32.totalorder %s420, 1
      %s422 = scalar_select %p421, %s420, 1
      %s423 = smul.addr %s422, 8
      %s424 = scalar_lea.vmem %s3, %s423
      %s425 = smul.u32 2, %s24
      %s426 = smul.u32 2, %s25
      %p427 = scmp.lt.s32.totalorder %s426, 1
      %s428 = scalar_select %p427, %s426, 1
      %s429 = smul.addr %s428, 8
      %s430 = scalar_lea.vmem %s4, %s429
      %s431 = smul.u32 2, %s25
      %s432 = smul.u32 2, %s24
      %p433 = scmp.lt.s32.totalorder %s22, 1
      %s434 = scalar_select %p433, %s22, 1
      %p435 = scmp.lt.s32.totalorder %s23, 3
      %s436 = scalar_select %p435, %s23, 3
      %p437 = scmp.lt.s32.totalorder %s432, 1
      %s438 = scalar_select %p437, %s432, 1
      %s439 = smul.addr %s436, 2
      %s440 = sadd.s32 %s438, %s439
      %s441 = smul.addr %s434, 8
      %s442 = sadd.s32 %s440, %s441
      %s443 = smul.addr %s442, 4
      %s444 = scalar_lea.vmem %s5, %s443
      %s445 = smul.u32 2, %s24
      %p447 = scmp.eq.s32.totalorder %s25, 0
      // Predicated region
      $region41: #{double_stream_block.15} parent=39 // pred_check
        %p448 = pneg %p447
      $region42: #{double_stream_block.15} parent=39 // pred_check_branch
        %450 = sbr.rel (%p448) target = $region44
      $region43: #{double_stream_block.15} parent=39 // pred_region
        %vm451 = vcmask 7168
        %452 = vst.msk [vmem:[#allocation2] sm:$0xff] %vm451, -inf
        %vm453 = vcmask 3072
        %454 = vst.msk [vmem:[#allocation2 + $0x8] sm:$0xf] %vm453, -inf
        %455 = vst.msk [vmem:[#allocation3] sm:$0xff] %vm451, 0.0
        %456 = vst.msk [vmem:[#allocation3 + $0x8] sm:$0xf] %vm453, 0.0
        %vm457 = vcmask 64512
        %458 = vst.msk [vmem:[#allocation4] sm:$0xff] %vm457, 0.0
        %vm459 = vcmask 60416
        %460 = vst.msk [vmem:[#allocation4 + $0x8] sm:$0xf] %vm459, 0.0
        %v461 = vld [vmem:[%s390] sm:$0xf]
        %v462 = vld [vmem:[%s390 + $0x4] sm:$0x3]
        %v463 = vunpack.c.l.bf16 %v461
        %v464 = vunpack.c.l.bf16 %v462
        %v465 = vld [vmem:[%s424] sm:$0xff]
        %v466 = vld [vmem:[%s424 + $0x8] sm:$0xf]
        %s467 = scalar_lea.vmem %s424, 16
        %v468 = vld [vmem:[%s467] sm:$0xff]
        %v469 = vld [vmem:[%s467 + $0x8] sm:$0xf]
        %s470 = scalar_lea.vmem %s424, 32
        %v471 = vld [vmem:[%s470] sm:$0xff]
        %v472 = vld [vmem:[%s470 + $0x8] sm:$0xf]
        %v473 = vmul.f32 %v463, %v463
        %v474 = vmul.f32 %v464, %v464
        %v475 = vsel %vm457, %v473, 0.0
        %476 = vadd.xlane.f32.xlu0 %v475
        %v477 = vpop.xlane.xlu0 %476
        %v478 = vsel %vm459, %v474, 0.0
        %479 = vadd.xlane.f32.xlu0 %v478
        %v480 = vpop.xlane.xlu0 %479
        %v481 = vrcp.pop 8.0
        %v482 = vmul.f32 8.0, %v481
        %v483 = vsub.f32 1.0, %v482
        %v484 = vmul.f32 %v481, %v483
        %v485 = vadd.f32 %v481, %v484
        %vm486 = vweird.f32 %v481
        %v487 = vsel %vm486, %v481, %v485
        %v488 = vmul.f32 %v477, %v487
        %v489 = vmul.f32 %v480, %v487
        %v490 = vadd.f32 %v488, 1e-06
        %v491 = vadd.f32 %v489, 1e-06
        %v492 = vrsqrt.pop %v490
        %v493 = vmul.f32 %v492, %v490
        %v494 = vmul.f32 %v493, %v492
        %v495 = vmul.f32 0.5, %v494
        %v496 = vsub.f32 1.5, %v495
        %v497 = vmul.f32 %v492, %v496
        %vm498 = vweird.f32 %v490
        %vm499 = vweird.f32 %v492
        %vm500 = vmor %vm498, %vm499
        %v501 = vsel %vm500, %v492, %v497
        %v502 = vrsqrt.pop %v491
        %v503 = vmul.f32 %v502, %v491
        %v504 = vmul.f32 %v503, %v502
        %v505 = vmul.f32 0.5, %v504
        %v506 = vsub.f32 1.5, %v505
        %v507 = vmul.f32 %v502, %v506
        %vm508 = vweird.f32 %v491
        %vm509 = vweird.f32 %v502
        %vm510 = vmor %vm508, %vm509
        %v511 = vsel %vm510, %v502, %v507
        %v512 = vmul.f32 %v463, %v501
        %v513 = vmul.f32 %v464, %v511
        %v514 = vmul.f32 %v512, %v465
        %v515 = vmul.f32 %v513, %v466
        %v516 = vmul.f32 %v468, %v514
        %v517 = vmul.f32 %v469, %v515
        %520 = vrot.lane.b32.xlu0 %v514, 124
        %v521 = vpop.permute.xlu0 %520
        %522 = vrot.lane.b32.xlu0 %v515, 124
        %v523 = vpop.permute.xlu0 %522
        %526 = vrot.lane.b32.xlu0 %v514, 4
        %v527 = vpop.permute.xlu0 %526
        %528 = vrot.lane.b32.xlu0 %v515, 4
        %v529 = vpop.permute.xlu0 %528
        %vm532 = vcmask 31744
        %v533 = vsel %vm532, %v521, %v527
        %v534 = vsel %vm532, %v523, %v529
        %v535 = vmul.f32 %v471, %v533
        %v536 = vmul.f32 %v472, %v534
        %v537 = vadd.f32 %v516, %v535
        %v538 = vadd.f32 %v517, %v536
        %v539 = vpack.c.bf16 %v537, %v537
        %v540 = vpack.c.bf16 %v538, %v538
        %541 = vst.msk [vmem:[#allocation5] sm:$0xf] %vm459, %v539
        %vm542 = vcmask 58368
        %543 = vst.msk [vmem:[#allocation5 + $0x4] sm:$0x3] %vm542, %v540
      $region44: #{double_stream_block.15} parent=39 // pred_fallthru
        _
      %v544 = vld [vmem:[%s404] sm:$0xf]
      %v545 = vld [vmem:[%s404 + $0x4] sm:$0x3]
      %v546 = vunpack.c.l.bf16 %v544
      %v547 = vunpack.c.l.bf16 %v545
      %v548 = vld [vmem:[%s430] sm:$0xff]
      %v549 = vld [vmem:[%s430 + $0x8] sm:$0xf]
      %s550 = scalar_lea.vmem %s430, 16
      %v551 = vld [vmem:[%s550] sm:$0xff]
      %v552 = vld [vmem:[%s550 + $0x8] sm:$0xf]
      %s553 = scalar_lea.vmem %s430, 32
      %v554 = vld [vmem:[%s553] sm:$0xff]
      %v555 = vld [vmem:[%s553 + $0x8] sm:$0xf]
      %v556 = vmul.f32 %v546, %v546
      %v557 = vmul.f32 %v547, %v547
      %vm558 = vcmask 64512
      %v559 = vsel %vm558, %v556, 0.0
      %560 = vadd.xlane.f32.xlu0 %v559
      %v561 = vpop.xlane.xlu0 %560
      %vm562 = vcmask 60416
      %v563 = vsel %vm562, %v557, 0.0
      %564 = vadd.xlane.f32.xlu0 %v563
      %v565 = vpop.xlane.xlu0 %564
      %v566 = vrcp.pop 8.0
      %v567 = vmul.f32 8.0, %v566
      %v568 = vsub.f32 1.0, %v567
      %v569 = vmul.f32 %v566, %v568
      %v570 = vadd.f32 %v566, %v569
      %vm571 = vweird.f32 %v566
      %v572 = vsel %vm571, %v566, %v570
      %v573 = vmul.f32 %v561, %v572
      %v574 = vmul.f32 %v565, %v572
      %v575 = vadd.f32 %v573, 1e-06
      %v576 = vadd.f32 %v574, 1e-06
      %v577 = vrsqrt.pop %v575
      %v578 = vmul.f32 %v577, %v575
      %v579 = vmul.f32 %v578, %v577
      %v580 = vmul.f32 0.5, %v579
      %v581 = vsub.f32 1.5, %v580
      %v582 = vmul.f32 %v577, %v581
      %vm583 = vweird.f32 %v575
      %vm584 = vweird.f32 %v577
      %vm585 = vmor %vm583, %vm584
      %v586 = vsel %vm585, %v577, %v582
      %v587 = vrsqrt.pop %v576
      %v588 = vmul.f32 %v587, %v576
      %v589 = vmul.f32 %v588, %v587
      %v590 = vmul.f32 0.5, %v589
      %v591 = vsub.f32 1.5, %v590
      %v592 = vmul.f32 %v587, %v591
      %vm593 = vweird.f32 %v576
      %vm594 = vweird.f32 %v587
      %vm595 = vmor %vm593, %vm594
      %v596 = vsel %vm595, %v587, %v592
      %v597 = vmul.f32 %v546, %v586
      %v598 = vmul.f32 %v547, %v596
      %v599 = vmul.f32 %v597, %v548
      %v600 = vmul.f32 %v598, %v549
      %v601 = vmul.f32 %v551, %v599
      %v602 = vmul.f32 %v552, %v600
      %605 = vrot.lane.b32.xlu0 %v599, 124
      %v606 = vpop.permute.xlu0 %605
      %607 = vrot.lane.b32.xlu0 %v600, 124
      %v608 = vpop.permute.xlu0 %607
      %611 = vrot.lane.b32.xlu0 %v599, 4
      %v612 = vpop.permute.xlu0 %611
      %613 = vrot.lane.b32.xlu0 %v600, 4
      %v614 = vpop.permute.xlu0 %613
      %vm617 = vcmask 31744
      %v618 = vsel %vm617, %v606, %v612
      %v619 = vsel %vm617, %v608, %v614
      %v620 = vmul.f32 %v554, %v618
      %v621 = vmul.f32 %v555, %v619
      %v622 = vadd.f32 %v601, %v620
      %v623 = vadd.f32 %v602, %v621
      %v624 = vld [vmem:[#allocation5] sm:$0xf]
      %v625 = vld [vmem:[#allocation5 + $0x4] sm:$0x3]
      %v626 = vpack.c.bf16 %v623, %v622
      %v629 = vunpack.c.l.b16 %v624
      %v630 = vunpack.c.l.b16 %v625
      %v631 = vpack.c.b16 %v630, %v629
      %v633 = vsel %vm558, %v631, 0
      %v636 = vsel %vm558, %v626, 0
      %638 = vmatpush.bf16.xpose.msra.mxu0 0
      %639 = vmatpush.bf16.xpose.msra.mxu0 0
      %640 = vmatpush.bf16.xpose.msra.mxu0 0
      %641 = vmatpush.bf16.xpose.msra.mxu0 0
      %642 = vmatpush.bf16.xpose.msra.mxu0 0
      %643 = vmatpush.bf16.xpose.msra.mxu0 0
      %644 = vmatpush.bf16.xpose.msra.mxu0 0
      %645 = vmatpush.bf16.xpose.msra.mxu0 %v636
      %646 = vmatmul.bf16.gmra.mxu0 %v633
      %v647 = vpop.f32.mrf.mxu0
      %v648 = vadd.f32 0.0, %v647
      %v649 = vpop.f32.mrf.mxu0
      %v650 = vadd.f32 0.0, %v649
      %651 = vdwg.mxu0
      %v652 = vld [vmem:[#allocation2] sm:$0xff]
      %v653 = vld [vmem:[#allocation2 + $0x8] sm:$0xf]
      %vm654 = vcmask 97280
      %v655 = vsel %vm654, %v648, -inf
      %656 = vmax.xlane.f32.xlu0 %v655
      %v657 = vpop.xlane.xlu0 %656
      %vm658 = vcmask 93184
      %v659 = vsel %vm658, %v650, -inf
      %660 = vmax.xlane.f32.xlu0 %v659
      %v661 = vpop.xlane.xlu0 %660
      %v662 = vmax.f32 %v652, %v657
      %v663 = vmax.f32 %v653, %v661
      %v664 = vsub.f32 %v652, %v662
      %v665 = vsub.f32 %v653, %v663
      %v666 = vmul.f32 %v664, 1.442695
      %v667 = vpow.pop %v666
      %v668 = vmul.f32 %v665, 1.442695
      %v669 = vpow.pop %v668
      %671 = vset.pattern.permute.xlu0 0
      %672 = vperm.xlu0 %671, %v662
      %v673 = vpop.permute.xlu0 %672
      %676 = vset.pattern.permute.xlu0 0
      %677 = vperm.xlu0 %676, %v663
      %v678 = vpop.permute.xlu0 %677
      %v680 = vsub.f32 %v648, %v673
      %v681 = vsub.f32 %v650, %v678
      %v682 = vmul.f32 %v680, 1.442695
      %v683 = vpow.pop %v682
      %v684 = vmul.f32 %v681, 1.442695
      %v685 = vpow.pop %v684
      %v686 = vld [vmem:[#allocation3] sm:$0xff]
      %v687 = vld [vmem:[#allocation3 + $0x8] sm:$0xf]
      %v688 = vmul.f32 %v667, %v686
      %v689 = vmul.f32 %v669, %v687
      %v690 = vsel %vm654, %v683, 0.0
      %691 = vadd.xlane.f32.xlu0 %v690
      %v692 = vpop.xlane.xlu0 %691
      %v693 = vsel %vm658, %v685, 0.0
      %694 = vadd.xlane.f32.xlu0 %v693
      %v695 = vpop.xlane.xlu0 %694
      %v696 = vadd.f32 %v688, %v692
      %v697 = vadd.f32 %v689, %v695
      %vm698 = vcmask 7168
      %699 = vst.msk [vmem:[#allocation3] sm:$0xff] %vm698, %v696
      %vm700 = vcmask 3072
      %701 = vst.msk [vmem:[#allocation3 + $0x8] sm:$0xf] %vm700, %v697
      %v702 = vld [vmem:[#allocation4] sm:$0xff]
      %v703 = vld [vmem:[#allocation4 + $0x8] sm:$0xf]
      %705 = vset.pattern.permute.xlu0 0
      %706 = vperm.xlu0 %705, %v667
      %v707 = vpop.permute.xlu0 %706
      %710 = vset.pattern.permute.xlu0 0
      %711 = vperm.xlu0 %710, %v669
      %v712 = vpop.permute.xlu0 %711
      %v714 = vmul.f32 %v707, %v702
      %v715 = vmul.f32 %v712, %v703
      %v716 = vpack.c.bf16 %v685, %v683
      %v717 = vld [vmem:[%s418] sm:$0xf]
      %v718 = vld [vmem:[%s418 + $0x4] sm:$0x3]
      %v721 = vunpack.c.l.b16 %v717
      %v722 = vunpack.c.l.b16 %v718
      %v723 = vpack.c.b16 %v722, %v721
      %v725 = vsel %vm654, %v716, 0
      %vm727 = vcmask 1045504
      %v729 = vsel %vm727, %v723, 0
      %731 = vmatpush.bf16.msra.mxu0 0
      %732 = vmatpush.bf16.msra.mxu0 0
      %733 = vmatpush.bf16.msra.mxu0 0
      %734 = vmatpush.bf16.msra.mxu0 0
      %735 = vmatpush.bf16.msra.mxu0 0
      %736 = vmatpush.bf16.msra.mxu0 0
      %737 = vmatpush.bf16.msra.mxu0 0
      %738 = vmatpush.bf16.msra.mxu0 %v729
      %739 = vmatmul.bf16.gmra.mxu0 %v725
      %v740 = vpop.f32.mrf.mxu0
      %v741 = vadd.f32 0.0, %v740
      %v742 = vpop.f32.mrf.mxu0
      %v743 = vadd.f32 0.0, %v742
      %744 = vdwg.mxu0
      %v745 = vadd.f32 %v714, %v741
      %v746 = vadd.f32 %v715, %v743
      %747 = vst.msk [vmem:[#allocation4] sm:$0xff] %vm558, %v745
      %748 = vst.msk [vmem:[#allocation4 + $0x8] sm:$0xf] %vm562, %v746
      %749 = vst.msk [vmem:[#allocation2] sm:$0xff] %vm698, %v662
      %750 = vst.msk [vmem:[#allocation2 + $0x8] sm:$0xf] %vm700, %v663
      // Predicated region
      $region45: #{double_stream_block.15} parent=39 // pred_check
        %p751 = pneg %p447
      $region46: #{double_stream_block.15} parent=39 // pred_check_branch
        %753 = sbr.rel (%p751) target = $region48
      $region47: #{double_stream_block.15} parent=39 // pred_region
        %v754 = vld [vmem:[#allocation3] sm:$0xff]
        %v755 = vld [vmem:[#allocation3 + $0x8] sm:$0xf]
        %v756 = vrcp.pop %v754
        %v757 = vrcp.pop %v755
        %v758 = vld [vmem:[#allocation4] sm:$0xff]
        %v759 = vld [vmem:[#allocation4 + $0x8] sm:$0xf]
        %761 = vset.pattern.permute.xlu0 0
        %762 = vperm.xlu0 %761, %v756
        %v763 = vpop.permute.xlu0 %762
        %766 = vset.pattern.permute.xlu0 0
        %767 = vperm.xlu0 %766, %v757
        %v768 = vpop.permute.xlu0 %767
        %v770 = vmul.f32 %v758, %v763
        %v771 = vmul.f32 %v759, %v768
        %v772 = vpack.c.bf16 %v770, %v770
        %v773 = vpack.c.bf16 %v771, %v771
        %774 = vst.msk [vmem:[%s444] sm:$0xf] %vm562, %v772
        %vm775 = vcmask 58368
        %776 = vst.msk [vmem:[%s444 + $0x4] sm:$0x3] %vm775, %v773
      $region48: #{double_stream_block.15} parent=39 // pred_fallthru
        _
      %s777 = smul.u32 2, %s24
      %p778 = scmp.lt.s32.totalorder %s22, 1
      %s779 = scalar_select %p778, %s22, 1
      %p780 = scmp.lt.s32.totalorder %s23, 3
      %s781 = scalar_select %p780, %s23, 3
      %p782 = scmp.lt.s32.totalorder %s777, 1
      %s783 = scalar_select %p782, %s777, 1
      %s784 = smul.addr %s781, 2
      %s785 = sadd.s32 %s783, %s784
      %s786 = smul.addr %s779, 8
      %s787 = sadd.s32 %s785, %s786
      %s788 = smul.addr %s787, 4
      %s789 = scalar_lea.vmem %s5, %s788
      // Predicated region
      $region49: #{double_stream_block.15} parent=39 // pred_check
        %p790 = pneg %p206
      $region50: #{double_stream_block.15} parent=39 // pred_check_branch
        %792 = sbr.rel (%p790) target = $region52
      $region51: #{double_stream_block.15} parent=39 // pred_region
        %s793 = smul.u32 2, %s24
      $region52: #{double_stream_block.15} parent=39 // pred_fallthru
        _
    $region40: #{double_stream_block.15} parent=5 // pred_fallthru
      _
    %p794 = scmp.le.s32.totalorder 2, %s11
    // Predicated region
    $region53: #{double_stream_block.15} parent=5 // pred_check
      %p795 = pneg %p794
    $region54: #{double_stream_block.15} parent=5 // pred_check_branch
      %797 = sbr.rel (%p795) target = $region56
    $region55: #{double_stream_block.15} parent=5 // pred_region
      %s798 = ssub.s32 %s11, 2
      // Predicated region
      $region57: #{double_stream_block.15} parent=55 // pred_check
        %p799 = pneg %p212
      $region58: #{double_stream_block.15} parent=55 // pred_check_branch
        %801 = sbr.rel (%p799) target = $region60
      $region59: #{double_stream_block.15} parent=55 // pred_region
        %s802 = smul.u32 2, %s28
        %p803 = scmp.lt.s32.totalorder %s26, 1
        %s804 = scalar_select %p803, %s26, 1
        %p805 = scmp.lt.s32.totalorder %s27, 3
        %s806 = scalar_select %p805, %s27, 3
        %p807 = scmp.lt.s32.totalorder %s802, 1
        %s808 = scalar_select %p807, %s802, 1
        %s809 = smul.addr %s806, 2
        %s810 = sadd.s32 %s808, %s809
        %s811 = smul.addr %s804, 8
        %s812 = sadd.s32 %s810, %s811
        %s813 = smul.addr %s812, 4
        %s814 = scalar_lea.vmem %s5, %s813
      $region60: #{double_stream_block.15} parent=55 // pred_fallthru
        _
    $region56: #{double_stream_block.15} parent=5 // pred_fallthru
      _
  $region6: #{double_stream_block.15} parent=0 // loop_footer
    %s15 = sadd.s32 1, %s11
  $region7: #{double_stream_block.15} parent=0 // loop_footer_branch
    %10 = sbr.rel target = $region3
  $region8: #{double_stream_block.15} parent=0 // loop_exit
    _

// kernel: double_stream_block.20
$region0: #{double_stream_block.20}
  #allocation0 [shape = 'u32[]', space=smem, size = 0x4, offset = 0x4, fixed_abs, tag = 'smem constant byte address 0x4 - core index']
  #allocation1 [shape = 'u32[72,128]{1,0:T(1,128)}', space=vmem, size = 0x9000, scoped, tag = 'internal scratch']
  %s0 = inlined_call_operand.vmem [shape: f32[2,4,32], index: 0, kind: input, shape index: {}]
  %s1 = inlined_call_operand.vmem [shape: f32[2,1,32], index: 1, kind: input, shape index: {}]
  %s2 = inlined_call_operand.vmem [shape: f32[2,1,32], index: 2, kind: input, shape index: {}]
  %s3 = inlined_call_operand.vmem [shape: bf16[32,128], index: 3, kind: input, shape index: {}]
  %s4 = inlined_call_operand.vmem [shape: f32[1,128], index: 4, kind: input, shape index: {}]
  %s5 = inlined_call_operand.vmem [shape: bf16[2,4,128], index: 5, kind: output, shape index: {}]
  %s6 = sld [smem:[#allocation0]]
  $region53: #{double_stream_block.20} parent=0
    _
  %s8 = ssub.s32 1, %s6
  %s9 = scalar_select 0, %s8, %s6
  loop: start=0, step=1, limit=4
  $region2: #{double_stream_block.20} parent=0 // loop_pre_header
    _
  $region3: #{double_stream_block.20} parent=0 // loop_header
    %s11 = sphi 0, %s15
    %p12 = scmp.ge.s32.totalorder %s11, 4
    %s18 = sphi 0, %s37
    %s19 = sphi 0, %s33
    %s20 = sphi 0, %s29
    %s21 = sphi 0, %s18
    %s22 = sphi 0, %s19
    %s23 = sphi 0, %s20
    %s24 = sphi 0, %s21
    %s25 = sphi 0, %s22
    %s26 = sphi 0, %s23
    %s42 = sphi 0, %s44
    %s45 = sphi 0, %s42
    %s46 = sphi 0, %s45
    %s62 = sphi 0, %s46
    %s68 = sphi 0, %s70
    %s71 = sphi 0, %s68
    %s72 = sphi 0, %s71
    %s88 = sphi 0, %s72
    %s94 = sphi 0, %s96
    %s97 = sphi 0, %s94
    %s98 = sphi 0, %s97
    %s114 = sphi 0, %s98
    %s120 = sphi 0, %s122
    %s123 = sphi 0, %s120
    %s124 = sphi 0, %s123
    %s140 = sphi 0, %s124
    %s146 = sphi 0, %s148
    %s149 = sphi 0, %s146
    %s150 = sphi 0, %s149
    %s166 = sphi 0, %s150
    %s176 = sphi 0, %s178
    %s179 = sphi 0, %s176
    %s180 = sphi 0, %s179
    %s196 = sphi 0, %s180
  $region4: #{double_stream_block.20} parent=0 // loop_header_branch
    %14 = sbr.rel (%p12) target = $region8
  $region5: #{double_stream_block.20} parent=0 // loop_body
    %s16 = ssub.s32 %s11, 1
    %s17 = ssub.s32 %s11, 2
    %s27 = sadd.s32 1, %s20
    %p28 = scmp.ge.s32.totalorder %s27, 1
    %s29 = scalar_select %p28, 0, %s27
    %s30 = sadd.s32 1, %s19
    %s31 = scalar_select %p28, %s30, %s19
    %p32 = scmp.ge.s32.totalorder %s31, 1
    %s33 = scalar_select %p32, 0, %s31
    %s34 = sadd.s32 1, %s18
    %s35 = scalar_select %p32, %s34, %s18
    %p36 = scmp.ge.s32.totalorder %s35, 2
    %s37 = scalar_select %p36, 0, %s35
    %s38 = ssub.s32 %s18, %s37
    %s39 = ssub.s32 %s19, %s33
    %s40 = sor.u32 %s38, %s39
    %p41 = scmp.eq.s32.totalorder %s40, 0
    %s43 = sadd.s32 %s42, 1
    %s44 = scalar_select %p41, %s42, %s43
    %p47 = pneg %p41
    %p48 = scmp.eq.s32.totalorder %s11, 1
    %p49 = por %p47, %p48
    %p50 = scmp.ne.s32.totalorder %s42, %s45
    %p51 = scmp.eq.s32.totalorder %s11, 0
    %p52 = por %p50, %p51
    %p53 = scmp.ne.s32.totalorder %s42, %s45
    %p54 = scmp.eq.s32.totalorder %s16, 1
    %p55 = por %p53, %p54
    %p56 = scmp.ne.s32.totalorder %s45, %s46
    %p57 = scmp.eq.s32.totalorder %s16, 0
    %p58 = por %p56, %p57
    %p59 = scmp.ne.s32.totalorder %s45, %s46
    %p60 = scmp.eq.s32.totalorder %s17, 1
    %p61 = por %p59, %p60
    %p63 = scmp.ne.s32.totalorder %s46, %s62
    %p64 = scmp.eq.s32.totalorder %s17, 0
    %p65 = por %p63, %p64
    %s66 = ssub.s32 %s18, %s37
    %p67 = scmp.eq.s32.totalorder %s66, 0
    %s69 = sadd.s32 %s68, 1
    %s70 = scalar_select %p67, %s68, %s69
    %p73 = pneg %p67
    %p74 = scmp.eq.s32.totalorder %s11, 1
    %p75 = por %p73, %p74
    %p76 = scmp.ne.s32.totalorder %s68, %s71
    %p77 = scmp.eq.s32.totalorder %s11, 0
    %p78 = por %p76, %p77
    %p79 = scmp.ne.s32.totalorder %s68, %s71
    %p80 = scmp.eq.s32.totalorder %s16, 1
    %p81 = por %p79, %p80
    %p82 = scmp.ne.s32.totalorder %s71, %s72
    %p83 = scmp.eq.s32.totalorder %s16, 0
    %p84 = por %p82, %p83
    %p85 = scmp.ne.s32.totalorder %s71, %s72
    %p86 = scmp.eq.s32.totalorder %s17, 1
    %p87 = por %p85, %p86
    %p89 = scmp.ne.s32.totalorder %s72, %s88
    %p90 = scmp.eq.s32.totalorder %s17, 0
    %p91 = por %p89, %p90
    %s92 = ssub.s32 %s18, %s37
    %p93 = scmp.eq.s32.totalorder %s92, 0
    %s95 = sadd.s32 %s94, 1
    %s96 = scalar_select %p93, %s94, %s95
    %p99 = pneg %p93
    %p100 = scmp.eq.s32.totalorder %s11, 1
    %p101 = por %p99, %p100
    %p102 = scmp.ne.s32.totalorder %s94, %s97
    %p103 = scmp.eq.s32.totalorder %s11, 0
    %p104 = por %p102, %p103
    %p105 = scmp.ne.s32.totalorder %s94, %s97
    %p106 = scmp.eq.s32.totalorder %s16, 1
    %p107 = por %p105, %p106
    %p108 = scmp.ne.s32.totalorder %s97, %s98
    %p109 = scmp.eq.s32.totalorder %s16, 0
    %p110 = por %p108, %p109
    %p111 = scmp.ne.s32.totalorder %s97, %s98
    %p112 = scmp.eq.s32.totalorder %s17, 1
    %p113 = por %p111, %p112
    %p115 = scmp.ne.s32.totalorder %s98, %s114
    %p116 = scmp.eq.s32.totalorder %s17, 0
    %p117 = por %p115, %p116
    %s118 = ssub.s32 %s20, %s29
    %p119 = scmp.eq.s32.totalorder %s118, 0
    %s121 = sadd.s32 %s120, 1
    %s122 = scalar_select %p119, %s120, %s121
    %p125 = pneg %p119
    %p126 = scmp.eq.s32.totalorder %s11, 1
    %p127 = por %p125, %p126
    %p128 = scmp.ne.s32.totalorder %s120, %s123
    %p129 = scmp.eq.s32.totalorder %s11, 0
    %p130 = por %p128, %p129
    %p131 = scmp.ne.s32.totalorder %s120, %s123
    %p132 = scmp.eq.s32.totalorder %s16, 1
    %p133 = por %p131, %p132
    %p134 = scmp.ne.s32.totalorder %s123, %s124
    %p135 = scmp.eq.s32.totalorder %s16, 0
    %p136 = por %p134, %p135
    %p137 = scmp.ne.s32.totalorder %s123, %s124
    %p138 = scmp.eq.s32.totalorder %s17, 1
    %p139 = por %p137, %p138
    %p141 = scmp.ne.s32.totalorder %s124, %s140
    %p142 = scmp.eq.s32.totalorder %s17, 0
    %p143 = por %p141, %p142
    %s144 = ssub.s32 %s20, %s29
    %p145 = scmp.eq.s32.totalorder %s144, 0
    %s147 = sadd.s32 %s146, 1
    %s148 = scalar_select %p145, %s146, %s147
    %p151 = pneg %p145
    %p152 = scmp.eq.s32.totalorder %s11, 1
    %p153 = por %p151, %p152
    %p154 = scmp.ne.s32.totalorder %s146, %s149
    %p155 = scmp.eq.s32.totalorder %s11, 0
    %p156 = por %p154, %p155
    %p157 = scmp.ne.s32.totalorder %s146, %s149
    %p158 = scmp.eq.s32.totalorder %s16, 1
    %p159 = por %p157, %p158
    %p160 = scmp.ne.s32.totalorder %s149, %s150
    %p161 = scmp.eq.s32.totalorder %s16, 0
    %p162 = por %p160, %p161
    %p163 = scmp.ne.s32.totalorder %s149, %s150
    %p164 = scmp.eq.s32.totalorder %s17, 1
    %p165 = por %p163, %p164
    %p167 = scmp.ne.s32.totalorder %s150, %s166
    %p168 = scmp.eq.s32.totalorder %s17, 0
    %p169 = por %p167, %p168
    %s170 = ssub.s32 %s18, %s37
    %s171 = ssub.s32 %s19, %s33
    %s172 = sor.u32 %s170, %s171
    %s173 = ssub.s32 %s20, %s29
    %s174 = sor.u32 %s172, %s173
    %p175 = scmp.eq.s32.totalorder %s174, 0
    %s177 = sadd.s32 %s176, 1
    %s178 = scalar_select %p175, %s176, %s177
    %p181 = pneg %p175
    %p182 = scmp.eq.s32.totalorder %s11, 1
    %p183 = por %p181, %p182
    %p184 = scmp.ne.s32.totalorder %s176, %s179
    %p185 = scmp.eq.s32.totalorder %s11, 0
    %p186 = por %p184, %p185
    %p187 = scmp.ne.s32.totalorder %s176, %s179
    %p188 = scmp.eq.s32.totalorder %s16, 1
    %p189 = por %p187, %p188
    %p190 = scmp.ne.s32.totalorder %s179, %s180
    %p191 = scmp.eq.s32.totalorder %s16, 0
    %p192 = por %p190, %p191
    %p193 = scmp.ne.s32.totalorder %s179, %s180
    %p194 = scmp.eq.s32.totalorder %s17, 1
    %p195 = por %p193, %p194
    %p197 = scmp.ne.s32.totalorder %s180, %s196
    %p198 = scmp.eq.s32.totalorder %s17, 0
    %p199 = por %p197, %p198
    %p200 = scmp.le.s32.totalorder 1, %s11
    %p201 = scmp.lt.s32.totalorder %s11, 3
    %p202 = pnand %p200, %p201
    %p203 = pneg %p202
    // Predicated region
    $region9: #{double_stream_block.20} parent=5 // pred_check
      _
    $region10: #{double_stream_block.20} parent=5 // pred_check_branch
      %205 = sbr.rel (%p202) target = $region12
    $region11: #{double_stream_block.20} parent=5 // pred_region
      %s206 = ssub.s32 %s11, 1
      // Predicated region
      $region13: #{double_stream_block.20} parent=11 // pred_check
        %p207 = pneg %p136
      $region14: #{double_stream_block.20} parent=11 // pred_check_branch
        %209 = sbr.rel (%p207) target = $region16
      $region15: #{double_stream_block.20} parent=11 // pred_region
        %p210 = scmp.lt.s32.totalorder %s23, 0
        %s211 = scalar_select %p210, %s23, 0
        %s212 = smul.addr %s211, 4
        %s213 = scalar_lea.vmem %s3, %s212
      $region16: #{double_stream_block.20} parent=11 // pred_fallthru
        _
      // Predicated region
      $region17: #{double_stream_block.20} parent=11 // pred_check
        %p214 = pneg %p162
      $region18: #{double_stream_block.20} parent=11 // pred_check_branch
        %216 = sbr.rel (%p214) target = $region20
      $region19: #{double_stream_block.20} parent=11 // pred_region
        %p217 = scmp.lt.s32.totalorder %s23, 0
        %s218 = scalar_select %p217, %s23, 0
        %s219 = scalar_lea.vmem %s4, %s218
      $region20: #{double_stream_block.20} parent=11 // pred_fallthru
        _
    $region12: #{double_stream_block.20} parent=5 // pred_fallthru
      _
    %p220 = scmp.lt.s32.totalorder %s11, 2
    // Predicated region
    $region21: #{double_stream_block.20} parent=5 // pred_check
      %p221 = pneg %p220
    $region22: #{double_stream_block.20} parent=5 // pred_check_branch
      %223 = sbr.rel (%p221) target = $region24
    $region23: #{double_stream_block.20} parent=5 // pred_region
      // Predicated region
      $region25: #{double_stream_block.20} parent=23 // pred_check
        %p224 = pneg %p52
      $region26: #{double_stream_block.20} parent=23 // pred_check_branch
        %226 = sbr.rel (%p224) target = $region28
      $region27: #{double_stream_block.20} parent=23 // pred_region
        %p227 = scmp.lt.s32.totalorder %s18, 1
        %s228 = scalar_select %p227, %s18, 1
        %p229 = scmp.lt.s32.totalorder %s19, 0
        %s230 = scalar_select %p229, %s19, 0
        %s231 = sadd.s32 %s230, %s228
        %s232 = smul.addr %s231, 4
        %s233 = scalar_lea.vmem %s0, %s232
      $region28: #{double_stream_block.20} parent=23 // pred_fallthru
        _
      // Predicated region
      $region29: #{double_stream_block.20} parent=23 // pred_check
        %p234 = pneg %p78
      $region30: #{double_stream_block.20} parent=23 // pred_check_branch
        %236 = sbr.rel (%p234) target = $region32
      $region31: #{double_stream_block.20} parent=23 // pred_region
        %p237 = scmp.lt.s32.totalorder %s18, 1
        %s238 = scalar_select %p237, %s18, 1
        %s239 = scalar_lea.vmem %s1, %s238
      $region32: #{double_stream_block.20} parent=23 // pred_fallthru
        _
      // Predicated region
      $region33: #{double_stream_block.20} parent=23 // pred_check
        %p240 = pneg %p104
      $region34: #{double_stream_block.20} parent=23 // pred_check_branch
        %242 = sbr.rel (%p240) target = $region36
      $region35: #{double_stream_block.20} parent=23 // pred_region
        %p243 = scmp.lt.s32.totalorder %s18, 1
        %s244 = scalar_select %p243, %s18, 1
        %s245 = scalar_lea.vmem %s2, %s244
      $region36: #{double_stream_block.20} parent=23 // pred_fallthru
        _
    $region24: #{double_stream_block.20} parent=5 // pred_fallthru
      _
    %p246 = scmp.le.s32.totalorder 1, %s11
    %p247 = scmp.lt.s32.totalorder %s11, 3
    %p248 = pnand %p246, %p247
    %p249 = pneg %p248
    // Predicated region
    $region37: #{double_stream_block.20} parent=5 // pred_check
      _
    $region38: #{double_stream_block.20} parent=5 // pred_check_branch
      %251 = sbr.rel (%p248) target = $region40
    $region39: #{double_stream_block.20} parent=5 // pred_region
      %s252 = ssub.s32 %s11, 1
      %p253 = scmp.lt.s32.totalorder %s21, 1
      %s254 = scalar_select %p253, %s21, 1
      %p255 = scmp.lt.s32.totalorder %s22, 0
      %s256 = scalar_select %p255, %s22, 0
      %s257 = sadd.s32 %s256, %s254
      %s258 = smul.addr %s257, 4
      %s259 = scalar_lea.vmem %s0, %s258
      %p260 = pneg %p58
      %p261 = pneg %p55
      %p262 = scmp.lt.s32.totalorder %s21, 1
      %s263 = scalar_select %p262, %s21, 1
      %s264 = scalar_lea.vmem %s1, %s263
      %p265 = pneg %p84
      %p266 = pneg %p81
      %p267 = scmp.lt.s32.totalorder %s21, 1
      %s268 = scalar_select %p267, %s21, 1
      %s269 = scalar_lea.vmem %s2, %s268
      %p270 = pneg %p110
      %p271 = pneg %p107
      %p272 = scmp.lt.s32.totalorder %s23, 0
      %s273 = scalar_select %p272, %s23, 0
      %s274 = smul.addr %s273, 4
      %s275 = scalar_lea.vmem %s3, %s274
      %p276 = pneg %p136
      %p277 = pneg %p133
      %p278 = scmp.lt.s32.totalorder %s23, 0
      %s279 = scalar_select %p278, %s23, 0
      %s280 = scalar_lea.vmem %s4, %s279
      %p281 = pneg %p162
      %p282 = pneg %p159
      %p283 = pneg %p192
      %p284 = pneg %p189
      %p285 = scmp.lt.s32.totalorder %s21, 1
      %s286 = scalar_select %p285, %s21, 1
      %p287 = scmp.lt.s32.totalorder %s22, 0
      %s288 = scalar_select %p287, %s22, 0
      %p289 = scmp.lt.s32.totalorder %s23, 0
      %s290 = scalar_select %p289, %s23, 0
      %s291 = sadd.s32 %s290, %s288
      %s292 = sadd.s32 %s291, %s286
      %s293 = smul.addr %s292, 2
      %s294 = scalar_lea.vmem %s5, %s293
      %p295 = scmp.lt.s32.totalorder %s21, 1
      %s296 = scalar_select %p295, %s21, 1
      %p297 = scmp.lt.s32.totalorder %s22, 0
      %s298 = scalar_select %p297, %s22, 0
      %s299 = sadd.s32 %s298, %s296
      %s300 = smul.addr %s299, 4
      %s301 = scalar_lea.vmem %s0, %s300
      %p302 = scmp.lt.s32.totalorder %s21, 1
      %s303 = scalar_select %p302, %s21, 1
      %s304 = scalar_lea.vmem %s1, %s303
      %p305 = scmp.lt.s32.totalorder %s21, 1
      %s306 = scalar_select %p305, %s21, 1
      %s307 = scalar_lea.vmem %s2, %s306
      %p308 = scmp.lt.s32.totalorder %s23, 0
      %s309 = scalar_select %p308, %s23, 0
      %s310 = smul.addr %s309, 4
      %s311 = scalar_lea.vmem %s3, %s310
      %p312 = scmp.lt.s32.totalorder %s23, 0
      %s313 = scalar_select %p312, %s23, 0
      %s314 = scalar_lea.vmem %s4, %s313
      %p315 = scmp.lt.s32.totalorder %s21, 1
      %s316 = scalar_select %p315, %s21, 1
      %p317 = scmp.lt.s32.totalorder %s22, 0
      %s318 = scalar_select %p317, %s22, 0
      %p319 = scmp.lt.s32.totalorder %s23, 0
      %s320 = scalar_select %p319, %s23, 0
      %s321 = sadd.s32 %s320, %s318
      %s322 = sadd.s32 %s321, %s316
      %s323 = smul.addr %s322, 2
      %s324 = scalar_lea.vmem %s5, %s323
      %v326 = vld [vmem:[%s301] sm:$0xf]
      %vm327 = vcmask 257024
      %v328 = vsel %vm327, %v326, 0.0
      %329 = vadd.xlane.f32.xlu0 %v328
      %v330 = vpop.xlane.xlu0 %329
      %v331 = vrcp.pop 32.0
      %v332 = vmul.f32 32.0, %v331
      %v333 = vsub.f32 1.0, %v332
      %v334 = vmul.f32 %v331, %v333
      %v335 = vadd.f32 %v331, %v334
      %vm336 = vweird.f32 %v331
      %v337 = vsel %vm336, %v331, %v335
      %v338 = vmul.f32 %v330, %v337
      %v339 = vsub.f32 %v326, %v338
      %v340 = vmul.f32 %v339, %v339
      %v341 = vsel %vm327, %v340, 0.0
      %342 = vadd.xlane.f32.xlu0 %v341
      %v343 = vpop.xlane.xlu0 %342
      %v344 = vmul.f32 %v343, %v337
      %v345 = vadd.f32 %v344, 1e-06
      %v346 = vrsqrt.pop %v345
      %v347 = vmul.f32 %v346, %v345
      %v348 = vmul.f32 %v347, %v346
      %v349 = vmul.f32 0.5, %v348
      %v350 = vsub.f32 1.5, %v349
      %v351 = vmul.f32 %v346, %v350
      %vm352 = vweird.f32 %v345
      %vm353 = vweird.f32 %v346
      %vm354 = vmor %vm352, %vm353
      %v355 = vsel %vm354, %v346, %v351
      %v356 = vmul.f32 %v339, %v355
      %v357 = vld [vmem:[%s304] sm:$0x1]
      %v358 = vadd.f32 %v357, 1.0
      %v360 = vperm.slane %v358, 0
      %v362 = vmul.f32 %v360, %v356
      %v363 = vld [vmem:[%s307] sm:$0x1]
      %v365 = vperm.slane %v363, 0
      %v367 = vadd.f32 %v362, %v365
      %v368 = vpack.c.bf16 %v367, %v367
      %v369 = vld [vmem:[%s311] sm:$0xf]
      %v370 = vld [vmem:[%s311 + $0x4] sm:$0xf]
      %v371 = vld [vmem:[%s311 + $0x8] sm:$0xf]
      %v372 = vld [vmem:[%s311 + $0xc] sm:$0xf]
      %v373 = vld [vmem:[%s314] sm:$0x1]
      %v375 = vperm.slane %v373, 0
      %v381 = vunpack.c.l.b16 %v369
      %v382 = vunpack.c.l.b16 %v370
      %v383 = vunpack.c.l.b16 %v371
      %v384 = vunpack.c.l.b16 %v372
      %v385 = vpack.c.b16 %v382, %v381
      %v386 = vpack.c.b16 %v384, %v383
      %vm389 = vcmask 261120
      %v391 = vsel %vm389, %v368, 0
      %393 = vmatpush.bf16.msra.mxu0 0
      %394 = vmatpush.bf16.msra.mxu0 0
      %395 = vmatpush.bf16.msra.mxu0 0
      %396 = vmatpush.bf16.msra.mxu0 0
      %397 = vmatpush.bf16.msra.mxu0 0
      %398 = vmatpush.bf16.msra.mxu0 0
      %399 = vmatpush.bf16.msra.mxu0 %v386
      %400 = vmatpush.bf16.msra.mxu0 %v385
      %401 = vmatmul.bf16.gmra.mxu0 %v391
      %v402 = vpop.f32.mrf.mxu0
      %v403 = vadd.f32 %v375, %v402
      %v404 = vpop.f32.mrf.mxu0
      %405 = vdwg.mxu0
      %v406 = vmul.f32 %v403, 0.5
      %v407 = vmul.f32 %v403, 0.044715
      %v408 = vmul.f32 %v407, %v403
      %v409 = vmul.f32 %v408, %v403
      %v410 = vadd.f32 %v403, %v409
      %v411 = vmul.f32 %v410, 0.7978846
      %v412 = vtanh.pop %v411
      %v413 = vadd.f32 %v412, 1.0
      %v414 = vmul.f32 %v406, %v413
      %v415 = vpack.c.bf16 %v414, %v414
      %416 = vst [vmem:[%s324] sm:$0x3] %v415
      %p417 = scmp.lt.s32.totalorder %s21, 1
      %s418 = scalar_select %p417, %s21, 1
      %p419 = scmp.lt.s32.totalorder %s22, 0
      %s420 = scalar_select %p419, %s22, 0
      %p421 = scmp.lt.s32.totalorder %s23, 0
      %s422 = scalar_select %p421, %s23, 0
      %s423 = sadd.s32 %s422, %s420
      %s424 = sadd.s32 %s423, %s418
      %s425 = smul.addr %s424, 2
      %s426 = scalar_lea.vmem %s5, %s425
      // Predicated region
      $region41: #{double_stream_block.20} parent=39 // pred_check
        %p427 = pneg %p189
      $region42: #{double_stream_block.20} parent=39 // pred_check_branch
        %429 = sbr.rel (%p427) target = $region44
      $region43: #{double_stream_block.20} parent=39 // pred_region
        _
      $region44: #{double_stream_block.20} parent=39 // pred_fallthru
        _
    $region40: #{double_stream_block.20} parent=5 // pred_fallthru
      _
    %p430 = scmp.le.s32.totalorder 2, %s11
    // Predicated region
    $region45: #{double_stream_block.20} parent=5 // pred_check
      %p431 = pneg %p430
    $region46: #{double_stream_block.20} parent=5 // pred_check_branch
      %433 = sbr.rel (%p431) target = $region48
    $region47: #{double_stream_block.20} parent=5 // pred_region
      %s434 = ssub.s32 %s11, 2
      // Predicated region
      $region49: #{double_stream_block.20} parent=47 // pred_check
        %p435 = pneg %p195
      $region50: #{double_stream_block.20} parent=47 // pred_check_branch
        %437 = sbr.rel (%p435) target = $region52
      $region51: #{double_stream_block.20} parent=47 // pred_region
        %p438 = scmp.lt.s32.totalorder %s24, 1
        %s439 = scalar_select %p438, %s24, 1
        %p440 = scmp.lt.s32.totalorder %s25, 0
        %s441 = scalar_select %p440, %s25, 0
        %p442 = scmp.lt.s32.totalorder %s26, 0
        %s443 = scalar_select %p442, %s26, 0
        %s444 = sadd.s32 %s443, %s441
        %s445 = sadd.s32 %s444, %s439
        %s446 = smul.addr %s445, 2
        %s447 = scalar_lea.vmem %s5, %s446
      $region52: #{double_stream_block.20} parent=47 // pred_fallthru
        _
    $region48: #{double_stream_block.20} parent=5 // pred_fallthru
      _
  $region6: #{double_stream_block.20} parent=0 // loop_footer
    %s15 = sadd.s32 1, %s11
  $region7: #{double_stream_block.20} parent=0 // loop_footer_branch
    %10 = sbr.rel target = $region3
  $region8: #{double_stream_block.20} parent=0 // loop_exit
    _

// kernel: double_stream_block.21
$region0: #{double_stream_block.21}
  #allocation0 [shape = 'u32[]', space=smem, size = 0x4, offset = 0x4, fixed_abs, tag = 'smem constant byte address 0x4 - core index']
  #allocation1 [shape = 'u32[72,128]{1,0:T(1,128)}', space=vmem, size = 0x9000, scoped, tag = 'internal scratch']
  #allocation2 [shape = 'f32[4,32]{1,0:T(4,128)}', space=vmem, size = 0x800, scoped, tag = 'scratch operand']
  %s0 = inlined_call_operand.vmem [shape: bf16[2,4,128], index: 0, kind: input, shape index: {}]
  %s1 = inlined_call_operand.vmem [shape: bf16[128,32], index: 1, kind: input, shape index: {}]
  %s2 = inlined_call_operand.vmem [shape: f32[1,32], index: 2, kind: input, shape index: {}]
  %s3 = inlined_call_operand.vmem [shape: f32[2,1,32], index: 3, kind: input, shape index: {}]
  %s4 = inlined_call_operand.vmem [shape: f32[2,4,32], index: 4, kind: input, shape index: {}]
  %s5 = inlined_call_operand.hbm [shape: f32[2,4,32], index: 5, kind: output, shape index: {}]
  %s6 = sld [smem:[#allocation0]]
  $region61: #{double_stream_block.21} parent=0
    _
  %s8 = ssub.s32 1, %s6
  %s9 = scalar_select 0, %s8, %s6
  $region1: #{double_stream_block.21} parent=0
    #allocation3 [shape = 'u8[4096]{0}', space=vmem, size = 0x1000, scoped, tag = 'output window, operand 0']
    #allocation4 [shape = 's32[2]{0}', space=sflag, size = 0x8, scoped, tag = 'scoped memory for double_stream_block.21']
    %10 = vsyncpa [#allocation4], 0
    %s11 = scalar_lea.sflag [#allocation4], 1
    %12 = vsyncpa %s11, 0
    loop: start=0, step=1, limit=4
    $region2: #{double_stream_block.21} parent=1 // loop_pre_header
      _
    $region3: #{double_stream_block.21} parent=1 // loop_header
      %s14 = sphi 0, %s18
      %p15 = scmp.ge.s32.totalorder %s14, 4
      %s21 = sphi 0, %s47
      %s22 = sphi 0, %s43
      %s23 = sphi 0, %s39
      %s24 = sphi 0, %s35
      %s25 = sphi 0, %s21
      %s26 = sphi 0, %s22
      %s27 = sphi 0, %s23
      %s28 = sphi 0, %s24
      %s29 = sphi 0, %s25
      %s30 = sphi 0, %s26
      %s31 = sphi 0, %s27
      %s32 = sphi 0, %s28
      %s54 = sphi 0, %s56
      %s57 = sphi 0, %s54
      %s58 = sphi 0, %s57
      %s74 = sphi 0, %s58
      %s82 = sphi 0, %s84
      %s85 = sphi 0, %s82
      %s86 = sphi 0, %s85
      %s102 = sphi 0, %s86
      %s108 = sphi 0, %s110
      %s111 = sphi 0, %s108
      %s112 = sphi 0, %s111
      %s128 = sphi 0, %s112
      %s136 = sphi 0, %s138
      %s139 = sphi 0, %s136
      %s140 = sphi 0, %s139
      %s156 = sphi 0, %s140
      %s166 = sphi 0, %s168
      %s169 = sphi 0, %s166
      %s170 = sphi 0, %s169
      %s186 = sphi 0, %s170
      %s196 = sphi 0, %s198
      %s199 = sphi 0, %s196
      %s200 = sphi 0, %s199
      %s216 = sphi 0, %s200
    $region4: #{double_stream_block.21} parent=1 // loop_header_branch
      %17 = sbr.rel (%p15) target = $region8
    $region5: #{double_stream_block.21} parent=1 // loop_body
      %s19 = ssub.s32 %s14, 1
      %s20 = ssub.s32 %s14, 2
      %s33 = sadd.s32 1, %s24
      %p34 = scmp.ge.s32.totalorder %s33, 1
      %s35 = scalar_select %p34, 0, %s33
      %s36 = sadd.s32 1, %s23
      %s37 = scalar_select %p34, %s36, %s23
      %p38 = scmp.ge.s32.totalorder %s37, 1
      %s39 = scalar_select %p38, 0, %s37
      %s40 = sadd.s32 1, %s22
      %s41 = scalar_select %p38, %s40, %s22
      %p42 = scmp.ge.s32.totalorder %s41, 1
      %s43 = scalar_select %p42, 0, %s41
      %s44 = sadd.s32 1, %s21
      %s45 = scalar_select %p42, %s44, %s21
      %p46 = scmp.ge.s32.totalorder %s45, 2
      %s47 = scalar_select %p46, 0, %s45
      %s48 = ssub.s32 %s21, %s47
      %s49 = ssub.s32 %s22, %s43
      %s50 = sor.u32 %s48, %s49
      %s51 = ssub.s32 %s24, %s35
      %s52 = sor.u32 %s50, %s51
      %p53 = scmp.eq.s32.totalorder %s52, 0
      %s55 = sadd.s32 %s54, 1
      %s56 = scalar_select %p53, %s54, %s55
      %p59 = pneg %p53
      %p60 = scmp.eq.s32.totalorder %s14, 1
      %p61 = por %p59, %p60
      %p62 = scmp.ne.s32.totalorder %s54, %s57
      %p63 = scmp.eq.s32.totalorder %s14, 0
      %p64 = por %p62, %p63
      %p65 = scmp.ne.s32.totalorder %s54, %s57
      %p66 = scmp.eq.s32.totalorder %s19, 1
      %p67 = por %p65, %p66
      %p68 = scmp.ne.s32.totalorder %s57, %s58
      %p69 = scmp.eq.s32.totalorder %s19, 0
      %p70 = por %p68, %p69
      %p71 = scmp.ne.s32.totalorder %s57, %s58
      %p72 = scmp.eq.s32.totalorder %s20, 1
      %p73 = por %p71, %p72
      %p75 = scmp.ne.s32.totalorder %s58, %s74
      %p76 = scmp.eq.s32.totalorder %s20, 0
      %p77 = por %p75, %p76
      %s78 = ssub.s32 %s24, %s35
      %s79 = ssub.s32 %s23, %s39
      %s80 = sor.u32 %s78, %s79
      %p81 = scmp.eq.s32.totalorder %s80, 0
      %s83 = sadd.s32 %s82, 1
      %s84 = scalar_select %p81, %s82, %s83
      %p87 = pneg %p81
      %p88 = scmp.eq.s32.totalorder %s14, 1
      %p89 = por %p87, %p88
      %p90 = scmp.ne.s32.totalorder %s82, %s85
      %p91 = scmp.eq.s32.totalorder %s14, 0
      %p92 = por %p90, %p91
      %p93 = scmp.ne.s32.totalorder %s82, %s85
      %p94 = scmp.eq.s32.totalorder %s19, 1
      %p95 = por %p93, %p94
      %p96 = scmp.ne.s32.totalorder %s85, %s86
      %p97 = scmp.eq.s32.totalorder %s19, 0
      %p98 = por %p96, %p97
      %p99 = scmp.ne.s32.totalorder %s85, %s86
      %p100 = scmp.eq.s32.totalorder %s20, 1
      %p101 = por %p99, %p100
      %p103 = scmp.ne.s32.totalorder %s86, %s102
      %p104 = scmp.eq.s32.totalorder %s20, 0
      %p105 = por %p103, %p104
      %s106 = ssub.s32 %s23, %s39
      %p107 = scmp.eq.s32.totalorder %s106, 0
      %s109 = sadd.s32 %s108, 1
      %s110 = scalar_select %p107, %s108, %s109
      %p113 = pneg %p107
      %p114 = scmp.eq.s32.totalorder %s14, 1
      %p115 = por %p113, %p114
      %p116 = scmp.ne.s32.totalorder %s108, %s111
      %p117 = scmp.eq.s32.totalorder %s14, 0
      %p118 = por %p116, %p117
      %p119 = scmp.ne.s32.totalorder %s108, %s111
      %p120 = scmp.eq.s32.totalorder %s19, 1
      %p121 = por %p119, %p120
      %p122 = scmp.ne.s32.totalorder %s111, %s112
      %p123 = scmp.eq.s32.totalorder %s19, 0
      %p124 = por %p122, %p123
      %p125 = scmp.ne.s32.totalorder %s111, %s112
      %p126 = scmp.eq.s32.totalorder %s20, 1
      %p127 = por %p125, %p126
      %p129 = scmp.ne.s32.totalorder %s112, %s128
      %p130 = scmp.eq.s32.totalorder %s20, 0
      %p131 = por %p129, %p130
      %s132 = ssub.s32 %s21, %s47
      %s133 = ssub.s32 %s23, %s39
      %s134 = sor.u32 %s132, %s133
      %p135 = scmp.eq.s32.totalorder %s134, 0
      %s137 = sadd.s32 %s136, 1
      %s138 = scalar_select %p135, %s136, %s137
      %p141 = pneg %p135
      %p142 = scmp.eq.s32.totalorder %s14, 1
      %p143 = por %p141, %p142
      %p144 = scmp.ne.s32.totalorder %s136, %s139
      %p145 = scmp.eq.s32.totalorder %s14, 0
      %p146 = por %p144, %p145
      %p147 = scmp.ne.s32.totalorder %s136, %s139
      %p148 = scmp.eq.s32.totalorder %s19, 1
      %p149 = por %p147, %p148
      %p150 = scmp.ne.s32.totalorder %s139, %s140
      %p151 = scmp.eq.s32.totalorder %s19, 0
      %p152 = por %p150, %p151
      %p153 = scmp.ne.s32.totalorder %s139, %s140
      %p154 = scmp.eq.s32.totalorder %s20, 1
      %p155 = por %p153, %p154
      %p157 = scmp.ne.s32.totalorder %s140, %s156
      %p158 = scmp.eq.s32.totalorder %s20, 0
      %p159 = por %p157, %p158
      %s160 = ssub.s32 %s21, %s47
      %s161 = ssub.s32 %s22, %s43
      %s162 = sor.u32 %s160, %s161
      %s163 = ssub.s32 %s23, %s39
      %s164 = sor.u32 %s162, %s163
      %p165 = scmp.eq.s32.totalorder %s164, 0
      %s167 = sadd.s32 %s166, 1
      %s168 = scalar_select %p165, %s166, %s167
      %p171 = pneg %p165
      %p172 = scmp.eq.s32.totalorder %s14, 1
      %p173 = por %p171, %p172
      %p174 = scmp.ne.s32.totalorder %s166, %s169
      %p175 = scmp.eq.s32.totalorder %s14, 0
      %p176 = por %p174, %p175
      %p177 = scmp.ne.s32.totalorder %s166, %s169
      %p178 = scmp.eq.s32.totalorder %s19, 1
      %p179 = por %p177, %p178
      %p180 = scmp.ne.s32.totalorder %s169, %s170
      %p181 = scmp.eq.s32.totalorder %s19, 0
      %p182 = por %p180, %p181
      %p183 = scmp.ne.s32.totalorder %s169, %s170
      %p184 = scmp.eq.s32.totalorder %s20, 1
      %p185 = por %p183, %p184
      %p187 = scmp.ne.s32.totalorder %s170, %s186
      %p188 = scmp.eq.s32.totalorder %s20, 0
      %p189 = por %p187, %p188
      %s190 = ssub.s32 %s21, %s47
      %s191 = ssub.s32 %s22, %s43
      %s192 = sor.u32 %s190, %s191
      %s193 = ssub.s32 %s23, %s39
      %s194 = sor.u32 %s192, %s193
      %p195 = scmp.eq.s32.totalorder %s194, 0
      %s197 = sadd.s32 %s196, 1
      %s198 = scalar_select %p195, %s196, %s197
      %p201 = pneg %p195
      %p202 = scmp.eq.s32.totalorder %s14, 1
      %p203 = por %p201, %p202
      %p204 = scmp.ne.s32.totalorder %s196, %s199
      %p205 = scmp.eq.s32.totalorder %s14, 0
      %p206 = por %p204, %p205
      %p207 = scmp.ne.s32.totalorder %s196, %s199
      %p208 = scmp.eq.s32.totalorder %s19, 1
      %p209 = por %p207, %p208
      %p210 = scmp.ne.s32.totalorder %s199, %s200
      %p211 = scmp.eq.s32.totalorder %s19, 0
      %p212 = por %p210, %p211
      %p213 = scmp.ne.s32.totalorder %s199, %s200
      %p214 = scmp.eq.s32.totalorder %s20, 1
      %p215 = por %p213, %p214
      %p217 = scmp.ne.s32.totalorder %s200, %s216
      %p218 = scmp.eq.s32.totalorder %s20, 0
      %p219 = por %p217, %p218
      %p220 = scmp.le.s32.totalorder 1, %s14
      %p221 = scmp.lt.s32.totalorder %s14, 3
      %p222 = pnand %p220, %p221
      %p223 = pneg %p222
      // Predicated region
      $region9: #{double_stream_block.21} parent=5 // pred_check
        _
      $region10: #{double_stream_block.21} parent=5 // pred_check_branch
        %225 = sbr.rel (%p222) target = $region12
      $region11: #{double_stream_block.21} parent=5 // pred_region
        %s226 = ssub.s32 %s14, 1
        // Predicated region
        $region13: #{double_stream_block.21} parent=11 // pred_check
          %p227 = pneg %p98
        $region14: #{double_stream_block.21} parent=11 // pred_check_branch
          %229 = sbr.rel (%p227) target = $region16
        $region15: #{double_stream_block.21} parent=11 // pred_region
          %s230 = smul.u32 16, %s28
          %p231 = scmp.lt.s32.totalorder %s230, 15
          %s232 = scalar_select %p231, %s230, 15
          %p233 = scmp.lt.s32.totalorder %s27, 0
          %s234 = scalar_select %p233, %s27, 0
          %s235 = sadd.s32 %s234, %s232
          %s236 = smul.addr %s235, 4
          %s237 = scalar_lea.vmem %s1, %s236
          %s238 = smul.u32 16, %s28
        $region16: #{double_stream_block.21} parent=11 // pred_fallthru
          _
        // Predicated region
        $region17: #{double_stream_block.21} parent=11 // pred_check
          %p239 = pneg %p124
        $region18: #{double_stream_block.21} parent=11 // pred_check_branch
          %241 = sbr.rel (%p239) target = $region20
        $region19: #{double_stream_block.21} parent=11 // pred_region
          %p242 = scmp.lt.s32.totalorder %s27, 0
          %s243 = scalar_select %p242, %s27, 0
          %s244 = scalar_lea.vmem %s2, %s243
        $region20: #{double_stream_block.21} parent=11 // pred_fallthru
          _
      $region12: #{double_stream_block.21} parent=5 // pred_fallthru
        _
      %p245 = scmp.lt.s32.totalorder %s14, 2
      // Predicated region
      $region21: #{double_stream_block.21} parent=5 // pred_check
        %p246 = pneg %p245
      $region22: #{double_stream_block.21} parent=5 // pred_check_branch
        %248 = sbr.rel (%p246) target = $region24
      $region23: #{double_stream_block.21} parent=5 // pred_region
        // Predicated region
        $region25: #{double_stream_block.21} parent=23 // pred_check
          %p249 = pneg %p64
        $region26: #{double_stream_block.21} parent=23 // pred_check_branch
          %251 = sbr.rel (%p249) target = $region28
        $region27: #{double_stream_block.21} parent=23 // pred_region
          %p252 = scmp.lt.s32.totalorder %s21, 1
          %s253 = scalar_select %p252, %s21, 1
          %p254 = scmp.lt.s32.totalorder %s22, 0
          %s255 = scalar_select %p254, %s22, 0
          %p256 = scmp.lt.s32.totalorder %s24, 0
          %s257 = scalar_select %p256, %s24, 0
          %s258 = sadd.s32 %s257, %s255
          %s259 = sadd.s32 %s258, %s253
          %s260 = smul.addr %s259, 2
          %s261 = scalar_lea.vmem %s0, %s260
        $region28: #{double_stream_block.21} parent=23 // pred_fallthru
          _
        // Predicated region
        $region29: #{double_stream_block.21} parent=23 // pred_check
          %p262 = pneg %p146
        $region30: #{double_stream_block.21} parent=23 // pred_check_branch
          %264 = sbr.rel (%p262) target = $region32
        $region31: #{double_stream_block.21} parent=23 // pred_region
          %p265 = scmp.lt.s32.totalorder %s21, 1
          %s266 = scalar_select %p265, %s21, 1
          %p267 = scmp.lt.s32.totalorder %s23, 0
          %s268 = scalar_select %p267, %s23, 0
          %s269 = sadd.s32 %s268, %s266
          %s270 = scalar_lea.vmem %s3, %s269
        $region32: #{double_stream_block.21} parent=23 // pred_fallthru
          _
        // Predicated region
        $region33: #{double_stream_block.21} parent=23 // pred_check
          %p271 = pneg %p176
        $region34: #{double_stream_block.21} parent=23 // pred_check_branch
          %273 = sbr.rel (%p271) target = $region36
        $region35: #{double_stream_block.21} parent=23 // pred_region
          %p274 = scmp.lt.s32.totalorder %s21, 1
          %s275 = scalar_select %p274, %s21, 1
          %p276 = scmp.lt.s32.totalorder %s22, 0
          %s277 = scalar_select %p276, %s22, 0
          %p278 = scmp.lt.s32.totalorder %s23, 0
          %s279 = scalar_select %p278, %s23, 0
          %s280 = sadd.s32 %s279, %s277
          %s281 = sadd.s32 %s280, %s275
          %s282 = smul.addr %s281, 4
          %s283 = scalar_lea.vmem %s4, %s282
        $region36: #{double_stream_block.21} parent=23 // pred_fallthru
          _
      $region24: #{double_stream_block.21} parent=5 // pred_fallthru
        _
      %p284 = scmp.le.s32.totalorder 1, %s14
      %p285 = scmp.lt.s32.totalorder %s14, 3
      %p286 = pnand %p284, %p285
      %p287 = pneg %p286
      // Predicated region
      $region37: #{double_stream_block.21} parent=5 // pred_check
        _
      $region38: #{double_stream_block.21} parent=5 // pred_check_branch
        %289 = sbr.rel (%p286) target = $region40
      $region39: #{double_stream_block.21} parent=5 // pred_region
        %s290 = ssub.s32 %s14, 1
        %p291 = scmp.lt.s32.totalorder %s25, 1
        %s292 = scalar_select %p291, %s25, 1
        %p293 = scmp.lt.s32.totalorder %s26, 0
        %s294 = scalar_select %p293, %s26, 0
        %p295 = scmp.lt.s32.totalorder %s28, 0
        %s296 = scalar_select %p295, %s28, 0
        %s297 = sadd.s32 %s296, %s294
        %s298 = sadd.s32 %s297, %s292
        %s299 = smul.addr %s298, 2
        %s300 = scalar_lea.vmem %s0, %s299
        %p301 = pneg %p70
        %p302 = pneg %p67
        %s303 = smul.u32 16, %s28
        %p304 = scmp.lt.s32.totalorder %s303, 15
        %s305 = scalar_select %p304, %s303, 15
        %p306 = scmp.lt.s32.totalorder %s27, 0
        %s307 = scalar_select %p306, %s27, 0
        %s308 = sadd.s32 %s307, %s305
        %s309 = smul.addr %s308, 4
        %s310 = scalar_lea.vmem %s1, %s309
        %p311 = pneg %p98
        %p312 = pneg %p95
        %p313 = scmp.lt.s32.totalorder %s27, 0
        %s314 = scalar_select %p313, %s27, 0
        %s315 = scalar_lea.vmem %s2, %s314
        %p316 = pneg %p124
        %p317 = pneg %p121
        %p318 = scmp.lt.s32.totalorder %s25, 1
        %s319 = scalar_select %p318, %s25, 1
        %p320 = scmp.lt.s32.totalorder %s27, 0
        %s321 = scalar_select %p320, %s27, 0
        %s322 = sadd.s32 %s321, %s319
        %s323 = scalar_lea.vmem %s3, %s322
        %p324 = pneg %p152
        %p325 = pneg %p149
        %p326 = scmp.lt.s32.totalorder %s25, 1
        %s327 = scalar_select %p326, %s25, 1
        %p328 = scmp.lt.s32.totalorder %s26, 0
        %s329 = scalar_select %p328, %s26, 0
        %p330 = scmp.lt.s32.totalorder %s27, 0
        %s331 = scalar_select %p330, %s27, 0
        %s332 = sadd.s32 %s331, %s329
        %s333 = sadd.s32 %s332, %s327
        %s334 = smul.addr %s333, 4
        %s335 = scalar_lea.vmem %s4, %s334
        %p336 = pneg %p182
        %p337 = pneg %p179
        %p338 = pneg %p212
        %p339 = pneg %p209
        %s340 = sand.u32 %s199, 1
        %s341 = scalar_lea.sflag [#allocation4], %s340
        %s342 = sand.u32 %s199, 1
        %s343 = smul.addr %s342, 4
        %s344 = scalar_lea.vmem [#allocation3], %s343
        %p345 = scmp.lt.s32.totalorder %s25, 1
        %s346 = scalar_select %p345, %s25, 1
        %p347 = scmp.lt.s32.totalorder %s26, 0
        %s348 = scalar_select %p347, %s26, 0
        %p349 = scmp.lt.s32.totalorder %s28, 0
        %s350 = scalar_select %p349, %s28, 0
        %s351 = sadd.s32 %s350, %s348
        %s352 = sadd.s32 %s351, %s346
        %s353 = smul.addr %s352, 2
        %s354 = scalar_lea.vmem %s0, %s353
        %s355 = smul.u32 16, %s28
        %p356 = scmp.lt.s32.totalorder %s355, 15
        %s357 = scalar_select %p356, %s355, 15
        %p358 = scmp.lt.s32.totalorder %s27, 0
        %s359 = scalar_select %p358, %s27, 0
        %s360 = sadd.s32 %s359, %s357
        %s361 = smul.addr %s360, 4
        %s362 = scalar_lea.vmem %s1, %s361
        %s363 = smul.u32 16, %s28
        %p364 = scmp.lt.s32.totalorder %s27, 0
        %s365 = scalar_select %p364, %s27, 0
        %s366 = scalar_lea.vmem %s2, %s365
        %p367 = scmp.lt.s32.totalorder %s25, 1
        %s368 = scalar_select %p367, %s25, 1
        %p369 = scmp.lt.s32.totalorder %s27, 0
        %s370 = scalar_select %p369, %s27, 0
        %s371 = sadd.s32 %s370, %s368
        %s372 = scalar_lea.vmem %s3, %s371
        %p373 = scmp.lt.s32.totalorder %s25, 1
        %s374 = scalar_select %p373, %s25, 1
        %p375 = scmp.lt.s32.totalorder %s26, 0
        %s376 = scalar_select %p375, %s26, 0
        %p377 = scmp.lt.s32.totalorder %s27, 0
        %s378 = scalar_select %p377, %s27, 0
        %s379 = sadd.s32 %s378, %s376
        %s380 = sadd.s32 %s379, %s374
        %s381 = smul.addr %s380, 4
        %s382 = scalar_lea.vmem %s4, %s381
        %p383 = scmp.eq.s32.totalorder %s28, 0
        // Predicated region
        $region41: #{double_stream_block.21} parent=39 // pred_check
          %p384 = pneg %p383
        $region42: #{double_stream_block.21} parent=39 // pred_check_branch
          %386 = sbr.rel (%p384) target = $region44
        $region43: #{double_stream_block.21} parent=39 // pred_region
          %vm387 = vcmask 257024
          %388 = vst.msk [vmem:[#allocation2] sm:$0xf] %vm387, 0.0
        $region44: #{double_stream_block.21} parent=39 // pred_fallthru
          _
        %v389 = vld [vmem:[#allocation2] sm:$0xf]
        %v390 = vld [vmem:[%s354] sm:$0x3]
        %v391 = vld [vmem:[%s362] sm:$0xf]
        %v392 = vld [vmem:[%s362 + $0x4] sm:$0xf]
        %v393 = vld [vmem:[%s362 + $0x8] sm:$0xf]
        %v394 = vld [vmem:[%s362 + $0xc] sm:$0xf]
        %v395 = vld [vmem:[%s362 + $0x10] sm:$0xf]
        %v396 = vld [vmem:[%s362 + $0x14] sm:$0xf]
        %v397 = vld [vmem:[%s362 + $0x18] sm:$0xf]
        %v398 = vld [vmem:[%s362 + $0x1c] sm:$0xf]
        %v399 = vld [vmem:[%s362 + $0x20] sm:$0xf]
        %v400 = vld [vmem:[%s362 + $0x24] sm:$0xf]
        %v401 = vld [vmem:[%s362 + $0x28] sm:$0xf]
        %v402 = vld [vmem:[%s362 + $0x2c] sm:$0xf]
        %v403 = vld [vmem:[%s362 + $0x30] sm:$0xf]
        %v404 = vld [vmem:[%s362 + $0x34] sm:$0xf]
        %v405 = vld [vmem:[%s362 + $0x38] sm:$0xf]
        %v406 = vld [vmem:[%s362 + $0x3c] sm:$0xf]
        %v423 = vunpack.c.l.b16 %v391
        %v424 = vunpack.c.l.b16 %v392
        %v425 = vunpack.c.l.b16 %v393
        %v426 = vunpack.c.l.b16 %v394
        %v427 = vunpack.c.l.b16 %v395
        %v428 = vunpack.c.l.b16 %v396
        %v429 = vunpack.c.l.b16 %v397
        %v430 = vunpack.c.l.b16 %v398
        %v431 = vunpack.c.l.b16 %v399
        %v432 = vunpack.c.l.b16 %v400
        %v433 = vunpack.c.l.b16 %v401
        %v434 = vunpack.c.l.b16 %v402
        %v435 = vunpack.c.l.b16 %v403
        %v436 = vunpack.c.l.b16 %v404
        %v437 = vunpack.c.l.b16 %v405
        %v438 = vunpack.c.l.b16 %v406
        %v439 = vpack.c.b16 %v424, %v423
        %v440 = vpack.c.b16 %v426, %v425
        %v441 = vpack.c.b16 %v428, %v427
        %v442 = vpack.c.b16 %v430, %v429
        %v443 = vpack.c.b16 %v432, %v431
        %v444 = vpack.c.b16 %v434, %v433
        %v445 = vpack.c.b16 %v436, %v435
        %v446 = vpack.c.b16 %v438, %v437
        %455 = vmatpush.bf16.msra.mxu0 %v446
        %456 = vmatpush.bf16.msra.mxu0 %v445
        %457 = vmatpush.bf16.msra.mxu0 %v444
        %458 = vmatpush.bf16.msra.mxu0 %v443
        %459 = vmatpush.bf16.msra.mxu0 %v442
        %460 = vmatpush.bf16.msra.mxu0 %v441
        %461 = vmatpush.bf16.msra.mxu0 %v440
        %462 = vmatpush.bf16.msra.mxu0 %v439
        %463 = vmatmul.bf16.gmra.mxu0 %v390
        %v464 = vpop.f32.mrf.mxu0
        %v465 = vadd.f32 0.0, %v464
        %v466 = vpop.f32.mrf.mxu0
        %467 = vdwg.mxu0
        %v468 = vadd.f32 %v389, %v465
        %vm469 = vcmask 257024
        %470 = vst.msk [vmem:[#allocation2] sm:$0xf] %vm469, %v468
        // Predicated region
        $region45: #{double_stream_block.21} parent=39 // pred_check
          %p471 = pneg %p383
        $region46: #{double_stream_block.21} parent=39 // pred_check_branch
          %473 = sbr.rel (%p471) target = $region48
        $region47: #{double_stream_block.21} parent=39 // pred_region
          %v474 = vld [vmem:[#allocation2] sm:$0xf]
          %v475 = vld [vmem:[%s366] sm:$0x1]
          %v477 = vperm.slane %v475, 0
          %v479 = vadd.f32 %v474, %v477
          %v480 = vld [vmem:[%s382] sm:$0xf]
          %v481 = vld [vmem:[%s372] sm:$0x1]
          %v483 = vperm.slane %v481, 0
          %v485 = vmul.f32 %v483, %v479
          %v486 = vadd.f32 %v480, %v485
          %487 = vst.msk [vmem:[%s344] sm:$0xf] %vm469, %v486
        $region48: #{double_stream_block.21} parent=39 // pred_fallthru
          _
        %s488 = sand.u32 %s199, 1
        %s489 = scalar_lea.sflag [#allocation4], %s488
        %s490 = sand.u32 %s199, 1
        %s491 = smul.addr %s490, 4
        %s492 = scalar_lea.vmem [#allocation3], %s491
        // Predicated region
        $region49: #{double_stream_block.21} parent=39 // pred_check
          %p493 = pneg %p209
        $region50: #{double_stream_block.21} parent=39 // pred_check_branch
          %495 = sbr.rel (%p493) target = $region52
        $region51: #{double_stream_block.21} parent=39 // pred_region
          %497 = vsyncadd %s489, 0
          %s498 = sadd.s32 %s27, %s26
          %s499 = sadd.s32 %s498, %s25
          %s500 = smul.addr %s499, 4
          %s501 = scalar_lea.hbm %s5, %s500
          %s503 = sshll.u32 %s492, 4
          %s504 = int_to_ptr.vmem [resolvable:$true] %s503
          %s505 = sshll.u32 %s501, 4
          %s506 = int_to_ptr.hbm [resolvable:$true] %s505
          %508 = dma.vmem_to_hbm [thread:$0]  %s504, 64, %s506, %s489
        $region52: #{double_stream_block.21} parent=39 // pred_fallthru
          _
      $region40: #{double_stream_block.21} parent=5 // pred_fallthru
        _
      %p509 = scmp.le.s32.totalorder 2, %s14
      // Predicated region
      $region53: #{double_stream_block.21} parent=5 // pred_check
        %p510 = pneg %p509
      $region54: #{double_stream_block.21} parent=5 // pred_check_branch
        %512 = sbr.rel (%p510) target = $region56
      $region55: #{double_stream_block.21} parent=5 // pred_region
        %s513 = ssub.s32 %s14, 2
        // Predicated region
        $region57: #{double_stream_block.21} parent=55 // pred_check
          %p514 = pneg %p215
        $region58: #{double_stream_block.21} parent=55 // pred_check_branch
          %516 = sbr.rel (%p514) target = $region60
        $region59: #{double_stream_block.21} parent=55 // pred_region
          %s517 = sand.u32 %s200, 1
          %s518 = scalar_lea.sflag [#allocation4], %s517
          %s519 = sand.u32 %s200, 1
          %s520 = smul.addr %s519, 4
          %s521 = scalar_lea.vmem [#allocation3], %s520
          %523 = dma.done %s518, 64
        $region60: #{double_stream_block.21} parent=55 // pred_fallthru
          _
      $region56: #{double_stream_block.21} parent=5 // pred_fallthru
        _
    $region6: #{double_stream_block.21} parent=1 // loop_footer
      %s18 = sadd.s32 1, %s14
    $region7: #{double_stream_block.21} parent=1 // loop_footer_branch
      %13 = sbr.rel target = $region3
    $region8: #{double_stream_block.21} parent=1 // loop_exit
      _
    %524 = vsyncpa [#allocation4], 1
    %s525 = scalar_lea.sflag [#allocation4], 1
    %526 = vsyncpa %s525, 1

// kernel: double_stream_block.16
$region0: #{double_stream_block.16}
  #allocation0 [shape = 'u32[]', space=smem, size = 0x4, offset = 0x4, fixed_abs, tag = 'smem constant byte address 0x4 - core index']
  #allocation1 [shape = 'u32[72,128]{1,0:T(1,128)}', space=vmem, size = 0x9000, scoped, tag = 'internal scratch']
  #allocation2 [shape = 'f32[8,32]{1,0:T(8,128)}', space=vmem, size = 0x1000, scoped, tag = 'scratch operand']
  %s0 = inlined_call_operand.vmem [shape: bf16[2,8,32], index: 0, kind: input, shape index: {}]
  %s1 = inlined_call_operand.vmem [shape: bf16[32,32], index: 1, kind: input, shape index: {}]
  %s2 = inlined_call_operand.vmem [shape: f32[1,32], index: 2, kind: input, shape index: {}]
  %s3 = inlined_call_operand.vmem [shape: f32[2,1,32], index: 3, kind: input, shape index: {}]
  %s4 = inlined_call_operand.vmem [shape: f32[2,8,32], index: 4, kind: input, shape index: {}]
  %s5 = inlined_call_operand.vmem [shape: f32[2,8,32], index: 5, kind: output, shape index: {}]
  %s6 = sld [smem:[#allocation0]]
  $region61: #{double_stream_block.16} parent=0
    _
  %s8 = ssub.s32 1, %s6
  %s9 = scalar_select 0, %s8, %s6
  loop: start=0, step=1, limit=4
  $region2: #{double_stream_block.16} parent=0 // loop_pre_header
    _
  $region3: #{double_stream_block.16} parent=0 // loop_header
    %s11 = sphi 0, %s15
    %p12 = scmp.ge.s32.totalorder %s11, 4
    %s18 = sphi 0, %s44
    %s19 = sphi 0, %s40
    %s20 = sphi 0, %s36
    %s21 = sphi 0, %s32
    %s22 = sphi 0, %s18
    %s23 = sphi 0, %s19
    %s24 = sphi 0, %s20
    %s25 = sphi 0, %s21
    %s26 = sphi 0, %s22
    %s27 = sphi 0, %s23
    %s28 = sphi 0, %s24
    %s29 = sphi 0, %s25
    %s51 = sphi 0, %s53
    %s54 = sphi 0, %s51
    %s55 = sphi 0, %s54
    %s71 = sphi 0, %s55
    %s79 = sphi 0, %s81
    %s82 = sphi 0, %s79
    %s83 = sphi 0, %s82
    %s99 = sphi 0, %s83
    %s105 = sphi 0, %s107
    %s108 = sphi 0, %s105
    %s109 = sphi 0, %s108
    %s125 = sphi 0, %s109
    %s133 = sphi 0, %s135
    %s136 = sphi 0, %s133
    %s137 = sphi 0, %s136
    %s153 = sphi 0, %s137
    %s163 = sphi 0, %s165
    %s166 = sphi 0, %s163
    %s167 = sphi 0, %s166
    %s183 = sphi 0, %s167
    %s193 = sphi 0, %s195
    %s196 = sphi 0, %s193
    %s197 = sphi 0, %s196
    %s213 = sphi 0, %s197
  $region4: #{double_stream_block.16} parent=0 // loop_header_branch
    %14 = sbr.rel (%p12) target = $region8
  $region5: #{double_stream_block.16} parent=0 // loop_body
    %s16 = ssub.s32 %s11, 1
    %s17 = ssub.s32 %s11, 2
    %s30 = sadd.s32 1, %s21
    %p31 = scmp.ge.s32.totalorder %s30, 1
    %s32 = scalar_select %p31, 0, %s30
    %s33 = sadd.s32 1, %s20
    %s34 = scalar_select %p31, %s33, %s20
    %p35 = scmp.ge.s32.totalorder %s34, 1
    %s36 = scalar_select %p35, 0, %s34
    %s37 = sadd.s32 1, %s19
    %s38 = scalar_select %p35, %s37, %s19
    %p39 = scmp.ge.s32.totalorder %s38, 1
    %s40 = scalar_select %p39, 0, %s38
    %s41 = sadd.s32 1, %s18
    %s42 = scalar_select %p39, %s41, %s18
    %p43 = scmp.ge.s32.totalorder %s42, 2
    %s44 = scalar_select %p43, 0, %s42
    %s45 = ssub.s32 %s18, %s44
    %s46 = ssub.s32 %s19, %s40
    %s47 = sor.u32 %s45, %s46
    %s48 = ssub.s32 %s21, %s32
    %s49 = sor.u32 %s47, %s48
    %p50 = scmp.eq.s32.totalorder %s49, 0
    %s52 = sadd.s32 %s51, 1
    %s53 = scalar_select %p50, %s51, %s52
    %p56 = pneg %p50
    %p57 = scmp.eq.s32.totalorder %s11, 1
    %p58 = por %p56, %p57
    %p59 = scmp.ne.s32.totalorder %s51, %s54
    %p60 = scmp.eq.s32.totalorder %s11, 0
    %p61 = por %p59, %p60
    %p62 = scmp.ne.s32.totalorder %s51, %s54
    %p63 = scmp.eq.s32.totalorder %s16, 1
    %p64 = por %p62, %p63
    %p65 = scmp.ne.s32.totalorder %s54, %s55
    %p66 = scmp.eq.s32.totalorder %s16, 0
    %p67 = por %p65, %p66
    %p68 = scmp.ne.s32.totalorder %s54, %s55
    %p69 = scmp.eq.s32.totalorder %s17, 1
    %p70 = por %p68, %p69
    %p72 = scmp.ne.s32.totalorder %s55, %s71
    %p73 = scmp.eq.s32.totalorder %s17, 0
    %p74 = por %p72, %p73
    %s75 = ssub.s32 %s21, %s32
    %s76 = ssub.s32 %s20, %s36
    %s77 = sor.u32 %s75, %s76
    %p78 = scmp.eq.s32.totalorder %s77, 0
    %s80 = sadd.s32 %s79, 1
    %s81 = scalar_select %p78, %s79, %s80
    %p84 = pneg %p78
    %p85 = scmp.eq.s32.totalorder %s11, 1
    %p86 = por %p84, %p85
    %p87 = scmp.ne.s32.totalorder %s79, %s82
    %p88 = scmp.eq.s32.totalorder %s11, 0
    %p89 = por %p87, %p88
    %p90 = scmp.ne.s32.totalorder %s79, %s82
    %p91 = scmp.eq.s32.totalorder %s16, 1
    %p92 = por %p90, %p91
    %p93 = scmp.ne.s32.totalorder %s82, %s83
    %p94 = scmp.eq.s32.totalorder %s16, 0
    %p95 = por %p93, %p94
    %p96 = scmp.ne.s32.totalorder %s82, %s83
    %p97 = scmp.eq.s32.totalorder %s17, 1
    %p98 = por %p96, %p97
    %p100 = scmp.ne.s32.totalorder %s83, %s99
    %p101 = scmp.eq.s32.totalorder %s17, 0
    %p102 = por %p100, %p101
    %s103 = ssub.s32 %s20, %s36
    %p104 = scmp.eq.s32.totalorder %s103, 0
    %s106 = sadd.s32 %s105, 1
    %s107 = scalar_select %p104, %s105, %s106
    %p110 = pneg %p104
    %p111 = scmp.eq.s32.totalorder %s11, 1
    %p112 = por %p110, %p111
    %p113 = scmp.ne.s32.totalorder %s105, %s108
    %p114 = scmp.eq.s32.totalorder %s11, 0
    %p115 = por %p113, %p114
    %p116 = scmp.ne.s32.totalorder %s105, %s108
    %p117 = scmp.eq.s32.totalorder %s16, 1
    %p118 = por %p116, %p117
    %p119 = scmp.ne.s32.totalorder %s108, %s109
    %p120 = scmp.eq.s32.totalorder %s16, 0
    %p121 = por %p119, %p120
    %p122 = scmp.ne.s32.totalorder %s108, %s109
    %p123 = scmp.eq.s32.totalorder %s17, 1
    %p124 = por %p122, %p123
    %p126 = scmp.ne.s32.totalorder %s109, %s125
    %p127 = scmp.eq.s32.totalorder %s17, 0
    %p128 = por %p126, %p127
    %s129 = ssub.s32 %s18, %s44
    %s130 = ssub.s32 %s20, %s36
    %s131 = sor.u32 %s129, %s130
    %p132 = scmp.eq.s32.totalorder %s131, 0
    %s134 = sadd.s32 %s133, 1
    %s135 = scalar_select %p132, %s133, %s134
    %p138 = pneg %p132
    %p139 = scmp.eq.s32.totalorder %s11, 1
    %p140 = por %p138, %p139
    %p141 = scmp.ne.s32.totalorder %s133, %s136
    %p142 = scmp.eq.s32.totalorder %s11, 0
    %p143 = por %p141, %p142
    %p144 = scmp.ne.s32.totalorder %s133, %s136
    %p145 = scmp.eq.s32.totalorder %s16, 1
    %p146 = por %p144, %p145
    %p147 = scmp.ne.s32.totalorder %s136, %s137
    %p148 = scmp.eq.s32.totalorder %s16, 0
    %p149 = por %p147, %p148
    %p150 = scmp.ne.s32.totalorder %s136, %s137
    %p151 = scmp.eq.s32.totalorder %s17, 1
    %p152 = por %p150, %p151
    %p154 = scmp.ne.s32.totalorder %s137, %s153
    %p155 = scmp.eq.s32.totalorder %s17, 0
    %p156 = por %p154, %p155
    %s157 = ssub.s32 %s18, %s44
    %s158 = ssub.s32 %s19, %s40
    %s159 = sor.u32 %s157, %s158
    %s160 = ssub.s32 %s20, %s36
    %s161 = sor.u32 %s159, %s160
    %p162 = scmp.eq.s32.totalorder %s161, 0
    %s164 = sadd.s32 %s163, 1
    %s165 = scalar_select %p162, %s163, %s164
    %p168 = pneg %p162
    %p169 = scmp.eq.s32.totalorder %s11, 1
    %p170 = por %p168, %p169
    %p171 = scmp.ne.s32.totalorder %s163, %s166
    %p172 = scmp.eq.s32.totalorder %s11, 0
    %p173 = por %p171, %p172
    %p174 = scmp.ne.s32.totalorder %s163, %s166
    %p175 = scmp.eq.s32.totalorder %s16, 1
    %p176 = por %p174, %p175
    %p177 = scmp.ne.s32.totalorder %s166, %s167
    %p178 = scmp.eq.s32.totalorder %s16, 0
    %p179 = por %p177, %p178
    %p180 = scmp.ne.s32.totalorder %s166, %s167
    %p181 = scmp.eq.s32.totalorder %s17, 1
    %p182 = por %p180, %p181
    %p184 = scmp.ne.s32.totalorder %s167, %s183
    %p185 = scmp.eq.s32.totalorder %s17, 0
    %p186 = por %p184, %p185
    %s187 = ssub.s32 %s18, %s44
    %s188 = ssub.s32 %s19, %s40
    %s189 = sor.u32 %s187, %s188
    %s190 = ssub.s32 %s20, %s36
    %s191 = sor.u32 %s189, %s190
    %p192 = scmp.eq.s32.totalorder %s191, 0
    %s194 = sadd.s32 %s193, 1
    %s195 = scalar_select %p192, %s193, %s194
    %p198 = pneg %p192
    %p199 = scmp.eq.s32.totalorder %s11, 1
    %p200 = por %p198, %p199
    %p201 = scmp.ne.s32.totalorder %s193, %s196
    %p202 = scmp.eq.s32.totalorder %s11, 0
    %p203 = por %p201, %p202
    %p204 = scmp.ne.s32.totalorder %s193, %s196
    %p205 = scmp.eq.s32.totalorder %s16, 1
    %p206 = por %p204, %p205
    %p207 = scmp.ne.s32.totalorder %s196, %s197
    %p208 = scmp.eq.s32.totalorder %s16, 0
    %p209 = por %p207, %p208
    %p210 = scmp.ne.s32.totalorder %s196, %s197
    %p211 = scmp.eq.s32.totalorder %s17, 1
    %p212 = por %p210, %p211
    %p214 = scmp.ne.s32.totalorder %s197, %s213
    %p215 = scmp.eq.s32.totalorder %s17, 0
    %p216 = por %p214, %p215
    %p217 = scmp.le.s32.totalorder 1, %s11
    %p218 = scmp.lt.s32.totalorder %s11, 3
    %p219 = pnand %p217, %p218
    %p220 = pneg %p219
    // Predicated region
    $region9: #{double_stream_block.16} parent=5 // pred_check
      _
    $region10: #{double_stream_block.16} parent=5 // pred_check_branch
      %222 = sbr.rel (%p219) target = $region12
    $region11: #{double_stream_block.16} parent=5 // pred_region
      %s223 = ssub.s32 %s11, 1
      // Predicated region
      $region13: #{double_stream_block.16} parent=11 // pred_check
        %p224 = pneg %p95
      $region14: #{double_stream_block.16} parent=11 // pred_check_branch
        %226 = sbr.rel (%p224) target = $region16
      $region15: #{double_stream_block.16} parent=11 // pred_region
        %s227 = smul.u32 4, %s25
        %p228 = scmp.lt.s32.totalorder %s227, 3
        %s229 = scalar_select %p228, %s227, 3
        %p230 = scmp.lt.s32.totalorder %s24, 0
        %s231 = scalar_select %p230, %s24, 0
        %s232 = sadd.s32 %s231, %s229
        %s233 = smul.addr %s232, 4
        %s234 = scalar_lea.vmem %s1, %s233
        %s235 = smul.u32 4, %s25
      $region16: #{double_stream_block.16} parent=11 // pred_fallthru
        _
      // Predicated region
      $region17: #{double_stream_block.16} parent=11 // pred_check
        %p236 = pneg %p121
      $region18: #{double_stream_block.16} parent=11 // pred_check_branch
        %238 = sbr.rel (%p236) target = $region20
      $region19: #{double_stream_block.16} parent=11 // pred_region
        %p239 = scmp.lt.s32.totalorder %s24, 0
        %s240 = scalar_select %p239, %s24, 0
        %s241 = scalar_lea.vmem %s2, %s240
      $region20: #{double_stream_block.16} parent=11 // pred_fallthru
        _
    $region12: #{double_stream_block.16} parent=5 // pred_fallthru
      _
    %p242 = scmp.lt.s32.totalorder %s11, 2
    // Predicated region
    $region21: #{double_stream_block.16} parent=5 // pred_check
      %p243 = pneg %p242
    $region22: #{double_stream_block.16} parent=5 // pred_check_branch
      %245 = sbr.rel (%p243) target = $region24
    $region23: #{double_stream_block.16} parent=5 // pred_region
      // Predicated region
      $region25: #{double_stream_block.16} parent=23 // pred_check
        %p246 = pneg %p61
      $region26: #{double_stream_block.16} parent=23 // pred_check_branch
        %248 = sbr.rel (%p246) target = $region28
      $region27: #{double_stream_block.16} parent=23 // pred_region
        %p249 = scmp.lt.s32.totalorder %s18, 1
        %s250 = scalar_select %p249, %s18, 1
        %p251 = scmp.lt.s32.totalorder %s19, 0
        %s252 = scalar_select %p251, %s19, 0
        %p253 = scmp.lt.s32.totalorder %s21, 0
        %s254 = scalar_select %p253, %s21, 0
        %s255 = sadd.s32 %s254, %s252
        %s256 = sadd.s32 %s255, %s250
        %s257 = smul.addr %s256, 4
        %s258 = scalar_lea.vmem %s0, %s257
      $region28: #{double_stream_block.16} parent=23 // pred_fallthru
        _
      // Predicated region
      $region29: #{double_stream_block.16} parent=23 // pred_check
        %p259 = pneg %p143
      $region30: #{double_stream_block.16} parent=23 // pred_check_branch
        %261 = sbr.rel (%p259) target = $region32
      $region31: #{double_stream_block.16} parent=23 // pred_region
        %p262 = scmp.lt.s32.totalorder %s18, 1
        %s263 = scalar_select %p262, %s18, 1
        %p264 = scmp.lt.s32.totalorder %s20, 0
        %s265 = scalar_select %p264, %s20, 0
        %s266 = sadd.s32 %s265, %s263
        %s267 = scalar_lea.vmem %s3, %s266
      $region32: #{double_stream_block.16} parent=23 // pred_fallthru
        _
      // Predicated region
      $region33: #{double_stream_block.16} parent=23 // pred_check
        %p268 = pneg %p173
      $region34: #{double_stream_block.16} parent=23 // pred_check_branch
        %270 = sbr.rel (%p268) target = $region36
      $region35: #{double_stream_block.16} parent=23 // pred_region
        %p271 = scmp.lt.s32.totalorder %s18, 1
        %s272 = scalar_select %p271, %s18, 1
        %p273 = scmp.lt.s32.totalorder %s19, 0
        %s274 = scalar_select %p273, %s19, 0
        %p275 = scmp.lt.s32.totalorder %s20, 0
        %s276 = scalar_select %p275, %s20, 0
        %s277 = sadd.s32 %s276, %s274
        %s278 = sadd.s32 %s277, %s272
        %s279 = smul.addr %s278, 8
        %s280 = scalar_lea.vmem %s4, %s279
      $region36: #{double_stream_block.16} parent=23 // pred_fallthru
        _
    $region24: #{double_stream_block.16} parent=5 // pred_fallthru
      _
    %p281 = scmp.le.s32.totalorder 1, %s11
    %p282 = scmp.lt.s32.totalorder %s11, 3
    %p283 = pnand %p281, %p282
    %p284 = pneg %p283
    // Predicated region
    $region37: #{double_stream_block.16} parent=5 // pred_check
      _
    $region38: #{double_stream_block.16} parent=5 // pred_check_branch
      %286 = sbr.rel (%p283) target = $region40
    $region39: #{double_stream_block.16} parent=5 // pred_region
      %s287 = ssub.s32 %s11, 1
      %p288 = scmp.lt.s32.totalorder %s22, 1
      %s289 = scalar_select %p288, %s22, 1
      %p290 = scmp.lt.s32.totalorder %s23, 0
      %s291 = scalar_select %p290, %s23, 0
      %p292 = scmp.lt.s32.totalorder %s25, 0
      %s293 = scalar_select %p292, %s25, 0
      %s294 = sadd.s32 %s293, %s291
      %s295 = sadd.s32 %s294, %s289
      %s296 = smul.addr %s295, 4
      %s297 = scalar_lea.vmem %s0, %s296
      %p298 = pneg %p67
      %p299 = pneg %p64
      %s300 = smul.u32 4, %s25
      %p301 = scmp.lt.s32.totalorder %s300, 3
      %s302 = scalar_select %p301, %s300, 3
      %p303 = scmp.lt.s32.totalorder %s24, 0
      %s304 = scalar_select %p303, %s24, 0
      %s305 = sadd.s32 %s304, %s302
      %s306 = smul.addr %s305, 4
      %s307 = scalar_lea.vmem %s1, %s306
      %p308 = pneg %p95
      %p309 = pneg %p92
      %p310 = scmp.lt.s32.totalorder %s24, 0
      %s311 = scalar_select %p310, %s24, 0
      %s312 = scalar_lea.vmem %s2, %s311
      %p313 = pneg %p121
      %p314 = pneg %p118
      %p315 = scmp.lt.s32.totalorder %s22, 1
      %s316 = scalar_select %p315, %s22, 1
      %p317 = scmp.lt.s32.totalorder %s24, 0
      %s318 = scalar_select %p317, %s24, 0
      %s319 = sadd.s32 %s318, %s316
      %s320 = scalar_lea.vmem %s3, %s319
      %p321 = pneg %p149
      %p322 = pneg %p146
      %p323 = scmp.lt.s32.totalorder %s22, 1
      %s324 = scalar_select %p323, %s22, 1
      %p325 = scmp.lt.s32.totalorder %s23, 0
      %s326 = scalar_select %p325, %s23, 0
      %p327 = scmp.lt.s32.totalorder %s24, 0
      %s328 = scalar_select %p327, %s24, 0
      %s329 = sadd.s32 %s328, %s326
      %s330 = sadd.s32 %s329, %s324
      %s331 = smul.addr %s330, 8
      %s332 = scalar_lea.vmem %s4, %s331
      %p333 = pneg %p179
      %p334 = pneg %p176
      %p335 = pneg %p209
      %p336 = pneg %p206
      %p337 = scmp.lt.s32.totalorder %s22, 1
      %s338 = scalar_select %p337, %s22, 1
      %p339 = scmp.lt.s32.totalorder %s23, 0
      %s340 = scalar_select %p339, %s23, 0
      %p341 = scmp.lt.s32.totalorder %s24, 0
      %s342 = scalar_select %p341, %s24, 0
      %s343 = sadd.s32 %s342, %s340
      %s344 = sadd.s32 %s343, %s338
      %s345 = smul.addr %s344, 8
      %s346 = scalar_lea.vmem %s5, %s345
      %p347 = scmp.lt.s32.totalorder %s22, 1
      %s348 = scalar_select %p347, %s22, 1
      %p349 = scmp.lt.s32.totalorder %s23, 0
      %s350 = scalar_select %p349, %s23, 0
      %p351 = scmp.lt.s32.totalorder %s25, 0
      %s352 = scalar_select %p351, %s25, 0
      %s353 = sadd.s32 %s352, %s350
      %s354 = sadd.s32 %s353, %s348
      %s355 = smul.addr %s354, 4
      %s356 = scalar_lea.vmem %s0, %s355
      %s357 = smul.u32 4, %s25
      %p358 = scmp.lt.s32.totalorder %s357, 3
      %s359 = scalar_select %p358, %s357, 3
      %p360 = scmp.lt.s32.totalorder %s24, 0
      %s361 = scalar_select %p360, %s24, 0
      %s362 = sadd.s32 %s361, %s359
      %s363 = smul.addr %s362, 4
      %s364 = scalar_lea.vmem %s1, %s363
      %s365 = smul.u32 4, %s25
      %p366 = scmp.lt.s32.totalorder %s24, 0
      %s367 = scalar_select %p366, %s24, 0
      %s368 = scalar_lea.vmem %s2, %s367
      %p369 = scmp.lt.s32.totalorder %s22, 1
      %s370 = scalar_select %p369, %s22, 1
      %p371 = scmp.lt.s32.totalorder %s24, 0
      %s372 = scalar_select %p371, %s24, 0
      %s373 = sadd.s32 %s372, %s370
      %s374 = scalar_lea.vmem %s3, %s373
      %p375 = scmp.lt.s32.totalorder %s22, 1
      %s376 = scalar_select %p375, %s22, 1
      %p377 = scmp.lt.s32.totalorder %s23, 0
      %s378 = scalar_select %p377, %s23, 0
      %p379 = scmp.lt.s32.totalorder %s24, 0
      %s380 = scalar_select %p379, %s24, 0
      %s381 = sadd.s32 %s380, %s378
      %s382 = sadd.s32 %s381, %s376
      %s383 = smul.addr %s382, 8
      %s384 = scalar_lea.vmem %s4, %s383
      %p385 = scmp.lt.s32.totalorder %s22, 1
      %s386 = scalar_select %p385, %s22, 1
      %p387 = scmp.lt.s32.totalorder %s23, 0
      %s388 = scalar_select %p387, %s23, 0
      %p389 = scmp.lt.s32.totalorder %s24, 0
      %s390 = scalar_select %p389, %s24, 0
      %s391 = sadd.s32 %s390, %s388
      %s392 = sadd.s32 %s391, %s386
      %s393 = smul.addr %s392, 8
      %s394 = scalar_lea.vmem %s5, %s393
      %p396 = scmp.eq.s32.totalorder %s25, 0
      // Predicated region
      $region41: #{double_stream_block.16} parent=39 // pred_check
        %p397 = pneg %p396
      $region42: #{double_stream_block.16} parent=39 // pred_check_branch
        %399 = sbr.rel (%p397) target = $region44
      $region43: #{double_stream_block.16} parent=39 // pred_region
        %vm400 = vcmask 261120
        %401 = vst.msk [vmem:[#allocation2] sm:$0xff] %vm400, 0.0
      $region44: #{double_stream_block.16} parent=39 // pred_fallthru
        _
      %v402 = vld [vmem:[#allocation2] sm:$0xff]
      %v403 = vld [vmem:[%s356] sm:$0xf]
      %v404 = vld [vmem:[%s364] sm:$0xf]
      %v405 = vld [vmem:[%s364 + $0x4] sm:$0xf]
      %v406 = vld [vmem:[%s364 + $0x8] sm:$0xf]
      %v407 = vld [vmem:[%s364 + $0xc] sm:$0xf]
      %v412 = vunpack.c.l.b16 %v404
      %v413 = vunpack.c.l.b16 %v405
      %v414 = vunpack.c.l.b16 %v406
      %v415 = vunpack.c.l.b16 %v407
      %v416 = vpack.c.b16 %v413, %v412
      %v417 = vpack.c.b16 %v415, %v414
      %vm420 = vcmask 261120
      %v422 = vsel %vm420, %v403, 0
      %424 = vmatpush.bf16.msra.mxu0 0
      %425 = vmatpush.bf16.msra.mxu0 0
      %426 = vmatpush.bf16.msra.mxu0 0
      %427 = vmatpush.bf16.msra.mxu0 0
      %428 = vmatpush.bf16.msra.mxu0 0
      %429 = vmatpush.bf16.msra.mxu0 0
      %430 = vmatpush.bf16.msra.mxu0 %v417
      %431 = vmatpush.bf16.msra.mxu0 %v416
      %432 = vmatmul.bf16.gmra.mxu0 %v422
      %v433 = vpop.f32.mrf.mxu0
      %v434 = vadd.f32 0.0, %v433
      %v435 = vpop.f32.mrf.mxu0
      %436 = vdwg.mxu0
      %v437 = vadd.f32 %v402, %v434
      %438 = vst.msk [vmem:[#allocation2] sm:$0xff] %vm420, %v437
      // Predicated region
      $region45: #{double_stream_block.16} parent=39 // pred_check
        %p439 = pneg %p396
      $region46: #{double_stream_block.16} parent=39 // pred_check_branch
        %441 = sbr.rel (%p439) target = $region48
      $region47: #{double_stream_block.16} parent=39 // pred_region
        %v442 = vld [vmem:[#allocation2] sm:$0xff]
        %v443 = vld [vmem:[%s368] sm:$0x1]
        %v445 = vperm.slane %v443, 0
        %v447 = vadd.f32 %v442, %v445
        %v448 = vld [vmem:[%s384] sm:$0xff]
        %v449 = vld [vmem:[%s374] sm:$0x1]
        %v451 = vperm.slane %v449, 0
        %v453 = vmul.f32 %v451, %v447
        %v454 = vadd.f32 %v448, %v453
        %455 = vst.msk [vmem:[%s394] sm:$0xff] %vm420, %v454
      $region48: #{double_stream_block.16} parent=39 // pred_fallthru
        _
      %p456 = scmp.lt.s32.totalorder %s22, 1
      %s457 = scalar_select %p456, %s22, 1
      %p458 = scmp.lt.s32.totalorder %s23, 0
      %s459 = scalar_select %p458, %s23, 0
      %p460 = scmp.lt.s32.totalorder %s24, 0
      %s461 = scalar_select %p460, %s24, 0
      %s462 = sadd.s32 %s461, %s459
      %s463 = sadd.s32 %s462, %s457
      %s464 = smul.addr %s463, 8
      %s465 = scalar_lea.vmem %s5, %s464
      // Predicated region
      $region49: #{double_stream_block.16} parent=39 // pred_check
        %p466 = pneg %p206
      $region50: #{double_stream_block.16} parent=39 // pred_check_branch
        %468 = sbr.rel (%p466) target = $region52
      $region51: #{double_stream_block.16} parent=39 // pred_region
        _
      $region52: #{double_stream_block.16} parent=39 // pred_fallthru
        _
    $region40: #{double_stream_block.16} parent=5 // pred_fallthru
      _
    %p469 = scmp.le.s32.totalorder 2, %s11
    // Predicated region
    $region53: #{double_stream_block.16} parent=5 // pred_check
      %p470 = pneg %p469
    $region54: #{double_stream_block.16} parent=5 // pred_check_branch
      %472 = sbr.rel (%p470) target = $region56
    $region55: #{double_stream_block.16} parent=5 // pred_region
      %s473 = ssub.s32 %s11, 2
      // Predicated region
      $region57: #{double_stream_block.16} parent=55 // pred_check
        %p474 = pneg %p212
      $region58: #{double_stream_block.16} parent=55 // pred_check_branch
        %476 = sbr.rel (%p474) target = $region60
      $region59: #{double_stream_block.16} parent=55 // pred_region
        %p477 = scmp.lt.s32.totalorder %s26, 1
        %s478 = scalar_select %p477, %s26, 1
        %p479 = scmp.lt.s32.totalorder %s27, 0
        %s480 = scalar_select %p479, %s27, 0
        %p481 = scmp.lt.s32.totalorder %s28, 0
        %s482 = scalar_select %p481, %s28, 0
        %s483 = sadd.s32 %s482, %s480
        %s484 = sadd.s32 %s483, %s478
        %s485 = smul.addr %s484, 8
        %s486 = scalar_lea.vmem %s5, %s485
      $region60: #{double_stream_block.16} parent=55 // pred_fallthru
        _
    $region56: #{double_stream_block.16} parent=5 // pred_fallthru
      _
  $region6: #{double_stream_block.16} parent=0 // loop_footer
    %s15 = sadd.s32 1, %s11
  $region7: #{double_stream_block.16} parent=0 // loop_footer_branch
    %10 = sbr.rel target = $region3
  $region8: #{double_stream_block.16} parent=0 // loop_exit
    _

// kernel: double_stream_block.17
$region0: #{double_stream_block.17}
  #allocation0 [shape = 'u32[]', space=smem, size = 0x4, offset = 0x4, fixed_abs, tag = 'smem constant byte address 0x4 - core index']
  #allocation1 [shape = 'u32[72,128]{1,0:T(1,128)}', space=vmem, size = 0x9000, scoped, tag = 'internal scratch']
  %s0 = inlined_call_operand.vmem [shape: f32[2,8,32], index: 0, kind: input, shape index: {}]
  %s1 = inlined_call_operand.vmem [shape: f32[2,1,32], index: 1, kind: input, shape index: {}]
  %s2 = inlined_call_operand.vmem [shape: f32[2,1,32], index: 2, kind: input, shape index: {}]
  %s3 = inlined_call_operand.vmem [shape: bf16[32,128], index: 3, kind: input, shape index: {}]
  %s4 = inlined_call_operand.vmem [shape: f32[1,128], index: 4, kind: input, shape index: {}]
  %s5 = inlined_call_operand.vmem [shape: bf16[2,8,128], index: 5, kind: output, shape index: {}]
  %s6 = sld [smem:[#allocation0]]
  $region53: #{double_stream_block.17} parent=0
    _
  %s8 = ssub.s32 1, %s6
  %s9 = scalar_select 0, %s8, %s6
  loop: start=0, step=1, limit=4
  $region2: #{double_stream_block.17} parent=0 // loop_pre_header
    _
  $region3: #{double_stream_block.17} parent=0 // loop_header
    %s11 = sphi 0, %s15
    %p12 = scmp.ge.s32.totalorder %s11, 4
    %s18 = sphi 0, %s37
    %s19 = sphi 0, %s33
    %s20 = sphi 0, %s29
    %s21 = sphi 0, %s18
    %s22 = sphi 0, %s19
    %s23 = sphi 0, %s20
    %s24 = sphi 0, %s21
    %s25 = sphi 0, %s22
    %s26 = sphi 0, %s23
    %s42 = sphi 0, %s44
    %s45 = sphi 0, %s42
    %s46 = sphi 0, %s45
    %s62 = sphi 0, %s46
    %s68 = sphi 0, %s70
    %s71 = sphi 0, %s68
    %s72 = sphi 0, %s71
    %s88 = sphi 0, %s72
    %s94 = sphi 0, %s96
    %s97 = sphi 0, %s94
    %s98 = sphi 0, %s97
    %s114 = sphi 0, %s98
    %s120 = sphi 0, %s122
    %s123 = sphi 0, %s120
    %s124 = sphi 0, %s123
    %s140 = sphi 0, %s124
    %s146 = sphi 0, %s148
    %s149 = sphi 0, %s146
    %s150 = sphi 0, %s149
    %s166 = sphi 0, %s150
    %s176 = sphi 0, %s178
    %s179 = sphi 0, %s176
    %s180 = sphi 0, %s179
    %s196 = sphi 0, %s180
  $region4: #{double_stream_block.17} parent=0 // loop_header_branch
    %14 = sbr.rel (%p12) target = $region8
  $region5: #{double_stream_block.17} parent=0 // loop_body
    %s16 = ssub.s32 %s11, 1
    %s17 = ssub.s32 %s11, 2
    %s27 = sadd.s32 1, %s20
    %p28 = scmp.ge.s32.totalorder %s27, 1
    %s29 = scalar_select %p28, 0, %s27
    %s30 = sadd.s32 1, %s19
    %s31 = scalar_select %p28, %s30, %s19
    %p32 = scmp.ge.s32.totalorder %s31, 1
    %s33 = scalar_select %p32, 0, %s31
    %s34 = sadd.s32 1, %s18
    %s35 = scalar_select %p32, %s34, %s18
    %p36 = scmp.ge.s32.totalorder %s35, 2
    %s37 = scalar_select %p36, 0, %s35
    %s38 = ssub.s32 %s18, %s37
    %s39 = ssub.s32 %s19, %s33
    %s40 = sor.u32 %s38, %s39
    %p41 = scmp.eq.s32.totalorder %s40, 0
    %s43 = sadd.s32 %s42, 1
    %s44 = scalar_select %p41, %s42, %s43
    %p47 = pneg %p41
    %p48 = scmp.eq.s32.totalorder %s11, 1
    %p49 = por %p47, %p48
    %p50 = scmp.ne.s32.totalorder %s42, %s45
    %p51 = scmp.eq.s32.totalorder %s11, 0
    %p52 = por %p50, %p51
    %p53 = scmp.ne.s32.totalorder %s42, %s45
    %p54 = scmp.eq.s32.totalorder %s16, 1
    %p55 = por %p53, %p54
    %p56 = scmp.ne.s32.totalorder %s45, %s46
    %p57 = scmp.eq.s32.totalorder %s16, 0
    %p58 = por %p56, %p57
    %p59 = scmp.ne.s32.totalorder %s45, %s46
    %p60 = scmp.eq.s32.totalorder %s17, 1
    %p61 = por %p59, %p60
    %p63 = scmp.ne.s32.totalorder %s46, %s62
    %p64 = scmp.eq.s32.totalorder %s17, 0
    %p65 = por %p63, %p64
    %s66 = ssub.s32 %s18, %s37
    %p67 = scmp.eq.s32.totalorder %s66, 0
    %s69 = sadd.s32 %s68, 1
    %s70 = scalar_select %p67, %s68, %s69
    %p73 = pneg %p67
    %p74 = scmp.eq.s32.totalorder %s11, 1
    %p75 = por %p73, %p74
    %p76 = scmp.ne.s32.totalorder %s68, %s71
    %p77 = scmp.eq.s32.totalorder %s11, 0
    %p78 = por %p76, %p77
    %p79 = scmp.ne.s32.totalorder %s68, %s71
    %p80 = scmp.eq.s32.totalorder %s16, 1
    %p81 = por %p79, %p80
    %p82 = scmp.ne.s32.totalorder %s71, %s72
    %p83 = scmp.eq.s32.totalorder %s16, 0
    %p84 = por %p82, %p83
    %p85 = scmp.ne.s32.totalorder %s71, %s72
    %p86 = scmp.eq.s32.totalorder %s17, 1
    %p87 = por %p85, %p86
    %p89 = scmp.ne.s32.totalorder %s72, %s88
    %p90 = scmp.eq.s32.totalorder %s17, 0
    %p91 = por %p89, %p90
    %s92 = ssub.s32 %s18, %s37
    %p93 = scmp.eq.s32.totalorder %s92, 0
    %s95 = sadd.s32 %s94, 1
    %s96 = scalar_select %p93, %s94, %s95
    %p99 = pneg %p93
    %p100 = scmp.eq.s32.totalorder %s11, 1
    %p101 = por %p99, %p100
    %p102 = scmp.ne.s32.totalorder %s94, %s97
    %p103 = scmp.eq.s32.totalorder %s11, 0
    %p104 = por %p102, %p103
    %p105 = scmp.ne.s32.totalorder %s94, %s97
    %p106 = scmp.eq.s32.totalorder %s16, 1
    %p107 = por %p105, %p106
    %p108 = scmp.ne.s32.totalorder %s97, %s98
    %p109 = scmp.eq.s32.totalorder %s16, 0
    %p110 = por %p108, %p109
    %p111 = scmp.ne.s32.totalorder %s97, %s98
    %p112 = scmp.eq.s32.totalorder %s17, 1
    %p113 = por %p111, %p112
    %p115 = scmp.ne.s32.totalorder %s98, %s114
    %p116 = scmp.eq.s32.totalorder %s17, 0
    %p117 = por %p115, %p116
    %s118 = ssub.s32 %s20, %s29
    %p119 = scmp.eq.s32.totalorder %s118, 0
    %s121 = sadd.s32 %s120, 1
    %s122 = scalar_select %p119, %s120, %s121
    %p125 = pneg %p119
    %p126 = scmp.eq.s32.totalorder %s11, 1
    %p127 = por %p125, %p126
    %p128 = scmp.ne.s32.totalorder %s120, %s123
    %p129 = scmp.eq.s32.totalorder %s11, 0
    %p130 = por %p128, %p129
    %p131 = scmp.ne.s32.totalorder %s120, %s123
    %p132 = scmp.eq.s32.totalorder %s16, 1
    %p133 = por %p131, %p132
    %p134 = scmp.ne.s32.totalorder %s123, %s124
    %p135 = scmp.eq.s32.totalorder %s16, 0
    %p136 = por %p134, %p135
    %p137 = scmp.ne.s32.totalorder %s123, %s124
    %p138 = scmp.eq.s32.totalorder %s17, 1
    %p139 = por %p137, %p138
    %p141 = scmp.ne.s32.totalorder %s124, %s140
    %p142 = scmp.eq.s32.totalorder %s17, 0
    %p143 = por %p141, %p142
    %s144 = ssub.s32 %s20, %s29
    %p145 = scmp.eq.s32.totalorder %s144, 0
    %s147 = sadd.s32 %s146, 1
    %s148 = scalar_select %p145, %s146, %s147
    %p151 = pneg %p145
    %p152 = scmp.eq.s32.totalorder %s11, 1
    %p153 = por %p151, %p152
    %p154 = scmp.ne.s32.totalorder %s146, %s149
    %p155 = scmp.eq.s32.totalorder %s11, 0
    %p156 = por %p154, %p155
    %p157 = scmp.ne.s32.totalorder %s146, %s149
    %p158 = scmp.eq.s32.totalorder %s16, 1
    %p159 = por %p157, %p158
    %p160 = scmp.ne.s32.totalorder %s149, %s150
    %p161 = scmp.eq.s32.totalorder %s16, 0
    %p162 = por %p160, %p161
    %p163 = scmp.ne.s32.totalorder %s149, %s150
    %p164 = scmp.eq.s32.totalorder %s17, 1
    %p165 = por %p163, %p164
    %p167 = scmp.ne.s32.totalorder %s150, %s166
    %p168 = scmp.eq.s32.totalorder %s17, 0
    %p169 = por %p167, %p168
    %s170 = ssub.s32 %s18, %s37
    %s171 = ssub.s32 %s19, %s33
    %s172 = sor.u32 %s170, %s171
    %s173 = ssub.s32 %s20, %s29
    %s174 = sor.u32 %s172, %s173
    %p175 = scmp.eq.s32.totalorder %s174, 0
    %s177 = sadd.s32 %s176, 1
    %s178 = scalar_select %p175, %s176, %s177
    %p181 = pneg %p175
    %p182 = scmp.eq.s32.totalorder %s11, 1
    %p183 = por %p181, %p182
    %p184 = scmp.ne.s32.totalorder %s176, %s179
    %p185 = scmp.eq.s32.totalorder %s11, 0
    %p186 = por %p184, %p185
    %p187 = scmp.ne.s32.totalorder %s176, %s179
    %p188 = scmp.eq.s32.totalorder %s16, 1
    %p189 = por %p187, %p188
    %p190 = scmp.ne.s32.totalorder %s179, %s180
    %p191 = scmp.eq.s32.totalorder %s16, 0
    %p192 = por %p190, %p191
    %p193 = scmp.ne.s32.totalorder %s179, %s180
    %p194 = scmp.eq.s32.totalorder %s17, 1
    %p195 = por %p193, %p194
    %p197 = scmp.ne.s32.totalorder %s180, %s196
    %p198 = scmp.eq.s32.totalorder %s17, 0
    %p199 = por %p197, %p198
    %p200 = scmp.le.s32.totalorder 1, %s11
    %p201 = scmp.lt.s32.totalorder %s11, 3
    %p202 = pnand %p200, %p201
    %p203 = pneg %p202
    // Predicated region
    $region9: #{double_stream_block.17} parent=5 // pred_check
      _
    $region10: #{double_stream_block.17} parent=5 // pred_check_branch
      %205 = sbr.rel (%p202) target = $region12
    $region11: #{double_stream_block.17} parent=5 // pred_region
      %s206 = ssub.s32 %s11, 1
      // Predicated region
      $region13: #{double_stream_block.17} parent=11 // pred_check
        %p207 = pneg %p136
      $region14: #{double_stream_block.17} parent=11 // pred_check_branch
        %209 = sbr.rel (%p207) target = $region16
      $region15: #{double_stream_block.17} parent=11 // pred_region
        %p210 = scmp.lt.s32.totalorder %s23, 0
        %s211 = scalar_select %p210, %s23, 0
        %s212 = smul.addr %s211, 4
        %s213 = scalar_lea.vmem %s3, %s212
      $region16: #{double_stream_block.17} parent=11 // pred_fallthru
        _
      // Predicated region
      $region17: #{double_stream_block.17} parent=11 // pred_check
        %p214 = pneg %p162
      $region18: #{double_stream_block.17} parent=11 // pred_check_branch
        %216 = sbr.rel (%p214) target = $region20
      $region19: #{double_stream_block.17} parent=11 // pred_region
        %p217 = scmp.lt.s32.totalorder %s23, 0
        %s218 = scalar_select %p217, %s23, 0
        %s219 = scalar_lea.vmem %s4, %s218
      $region20: #{double_stream_block.17} parent=11 // pred_fallthru
        _
    $region12: #{double_stream_block.17} parent=5 // pred_fallthru
      _
    %p220 = scmp.lt.s32.totalorder %s11, 2
    // Predicated region
    $region21: #{double_stream_block.17} parent=5 // pred_check
      %p221 = pneg %p220
    $region22: #{double_stream_block.17} parent=5 // pred_check_branch
      %223 = sbr.rel (%p221) target = $region24
    $region23: #{double_stream_block.17} parent=5 // pred_region
      // Predicated region
      $region25: #{double_stream_block.17} parent=23 // pred_check
        %p224 = pneg %p52
      $region26: #{double_stream_block.17} parent=23 // pred_check_branch
        %226 = sbr.rel (%p224) target = $region28
      $region27: #{double_stream_block.17} parent=23 // pred_region
        %p227 = scmp.lt.s32.totalorder %s18, 1
        %s228 = scalar_select %p227, %s18, 1
        %p229 = scmp.lt.s32.totalorder %s19, 0
        %s230 = scalar_select %p229, %s19, 0
        %s231 = sadd.s32 %s230, %s228
        %s232 = smul.addr %s231, 8
        %s233 = scalar_lea.vmem %s0, %s232
      $region28: #{double_stream_block.17} parent=23 // pred_fallthru
        _
      // Predicated region
      $region29: #{double_stream_block.17} parent=23 // pred_check
        %p234 = pneg %p78
      $region30: #{double_stream_block.17} parent=23 // pred_check_branch
        %236 = sbr.rel (%p234) target = $region32
      $region31: #{double_stream_block.17} parent=23 // pred_region
        %p237 = scmp.lt.s32.totalorder %s18, 1
        %s238 = scalar_select %p237, %s18, 1
        %s239 = scalar_lea.vmem %s1, %s238
      $region32: #{double_stream_block.17} parent=23 // pred_fallthru
        _
      // Predicated region
      $region33: #{double_stream_block.17} parent=23 // pred_check
        %p240 = pneg %p104
      $region34: #{double_stream_block.17} parent=23 // pred_check_branch
        %242 = sbr.rel (%p240) target = $region36
      $region35: #{double_stream_block.17} parent=23 // pred_region
        %p243 = scmp.lt.s32.totalorder %s18, 1
        %s244 = scalar_select %p243, %s18, 1
        %s245 = scalar_lea.vmem %s2, %s244
      $region36: #{double_stream_block.17} parent=23 // pred_fallthru
        _
    $region24: #{double_stream_block.17} parent=5 // pred_fallthru
      _
    %p246 = scmp.le.s32.totalorder 1, %s11
    %p247 = scmp.lt.s32.totalorder %s11, 3
    %p248 = pnand %p246, %p247
    %p249 = pneg %p248
    // Predicated region
    $region37: #{double_stream_block.17} parent=5 // pred_check
      _
    $region38: #{double_stream_block.17} parent=5 // pred_check_branch
      %251 = sbr.rel (%p248) target = $region40
    $region39: #{double_stream_block.17} parent=5 // pred_region
      %s252 = ssub.s32 %s11, 1
      %p253 = scmp.lt.s32.totalorder %s21, 1
      %s254 = scalar_select %p253, %s21, 1
      %p255 = scmp.lt.s32.totalorder %s22, 0
      %s256 = scalar_select %p255, %s22, 0
      %s257 = sadd.s32 %s256, %s254
      %s258 = smul.addr %s257, 8
      %s259 = scalar_lea.vmem %s0, %s258
      %p260 = pneg %p58
      %p261 = pneg %p55
      %p262 = scmp.lt.s32.totalorder %s21, 1
      %s263 = scalar_select %p262, %s21, 1
      %s264 = scalar_lea.vmem %s1, %s263
      %p265 = pneg %p84
      %p266 = pneg %p81
      %p267 = scmp.lt.s32.totalorder %s21, 1
      %s268 = scalar_select %p267, %s21, 1
      %s269 = scalar_lea.vmem %s2, %s268
      %p270 = pneg %p110
      %p271 = pneg %p107
      %p272 = scmp.lt.s32.totalorder %s23, 0
      %s273 = scalar_select %p272, %s23, 0
      %s274 = smul.addr %s273, 4
      %s275 = scalar_lea.vmem %s3, %s274
      %p276 = pneg %p136
      %p277 = pneg %p133
      %p278 = scmp.lt.s32.totalorder %s23, 0
      %s279 = scalar_select %p278, %s23, 0
      %s280 = scalar_lea.vmem %s4, %s279
      %p281 = pneg %p162
      %p282 = pneg %p159
      %p283 = pneg %p192
      %p284 = pneg %p189
      %p285 = scmp.lt.s32.totalorder %s21, 1
      %s286 = scalar_select %p285, %s21, 1
      %p287 = scmp.lt.s32.totalorder %s22, 0
      %s288 = scalar_select %p287, %s22, 0
      %p289 = scmp.lt.s32.totalorder %s23, 0
      %s290 = scalar_select %p289, %s23, 0
      %s291 = sadd.s32 %s290, %s288
      %s292 = sadd.s32 %s291, %s286
      %s293 = smul.addr %s292, 4
      %s294 = scalar_lea.vmem %s5, %s293
      %p295 = scmp.lt.s32.totalorder %s21, 1
      %s296 = scalar_select %p295, %s21, 1
      %p297 = scmp.lt.s32.totalorder %s22, 0
      %s298 = scalar_select %p297, %s22, 0
      %s299 = sadd.s32 %s298, %s296
      %s300 = smul.addr %s299, 8
      %s301 = scalar_lea.vmem %s0, %s300
      %p302 = scmp.lt.s32.totalorder %s21, 1
      %s303 = scalar_select %p302, %s21, 1
      %s304 = scalar_lea.vmem %s1, %s303
      %p305 = scmp.lt.s32.totalorder %s21, 1
      %s306 = scalar_select %p305, %s21, 1
      %s307 = scalar_lea.vmem %s2, %s306
      %p308 = scmp.lt.s32.totalorder %s23, 0
      %s309 = scalar_select %p308, %s23, 0
      %s310 = smul.addr %s309, 4
      %s311 = scalar_lea.vmem %s3, %s310
      %p312 = scmp.lt.s32.totalorder %s23, 0
      %s313 = scalar_select %p312, %s23, 0
      %s314 = scalar_lea.vmem %s4, %s313
      %p315 = scmp.lt.s32.totalorder %s21, 1
      %s316 = scalar_select %p315, %s21, 1
      %p317 = scmp.lt.s32.totalorder %s22, 0
      %s318 = scalar_select %p317, %s22, 0
      %p319 = scmp.lt.s32.totalorder %s23, 0
      %s320 = scalar_select %p319, %s23, 0
      %s321 = sadd.s32 %s320, %s318
      %s322 = sadd.s32 %s321, %s316
      %s323 = smul.addr %s322, 4
      %s324 = scalar_lea.vmem %s5, %s323
      %v326 = vld [vmem:[%s301] sm:$0xff]
      %vm327 = vcmask 261120
      %v328 = vsel %vm327, %v326, 0.0
      %329 = vadd.xlane.f32.xlu0 %v328
      %v330 = vpop.xlane.xlu0 %329
      %v331 = vrcp.pop 32.0
      %v332 = vmul.f32 32.0, %v331
      %v333 = vsub.f32 1.0, %v332
      %v334 = vmul.f32 %v331, %v333
      %v335 = vadd.f32 %v331, %v334
      %vm336 = vweird.f32 %v331
      %v337 = vsel %vm336, %v331, %v335
      %v338 = vmul.f32 %v330, %v337
      %v339 = vsub.f32 %v326, %v338
      %v340 = vmul.f32 %v339, %v339
      %v341 = vsel %vm327, %v340, 0.0
      %342 = vadd.xlane.f32.xlu0 %v341
      %v343 = vpop.xlane.xlu0 %342
      %v344 = vmul.f32 %v343, %v337
      %v345 = vadd.f32 %v344, 1e-06
      %v346 = vrsqrt.pop %v345
      %v347 = vmul.f32 %v346, %v345
      %v348 = vmul.f32 %v347, %v346
      %v349 = vmul.f32 0.5, %v348
      %v350 = vsub.f32 1.5, %v349
      %v351 = vmul.f32 %v346, %v350
      %vm352 = vweird.f32 %v345
      %vm353 = vweird.f32 %v346
      %vm354 = vmor %vm352, %vm353
      %v355 = vsel %vm354, %v346, %v351
      %v356 = vmul.f32 %v339, %v355
      %v357 = vld [vmem:[%s304] sm:$0x1]
      %v358 = vadd.f32 %v357, 1.0
      %v360 = vperm.slane %v358, 0
      %v362 = vmul.f32 %v360, %v356
      %v363 = vld [vmem:[%s307] sm:$0x1]
      %v365 = vperm.slane %v363, 0
      %v367 = vadd.f32 %v362, %v365
      %v368 = vpack.c.bf16 %v367, %v367
      %v369 = vld [vmem:[%s311] sm:$0xf]
      %v370 = vld [vmem:[%s311 + $0x4] sm:$0xf]
      %v371 = vld [vmem:[%s311 + $0x8] sm:$0xf]
      %v372 = vld [vmem:[%s311 + $0xc] sm:$0xf]
      %v373 = vld [vmem:[%s314] sm:$0x1]
      %v375 = vperm.slane %v373, 0
      %v381 = vunpack.c.l.b16 %v369
      %v382 = vunpack.c.l.b16 %v370
      %v383 = vunpack.c.l.b16 %v371
      %v384 = vunpack.c.l.b16 %v372
      %v385 = vpack.c.b16 %v382, %v381
      %v386 = vpack.c.b16 %v384, %v383
      %v390 = vsel %vm327, %v368, 0
      %392 = vmatpush.bf16.msra.mxu0 0
      %393 = vmatpush.bf16.msra.mxu0 0
      %394 = vmatpush.bf16.msra.mxu0 0
      %395 = vmatpush.bf16.msra.mxu0 0
      %396 = vmatpush.bf16.msra.mxu0 0
      %397 = vmatpush.bf16.msra.mxu0 0
      %398 = vmatpush.bf16.msra.mxu0 %v386
      %399 = vmatpush.bf16.msra.mxu0 %v385
      %400 = vmatmul.bf16.gmra.mxu0 %v390
      %v401 = vpop.f32.mrf.mxu0
      %v402 = vadd.f32 %v375, %v401
      %v403 = vpop.f32.mrf.mxu0
      %404 = vdwg.mxu0
      %v405 = vmul.f32 %v402, 0.5
      %v406 = vmul.f32 %v402, 0.044715
      %v407 = vmul.f32 %v406, %v402
      %v408 = vmul.f32 %v407, %v402
      %v409 = vadd.f32 %v402, %v408
      %v410 = vmul.f32 %v409, 0.7978846
      %v411 = vtanh.pop %v410
      %v412 = vadd.f32 %v411, 1.0
      %v413 = vmul.f32 %v405, %v412
      %v414 = vpack.c.bf16 %v413, %v413
      %415 = vst [vmem:[%s324] sm:$0xf] %v414
      %p416 = scmp.lt.s32.totalorder %s21, 1
      %s417 = scalar_select %p416, %s21, 1
      %p418 = scmp.lt.s32.totalorder %s22, 0
      %s419 = scalar_select %p418, %s22, 0
      %p420 = scmp.lt.s32.totalorder %s23, 0
      %s421 = scalar_select %p420, %s23, 0
      %s422 = sadd.s32 %s421, %s419
      %s423 = sadd.s32 %s422, %s417
      %s424 = smul.addr %s423, 4
      %s425 = scalar_lea.vmem %s5, %s424
      // Predicated region
      $region41: #{double_stream_block.17} parent=39 // pred_check
        %p426 = pneg %p189
      $region42: #{double_stream_block.17} parent=39 // pred_check_branch
        %428 = sbr.rel (%p426) target = $region44
      $region43: #{double_stream_block.17} parent=39 // pred_region
        _
      $region44: #{double_stream_block.17} parent=39 // pred_fallthru
        _
    $region40: #{double_stream_block.17} parent=5 // pred_fallthru
      _
    %p429 = scmp.le.s32.totalorder 2, %s11
    // Predicated region
    $region45: #{double_stream_block.17} parent=5 // pred_check
      %p430 = pneg %p429
    $region46: #{double_stream_block.17} parent=5 // pred_check_branch
      %432 = sbr.rel (%p430) target = $region48
    $region47: #{double_stream_block.17} parent=5 // pred_region
      %s433 = ssub.s32 %s11, 2
      // Predicated region
      $region49: #{double_stream_block.17} parent=47 // pred_check
        %p434 = pneg %p195
      $region50: #{double_stream_block.17} parent=47 // pred_check_branch
        %436 = sbr.rel (%p434) target = $region52
      $region51: #{double_stream_block.17} parent=47 // pred_region
        %p437 = scmp.lt.s32.totalorder %s24, 1
        %s438 = scalar_select %p437, %s24, 1
        %p439 = scmp.lt.s32.totalorder %s25, 0
        %s440 = scalar_select %p439, %s25, 0
        %p441 = scmp.lt.s32.totalorder %s26, 0
        %s442 = scalar_select %p441, %s26, 0
        %s443 = sadd.s32 %s442, %s440
        %s444 = sadd.s32 %s443, %s438
        %s445 = smul.addr %s444, 4
        %s446 = scalar_lea.vmem %s5, %s445
      $region52: #{double_stream_block.17} parent=47 // pred_fallthru
        _
    $region48: #{double_stream_block.17} parent=5 // pred_fallthru
      _
  $region6: #{double_stream_block.17} parent=0 // loop_footer
    %s15 = sadd.s32 1, %s11
  $region7: #{double_stream_block.17} parent=0 // loop_footer_branch
    %10 = sbr.rel target = $region3
  $region8: #{double_stream_block.17} parent=0 // loop_exit
    _

// kernel: double_stream_block.18
$region0: #{double_stream_block.18}
  #allocation0 [shape = 'u32[]', space=smem, size = 0x4, offset = 0x4, fixed_abs, tag = 'smem constant byte address 0x4 - core index']
  #allocation1 [shape = 'u32[72,128]{1,0:T(1,128)}', space=vmem, size = 0x9000, scoped, tag = 'internal scratch']
  #allocation2 [shape = 'f32[8,32]{1,0:T(8,128)}', space=vmem, size = 0x1000, scoped, tag = 'scratch operand']
  %s0 = inlined_call_operand.vmem [shape: bf16[2,8,128], index: 0, kind: input, shape index: {}]
  %s1 = inlined_call_operand.vmem [shape: bf16[128,32], index: 1, kind: input, shape index: {}]
  %s2 = inlined_call_operand.vmem [shape: f32[1,32], index: 2, kind: input, shape index: {}]
  %s3 = inlined_call_operand.vmem [shape: f32[2,1,32], index: 3, kind: input, shape index: {}]
  %s4 = inlined_call_operand.vmem [shape: f32[2,8,32], index: 4, kind: input, shape index: {}]
  %s5 = inlined_call_operand.hbm [shape: f32[2,8,32], index: 5, kind: output, shape index: {}]
  %s6 = sld [smem:[#allocation0]]
  $region61: #{double_stream_block.18} parent=0
    _
  %s8 = ssub.s32 1, %s6
  %s9 = scalar_select 0, %s8, %s6
  $region1: #{double_stream_block.18} parent=0
    #allocation3 [shape = 'u8[8192]{0}', space=vmem, size = 0x2000, scoped, tag = 'output window, operand 0']
    #allocation4 [shape = 's32[2]{0}', space=sflag, size = 0x8, scoped, tag = 'scoped memory for double_stream_block.18']
    %10 = vsyncpa [#allocation4], 0
    %s11 = scalar_lea.sflag [#allocation4], 1
    %12 = vsyncpa %s11, 0
    loop: start=0, step=1, limit=4
    $region2: #{double_stream_block.18} parent=1 // loop_pre_header
      _
    $region3: #{double_stream_block.18} parent=1 // loop_header
      %s14 = sphi 0, %s18
      %p15 = scmp.ge.s32.totalorder %s14, 4
      %s21 = sphi 0, %s47
      %s22 = sphi 0, %s43
      %s23 = sphi 0, %s39
      %s24 = sphi 0, %s35
      %s25 = sphi 0, %s21
      %s26 = sphi 0, %s22
      %s27 = sphi 0, %s23
      %s28 = sphi 0, %s24
      %s29 = sphi 0, %s25
      %s30 = sphi 0, %s26
      %s31 = sphi 0, %s27
      %s32 = sphi 0, %s28
      %s54 = sphi 0, %s56
      %s57 = sphi 0, %s54
      %s58 = sphi 0, %s57
      %s74 = sphi 0, %s58
      %s82 = sphi 0, %s84
      %s85 = sphi 0, %s82
      %s86 = sphi 0, %s85
      %s102 = sphi 0, %s86
      %s108 = sphi 0, %s110
      %s111 = sphi 0, %s108
      %s112 = sphi 0, %s111
      %s128 = sphi 0, %s112
      %s136 = sphi 0, %s138
      %s139 = sphi 0, %s136
      %s140 = sphi 0, %s139
      %s156 = sphi 0, %s140
      %s166 = sphi 0, %s168
      %s169 = sphi 0, %s166
      %s170 = sphi 0, %s169
      %s186 = sphi 0, %s170
      %s196 = sphi 0, %s198
      %s199 = sphi 0, %s196
      %s200 = sphi 0, %s199
      %s216 = sphi 0, %s200
    $region4: #{double_stream_block.18} parent=1 // loop_header_branch
      %17 = sbr.rel (%p15) target = $region8
    $region5: #{double_stream_block.18} parent=1 // loop_body
      %s19 = ssub.s32 %s14, 1
      %s20 = ssub.s32 %s14, 2
      %s33 = sadd.s32 1, %s24
      %p34 = scmp.ge.s32.totalorder %s33, 1
      %s35 = scalar_select %p34, 0, %s33
      %s36 = sadd.s32 1, %s23
      %s37 = scalar_select %p34, %s36, %s23
      %p38 = scmp.ge.s32.totalorder %s37, 1
      %s39 = scalar_select %p38, 0, %s37
      %s40 = sadd.s32 1, %s22
      %s41 = scalar_select %p38, %s40, %s22
      %p42 = scmp.ge.s32.totalorder %s41, 1
      %s43 = scalar_select %p42, 0, %s41
      %s44 = sadd.s32 1, %s21
      %s45 = scalar_select %p42, %s44, %s21
      %p46 = scmp.ge.s32.totalorder %s45, 2
      %s47 = scalar_select %p46, 0, %s45
      %s48 = ssub.s32 %s21, %s47
      %s49 = ssub.s32 %s22, %s43
      %s50 = sor.u32 %s48, %s49
      %s51 = ssub.s32 %s24, %s35
      %s52 = sor.u32 %s50, %s51
      %p53 = scmp.eq.s32.totalorder %s52, 0
      %s55 = sadd.s32 %s54, 1
      %s56 = scalar_select %p53, %s54, %s55
      %p59 = pneg %p53
      %p60 = scmp.eq.s32.totalorder %s14, 1
      %p61 = por %p59, %p60
      %p62 = scmp.ne.s32.totalorder %s54, %s57
      %p63 = scmp.eq.s32.totalorder %s14, 0
      %p64 = por %p62, %p63
      %p65 = scmp.ne.s32.totalorder %s54, %s57
      %p66 = scmp.eq.s32.totalorder %s19, 1
      %p67 = por %p65, %p66
      %p68 = scmp.ne.s32.totalorder %s57, %s58
      %p69 = scmp.eq.s32.totalorder %s19, 0
      %p70 = por %p68, %p69
      %p71 = scmp.ne.s32.totalorder %s57, %s58
      %p72 = scmp.eq.s32.totalorder %s20, 1
      %p73 = por %p71, %p72
      %p75 = scmp.ne.s32.totalorder %s58, %s74
      %p76 = scmp.eq.s32.totalorder %s20, 0
      %p77 = por %p75, %p76
      %s78 = ssub.s32 %s24, %s35
      %s79 = ssub.s32 %s23, %s39
      %s80 = sor.u32 %s78, %s79
      %p81 = scmp.eq.s32.totalorder %s80, 0
      %s83 = sadd.s32 %s82, 1
      %s84 = scalar_select %p81, %s82, %s83
      %p87 = pneg %p81
      %p88 = scmp.eq.s32.totalorder %s14, 1
      %p89 = por %p87, %p88
      %p90 = scmp.ne.s32.totalorder %s82, %s85
      %p91 = scmp.eq.s32.totalorder %s14, 0
      %p92 = por %p90, %p91
      %p93 = scmp.ne.s32.totalorder %s82, %s85
      %p94 = scmp.eq.s32.totalorder %s19, 1
      %p95 = por %p93, %p94
      %p96 = scmp.ne.s32.totalorder %s85, %s86
      %p97 = scmp.eq.s32.totalorder %s19, 0
      %p98 = por %p96, %p97
      %p99 = scmp.ne.s32.totalorder %s85, %s86
      %p100 = scmp.eq.s32.totalorder %s20, 1
      %p101 = por %p99, %p100
      %p103 = scmp.ne.s32.totalorder %s86, %s102
      %p104 = scmp.eq.s32.totalorder %s20, 0
      %p105 = por %p103, %p104
      %s106 = ssub.s32 %s23, %s39
      %p107 = scmp.eq.s32.totalorder %s106, 0
      %s109 = sadd.s32 %s108, 1
      %s110 = scalar_select %p107, %s108, %s109
      %p113 = pneg %p107
      %p114 = scmp.eq.s32.totalorder %s14, 1
      %p115 = por %p113, %p114
      %p116 = scmp.ne.s32.totalorder %s108, %s111
      %p117 = scmp.eq.s32.totalorder %s14, 0
      %p118 = por %p116, %p117
      %p119 = scmp.ne.s32.totalorder %s108, %s111
      %p120 = scmp.eq.s32.totalorder %s19, 1
      %p121 = por %p119, %p120
      %p122 = scmp.ne.s32.totalorder %s111, %s112
      %p123 = scmp.eq.s32.totalorder %s19, 0
      %p124 = por %p122, %p123
      %p125 = scmp.ne.s32.totalorder %s111, %s112
      %p126 = scmp.eq.s32.totalorder %s20, 1
      %p127 = por %p125, %p126
      %p129 = scmp.ne.s32.totalorder %s112, %s128
      %p130 = scmp.eq.s32.totalorder %s20, 0
      %p131 = por %p129, %p130
      %s132 = ssub.s32 %s21, %s47
      %s133 = ssub.s32 %s23, %s39
      %s134 = sor.u32 %s132, %s133
      %p135 = scmp.eq.s32.totalorder %s134, 0
      %s137 = sadd.s32 %s136, 1
      %s138 = scalar_select %p135, %s136, %s137
      %p141 = pneg %p135
      %p142 = scmp.eq.s32.totalorder %s14, 1
      %p143 = por %p141, %p142
      %p144 = scmp.ne.s32.totalorder %s136, %s139
      %p145 = scmp.eq.s32.totalorder %s14, 0
      %p146 = por %p144, %p145
      %p147 = scmp.ne.s32.totalorder %s136, %s139
      %p148 = scmp.eq.s32.totalorder %s19, 1
      %p149 = por %p147, %p148
      %p150 = scmp.ne.s32.totalorder %s139, %s140
      %p151 = scmp.eq.s32.totalorder %s19, 0
      %p152 = por %p150, %p151
      %p153 = scmp.ne.s32.totalorder %s139, %s140
      %p154 = scmp.eq.s32.totalorder %s20, 1
      %p155 = por %p153, %p154
      %p157 = scmp.ne.s32.totalorder %s140, %s156
      %p158 = scmp.eq.s32.totalorder %s20, 0
      %p159 = por %p157, %p158
      %s160 = ssub.s32 %s21, %s47
      %s161 = ssub.s32 %s22, %s43
      %s162 = sor.u32 %s160, %s161
      %s163 = ssub.s32 %s23, %s39
      %s164 = sor.u32 %s162, %s163
      %p165 = scmp.eq.s32.totalorder %s164, 0
      %s167 = sadd.s32 %s166, 1
      %s168 = scalar_select %p165, %s166, %s167
      %p171 = pneg %p165
      %p172 = scmp.eq.s32.totalorder %s14, 1
      %p173 = por %p171, %p172
      %p174 = scmp.ne.s32.totalorder %s166, %s169
      %p175 = scmp.eq.s32.totalorder %s14, 0
      %p176 = por %p174, %p175
      %p177 = scmp.ne.s32.totalorder %s166, %s169
      %p178 = scmp.eq.s32.totalorder %s19, 1
      %p179 = por %p177, %p178
      %p180 = scmp.ne.s32.totalorder %s169, %s170
      %p181 = scmp.eq.s32.totalorder %s19, 0
      %p182 = por %p180, %p181
      %p183 = scmp.ne.s32.totalorder %s169, %s170
      %p184 = scmp.eq.s32.totalorder %s20, 1
      %p185 = por %p183, %p184
      %p187 = scmp.ne.s32.totalorder %s170, %s186
      %p188 = scmp.eq.s32.totalorder %s20, 0
      %p189 = por %p187, %p188
      %s190 = ssub.s32 %s21, %s47
      %s191 = ssub.s32 %s22, %s43
      %s192 = sor.u32 %s190, %s191
      %s193 = ssub.s32 %s23, %s39
      %s194 = sor.u32 %s192, %s193
      %p195 = scmp.eq.s32.totalorder %s194, 0
      %s197 = sadd.s32 %s196, 1
      %s198 = scalar_select %p195, %s196, %s197
      %p201 = pneg %p195
      %p202 = scmp.eq.s32.totalorder %s14, 1
      %p203 = por %p201, %p202
      %p204 = scmp.ne.s32.totalorder %s196, %s199
      %p205 = scmp.eq.s32.totalorder %s14, 0
      %p206 = por %p204, %p205
      %p207 = scmp.ne.s32.totalorder %s196, %s199
      %p208 = scmp.eq.s32.totalorder %s19, 1
      %p209 = por %p207, %p208
      %p210 = scmp.ne.s32.totalorder %s199, %s200
      %p211 = scmp.eq.s32.totalorder %s19, 0
      %p212 = por %p210, %p211
      %p213 = scmp.ne.s32.totalorder %s199, %s200
      %p214 = scmp.eq.s32.totalorder %s20, 1
      %p215 = por %p213, %p214
      %p217 = scmp.ne.s32.totalorder %s200, %s216
      %p218 = scmp.eq.s32.totalorder %s20, 0
      %p219 = por %p217, %p218
      %p220 = scmp.le.s32.totalorder 1, %s14
      %p221 = scmp.lt.s32.totalorder %s14, 3
      %p222 = pnand %p220, %p221
      %p223 = pneg %p222
      // Predicated region
      $region9: #{double_stream_block.18} parent=5 // pred_check
        _
      $region10: #{double_stream_block.18} parent=5 // pred_check_branch
        %225 = sbr.rel (%p222) target = $region12
      $region11: #{double_stream_block.18} parent=5 // pred_region
        %s226 = ssub.s32 %s14, 1
        // Predicated region
        $region13: #{double_stream_block.18} parent=11 // pred_check
          %p227 = pneg %p98
        $region14: #{double_stream_block.18} parent=11 // pred_check_branch
          %229 = sbr.rel (%p227) target = $region16
        $region15: #{double_stream_block.18} parent=11 // pred_region
          %s230 = smul.u32 16, %s28
          %p231 = scmp.lt.s32.totalorder %s230, 15
          %s232 = scalar_select %p231, %s230, 15
          %p233 = scmp.lt.s32.totalorder %s27, 0
          %s234 = scalar_select %p233, %s27, 0
          %s235 = sadd.s32 %s234, %s232
          %s236 = smul.addr %s235, 4
          %s237 = scalar_lea.vmem %s1, %s236
          %s238 = smul.u32 16, %s28
        $region16: #{double_stream_block.18} parent=11 // pred_fallthru
          _
        // Predicated region
        $region17: #{double_stream_block.18} parent=11 // pred_check
          %p239 = pneg %p124
        $region18: #{double_stream_block.18} parent=11 // pred_check_branch
          %241 = sbr.rel (%p239) target = $region20
        $region19: #{double_stream_block.18} parent=11 // pred_region
          %p242 = scmp.lt.s32.totalorder %s27, 0
          %s243 = scalar_select %p242, %s27, 0
          %s244 = scalar_lea.vmem %s2, %s243
        $region20: #{double_stream_block.18} parent=11 // pred_fallthru
          _
      $region12: #{double_stream_block.18} parent=5 // pred_fallthru
        _
      %p245 = scmp.lt.s32.totalorder %s14, 2
      // Predicated region
      $region21: #{double_stream_block.18} parent=5 // pred_check
        %p246 = pneg %p245
      $region22: #{double_stream_block.18} parent=5 // pred_check_branch
        %248 = sbr.rel (%p246) target = $region24
      $region23: #{double_stream_block.18} parent=5 // pred_region
        // Predicated region
        $region25: #{double_stream_block.18} parent=23 // pred_check
          %p249 = pneg %p64
        $region26: #{double_stream_block.18} parent=23 // pred_check_branch
          %251 = sbr.rel (%p249) target = $region28
        $region27: #{double_stream_block.18} parent=23 // pred_region
          %p252 = scmp.lt.s32.totalorder %s21, 1
          %s253 = scalar_select %p252, %s21, 1
          %p254 = scmp.lt.s32.totalorder %s22, 0
          %s255 = scalar_select %p254, %s22, 0
          %p256 = scmp.lt.s32.totalorder %s24, 0
          %s257 = scalar_select %p256, %s24, 0
          %s258 = sadd.s32 %s257, %s255
          %s259 = sadd.s32 %s258, %s253
          %s260 = smul.addr %s259, 4
          %s261 = scalar_lea.vmem %s0, %s260
        $region28: #{double_stream_block.18} parent=23 // pred_fallthru
          _
        // Predicated region
        $region29: #{double_stream_block.18} parent=23 // pred_check
          %p262 = pneg %p146
        $region30: #{double_stream_block.18} parent=23 // pred_check_branch
          %264 = sbr.rel (%p262) target = $region32
        $region31: #{double_stream_block.18} parent=23 // pred_region
          %p265 = scmp.lt.s32.totalorder %s21, 1
          %s266 = scalar_select %p265, %s21, 1
          %p267 = scmp.lt.s32.totalorder %s23, 0
          %s268 = scalar_select %p267, %s23, 0
          %s269 = sadd.s32 %s268, %s266
          %s270 = scalar_lea.vmem %s3, %s269
        $region32: #{double_stream_block.18} parent=23 // pred_fallthru
          _
        // Predicated region
        $region33: #{double_stream_block.18} parent=23 // pred_check
          %p271 = pneg %p176
        $region34: #{double_stream_block.18} parent=23 // pred_check_branch
          %273 = sbr.rel (%p271) target = $region36
        $region35: #{double_stream_block.18} parent=23 // pred_region
          %p274 = scmp.lt.s32.totalorder %s21, 1
          %s275 = scalar_select %p274, %s21, 1
          %p276 = scmp.lt.s32.totalorder %s22, 0
          %s277 = scalar_select %p276, %s22, 0
          %p278 = scmp.lt.s32.totalorder %s23, 0
          %s279 = scalar_select %p278, %s23, 0
          %s280 = sadd.s32 %s279, %s277
          %s281 = sadd.s32 %s280, %s275
          %s282 = smul.addr %s281, 8
          %s283 = scalar_lea.vmem %s4, %s282
        $region36: #{double_stream_block.18} parent=23 // pred_fallthru
          _
      $region24: #{double_stream_block.18} parent=5 // pred_fallthru
        _
      %p284 = scmp.le.s32.totalorder 1, %s14
      %p285 = scmp.lt.s32.totalorder %s14, 3
      %p286 = pnand %p284, %p285
      %p287 = pneg %p286
      // Predicated region
      $region37: #{double_stream_block.18} parent=5 // pred_check
        _
      $region38: #{double_stream_block.18} parent=5 // pred_check_branch
        %289 = sbr.rel (%p286) target = $region40
      $region39: #{double_stream_block.18} parent=5 // pred_region
        %s290 = ssub.s32 %s14, 1
        %p291 = scmp.lt.s32.totalorder %s25, 1
        %s292 = scalar_select %p291, %s25, 1
        %p293 = scmp.lt.s32.totalorder %s26, 0
        %s294 = scalar_select %p293, %s26, 0
        %p295 = scmp.lt.s32.totalorder %s28, 0
        %s296 = scalar_select %p295, %s28, 0
        %s297 = sadd.s32 %s296, %s294
        %s298 = sadd.s32 %s297, %s292
        %s299 = smul.addr %s298, 4
        %s300 = scalar_lea.vmem %s0, %s299
        %p301 = pneg %p70
        %p302 = pneg %p67
        %s303 = smul.u32 16, %s28
        %p304 = scmp.lt.s32.totalorder %s303, 15
        %s305 = scalar_select %p304, %s303, 15
        %p306 = scmp.lt.s32.totalorder %s27, 0
        %s307 = scalar_select %p306, %s27, 0
        %s308 = sadd.s32 %s307, %s305
        %s309 = smul.addr %s308, 4
        %s310 = scalar_lea.vmem %s1, %s309
        %p311 = pneg %p98
        %p312 = pneg %p95
        %p313 = scmp.lt.s32.totalorder %s27, 0
        %s314 = scalar_select %p313, %s27, 0
        %s315 = scalar_lea.vmem %s2, %s314
        %p316 = pneg %p124
        %p317 = pneg %p121
        %p318 = scmp.lt.s32.totalorder %s25, 1
        %s319 = scalar_select %p318, %s25, 1
        %p320 = scmp.lt.s32.totalorder %s27, 0
        %s321 = scalar_select %p320, %s27, 0
        %s322 = sadd.s32 %s321, %s319
        %s323 = scalar_lea.vmem %s3, %s322
        %p324 = pneg %p152
        %p325 = pneg %p149
        %p326 = scmp.lt.s32.totalorder %s25, 1
        %s327 = scalar_select %p326, %s25, 1
        %p328 = scmp.lt.s32.totalorder %s26, 0
        %s329 = scalar_select %p328, %s26, 0
        %p330 = scmp.lt.s32.totalorder %s27, 0
        %s331 = scalar_select %p330, %s27, 0
        %s332 = sadd.s32 %s331, %s329
        %s333 = sadd.s32 %s332, %s327
        %s334 = smul.addr %s333, 8
        %s335 = scalar_lea.vmem %s4, %s334
        %p336 = pneg %p182
        %p337 = pneg %p179
        %p338 = pneg %p212
        %p339 = pneg %p209
        %s340 = sand.u32 %s199, 1
        %s341 = scalar_lea.sflag [#allocation4], %s340
        %s342 = sand.u32 %s199, 1
        %s343 = smul.addr %s342, 8
        %s344 = scalar_lea.vmem [#allocation3], %s343
        %p345 = scmp.lt.s32.totalorder %s25, 1
        %s346 = scalar_select %p345, %s25, 1
        %p347 = scmp.lt.s32.totalorder %s26, 0
        %s348 = scalar_select %p347, %s26, 0
        %p349 = scmp.lt.s32.totalorder %s28, 0
        %s350 = scalar_select %p349, %s28, 0
        %s351 = sadd.s32 %s350, %s348
        %s352 = sadd.s32 %s351, %s346
        %s353 = smul.addr %s352, 4
        %s354 = scalar_lea.vmem %s0, %s353
        %s355 = smul.u32 16, %s28
        %p356 = scmp.lt.s32.totalorder %s355, 15
        %s357 = scalar_select %p356, %s355, 15
        %p358 = scmp.lt.s32.totalorder %s27, 0
        %s359 = scalar_select %p358, %s27, 0
        %s360 = sadd.s32 %s359, %s357
        %s361 = smul.addr %s360, 4
        %s362 = scalar_lea.vmem %s1, %s361
        %s363 = smul.u32 16, %s28
        %p364 = scmp.lt.s32.totalorder %s27, 0
        %s365 = scalar_select %p364, %s27, 0
        %s366 = scalar_lea.vmem %s2, %s365
        %p367 = scmp.lt.s32.totalorder %s25, 1
        %s368 = scalar_select %p367, %s25, 1
        %p369 = scmp.lt.s32.totalorder %s27, 0
        %s370 = scalar_select %p369, %s27, 0
        %s371 = sadd.s32 %s370, %s368
        %s372 = scalar_lea.vmem %s3, %s371
        %p373 = scmp.lt.s32.totalorder %s25, 1
        %s374 = scalar_select %p373, %s25, 1
        %p375 = scmp.lt.s32.totalorder %s26, 0
        %s376 = scalar_select %p375, %s26, 0
        %p377 = scmp.lt.s32.totalorder %s27, 0
        %s378 = scalar_select %p377, %s27, 0
        %s379 = sadd.s32 %s378, %s376
        %s380 = sadd.s32 %s379, %s374
        %s381 = smul.addr %s380, 8
        %s382 = scalar_lea.vmem %s4, %s381
        %p383 = scmp.eq.s32.totalorder %s28, 0
        // Predicated region
        $region41: #{double_stream_block.18} parent=39 // pred_check
          %p384 = pneg %p383
        $region42: #{double_stream_block.18} parent=39 // pred_check_branch
          %386 = sbr.rel (%p384) target = $region44
        $region43: #{double_stream_block.18} parent=39 // pred_region
          %vm387 = vcmask 261120
          %388 = vst.msk [vmem:[#allocation2] sm:$0xff] %vm387, 0.0
        $region44: #{double_stream_block.18} parent=39 // pred_fallthru
          _
        %v389 = vld [vmem:[#allocation2] sm:$0xff]
        %v390 = vld [vmem:[%s354] sm:$0xf]
        %v391 = vld [vmem:[%s362] sm:$0xf]
        %v392 = vld [vmem:[%s362 + $0x4] sm:$0xf]
        %v393 = vld [vmem:[%s362 + $0x8] sm:$0xf]
        %v394 = vld [vmem:[%s362 + $0xc] sm:$0xf]
        %v395 = vld [vmem:[%s362 + $0x10] sm:$0xf]
        %v396 = vld [vmem:[%s362 + $0x14] sm:$0xf]
        %v397 = vld [vmem:[%s362 + $0x18] sm:$0xf]
        %v398 = vld [vmem:[%s362 + $0x1c] sm:$0xf]
        %v399 = vld [vmem:[%s362 + $0x20] sm:$0xf]
        %v400 = vld [vmem:[%s362 + $0x24] sm:$0xf]
        %v401 = vld [vmem:[%s362 + $0x28] sm:$0xf]
        %v402 = vld [vmem:[%s362 + $0x2c] sm:$0xf]
        %v403 = vld [vmem:[%s362 + $0x30] sm:$0xf]
        %v404 = vld [vmem:[%s362 + $0x34] sm:$0xf]
        %v405 = vld [vmem:[%s362 + $0x38] sm:$0xf]
        %v406 = vld [vmem:[%s362 + $0x3c] sm:$0xf]
        %v423 = vunpack.c.l.b16 %v391
        %v424 = vunpack.c.l.b16 %v392
        %v425 = vunpack.c.l.b16 %v393
        %v426 = vunpack.c.l.b16 %v394
        %v427 = vunpack.c.l.b16 %v395
        %v428 = vunpack.c.l.b16 %v396
        %v429 = vunpack.c.l.b16 %v397
        %v430 = vunpack.c.l.b16 %v398
        %v431 = vunpack.c.l.b16 %v399
        %v432 = vunpack.c.l.b16 %v400
        %v433 = vunpack.c.l.b16 %v401
        %v434 = vunpack.c.l.b16 %v402
        %v435 = vunpack.c.l.b16 %v403
        %v436 = vunpack.c.l.b16 %v404
        %v437 = vunpack.c.l.b16 %v405
        %v438 = vunpack.c.l.b16 %v406
        %v439 = vpack.c.b16 %v424, %v423
        %v440 = vpack.c.b16 %v426, %v425
        %v441 = vpack.c.b16 %v428, %v427
        %v442 = vpack.c.b16 %v430, %v429
        %v443 = vpack.c.b16 %v432, %v431
        %v444 = vpack.c.b16 %v434, %v433
        %v445 = vpack.c.b16 %v436, %v435
        %v446 = vpack.c.b16 %v438, %v437
        %455 = vmatpush.bf16.msra.mxu0 %v446
        %456 = vmatpush.bf16.msra.mxu0 %v445
        %457 = vmatpush.bf16.msra.mxu0 %v444
        %458 = vmatpush.bf16.msra.mxu0 %v443
        %459 = vmatpush.bf16.msra.mxu0 %v442
        %460 = vmatpush.bf16.msra.mxu0 %v441
        %461 = vmatpush.bf16.msra.mxu0 %v440
        %462 = vmatpush.bf16.msra.mxu0 %v439
        %463 = vmatmul.bf16.gmra.mxu0 %v390
        %v464 = vpop.f32.mrf.mxu0
        %v465 = vadd.f32 0.0, %v464
        %v466 = vpop.f32.mrf.mxu0
        %467 = vdwg.mxu0
        %v468 = vadd.f32 %v389, %v465
        %vm469 = vcmask 261120
        %470 = vst.msk [vmem:[#allocation2] sm:$0xff] %vm469, %v468
        // Predicated region
        $region45: #{double_stream_block.18} parent=39 // pred_check
          %p471 = pneg %p383
        $region46: #{double_stream_block.18} parent=39 // pred_check_branch
          %473 = sbr.rel (%p471) target = $region48
        $region47: #{double_stream_block.18} parent=39 // pred_region
          %v474 = vld [vmem:[#allocation2] sm:$0xff]
          %v475 = vld [vmem:[%s366] sm:$0x1]
          %v477 = vperm.slane %v475, 0
          %v479 = vadd.f32 %v474, %v477
          %v480 = vld [vmem:[%s382] sm:$0xff]
          %v481 = vld [vmem:[%s372] sm:$0x1]
          %v483 = vperm.slane %v481, 0
          %v485 = vmul.f32 %v483, %v479
          %v486 = vadd.f32 %v480, %v485
          %487 = vst.msk [vmem:[%s344] sm:$0xff] %vm469, %v486
        $region48: #{double_stream_block.18} parent=39 // pred_fallthru
          _
        %s488 = sand.u32 %s199, 1
        %s489 = scalar_lea.sflag [#allocation4], %s488
        %s490 = sand.u32 %s199, 1
        %s491 = smul.addr %s490, 8
        %s492 = scalar_lea.vmem [#allocation3], %s491
        // Predicated region
        $region49: #{double_stream_block.18} parent=39 // pred_check
          %p493 = pneg %p209
        $region50: #{double_stream_block.18} parent=39 // pred_check_branch
          %495 = sbr.rel (%p493) target = $region52
        $region51: #{double_stream_block.18} parent=39 // pred_region
          %497 = vsyncadd %s489, 0
          %s498 = sadd.s32 %s27, %s26
          %s499 = sadd.s32 %s498, %s25
          %s500 = smul.addr %s499, 8
          %s501 = scalar_lea.hbm %s5, %s500
          %s503 = sshll.u32 %s492, 4
          %s504 = int_to_ptr.vmem [resolvable:$true] %s503
          %s505 = sshll.u32 %s501, 4
          %s506 = int_to_ptr.hbm [resolvable:$true] %s505
          %508 = dma.vmem_to_hbm [thread:$0]  %s504, 128, %s506, %s489
        $region52: #{double_stream_block.18} parent=39 // pred_fallthru
          _
      $region40: #{double_stream_block.18} parent=5 // pred_fallthru
        _
      %p509 = scmp.le.s32.totalorder 2, %s14
      // Predicated region
      $region53: #{double_stream_block.18} parent=5 // pred_check
        %p510 = pneg %p509
      $region54: #{double_stream_block.18} parent=5 // pred_check_branch
        %512 = sbr.rel (%p510) target = $region56
      $region55: #{double_stream_block.18} parent=5 // pred_region
        %s513 = ssub.s32 %s14, 2
        // Predicated region
        $region57: #{double_stream_block.18} parent=55 // pred_check
          %p514 = pneg %p215
        $region58: #{double_stream_block.18} parent=55 // pred_check_branch
          %516 = sbr.rel (%p514) target = $region60
        $region59: #{double_stream_block.18} parent=55 // pred_region
          %s517 = sand.u32 %s200, 1
          %s518 = scalar_lea.sflag [#allocation4], %s517
          %s519 = sand.u32 %s200, 1
          %s520 = smul.addr %s519, 8
          %s521 = scalar_lea.vmem [#allocation3], %s520
          %523 = dma.done %s518, 128
        $region60: #{double_stream_block.18} parent=55 // pred_fallthru
          _
      $region56: #{double_stream_block.18} parent=5 // pred_fallthru
        _
    $region6: #{double_stream_block.18} parent=1 // loop_footer
      %s18 = sadd.s32 1, %s14
    $region7: #{double_stream_block.18} parent=1 // loop_footer_branch
      %13 = sbr.rel target = $region3
    $region8: #{double_stream_block.18} parent=1 // loop_exit
      _
    %524 = vsyncpa [#allocation4], 1
    %s525 = scalar_lea.sflag [#allocation4], 1
    %526 = vsyncpa %s525, 1

</llo_original>
